<compile_context>
chip_gen: v7x
topology: tpu7x:2x2x1
jax: 0.10.0
libtpu: 0.0.40
codegen_flags: <defaults>
</compile_context>

<pallas_src>
import functools

import jax
import jax.numpy as jnp
from jax.experimental import pallas as pl
from jax.experimental.pallas import tpu as pltpu


# ----------------------------------------------------------------------------
# helpers
# ----------------------------------------------------------------------------
def _round_up(x, m):
    return (x + m - 1) // m * m


def _pick_tile(dim, pref, align):
    """Tile = pref when dim is large; otherwise dim rounded up to `align`."""
    return pref if dim >= pref else _round_up(dim, align)


# ----------------------------------------------------------------------------
# Kernel 1: generic (M,K)x(K,N) + bias matmul on a fully parallel grid.
# Used for both the hoisted input projection and the vocab head.
# ----------------------------------------------------------------------------
def _matmul_bias_kernel(x_ref, w_ref, b_ref, o_ref):
    o_ref[...] = (jnp.dot(x_ref[...], w_ref[...],
                          preferred_element_type=jnp.float32)
                  + b_ref[...]).astype(o_ref.dtype)


def matmul_bias_pallas(x, w, b, *, tm_pref=256, tn_pref=512):
    """x: (M, K), w: (K, N), b: (N,) or (1, N) -> (M, N) float32."""
    M, K = x.shape
    K2, N = w.shape
    assert K == K2
    tm = _pick_tile(M, tm_pref, 8)
    tn = _pick_tile(N, tn_pref, 128)
    M_pad, N_pad, K_pad = _round_up(M, tm), _round_up(N, tn), _round_up(K, 128)

    x_p = jnp.pad(x, ((0, M_pad - M), (0, K_pad - K)))
    w_p = jnp.pad(w, ((0, K_pad - K), (0, N_pad - N)))
    b_p = jnp.pad(b.reshape(1, -1).astype(jnp.float32), ((0, 0), (0, N_pad - N)))

    out = pl.pallas_call(
        _matmul_bias_kernel,
        out_shape=jax.ShapeDtypeStruct((M_pad, N_pad), jnp.float32),
        grid_spec=pltpu.PrefetchScalarGridSpec(
            num_scalar_prefetch=0,
            grid=(M_pad // tm, N_pad // tn),
            in_specs=[
                pl.BlockSpec((tm, K_pad), lambda i, j: (i, 0)),
                pl.BlockSpec((K_pad, tn), lambda i, j: (0, j)),
                pl.BlockSpec((1, tn), lambda i, j: (0, j)),
            ],
            out_specs=pl.BlockSpec((tm, tn), lambda i, j: (i, j)),
        ),
        compiler_params=pltpu.CompilerParams(
            dimension_semantics=("parallel", "parallel")),
    )(x_p, w_p, b_p)
    return out[:M, :N]


# ----------------------------------------------------------------------------
# Kernel 2: the LSTM recurrence.  One grid step == TT timesteps.
# Per step only h @ W_hh^T (+ precomputed gates_x[t]) -> gate math -> h/c update.
# Output hidden states are written directly batch-first: (B_pad, T_pad, H_pad).
# ----------------------------------------------------------------------------
def _lstm_seq_kernel(gx_ref, whh_ref, hs_ref, h_scr, c_scr, *, tt_block, hidden_pad):
    @pl.when(pl.program_id(0) == 0)
    def _():
        h_scr[...] = jnp.zeros_like(h_scr)   # init_hidden: zeros
        c_scr[...] = jnp.zeros_like(c_scr)

    H = hidden_pad
    # Static unroll over the TT timesteps of this time block (TT is small).
    for tt in range(tt_block):
        h = h_scr[...]                                     # (B_pad, H_pad)
        c = c_scr[...]
        gx = gx_ref[:, pl.ds(tt, 1), :][:, 0, :]           # (B_pad, 4*H_pad)
        gates = gx + jnp.dot(h, whh_ref[...],
                             preferred_element_type=jnp.float32)
        # each gate occupies its own 128-lane-aligned column block
        i_g = jax.nn.sigmoid(gates[:, 0 * H:1 * H])
        f_g = jax.nn.sigmoid(gates[:, 1 * H:2 * H])
        g_g = jnp.tanh(gates[:, 2 * H:3 * H])
        o_g = jax.nn.sigmoid(gates[:, 3 * H:4 * H])
        c_new = f_g * c + i_g * g_g
        h_new = o_g * jnp.tanh(c_new)
        c_scr[...] = c_new
        h_scr[...] = h_new
        hs_ref[:, pl.ds(tt, 1), :] = h_new[:, None, :]


def lstm_seq_pallas(gates_x, w_hh_t, *, tt_block):
    """gates_x: (B_pad, T_pad, 4*H_pad), w_hh_t: (H_pad, 4*H_pad)
       -> hidden states (B_pad, T_pad, H_pad), batch-first."""
    B_pad, T_pad, G4 = gates_x.shape
    H_pad = w_hh_t.shape[0]
    assert G4 == 4 * H_pad and T_pad % tt_block == 0

    kernel = functools.partial(_lstm_seq_kernel,
                               tt_block=tt_block, hidden_pad=H_pad)
    return pl.pallas_call(
        kernel,
        out_shape=jax.ShapeDtypeStruct((B_pad, T_pad, H_pad), jnp.float32),
        grid_spec=pltpu.PrefetchScalarGridSpec(
            num_scalar_prefetch=0,
            grid=(T_pad // tt_block,),
            in_specs=[
                pl.BlockSpec((B_pad, tt_block, G4), lambda tb: (0, tb, 0)),
                pl.BlockSpec((H_pad, G4), lambda tb: (0, 0)),   # resident weight
            ],
            out_specs=pl.BlockSpec((B_pad, tt_block, H_pad), lambda tb: (0, tb, 0)),
            scratch_shapes=[
                pltpu.VMEM((B_pad, H_pad), jnp.float32),   # h
                pltpu.VMEM((B_pad, H_pad), jnp.float32),   # c
            ],
        ),
        compiler_params=pltpu.CompilerParams(
            dimension_semantics=("arbitrary",),   # time recurrence is sequential
        ),
    )(gates_x, w_hh_t)


# ----------------------------------------------------------------------------
# Parameter packing: transpose weights, pad H/E to 128 lanes, B handled later,
# and give each gate (i,f,g,o) its own 128-lane-aligned column block.
# ----------------------------------------------------------------------------
def _pack_gate_cols(m, H, H_pad):
    """(K, 4H) in PyTorch gate order (i,f,g,o) -> (K, 4*H_pad), gate blocks aligned."""
    blocks = []
    for g in range(4):
        blk = m[:, g * H:(g + 1) * H]
        blocks.append(jnp.pad(blk, ((0, 0), (0, H_pad - H))))
    return jnp.concatenate(blocks, axis=1)


def pack_params(raw):
    """Repack raw PyTorch-convention weights into TPU-friendly padded layouts."""
    H = raw["w_hh"].shape[1]
    E = raw["w_ih"].shape[1]
    H_pad = _round_up(H, 128)
    E_pad = _round_up(E, 128)
    w_ih_t = jnp.pad(raw["w_ih"].T, ((0, E_pad - E), (0, 0)))      # (E_pad, 4H)
    w_hh_t = jnp.pad(raw["w_hh"].T, ((0, H_pad - H), (0, 0)))      # (H_pad, 4H)
    bias = (raw["b_ih"] + raw["b_hh"])[None, :]                    # (1, 4H)
    return {
        "emb": raw["emb"],
        "w_ih_t": _pack_gate_cols(w_ih_t, H, H_pad),               # (E_pad, 4*H_pad)
        "w_hh_t": _pack_gate_cols(w_hh_t, H, H_pad),               # (H_pad, 4*H_pad)
        "bias": _pack_gate_cols(bias, H, H_pad),                   # (1, 4*H_pad)
        "w_lin_t": jnp.pad(raw["w_lin"].T, ((0, H_pad - H), (0, 0))),  # (H_pad, V)
        "b_lin": raw["b_lin"],                                     # (V,)
    }


# ----------------------------------------------------------------------------
# DecoderRNN.forward equivalent
# ----------------------------------------------------------------------------
def decoder_forward(params, features, captions):
    """features: (B, E) float32, captions: (B, L) int32 -> (B, L, V) logits."""
    # captions = captions[:, :-1]; embeds = word_embeddings(captions)
    captions = captions[:, :-1]
    embeds = jnp.take(params["emb"], captions, axis=0)                  # (B, L-1, E)
    # inputs = cat((features.unsqueeze(1), embeds), dim=1)   (batch_first)
    inputs = jnp.concatenate([features[:, None, :], embeds], axis=1)    # (B, T, E)

    B, T, E = inputs.shape
    E_pad = params["w_ih_t"].shape[0]
    G4 = params["w_hh_t"].shape[1]
    H_pad = G4 // 4
    V = params["b_lin"].shape[0]

    TT = 8                                   # timesteps per recurrent grid step
    B_pad = _round_up(B, 8)                  # f32 sublane count
    T_pad = _round_up(T, TT)

    x = jnp.pad(inputs, ((0, B_pad - B), (0, T_pad - T), (0, E_pad - E)))

    # (1) hoisted input projection: one parallel GEMM over all (B*T) rows
    gates_x = matmul_bias_pallas(
        x.reshape(B_pad * T_pad, E_pad), params["w_ih_t"], params["bias"])
    gates_x = gates_x.reshape(B_pad, T_pad, G4)

    # (2) sequential LSTM recurrence (only h @ W_hh^T per step), batch-first hs
    hs = lstm_seq_pallas(gates_x, params["w_hh_t"], tt_block=TT)   # (B_pad,T_pad,H_pad)

    # (3) vocab head: one parallel GEMM; already batch-first -> no logits transpose
    logits = matmul_bias_pallas(
        hs.reshape(B_pad * T_pad, H_pad), params["w_lin_t"], params["b_lin"])
    return logits.reshape(B_pad, T_pad, V)[:B, :T, :]


# ----------------------------------------------------------------------------
# pure-JAX reference (PyTorch semantics) for correctness checking
# ----------------------------------------------------------------------------
def decoder_forward_ref(raw, features, captions):
    captions = captions[:, :-1]
    embeds = jnp.take(raw["emb"], captions, axis=0)
    inputs = jnp.concatenate([features[:, None, :], embeds], axis=1)    # (B, T, E)
    B, _, _ = inputs.shape
    H = raw["w_hh"].shape[1]
    w_ih_t, w_hh_t = raw["w_ih"].T, raw["w_hh"].T
    bias = (raw["b_ih"] + raw["b_hh"])[None, :]

    def step(carry, x_t):
        h, c = carry
        gates = x_t @ w_ih_t + h @ w_hh_t + bias
        i = jax.nn.sigmoid(gates[:, 0 * H:1 * H])
        f = jax.nn.sigmoid(gates[:, 1 * H:2 * H])
        g = jnp.tanh(gates[:, 2 * H:3 * H])
        o = jax.nn.sigmoid(gates[:, 3 * H:4 * H])
        c = f * c + i * g
        h = o * jnp.tanh(c)
        return (h, c), h

    h0 = jnp.zeros((B, H), jnp.float32)
    (_, _), hs = jax.lax.scan(step, (h0, h0), jnp.transpose(inputs, (1, 0, 2)))
    lstm_out = jnp.transpose(hs, (1, 0, 2))                             # (B, T, H)
    return lstm_out @ raw["w_lin"].T + raw["b_lin"]


# ----------------------------------------------------------------------------
# Deterministic parameter init (shapes from DecoderRNN.__init__)
# ----------------------------------------------------------------------------
def init_params(key, vocab_size, embedding_dim, hidden_size):
    ks = jax.random.split(key, 6)
    s = 0.1
    return {
        "emb":   s * jax.random.normal(ks[0], (vocab_size, embedding_dim), jnp.float32),
        "w_ih":  s * jax.random.normal(ks[1], (4 * hidden_size, embedding_dim), jnp.float32),
        "w_hh":  s * jax.random.normal(ks[2], (4 * hidden_size, hidden_size), jnp.float32),
        "b_ih":  s * jax.random.normal(ks[3], (4 * hidden_size,), jnp.float32),
        "b_hh":  s * jax.random.normal(ks[4], (4 * hidden_size,), jnp.float32),
        "w_lin": s * jax.random.normal(ks[5], (vocab_size, hidden_size), jnp.float32),
        "b_lin": jnp.zeros((vocab_size,), jnp.float32),
    }


if __name__ == "__main__":
    B = 2              # batch
    L = 8              # caption length (sequence length T = 1 + (L-1) = 8)
    E = 32             # embedding_dim == features dim
    H = 32             # hidden_size
    V = 128            # vocab_size

    key = jax.random.PRNGKey(0)
    kp, kf, kc = jax.random.split(key, 3)

    raw = init_params(kp, V, E, H)
    params = pack_params(raw)
    features = jax.random.normal(kf, (B, E), jnp.float32)
    captions = jax.random.randint(kc, (B, L), 0, V, dtype=jnp.int32)

    out = jax.jit(decoder_forward)(params, features, captions)
    out = jax.block_until_ready(out)

    ref = decoder_forward_ref(raw, features, captions)
    assert out.shape == (B, L, V), out.shape
    err = float(jnp.max(jnp.abs(out - ref)))
    assert err < 1e-4, err

    print("KERNEL_OK")
</pallas_src>

<mosaic_0001>
module attributes {stable_mosaic.version = 11 : i64} {
  func.func @_matmul_bias_kernel(%arg0: i32, %arg1: i32, %arg2: memref<64x128xf32, #tpu.memory_space<vmem>>, %arg3: memref<128x128xf32, #tpu.memory_space<vmem>>, %arg4: memref<1x128xf32, #tpu.memory_space<vmem>>, %arg5: memref<64x128xf32, #tpu.memory_space<vmem>>) attributes {dimension_semantics = [#tpu.dimension_semantics<parallel>, #tpu.dimension_semantics<parallel>], iteration_bounds = array<i64: 1, 1>, scalar_prefetch = 0 : i64, scratch_operands = 0 : i64, tpu.core_type = #tpu.core_type<tc>, window_params = [{transform_indices = @transform_0, window_bounds = array<i64: 64, 128>}, {transform_indices = @transform_1, window_bounds = array<i64: 128, 128>}, {transform_indices = @transform_2, window_bounds = array<i64: 1, 128>}, {transform_indices = @transform_3, window_bounds = array<i64: 64, 128>}]} {
    %c0 = arith.constant 0 : index
    %c0_0 = arith.constant 0 : index
    %0 = vector.load %arg2[%c0, %c0_0] : memref<64x128xf32, #tpu.memory_space<vmem>>, vector<64x128xf32>
    %c0_1 = arith.constant 0 : index
    %c0_2 = arith.constant 0 : index
    %1 = vector.load %arg3[%c0_1, %c0_2] : memref<128x128xf32, #tpu.memory_space<vmem>>, vector<128x128xf32>
    %cst = arith.constant dense<0.000000e+00> : vector<64x128xf32>
    %2 = tpu.matmul %0, %1, %cst {dimension_numbers = #tpu.dot_dimension_numbers<[1], [0], [0], [1], [0, 0, 1, 1], [], []>} : vector<64x128xf32>, vector<128x128xf32>, vector<64x128xf32> -> vector<64x128xf32>
    %c0_3 = arith.constant 0 : index
    %c0_4 = arith.constant 0 : index
    %3 = vector.load %arg4[%c0_3, %c0_4] : memref<1x128xf32, #tpu.memory_space<vmem>>, vector<1x128xf32>
    %4 = vector.broadcast %3 : vector<1x128xf32> to vector<64x128xf32>
    %5 = arith.addf %2, %4 : vector<64x128xf32>
    %c0_5 = arith.constant 0 : index
    %c0_6 = arith.constant 0 : index
    %6 = vector.load %arg5[%c0_5, %c0_6] : memref<64x128xf32, #tpu.memory_space<vmem>>, vector<64x128xf32>
    tpu.vector_store %arg5[%c0_5, %c0_6], %5 {strides = array<i32>} : memref<64x128xf32, #tpu.memory_space<vmem>>, vector<64x128xf32>,
    return
  }
  func.func @transform_0(%arg0: i32, %arg1: i32) -> (i32, i32) {
    %c0_i32 = arith.constant 0 : i32
    %c0_i32_0 = arith.constant 0 : i32
    return %arg0, %c0_i32 : i32, i32
  }
  func.func @transform_1(%arg0: i32, %arg1: i32) -> (i32, i32) {
    %c0_i32 = arith.constant 0 : i32
    %c0_i32_0 = arith.constant 0 : i32
    return %c0_i32, %arg1 : i32, i32
  }
  func.func @transform_2(%arg0: i32, %arg1: i32) -> (i32, i32) {
    %c0_i32 = arith.constant 0 : i32
    %c0_i32_0 = arith.constant 0 : i32
    return %c0_i32, %arg1 : i32, i32
  }
  func.func @transform_3(%arg0: i32, %arg1: i32) -> (i32, i32) {
    %c0_i32 = arith.constant 0 : i32
    return %arg0, %arg1 : i32, i32
  }
}

module attributes {stable_mosaic.version = 11 : i64} {
  func.func @_matmul_bias_kernel(%arg0: i32, %arg1: i32, %arg2: memref<64x128xf32, #tpu.memory_space<vmem>>, %arg3: memref<128x512xf32, #tpu.memory_space<vmem>>, %arg4: memref<1x512xf32, #tpu.memory_space<vmem>>, %arg5: memref<64x512xf32, #tpu.memory_space<vmem>>) attributes {dimension_semantics = [#tpu.dimension_semantics<parallel>, #tpu.dimension_semantics<parallel>], iteration_bounds = array<i64: 1, 1>, scalar_prefetch = 0 : i64, scratch_operands = 0 : i64, tpu.core_type = #tpu.core_type<tc>, window_params = [{transform_indices = @transform_0, window_bounds = array<i64: 64, 128>}, {transform_indices = @transform_1, window_bounds = array<i64: 128, 512>}, {transform_indices = @transform_2, window_bounds = array<i64: 1, 512>}, {transform_indices = @transform_3, window_bounds = array<i64: 64, 512>}]} {
    %c0 = arith.constant 0 : index
    %c0_0 = arith.constant 0 : index
    %0 = vector.load %arg2[%c0, %c0_0] : memref<64x128xf32, #tpu.memory_space<vmem>>, vector<64x128xf32>
    %c0_1 = arith.constant 0 : index
    %c0_2 = arith.constant 0 : index
    %1 = vector.load %arg3[%c0_1, %c0_2] : memref<128x512xf32, #tpu.memory_space<vmem>>, vector<128x512xf32>
    %cst = arith.constant dense<0.000000e+00> : vector<64x512xf32>
    %2 = tpu.matmul %0, %1, %cst {dimension_numbers = #tpu.dot_dimension_numbers<[1], [0], [0], [1], [0, 0, 1, 1], [], []>} : vector<64x128xf32>, vector<128x512xf32>, vector<64x512xf32> -> vector<64x512xf32>
    %c0_3 = arith.constant 0 : index
    %c0_4 = arith.constant 0 : index
    %3 = vector.load %arg4[%c0_3, %c0_4] : memref<1x512xf32, #tpu.memory_space<vmem>>, vector<1x512xf32>
    %4 = vector.broadcast %3 : vector<1x512xf32> to vector<64x512xf32>
    %5 = arith.addf %2, %4 : vector<64x512xf32>
    %c0_5 = arith.constant 0 : index
    %c0_6 = arith.constant 0 : index
    %6 = vector.load %arg5[%c0_5, %c0_6] : memref<64x512xf32, #tpu.memory_space<vmem>>, vector<64x512xf32>
    tpu.vector_store %arg5[%c0_5, %c0_6], %5 {strides = array<i32>} : memref<64x512xf32, #tpu.memory_space<vmem>>, vector<64x512xf32>,
    return
  }
  func.func @transform_0(%arg0: i32, %arg1: i32) -> (i32, i32) {
    %c0_i32 = arith.constant 0 : i32
    %c0_i32_0 = arith.constant 0 : i32
    return %arg0, %c0_i32 : i32, i32
  }
  func.func @transform_1(%arg0: i32, %arg1: i32) -> (i32, i32) {
    %c0_i32 = arith.constant 0 : i32
    %c0_i32_0 = arith.constant 0 : i32
    return %c0_i32, %arg1 : i32, i32
  }
  func.func @transform_2(%arg0: i32, %arg1: i32) -> (i32, i32) {
    %c0_i32 = arith.constant 0 : i32
    %c0_i32_0 = arith.constant 0 : i32
    return %c0_i32, %arg1 : i32, i32
  }
  func.func @transform_3(%arg0: i32, %arg1: i32) -> (i32, i32) {
    %c0_i32 = arith.constant 0 : i32
    return %arg0, %arg1 : i32, i32
  }
}

module attributes {stable_mosaic.version = 11 : i64} {
  func.func @_lstm_seq_kernel(%arg0: i32, %arg1: memref<8x8x512xf32, #tpu.memory_space<vmem>>, %arg2: memref<128x512xf32, #tpu.memory_space<vmem>>, %arg3: memref<8x8x128xf32, #tpu.memory_space<vmem>>, %arg4: memref<8x128xf32, #tpu.memory_space<vmem>>, %arg5: memref<8x128xf32, #tpu.memory_space<vmem>>) attributes {dimension_semantics = [#tpu.dimension_semantics<arbitrary>], iteration_bounds = array<i64: 1>, scalar_prefetch = 0 : i64, scratch_operands = 2 : i64, tpu.core_type = #tpu.core_type<tc>, window_params = [{transform_indices = @transform_0, window_bounds = array<i64: 8, 8, 512>}, {pipeline_mode = #tpu.pipeline_mode<synchronous>, transform_indices = @transform_1, window_bounds = array<i64: 128, 512>}, {transform_indices = @transform_2, window_bounds = array<i64: 8, 8, 128>}]} {
    %c0_i32 = arith.constant 0 : i32
    %0 = arith.cmpi eq, %arg0, %c0_i32 : i32
    %1 = arith.extui %0 : i1 to i32
    %c0_i32_0 = arith.constant 0 : i32
    %2 = arith.cmpi ne, %1, %c0_i32_0 : i32
    scf.if %2 {
      %cst_152 = arith.constant 0.000000e+00 : f32
      %291 = vector.broadcast %cst_152 : f32 to vector<8x128xf32>
      %c0_153 = arith.constant 0 : index
      %c0_154 = arith.constant 0 : index
      %292 = vector.load %arg4[%c0_153, %c0_154] : memref<8x128xf32, #tpu.memory_space<vmem>>, vector<8x128xf32>
      tpu.vector_store %arg4[%c0_153, %c0_154], %291 {strides = array<i32>} : memref<8x128xf32, #tpu.memory_space<vmem>>, vector<8x128xf32>,
      %cst_155 = arith.constant 0.000000e+00 : f32
      %293 = vector.broadcast %cst_155 : f32 to vector<8x128xf32>
      %c0_156 = arith.constant 0 : index
      %c0_157 = arith.constant 0 : index
      %294 = vector.load %arg5[%c0_156, %c0_157] : memref<8x128xf32, #tpu.memory_space<vmem>>, vector<8x128xf32>
      tpu.vector_store %arg5[%c0_156, %c0_157], %293 {strides = array<i32>} : memref<8x128xf32, #tpu.memory_space<vmem>>, vector<8x128xf32>,
    } else {
    }
    %c0 = arith.constant 0 : index
    %c0_1 = arith.constant 0 : index
    %3 = vector.load %arg4[%c0, %c0_1] : memref<8x128xf32, #tpu.memory_space<vmem>>, vector<8x128xf32>
    %c0_2 = arith.constant 0 : index
    %c0_3 = arith.constant 0 : index
    %4 = vector.load %arg5[%c0_2, %c0_3] : memref<8x128xf32, #tpu.memory_space<vmem>>, vector<8x128xf32>
    %c0_4 = arith.constant 0 : index
    %c0_5 = arith.constant 0 : index
    %c0_6 = arith.constant 0 : index
    %5 = vector.load %arg1[%c0_4, %c0_5, %c0_6] : memref<8x8x512xf32, #tpu.memory_space<vmem>>, vector<8x1x512xf32>
    %6 = vector.shape_cast %5 : vector<8x1x512xf32> to vector<8x512xf32>
    %c0_7 = arith.constant 0 : index
    %c0_8 = arith.constant 0 : index
    %7 = vector.load %arg2[%c0_7, %c0_8] : memref<128x512xf32, #tpu.memory_space<vmem>>, vector<128x512xf32>
    %cst = arith.constant dense<0.000000e+00> : vector<8x512xf32>
    %8 = tpu.matmul %3, %7, %cst {dimension_numbers = #tpu.dot_dimension_numbers<[1], [0], [0], [1], [0, 0, 1, 1], [], []>} : vector<8x128xf32>, vector<128x512xf32>, vector<8x512xf32> -> vector<8x512xf32>
    %9 = arith.addf %6, %8 : vector<8x512xf32>
    %10 = vector.extract_strided_slice %9 {offsets = [0, 0], sizes = [8, 128], strides = [1, 1]} : vector<8x512xf32> to vector<8x128xf32>
    %11 = arith.negf %10 : vector<8x128xf32>
    %12 = math.exp %11 : vector<8x128xf32>
    %cst_9 = arith.constant 1.000000e+00 : f32
    %13 = vector.broadcast %cst_9 : f32 to vector<8x128xf32>
    %14 = arith.addf %13, %12 : vector<8x128xf32>
    %15 = arith.divf %13, %14 : vector<8x128xf32>
    %16 = vector.extract_strided_slice %9 {offsets = [0, 128], sizes = [8, 128], strides = [1, 1]} : vector<8x512xf32> to vector<8x128xf32>
    %17 = arith.negf %16 : vector<8x128xf32>
    %18 = math.exp %17 : vector<8x128xf32>
    %cst_10 = arith.constant 1.000000e+00 : f32
    %19 = vector.broadcast %cst_10 : f32 to vector<8x128xf32>
    %20 = arith.addf %19, %18 : vector<8x128xf32>
    %21 = arith.divf %19, %20 : vector<8x128xf32>
    %22 = vector.extract_strided_slice %9 {offsets = [0, 256], sizes = [8, 128], strides = [1, 1]} : vector<8x512xf32> to vector<8x128xf32>
    %23 = math.tanh %22 : vector<8x128xf32>
    %24 = vector.extract_strided_slice %9 {offsets = [0, 384], sizes = [8, 128], strides = [1, 1]} : vector<8x512xf32> to vector<8x128xf32>
    %25 = arith.negf %24 : vector<8x128xf32>
    %26 = math.exp %25 : vector<8x128xf32>
    %cst_11 = arith.constant 1.000000e+00 : f32
    %27 = vector.broadcast %cst_11 : f32 to vector<8x128xf32>
    %28 = arith.addf %27, %26 : vector<8x128xf32>
    %29 = arith.divf %27, %28 : vector<8x128xf32>
    %30 = arith.mulf %21, %4 : vector<8x128xf32>
    %31 = arith.mulf %15, %23 : vector<8x128xf32>
    %32 = arith.addf %30, %31 : vector<8x128xf32>
    %33 = math.tanh %32 : vector<8x128xf32>
    %34 = arith.mulf %29, %33 : vector<8x128xf32>
    %c0_12 = arith.constant 0 : index
    %c0_13 = arith.constant 0 : index
    %35 = vector.load %arg5[%c0_12, %c0_13] : memref<8x128xf32, #tpu.memory_space<vmem>>, vector<8x128xf32>
    tpu.vector_store %arg5[%c0_12, %c0_13], %32 {strides = array<i32>} : memref<8x128xf32, #tpu.memory_space<vmem>>, vector<8x128xf32>,
    %c0_14 = arith.constant 0 : index
    %c0_15 = arith.constant 0 : index
    %36 = vector.load %arg4[%c0_14, %c0_15] : memref<8x128xf32, #tpu.memory_space<vmem>>, vector<8x128xf32>
    tpu.vector_store %arg4[%c0_14, %c0_15], %34 {strides = array<i32>} : memref<8x128xf32, #tpu.memory_space<vmem>>, vector<8x128xf32>,
    %37 = vector.shape_cast %34 : vector<8x128xf32> to vector<8x1x128xf32>
    %c0_16 = arith.constant 0 : index
    %c0_17 = arith.constant 0 : index
    %c0_18 = arith.constant 0 : index
    %38 = vector.load %arg3[%c0_16, %c0_17, %c0_18] : memref<8x8x128xf32, #tpu.memory_space<vmem>>, vector<8x1x128xf32>
    tpu.vector_store %arg3[%c0_16, %c0_17, %c0_18], %37 {strides = array<i32>} : memref<8x8x128xf32, #tpu.memory_space<vmem>>, vector<8x1x128xf32>,
    %c0_19 = arith.constant 0 : index
    %c0_20 = arith.constant 0 : index
    %39 = vector.load %arg4[%c0_19, %c0_20] : memref<8x128xf32, #tpu.memory_space<vmem>>, vector<8x128xf32>
    %c0_21 = arith.constant 0 : index
    %c0_22 = arith.constant 0 : index
    %40 = vector.load %arg5[%c0_21, %c0_22] : memref<8x128xf32, #tpu.memory_space<vmem>>, vector<8x128xf32>
    %c0_23 = arith.constant 0 : index
    %c1 = arith.constant 1 : index
    %c0_24 = arith.constant 0 : index
    %41 = vector.load %arg1[%c0_23, %c1, %c0_24] : memref<8x8x512xf32, #tpu.memory_space<vmem>>, vector<8x1x512xf32>
    %42 = vector.shape_cast %41 : vector<8x1x512xf32> to vector<8x512xf32>
    %c0_25 = arith.constant 0 : index
    %c0_26 = arith.constant 0 : index
    %43 = vector.load %arg2[%c0_25, %c0_26] : memref<128x512xf32, #tpu.memory_space<vmem>>, vector<128x512xf32>
    %cst_27 = arith.constant dense<0.000000e+00> : vector<8x512xf32>
    %44 = tpu.matmul %39, %43, %cst_27 {dimension_numbers = #tpu.dot_dimension_numbers<[1], [0], [0], [1], [0, 0, 1, 1], [], []>} : vector<8x128xf32>, vector<128x512xf32>, vector<8x512xf32> -> vector<8x512xf32>
    %45 = arith.addf %42, %44 : vector<8x512xf32>
    %46 = vector.extract_strided_slice %45 {offsets = [0, 0], sizes = [8, 128], strides = [1, 1]} : vector<8x512xf32> to vector<8x128xf32>
    %47 = arith.negf %46 : vector<8x128xf32>
    %48 = math.exp %47 : vector<8x128xf32>
    %cst_28 = arith.constant 1.000000e+00 : f32
    %49 = vector.broadcast %cst_28 : f32 to vector<8x128xf32>
    %50 = arith.addf %49, %48 : vector<8x128xf32>
    %51 = arith.divf %49, %50 : vector<8x128xf32>
    %52 = vector.extract_strided_slice %45 {offsets = [0, 128], sizes = [8, 128], strides = [1, 1]} : vector<8x512xf32> to vector<8x128xf32>
    %53 = arith.negf %52 : vector<8x128xf32>
    %54 = math.exp %53 : vector<8x128xf32>
    %cst_29 = arith.constant 1.000000e+00 : f32
    %55 = vector.broadcast %cst_29 : f32 to vector<8x128xf32>
    %56 = arith.addf %55, %54 : vector<8x128xf32>
    %57 = arith.divf %55, %56 : vector<8x128xf32>
    %58 = vector.extract_strided_slice %45 {offsets = [0, 256], sizes = [8, 128], strides = [1, 1]} : vector<8x512xf32> to vector<8x128xf32>
    %59 = math.tanh %58 : vector<8x128xf32>
    %60 = vector.extract_strided_slice %45 {offsets = [0, 384], sizes = [8, 128], strides = [1, 1]} : vector<8x512xf32> to vector<8x128xf32>
    %61 = arith.negf %60 : vector<8x128xf32>
    %62 = math.exp %61 : vector<8x128xf32>
    %cst_30 = arith.constant 1.000000e+00 : f32
    %63 = vector.broadcast %cst_30 : f32 to vector<8x128xf32>
    %64 = arith.addf %63, %62 : vector<8x128xf32>
    %65 = arith.divf %63, %64 : vector<8x128xf32>
    %66 = arith.mulf %57, %40 : vector<8x128xf32>
    %67 = arith.mulf %51, %59 : vector<8x128xf32>
    %68 = arith.addf %66, %67 : vector<8x128xf32>
    %69 = math.tanh %68 : vector<8x128xf32>
    %70 = arith.mulf %65, %69 : vector<8x128xf32>
    %c0_31 = arith.constant 0 : index
    %c0_32 = arith.constant 0 : index
    %71 = vector.load %arg5[%c0_31, %c0_32] : memref<8x128xf32, #tpu.memory_space<vmem>>, vector<8x128xf32>
    tpu.vector_store %arg5[%c0_31, %c0_32], %68 {strides = array<i32>} : memref<8x128xf32, #tpu.memory_space<vmem>>, vector<8x128xf32>,
    %c0_33 = arith.constant 0 : index
    %c0_34 = arith.constant 0 : index
    %72 = vector.load %arg4[%c0_33, %c0_34] : memref<8x128xf32, #tpu.memory_space<vmem>>, vector<8x128xf32>
    tpu.vector_store %arg4[%c0_33, %c0_34], %70 {strides = array<i32>} : memref<8x128xf32, #tpu.memory_space<vmem>>, vector<8x128xf32>,
    %73 = vector.shape_cast %70 : vector<8x128xf32> to vector<8x1x128xf32>
    %c0_35 = arith.constant 0 : index
    %c1_36 = arith.constant 1 : index
    %c0_37 = arith.constant 0 : index
    %74 = vector.load %arg3[%c0_35, %c1_36, %c0_37] : memref<8x8x128xf32, #tpu.memory_space<vmem>>, vector<8x1x128xf32>
    tpu.vector_store %arg3[%c0_35, %c1_36, %c0_37], %73 {strides = array<i32>} : memref<8x8x128xf32, #tpu.memory_space<vmem>>, vector<8x1x128xf32>,
    %c0_38 = arith.constant 0 : index
    %c0_39 = arith.constant 0 : index
    %75 = vector.load %arg4[%c0_38, %c0_39] : memref<8x128xf32, #tpu.memory_space<vmem>>, vector<8x128xf32>
    %c0_40 = arith.constant 0 : index
    %c0_41 = arith.constant 0 : index
    %76 = vector.load %arg5[%c0_40, %c0_41] : memref<8x128xf32, #tpu.memory_space<vmem>>, vector<8x128xf32>
    %c0_42 = arith.constant 0 : index
    %c2 = arith.constant 2 : index
    %c0_43 = arith.constant 0 : index
    %77 = vector.load %arg1[%c0_42, %c2, %c0_43] : memref<8x8x512xf32, #tpu.memory_space<vmem>>, vector<8x1x512xf32>
    %78 = vector.shape_cast %77 : vector<8x1x512xf32> to vector<8x512xf32>
    %c0_44 = arith.constant 0 : index
    %c0_45 = arith.constant 0 : index
    %79 = vector.load %arg2[%c0_44, %c0_45] : memref<128x512xf32, #tpu.memory_space<vmem>>, vector<128x512xf32>
    %cst_46 = arith.constant dense<0.000000e+00> : vector<8x512xf32>
    %80 = tpu.matmul %75, %79, %cst_46 {dimension_numbers = #tpu.dot_dimension_numbers<[1], [0], [0], [1], [0, 0, 1, 1], [], []>} : vector<8x128xf32>, vector<128x512xf32>, vector<8x512xf32> -> vector<8x512xf32>
    %81 = arith.addf %78, %80 : vector<8x512xf32>
    %82 = vector.extract_strided_slice %81 {offsets = [0, 0], sizes = [8, 128], strides = [1, 1]} : vector<8x512xf32> to vector<8x128xf32>
    %83 = arith.negf %82 : vector<8x128xf32>
    %84 = math.exp %83 : vector<8x128xf32>
    %cst_47 = arith.constant 1.000000e+00 : f32
    %85 = vector.broadcast %cst_47 : f32 to vector<8x128xf32>
    %86 = arith.addf %85, %84 : vector<8x128xf32>
    %87 = arith.divf %85, %86 : vector<8x128xf32>
    %88 = vector.extract_strided_slice %81 {offsets = [0, 128], sizes = [8, 128], strides = [1, 1]} : vector<8x512xf32> to vector<8x128xf32>
    %89 = arith.negf %88 : vector<8x128xf32>
    %90 = math.exp %89 : vector<8x128xf32>
    %cst_48 = arith.constant 1.000000e+00 : f32
    %91 = vector.broadcast %cst_48 : f32 to vector<8x128xf32>
    %92 = arith.addf %91, %90 : vector<8x128xf32>
    %93 = arith.divf %91, %92 : vector<8x128xf32>
    %94 = vector.extract_strided_slice %81 {offsets = [0, 256], sizes = [8, 128], strides = [1, 1]} : vector<8x512xf32> to vector<8x128xf32>
    %95 = math.tanh %94 : vector<8x128xf32>
    %96 = vector.extract_strided_slice %81 {offsets = [0, 384], sizes = [8, 128], strides = [1, 1]} : vector<8x512xf32> to vector<8x128xf32>
    %97 = arith.negf %96 : vector<8x128xf32>
    %98 = math.exp %97 : vector<8x128xf32>
    %cst_49 = arith.constant 1.000000e+00 : f32
    %99 = vector.broadcast %cst_49 : f32 to vector<8x128xf32>
    %100 = arith.addf %99, %98 : vector<8x128xf32>
    %101 = arith.divf %99, %100 : vector<8x128xf32>
    %102 = arith.mulf %93, %76 : vector<8x128xf32>
    %103 = arith.mulf %87, %95 : vector<8x128xf32>
    %104 = arith.addf %102, %103 : vector<8x128xf32>
    %105 = math.tanh %104 : vector<8x128xf32>
    %106 = arith.mulf %101, %105 : vector<8x128xf32>
    %c0_50 = arith.constant 0 : index
    %c0_51 = arith.constant 0 : index
    %107 = vector.load %arg5[%c0_50, %c0_51] : memref<8x128xf32, #tpu.memory_space<vmem>>, vector<8x128xf32>
    tpu.vector_store %arg5[%c0_50, %c0_51], %104 {strides = array<i32>} : memref<8x128xf32, #tpu.memory_space<vmem>>, vector<8x128xf32>,
    %c0_52 = arith.constant 0 : index
    %c0_53 = arith.constant 0 : index
    %108 = vector.load %arg4[%c0_52, %c0_53] : memref<8x128xf32, #tpu.memory_space<vmem>>, vector<8x128xf32>
    tpu.vector_store %arg4[%c0_52, %c0_53], %106 {strides = array<i32>} : memref<8x128xf32, #tpu.memory_space<vmem>>, vector<8x128xf32>,
    %109 = vector.shape_cast %106 : vector<8x128xf32> to vector<8x1x128xf32>
    %c0_54 = arith.constant 0 : index
    %c2_55 = arith.constant 2 : index
    %c0_56 = arith.constant 0 : index
    %110 = vector.load %arg3[%c0_54, %c2_55, %c0_56] : memref<8x8x128xf32, #tpu.memory_space<vmem>>, vector<8x1x128xf32>
    tpu.vector_store %arg3[%c0_54, %c2_55, %c0_56], %109 {strides = array<i32>} : memref<8x8x128xf32, #tpu.memory_space<vmem>>, vector<8x1x128xf32>,
    %c0_57 = arith.constant 0 : index
    %c0_58 = arith.constant 0 : index
    %111 = vector.load %arg4[%c0_57, %c0_58] : memref<8x128xf32, #tpu.memory_space<vmem>>, vector<8x128xf32>
    %c0_59 = arith.constant 0 : index
    %c0_60 = arith.constant 0 : index
    %112 = vector.load %arg5[%c0_59, %c0_60] : memref<8x128xf32, #tpu.memory_space<vmem>>, vector<8x128xf32>
    %c0_61 = arith.constant 0 : index
    %c3 = arith.constant 3 : index
    %c0_62 = arith.constant 0 : index
    %113 = vector.load %arg1[%c0_61, %c3, %c0_62] : memref<8x8x512xf32, #tpu.memory_space<vmem>>, vector<8x1x512xf32>
    %114 = vector.shape_cast %113 : vector<8x1x512xf32> to vector<8x512xf32>
    %c0_63 = arith.constant 0 : index
    %c0_64 = arith.constant 0 : index
    %115 = vector.load %arg2[%c0_63, %c0_64] : memref<128x512xf32, #tpu.memory_space<vmem>>, vector<128x512xf32>
    %cst_65 = arith.constant dense<0.000000e+00> : vector<8x512xf32>
    %116 = tpu.matmul %111, %115, %cst_65 {dimension_numbers = #tpu.dot_dimension_numbers<[1], [0], [0], [1], [0, 0, 1, 1], [], []>} : vector<8x128xf32>, vector<128x512xf32>, vector<8x512xf32> -> vector<8x512xf32>
    %117 = arith.addf %114, %116 : vector<8x512xf32>
    %118 = vector.extract_strided_slice %117 {offsets = [0, 0], sizes = [8, 128], strides = [1, 1]} : vector<8x512xf32> to vector<8x128xf32>
    %119 = arith.negf %118 : vector<8x128xf32>
    %120 = math.exp %119 : vector<8x128xf32>
    %cst_66 = arith.constant 1.000000e+00 : f32
    %121 = vector.broadcast %cst_66 : f32 to vector<8x128xf32>
    %122 = arith.addf %121, %120 : vector<8x128xf32>
    %123 = arith.divf %121, %122 : vector<8x128xf32>
    %124 = vector.extract_strided_slice %117 {offsets = [0, 128], sizes = [8, 128], strides = [1, 1]} : vector<8x512xf32> to vector<8x128xf32>
    %125 = arith.negf %124 : vector<8x128xf32>
    %126 = math.exp %125 : vector<8x128xf32>
    %cst_67 = arith.constant 1.000000e+00 : f32
    %127 = vector.broadcast %cst_67 : f32 to vector<8x128xf32>
    %128 = arith.addf %127, %126 : vector<8x128xf32>
    %129 = arith.divf %127, %128 : vector<8x128xf32>
    %130 = vector.extract_strided_slice %117 {offsets = [0, 256], sizes = [8, 128], strides = [1, 1]} : vector<8x512xf32> to vector<8x128xf32>
    %131 = math.tanh %130 : vector<8x128xf32>
    %132 = vector.extract_strided_slice %117 {offsets = [0, 384], sizes = [8, 128], strides = [1, 1]} : vector<8x512xf32> to vector<8x128xf32>
    %133 = arith.negf %132 : vector<8x128xf32>
    %134 = math.exp %133 : vector<8x128xf32>
    %cst_68 = arith.constant 1.000000e+00 : f32
    %135 = vector.broadcast %cst_68 : f32 to vector<8x128xf32>
    %136 = arith.addf %135, %134 : vector<8x128xf32>
    %137 = arith.divf %135, %136 : vector<8x128xf32>
    %138 = arith.mulf %129, %112 : vector<8x128xf32>
    %139 = arith.mulf %123, %131 : vector<8x128xf32>
    %140 = arith.addf %138, %139 : vector<8x128xf32>
    %141 = math.tanh %140 : vector<8x128xf32>
    %142 = arith.mulf %137, %141 : vector<8x128xf32>
    %c0_69 = arith.constant 0 : index
    %c0_70 = arith.constant 0 : index
    %143 = vector.load %arg5[%c0_69, %c0_70] : memref<8x128xf32, #tpu.memory_space<vmem>>, vector<8x128xf32>
    tpu.vector_store %arg5[%c0_69, %c0_70], %140 {strides = array<i32>} : memref<8x128xf32, #tpu.memory_space<vmem>>, vector<8x128xf32>,
    %c0_71 = arith.constant 0 : index
    %c0_72 = arith.constant 0 : index
    %144 = vector.load %arg4[%c0_71, %c0_72] : memref<8x128xf32, #tpu.memory_space<vmem>>, vector<8x128xf32>
    tpu.vector_store %arg4[%c0_71, %c0_72], %142 {strides = array<i32>} : memref<8x128xf32, #tpu.memory_space<vmem>>, vector<8x128xf32>,
    %145 = vector.shape_cast %142 : vector<8x128xf32> to vector<8x1x128xf32>
    %c0_73 = arith.constant 0 : index
    %c3_74 = arith.constant 3 : index
    %c0_75 = arith.constant 0 : index
    %146 = vector.load %arg3[%c0_73, %c3_74, %c0_75] : memref<8x8x128xf32, #tpu.memory_space<vmem>>, vector<8x1x128xf32>
    tpu.vector_store %arg3[%c0_73, %c3_74, %c0_75], %145 {strides = array<i32>} : memref<8x8x128xf32, #tpu.memory_space<vmem>>, vector<8x1x128xf32>,
    %c0_76 = arith.constant 0 : index
    %c0_77 = arith.constant 0 : index
    %147 = vector.load %arg4[%c0_76, %c0_77] : memref<8x128xf32, #tpu.memory_space<vmem>>, vector<8x128xf32>
    %c0_78 = arith.constant 0 : index
    %c0_79 = arith.constant 0 : index
    %148 = vector.load %arg5[%c0_78, %c0_79] : memref<8x128xf32, #tpu.memory_space<vmem>>, vector<8x128xf32>
    %c0_80 = arith.constant 0 : index
    %c4 = arith.constant 4 : index
    %c0_81 = arith.constant 0 : index
    %149 = vector.load %arg1[%c0_80, %c4, %c0_81] : memref<8x8x512xf32, #tpu.memory_space<vmem>>, vector<8x1x512xf32>
    %150 = vector.shape_cast %149 : vector<8x1x512xf32> to vector<8x512xf32>
    %c0_82 = arith.constant 0 : index
    %c0_83 = arith.constant 0 : index
    %151 = vector.load %arg2[%c0_82, %c0_83] : memref<128x512xf32, #tpu.memory_space<vmem>>, vector<128x512xf32>
    %cst_84 = arith.constant dense<0.000000e+00> : vector<8x512xf32>
    %152 = tpu.matmul %147, %151, %cst_84 {dimension_numbers = #tpu.dot_dimension_numbers<[1], [0], [0], [1], [0, 0, 1, 1], [], []>} : vector<8x128xf32>, vector<128x512xf32>, vector<8x512xf32> -> vector<8x512xf32>
    %153 = arith.addf %150, %152 : vector<8x512xf32>
    %154 = vector.extract_strided_slice %153 {offsets = [0, 0], sizes = [8, 128], strides = [1, 1]} : vector<8x512xf32> to vector<8x128xf32>
    %155 = arith.negf %154 : vector<8x128xf32>
    %156 = math.exp %155 : vector<8x128xf32>
    %cst_85 = arith.constant 1.000000e+00 : f32
    %157 = vector.broadcast %cst_85 : f32 to vector<8x128xf32>
    %158 = arith.addf %157, %156 : vector<8x128xf32>
    %159 = arith.divf %157, %158 : vector<8x128xf32>
    %160 = vector.extract_strided_slice %153 {offsets = [0, 128], sizes = [8, 128], strides = [1, 1]} : vector<8x512xf32> to vector<8x128xf32>
    %161 = arith.negf %160 : vector<8x128xf32>
    %162 = math.exp %161 : vector<8x128xf32>
    %cst_86 = arith.constant 1.000000e+00 : f32
    %163 = vector.broadcast %cst_86 : f32 to vector<8x128xf32>
    %164 = arith.addf %163, %162 : vector<8x128xf32>
    %165 = arith.divf %163, %164 : vector<8x128xf32>
    %166 = vector.extract_strided_slice %153 {offsets = [0, 256], sizes = [8, 128], strides = [1, 1]} : vector<8x512xf32> to vector<8x128xf32>
    %167 = math.tanh %166 : vector<8x128xf32>
    %168 = vector.extract_strided_slice %153 {offsets = [0, 384], sizes = [8, 128], strides = [1, 1]} : vector<8x512xf32> to vector<8x128xf32>
    %169 = arith.negf %168 : vector<8x128xf32>
    %170 = math.exp %169 : vector<8x128xf32>
    %cst_87 = arith.constant 1.000000e+00 : f32
    %171 = vector.broadcast %cst_87 : f32 to vector<8x128xf32>
    %172 = arith.addf %171, %170 : vector<8x128xf32>
    %173 = arith.divf %171, %172 : vector<8x128xf32>
    %174 = arith.mulf %165, %148 : vector<8x128xf32>
    %175 = arith.mulf %159, %167 : vector<8x128xf32>
    %176 = arith.addf %174, %175 : vector<8x128xf32>
    %177 = math.tanh %176 : vector<8x128xf32>
    %178 = arith.mulf %173, %177 : vector<8x128xf32>
    %c0_88 = arith.constant 0 : index
    %c0_89 = arith.constant 0 : index
    %179 = vector.load %arg5[%c0_88, %c0_89] : memref<8x128xf32, #tpu.memory_space<vmem>>, vector<8x128xf32>
    tpu.vector_store %arg5[%c0_88, %c0_89], %176 {strides = array<i32>} : memref<8x128xf32, #tpu.memory_space<vmem>>, vector<8x128xf32>,
    %c0_90 = arith.constant 0 : index
    %c0_91 = arith.constant 0 : index
    %180 = vector.load %arg4[%c0_90, %c0_91] : memref<8x128xf32, #tpu.memory_space<vmem>>, vector<8x128xf32>
    tpu.vector_store %arg4[%c0_90, %c0_91], %178 {strides = array<i32>} : memref<8x128xf32, #tpu.memory_space<vmem>>, vector<8x128xf32>,
    %181 = vector.shape_cast %178 : vector<8x128xf32> to vector<8x1x128xf32>
    %c0_92 = arith.constant 0 : index
    %c4_93 = arith.constant 4 : index
    %c0_94 = arith.constant 0 : index
    %182 = vector.load %arg3[%c0_92, %c4_93, %c0_94] : memref<8x8x128xf32, #tpu.memory_space<vmem>>, vector<8x1x128xf32>
    tpu.vector_store %arg3[%c0_92, %c4_93, %c0_94], %181 {strides = array<i32>} : memref<8x8x128xf32, #tpu.memory_space<vmem>>, vector<8x1x128xf32>,
    %c0_95 = arith.constant 0 : index
    %c0_96 = arith.constant 0 : index
    %183 = vector.load %arg4[%c0_95, %c0_96] : memref<8x128xf32, #tpu.memory_space<vmem>>, vector<8x128xf32>
    %c0_97 = arith.constant 0 : index
    %c0_98 = arith.constant 0 : index
    %184 = vector.load %arg5[%c0_97, %c0_98] : memref<8x128xf32, #tpu.memory_space<vmem>>, vector<8x128xf32>
    %c0_99 = arith.constant 0 : index
    %c5 = arith.constant 5 : index
    %c0_100 = arith.constant 0 : index
    %185 = vector.load %arg1[%c0_99, %c5, %c0_100] : memref<8x8x512xf32, #tpu.memory_space<vmem>>, vector<8x1x512xf32>
    %186 = vector.shape_cast %185 : vector<8x1x512xf32> to vector<8x512xf32>
    %c0_101 = arith.constant 0 : index
    %c0_102 = arith.constant 0 : index
    %187 = vector.load %arg2[%c0_101, %c0_102] : memref<128x512xf32, #tpu.memory_space<vmem>>, vector<128x512xf32>
    %cst_103 = arith.constant dense<0.000000e+00> : vector<8x512xf32>
    %188 = tpu.matmul %183, %187, %cst_103 {dimension_numbers = #tpu.dot_dimension_numbers<[1], [0], [0], [1], [0, 0, 1, 1], [], []>} : vector<8x128xf32>, vector<128x512xf32>, vector<8x512xf32> -> vector<8x512xf32>
    %189 = arith.addf %186, %188 : vector<8x512xf32>
    %190 = vector.extract_strided_slice %189 {offsets = [0, 0], sizes = [8, 128], strides = [1, 1]} : vector<8x512xf32> to vector<8x128xf32>
    %191 = arith.negf %190 : vector<8x128xf32>
    %192 = math.exp %191 : vector<8x128xf32>
    %cst_104 = arith.constant 1.000000e+00 : f32
    %193 = vector.broadcast %cst_104 : f32 to vector<8x128xf32>
    %194 = arith.addf %193, %192 : vector<8x128xf32>
    %195 = arith.divf %193, %194 : vector<8x128xf32>
    %196 = vector.extract_strided_slice %189 {offsets = [0, 128], sizes = [8, 128], strides = [1, 1]} : vector<8x512xf32> to vector<8x128xf32>
    %197 = arith.negf %196 : vector<8x128xf32>
    %198 = math.exp %197 : vector<8x128xf32>
    %cst_105 = arith.constant 1.000000e+00 : f32
    %199 = vector.broadcast %cst_105 : f32 to vector<8x128xf32>
    %200 = arith.addf %199, %198 : vector<8x128xf32>
    %201 = arith.divf %199, %200 : vector<8x128xf32>
    %202 = vector.extract_strided_slice %189 {offsets = [0, 256], sizes = [8, 128], strides = [1, 1]} : vector<8x512xf32> to vector<8x128xf32>
    %203 = math.tanh %202 : vector<8x128xf32>
    %204 = vector.extract_strided_slice %189 {offsets = [0, 384], sizes = [8, 128], strides = [1, 1]} : vector<8x512xf32> to vector<8x128xf32>
    %205 = arith.negf %204 : vector<8x128xf32>
    %206 = math.exp %205 : vector<8x128xf32>
    %cst_106 = arith.constant 1.000000e+00 : f32
    %207 = vector.broadcast %cst_106 : f32 to vector<8x128xf32>
    %208 = arith.addf %207, %206 : vector<8x128xf32>
    %209 = arith.divf %207, %208 : vector<8x128xf32>
    %210 = arith.mulf %201, %184 : vector<8x128xf32>
    %211 = arith.mulf %195, %203 : vector<8x128xf32>
    %212 = arith.addf %210, %211 : vector<8x128xf32>
    %213 = math.tanh %212 : vector<8x128xf32>
    %214 = arith.mulf %209, %213 : vector<8x128xf32>
    %c0_107 = arith.constant 0 : index
    %c0_108 = arith.constant 0 : index
    %215 = vector.load %arg5[%c0_107, %c0_108] : memref<8x128xf32, #tpu.memory_space<vmem>>, vector<8x128xf32>
    tpu.vector_store %arg5[%c0_107, %c0_108], %212 {strides = array<i32>} : memref<8x128xf32, #tpu.memory_space<vmem>>, vector<8x128xf32>,
    %c0_109 = arith.constant 0 : index
    %c0_110 = arith.constant 0 : index
    %216 = vector.load %arg4[%c0_109, %c0_110] : memref<8x128xf32, #tpu.memory_space<vmem>>, vector<8x128xf32>
    tpu.vector_store %arg4[%c0_109, %c0_110], %214 {strides = array<i32>} : memref<8x128xf32, #tpu.memory_space<vmem>>, vector<8x128xf32>,
    %217 = vector.shape_cast %214 : vector<8x128xf32> to vector<8x1x128xf32>
    %c0_111 = arith.constant 0 : index
    %c5_112 = arith.constant 5 : index
    %c0_113 = arith.constant 0 : index
    %218 = vector.load %arg3[%c0_111, %c5_112, %c0_113] : memref<8x8x128xf32, #tpu.memory_space<vmem>>, vector<8x1x128xf32>
    tpu.vector_store %arg3[%c0_111, %c5_112, %c0_113], %217 {strides = array<i32>} : memref<8x8x128xf32, #tpu.memory_space<vmem>>, vector<8x1x128xf32>,
    %c0_114 = arith.constant 0 : index
    %c0_115 = arith.constant 0 : index
    %219 = vector.load %arg4[%c0_114, %c0_115] : memref<8x128xf32, #tpu.memory_space<vmem>>, vector<8x128xf32>
    %c0_116 = arith.constant 0 : index
    %c0_117 = arith.constant 0 : index
    %220 = vector.load %arg5[%c0_116, %c0_117] : memref<8x128xf32, #tpu.memory_space<vmem>>, vector<8x128xf32>
    %c0_118 = arith.constant 0 : index
    %c6 = arith.constant 6 : index
    %c0_119 = arith.constant 0 : index
    %221 = vector.load %arg1[%c0_118, %c6, %c0_119] : memref<8x8x512xf32, #tpu.memory_space<vmem>>, vector<8x1x512xf32>
    %222 = vector.shape_cast %221 : vector<8x1x512xf32> to vector<8x512xf32>
    %c0_120 = arith.constant 0 : index
    %c0_121 = arith.constant 0 : index
    %223 = vector.load %arg2[%c0_120, %c0_121] : memref<128x512xf32, #tpu.memory_space<vmem>>, vector<128x512xf32>
    %cst_122 = arith.constant dense<0.000000e+00> : vector<8x512xf32>
    %224 = tpu.matmul %219, %223, %cst_122 {dimension_numbers = #tpu.dot_dimension_numbers<[1], [0], [0], [1], [0, 0, 1, 1], [], []>} : vector<8x128xf32>, vector<128x512xf32>, vector<8x512xf32> -> vector<8x512xf32>
    %225 = arith.addf %222, %224 : vector<8x512xf32>
    %226 = vector.extract_strided_slice %225 {offsets = [0, 0], sizes = [8, 128], strides = [1, 1]} : vector<8x512xf32> to vector<8x128xf32>
    %227 = arith.negf %226 : vector<8x128xf32>
    %228 = math.exp %227 : vector<8x128xf32>
    %cst_123 = arith.constant 1.000000e+00 : f32
    %229 = vector.broadcast %cst_123 : f32 to vector<8x128xf32>
    %230 = arith.addf %229, %228 : vector<8x128xf32>
    %231 = arith.divf %229, %230 : vector<8x128xf32>
    %232 = vector.extract_strided_slice %225 {offsets = [0, 128], sizes = [8, 128], strides = [1, 1]} : vector<8x512xf32> to vector<8x128xf32>
    %233 = arith.negf %232 : vector<8x128xf32>
    %234 = math.exp %233 : vector<8x128xf32>
    %cst_124 = arith.constant 1.000000e+00 : f32
    %235 = vector.broadcast %cst_124 : f32 to vector<8x128xf32>
    %236 = arith.addf %235, %234 : vector<8x128xf32>
    %237 = arith.divf %235, %236 : vector<8x128xf32>
    %238 = vector.extract_strided_slice %225 {offsets = [0, 256], sizes = [8, 128], strides = [1, 1]} : vector<8x512xf32> to vector<8x128xf32>
    %239 = math.tanh %238 : vector<8x128xf32>
    %240 = vector.extract_strided_slice %225 {offsets = [0, 384], sizes = [8, 128], strides = [1, 1]} : vector<8x512xf32> to vector<8x128xf32>
    %241 = arith.negf %240 : vector<8x128xf32>
    %242 = math.exp %241 : vector<8x128xf32>
    %cst_125 = arith.constant 1.000000e+00 : f32
    %243 = vector.broadcast %cst_125 : f32 to vector<8x128xf32>
    %244 = arith.addf %243, %242 : vector<8x128xf32>
    %245 = arith.divf %243, %244 : vector<8x128xf32>
    %246 = arith.mulf %237, %220 : vector<8x128xf32>
    %247 = arith.mulf %231, %239 : vector<8x128xf32>
    %248 = arith.addf %246, %247 : vector<8x128xf32>
    %249 = math.tanh %248 : vector<8x128xf32>
    %250 = arith.mulf %245, %249 : vector<8x128xf32>
    %c0_126 = arith.constant 0 : index
    %c0_127 = arith.constant 0 : index
    %251 = vector.load %arg5[%c0_126, %c0_127] : memref<8x128xf32, #tpu.memory_space<vmem>>, vector<8x128xf32>
    tpu.vector_store %arg5[%c0_126, %c0_127], %248 {strides = array<i32>} : memref<8x128xf32, #tpu.memory_space<vmem>>, vector<8x128xf32>,
    %c0_128 = arith.constant 0 : index
    %c0_129 = arith.constant 0 : index
    %252 = vector.load %arg4[%c0_128, %c0_129] : memref<8x128xf32, #tpu.memory_space<vmem>>, vector<8x128xf32>
    tpu.vector_store %arg4[%c0_128, %c0_129], %250 {strides = array<i32>} : memref<8x128xf32, #tpu.memory_space<vmem>>, vector<8x128xf32>,
    %253 = vector.shape_cast %250 : vector<8x128xf32> to vector<8x1x128xf32>
    %c0_130 = arith.constant 0 : index
    %c6_131 = arith.constant 6 : index
    %c0_132 = arith.constant 0 : index
    %254 = vector.load %arg3[%c0_130, %c6_131, %c0_132] : memref<8x8x128xf32, #tpu.memory_space<vmem>>, vector<8x1x128xf32>
    tpu.vector_store %arg3[%c0_130, %c6_131, %c0_132], %253 {strides = array<i32>} : memref<8x8x128xf32, #tpu.memory_space<vmem>>, vector<8x1x128xf32>,
    %c0_133 = arith.constant 0 : index
    %c0_134 = arith.constant 0 : index
    %255 = vector.load %arg4[%c0_133, %c0_134] : memref<8x128xf32, #tpu.memory_space<vmem>>, vector<8x128xf32>
    %c0_135 = arith.constant 0 : index
    %c0_136 = arith.constant 0 : index
    %256 = vector.load %arg5[%c0_135, %c0_136] : memref<8x128xf32, #tpu.memory_space<vmem>>, vector<8x128xf32>
    %c0_137 = arith.constant 0 : index
    %c7 = arith.constant 7 : index
    %c0_138 = arith.constant 0 : index
    %257 = vector.load %arg1[%c0_137, %c7, %c0_138] : memref<8x8x512xf32, #tpu.memory_space<vmem>>, vector<8x1x512xf32>
    %258 = vector.shape_cast %257 : vector<8x1x512xf32> to vector<8x512xf32>
    %c0_139 = arith.constant 0 : index
    %c0_140 = arith.constant 0 : index
    %259 = vector.load %arg2[%c0_139, %c0_140] : memref<128x512xf32, #tpu.memory_space<vmem>>, vector<128x512xf32>
    %cst_141 = arith.constant dense<0.000000e+00> : vector<8x512xf32>
    %260 = tpu.matmul %255, %259, %cst_141 {dimension_numbers = #tpu.dot_dimension_numbers<[1], [0], [0], [1], [0, 0, 1, 1], [], []>} : vector<8x128xf32>, vector<128x512xf32>, vector<8x512xf32> -> vector<8x512xf32>
    %261 = arith.addf %258, %260 : vector<8x512xf32>
    %262 = vector.extract_strided_slice %261 {offsets = [0, 0], sizes = [8, 128], strides = [1, 1]} : vector<8x512xf32> to vector<8x128xf32>
    %263 = arith.negf %262 : vector<8x128xf32>
    %264 = math.exp %263 : vector<8x128xf32>
    %cst_142 = arith.constant 1.000000e+00 : f32
    %265 = vector.broadcast %cst_142 : f32 to vector<8x128xf32>
    %266 = arith.addf %265, %264 : vector<8x128xf32>
    %267 = arith.divf %265, %266 : vector<8x128xf32>
    %268 = vector.extract_strided_slice %261 {offsets = [0, 128], sizes = [8, 128], strides = [1, 1]} : vector<8x512xf32> to vector<8x128xf32>
    %269 = arith.negf %268 : vector<8x128xf32>
    %270 = math.exp %269 : vector<8x128xf32>
    %cst_143 = arith.constant 1.000000e+00 : f32
    %271 = vector.broadcast %cst_143 : f32 to vector<8x128xf32>
    %272 = arith.addf %271, %270 : vector<8x128xf32>
    %273 = arith.divf %271, %272 : vector<8x128xf32>
    %274 = vector.extract_strided_slice %261 {offsets = [0, 256], sizes = [8, 128], strides = [1, 1]} : vector<8x512xf32> to vector<8x128xf32>
    %275 = math.tanh %274 : vector<8x128xf32>
    %276 = vector.extract_strided_slice %261 {offsets = [0, 384], sizes = [8, 128], strides = [1, 1]} : vector<8x512xf32> to vector<8x128xf32>
    %277 = arith.negf %276 : vector<8x128xf32>
    %278 = math.exp %277 : vector<8x128xf32>
    %cst_144 = arith.constant 1.000000e+00 : f32
    %279 = vector.broadcast %cst_144 : f32 to vector<8x128xf32>
    %280 = arith.addf %279, %278 : vector<8x128xf32>
    %281 = arith.divf %279, %280 : vector<8x128xf32>
    %282 = arith.mulf %273, %256 : vector<8x128xf32>
    %283 = arith.mulf %267, %275 : vector<8x128xf32>
    %284 = arith.addf %282, %283 : vector<8x128xf32>
    %285 = math.tanh %284 : vector<8x128xf32>
    %286 = arith.mulf %281, %285 : vector<8x128xf32>
    %c0_145 = arith.constant 0 : index
    %c0_146 = arith.constant 0 : index
    %287 = vector.load %arg5[%c0_145, %c0_146] : memref<8x128xf32, #tpu.memory_space<vmem>>, vector<8x128xf32>
    tpu.vector_store %arg5[%c0_145, %c0_146], %284 {strides = array<i32>} : memref<8x128xf32, #tpu.memory_space<vmem>>, vector<8x128xf32>,
    %c0_147 = arith.constant 0 : index
    %c0_148 = arith.constant 0 : index
    %288 = vector.load %arg4[%c0_147, %c0_148] : memref<8x128xf32, #tpu.memory_space<vmem>>, vector<8x128xf32>
    tpu.vector_store %arg4[%c0_147, %c0_148], %286 {strides = array<i32>} : memref<8x128xf32, #tpu.memory_space<vmem>>, vector<8x128xf32>,
    %289 = vector.shape_cast %286 : vector<8x128xf32> to vector<8x1x128xf32>
    %c0_149 = arith.constant 0 : index
    %c7_150 = arith.constant 7 : index
    %c0_151 = arith.constant 0 : index
    %290 = vector.load %arg3[%c0_149, %c7_150, %c0_151] : memref<8x8x128xf32, #tpu.memory_space<vmem>>, vector<8x1x128xf32>
    tpu.vector_store %arg3[%c0_149, %c7_150, %c0_151], %289 {strides = array<i32>} : memref<8x8x128xf32, #tpu.memory_space<vmem>>, vector<8x1x128xf32>,
    return
  }
  func.func @transform_0(%arg0: i32) -> (i32, i32, i32) {
    %c0_i32 = arith.constant 0 : i32
    %c0_i32_0 = arith.constant 0 : i32
    %c0_i32_1 = arith.constant 0 : i32
    return %c0_i32, %arg0, %c0_i32_0 : i32, i32, i32
  }
  func.func @transform_1(%arg0: i32) -> (i32, i32) {
    %c0_i32 = arith.constant 0 : i32
    %c0_i32_0 = arith.constant 0 : i32
    %c0_i32_1 = arith.constant 0 : i32
    return %c0_i32, %c0_i32_0 : i32, i32
  }
  func.func @transform_2(%arg0: i32) -> (i32, i32, i32) {
    %c0_i32 = arith.constant 0 : i32
    %c0_i32_0 = arith.constant 0 : i32
    %c0_i32_1 = arith.constant 0 : i32
    return %c0_i32, %arg0, %c0_i32_0 : i32, i32, i32
  }
}

</mosaic_0001>

<llo_original>
// kernel: decoder_forward.5
$region0: #{decoder_forward.5}
  #allocation0 [shape = 'u32[]', space=smem, size = 0x4, offset = 0x4, fixed_abs, tag = 'smem constant byte address 0x4 - core index']
  #allocation1 [shape = 'u32[144,128]{1,0:T(1,128)}', space=vmem, size = 0x12000, scoped, tag = 'internal scratch']
  %s0 = inlined_call_operand.vmem [shape: f32[64,128], index: 0, kind: input, shape index: {}]
  %s1 = inlined_call_operand.vmem [shape: f32[128,128], index: 1, kind: input, shape index: {}]
  %s2 = inlined_call_operand.vmem [shape: f32[1,128], index: 2, kind: input, shape index: {}]
  %s3 = inlined_call_operand.vmem [shape: f32[64,128], index: 3, kind: output, shape index: {}]
  %s4 = sld [smem:[#allocation0]]
  $region22: #{decoder_forward.5} parent=0
    _
  %s6 = ssub.s32 1, %s4
  %s7 = scalar_select 0, %s6, %s4
  // Predicated region
  $region2: #{decoder_forward.5} parent=0 // pred_check
    _
  $region3: #{decoder_forward.5} parent=0 // pred_check_branch
    %9 = sbr.rel (0) target = $region5
  $region4: #{decoder_forward.5} parent=0 // pred_region
    _
  $region5: #{decoder_forward.5} parent=0 // pred_fallthru
    _
  // Predicated region
  $region6: #{decoder_forward.5} parent=0 // pred_check
    _
  $region7: #{decoder_forward.5} parent=0 // pred_check_branch
    %11 = sbr.rel (0) target = $region9
  $region8: #{decoder_forward.5} parent=0 // pred_region
    _
  $region9: #{decoder_forward.5} parent=0 // pred_fallthru
    _
  // Predicated region
  $region10: #{decoder_forward.5} parent=0 // pred_check
    _
  $region11: #{decoder_forward.5} parent=0 // pred_check_branch
    %13 = sbr.rel (0) target = $region13
  $region12: #{decoder_forward.5} parent=0 // pred_region
    _
  $region13: #{decoder_forward.5} parent=0 // pred_fallthru
    _
  %v14 = vld [vmem:[%s0] sm:$0xff]
  %v15 = vld [vmem:[%s0 + $0x8] sm:$0xff]
  %v16 = vld [vmem:[%s0 + $0x10] sm:$0xff]
  %v17 = vld [vmem:[%s0 + $0x18] sm:$0xff]
  %v18 = vld [vmem:[%s0 + $0x20] sm:$0xff]
  %v19 = vld [vmem:[%s0 + $0x28] sm:$0xff]
  %v20 = vld [vmem:[%s0 + $0x30] sm:$0xff]
  %v21 = vld [vmem:[%s0 + $0x38] sm:$0xff]
  %v22 = vld [vmem:[%s1] sm:$0xff]
  %v23 = vld [vmem:[%s1 + $0x8] sm:$0xff]
  %v24 = vld [vmem:[%s1 + $0x10] sm:$0xff]
  %v25 = vld [vmem:[%s1 + $0x18] sm:$0xff]
  %v26 = vld [vmem:[%s1 + $0x20] sm:$0xff]
  %v27 = vld [vmem:[%s1 + $0x28] sm:$0xff]
  %v28 = vld [vmem:[%s1 + $0x30] sm:$0xff]
  %v29 = vld [vmem:[%s1 + $0x38] sm:$0xff]
  %v30 = vld [vmem:[%s1 + $0x40] sm:$0xff]
  %v31 = vld [vmem:[%s1 + $0x48] sm:$0xff]
  %v32 = vld [vmem:[%s1 + $0x50] sm:$0xff]
  %v33 = vld [vmem:[%s1 + $0x58] sm:$0xff]
  %v34 = vld [vmem:[%s1 + $0x60] sm:$0xff]
  %v35 = vld [vmem:[%s1 + $0x68] sm:$0xff]
  %v36 = vld [vmem:[%s1 + $0x70] sm:$0xff]
  %v37 = vld [vmem:[%s1 + $0x78] sm:$0xff]
  %v38 = vld [vmem:[%s2] sm:$0x1]
  %v40 = vlaneseq
  %v41 = vshrl.u32 %v40, 7
  %v42 = vsub.s32 0, %v41
  %v43 = vrot.slane %v38, %v42
  %45 = vmatprep.subr.mxu0 0.0
  %46 = vmatpush1.msra.mxu0 %v22
  %47 = vmatprep.subr.mxu0 0.0
  %48 = vmatpush1.msra.mxu0 %v23
  %49 = vmatprep.subr.mxu0 0.0
  %50 = vmatpush1.msra.mxu0 %v24
  %51 = vmatprep.subr.mxu0 0.0
  %52 = vmatpush1.msra.mxu0 %v25
  %53 = vmatprep.subr.mxu0 0.0
  %54 = vmatpush1.msra.mxu0 %v26
  %55 = vmatprep.subr.mxu0 0.0
  %56 = vmatpush1.msra.mxu0 %v27
  %57 = vmatprep.subr.mxu0 0.0
  %58 = vmatpush1.msra.mxu0 %v28
  %59 = vmatprep.subr.mxu0 0.0
  %60 = vmatpush1.msra.mxu0 %v29
  %61 = vmatprep.subr.mxu0 0.0
  %62 = vmatpush1.msra.mxu0 %v30
  %63 = vmatprep.subr.mxu0 0.0
  %64 = vmatpush1.msra.mxu0 %v31
  %65 = vmatprep.subr.mxu0 0.0
  %66 = vmatpush1.msra.mxu0 %v32
  %67 = vmatprep.subr.mxu0 0.0
  %68 = vmatpush1.msra.mxu0 %v33
  %69 = vmatprep.subr.mxu0 0.0
  %70 = vmatpush1.msra.mxu0 %v34
  %71 = vmatprep.subr.mxu0 0.0
  %72 = vmatpush1.msra.mxu0 %v35
  %73 = vmatprep.subr.mxu0 0.0
  %74 = vmatpush1.msra.mxu0 %v36
  %75 = vmatprep.subr.mxu0 0.0
  %76 = vmatpush1.msra.mxu0 %v37
  %77 = vmatprep.subr.mxu0 0.0
  %78 = vmatpush1.msra.mxu0 0.0
  %79 = vmatprep.subr.mxu0 0.0
  %80 = vmatpush1.msra.mxu0 0.0
  %81 = vmatprep.subr.mxu0 0.0
  %82 = vmatpush1.msra.mxu0 0.0
  %83 = vmatprep.subr.mxu0 0.0
  %84 = vmatpush1.msra.mxu0 0.0
  %85 = vmatprep.subr.mxu0 0.0
  %86 = vmatpush1.msra.mxu0 0.0
  %87 = vmatprep.subr.mxu0 0.0
  %88 = vmatpush1.msra.mxu0 0.0
  %89 = vmatprep.subr.mxu0 0.0
  %90 = vmatpush1.msra.mxu0 0.0
  %91 = vmatprep.subr.mxu0 0.0
  %92 = vmatpush1.msra.mxu0 0.0
  %93 = vmatprep.subr.mxu0 0.0
  %94 = vmatpush1.msra.mxu0 0.0
  %95 = vmatprep.subr.mxu0 0.0
  %96 = vmatpush1.msra.mxu0 0.0
  %97 = vmatprep.subr.mxu0 0.0
  %98 = vmatpush1.msra.mxu0 0.0
  %99 = vmatprep.subr.mxu0 0.0
  %100 = vmatpush1.msra.mxu0 0.0
  %101 = vmatprep.subr.mxu0 0.0
  %102 = vmatpush1.msra.mxu0 0.0
  %103 = vmatprep.subr.mxu0 0.0
  %104 = vmatpush1.msra.mxu0 0.0
  %105 = vmatprep.subr.mxu0 0.0
  %106 = vmatpush1.msra.mxu0 0.0
  %107 = vmatprep.subr.mxu0 0.0
  %108 = vmatpush1.msra.mxu0 0.0
  %109 = vmatprep.mubr.f32.mxu0 0.0
  %110 = vmatmul.mubr.f32.gmra.mrb[0].mxu0 %v14
  %v111 = vpop.f32.mrb[0].mxu0
  %v112 = vadd.f32 %v43, %v111
  %v113 = vpop.f32.mrb[0].mxu0
  %114 = vmatprep.mubr.f32.mxu0 0.0
  %115 = vmatmul.mubr.f32.gmra.mrb[0].mxu0 %v15
  %v116 = vpop.f32.mrb[0].mxu0
  %v117 = vadd.f32 %v43, %v116
  %v118 = vpop.f32.mrb[0].mxu0
  %119 = vmatprep.mubr.f32.mxu0 0.0
  %120 = vmatmul.mubr.f32.gmra.mrb[0].mxu0 %v16
  %v121 = vpop.f32.mrb[0].mxu0
  %v122 = vadd.f32 %v43, %v121
  %v123 = vpop.f32.mrb[0].mxu0
  %124 = vmatprep.mubr.f32.mxu0 0.0
  %125 = vmatmul.mubr.f32.gmra.mrb[0].mxu0 %v17
  %v126 = vpop.f32.mrb[0].mxu0
  %v127 = vadd.f32 %v43, %v126
  %v128 = vpop.f32.mrb[0].mxu0
  %129 = vmatprep.mubr.f32.mxu0 0.0
  %130 = vmatmul.mubr.f32.gmra.mrb[0].mxu0 %v18
  %v131 = vpop.f32.mrb[0].mxu0
  %v132 = vadd.f32 %v43, %v131
  %v133 = vpop.f32.mrb[0].mxu0
  %134 = vmatprep.mubr.f32.mxu0 0.0
  %135 = vmatmul.mubr.f32.gmra.mrb[0].mxu0 %v19
  %v136 = vpop.f32.mrb[0].mxu0
  %v137 = vadd.f32 %v43, %v136
  %v138 = vpop.f32.mrb[0].mxu0
  %139 = vmatprep.mubr.f32.mxu0 0.0
  %140 = vmatmul.mubr.f32.gmra.mrb[0].mxu0 %v20
  %v141 = vpop.f32.mrb[0].mxu0
  %v142 = vadd.f32 %v43, %v141
  %v143 = vpop.f32.mrb[0].mxu0
  %144 = vmatprep.mubr.f32.mxu0 0.0
  %145 = vmatmul.mubr.f32.gmra.mrb[0].mxu0 %v21
  %v146 = vpop.f32.mrb[0].mxu0
  %v147 = vadd.f32 %v43, %v146
  %v148 = vpop.f32.mrb[0].mxu0
  %149 = vdwg.mxu0
  %150 = vst [vmem:[%s3] sm:$0xff] %v112
  %151 = vst [vmem:[%s3 + $0x8] sm:$0xff] %v117
  %152 = vst [vmem:[%s3 + $0x10] sm:$0xff] %v122
  %153 = vst [vmem:[%s3 + $0x18] sm:$0xff] %v127
  %154 = vst [vmem:[%s3 + $0x20] sm:$0xff] %v132
  %155 = vst [vmem:[%s3 + $0x28] sm:$0xff] %v137
  %156 = vst [vmem:[%s3 + $0x30] sm:$0xff] %v142
  %157 = vst [vmem:[%s3 + $0x38] sm:$0xff] %v147
  // Predicated region
  $region14: #{decoder_forward.5} parent=0 // pred_check
    _
  $region15: #{decoder_forward.5} parent=0 // pred_check_branch
    %159 = sbr.rel (0) target = $region17
  $region16: #{decoder_forward.5} parent=0 // pred_region
    _
  $region17: #{decoder_forward.5} parent=0 // pred_fallthru
    _
  // Predicated region
  $region18: #{decoder_forward.5} parent=0 // pred_check
    _
  $region19: #{decoder_forward.5} parent=0 // pred_check_branch
    %161 = sbr.rel (0) target = $region21
  $region20: #{decoder_forward.5} parent=0 // pred_region
    _
  $region21: #{decoder_forward.5} parent=0 // pred_fallthru
    _

// kernel: decoder_forward.3
$region0: #{decoder_forward.3}
  #allocation0 [shape = 'u32[]', space=smem, size = 0x4, offset = 0x4, fixed_abs, tag = 'smem constant byte address 0x4 - core index']
  #allocation1 [shape = 'u32[144,128]{1,0:T(1,128)}', space=vmem, size = 0x12000, scoped, tag = 'internal scratch']
  %s0 = inlined_call_operand.vmem [shape: f32[64,128], index: 0, kind: input, shape index: {}]
  %s1 = inlined_call_operand.hbm [shape: f32[128,512], index: 1, kind: input, shape index: {}]
  %s2 = inlined_call_operand.vmem [shape: f32[1,512], index: 2, kind: input, shape index: {}]
  %s3 = inlined_call_operand.vmem [shape: f32[64,512], index: 3, kind: output, shape index: {}]
  %s4 = sld [smem:[#allocation0]]
  $region26: #{decoder_forward.3} parent=0
    _
  %s6 = ssub.s32 1, %s4
  %s7 = scalar_select 0, %s6, %s4
  $region1: #{decoder_forward.3} parent=0
    #allocation2 [shape = 'u8[262144]{0}', space=vmem, size = 0x40000, scoped, tag = 'input window, operand 1, single buffered']
    #allocation3 [shape = 's32[1]{0}', space=sflag, size = 0x4, scoped, tag = 'scoped memory for decoder_forward.3']
    %8 = vsyncpa [#allocation3], 0
    // Predicated region
    $region2: #{decoder_forward.3} parent=1 // pred_check
      _
    $region3: #{decoder_forward.3} parent=1 // pred_check_branch
      %10 = sbr.rel (0) target = $region5
    $region4: #{decoder_forward.3} parent=1 // pred_region
      _
    $region5: #{decoder_forward.3} parent=1 // pred_fallthru
      _
    // Predicated region
    $region6: #{decoder_forward.3} parent=1 // pred_check
      _
    $region7: #{decoder_forward.3} parent=1 // pred_check_branch
      %12 = sbr.rel (0) target = $region9
    $region8: #{decoder_forward.3} parent=1 // pred_region
      %s14 = ssub.s32 8192, 8192
      %15 = vsyncadd [#allocation3], %s14
      %s16 = sshll.u32 [#allocation2], 4
      %s17 = int_to_ptr.vmem [resolvable:$true] %s16
      %22 = dma.hbm_to_vmem [thread:$0]  %s1, 8192, %s17, [#allocation3], 512, 512, 32
    $region9: #{decoder_forward.3} parent=1 // pred_fallthru
      _
    // Predicated region
    $region10: #{decoder_forward.3} parent=1 // pred_check
      _
    $region11: #{decoder_forward.3} parent=1 // pred_check_branch
      %24 = sbr.rel (0) target = $region13
    $region12: #{decoder_forward.3} parent=1 // pred_region
      _
    $region13: #{decoder_forward.3} parent=1 // pred_fallthru
      _
    // Predicated region
    $region14: #{decoder_forward.3} parent=1 // pred_check
      _
    $region15: #{decoder_forward.3} parent=1 // pred_check_branch
      %26 = sbr.rel (0) target = $region17
    $region16: #{decoder_forward.3} parent=1 // pred_region
      %27 = dma.done [#allocation3], 8192
    $region17: #{decoder_forward.3} parent=1 // pred_fallthru
      _
    %v28 = vld [vmem:[%s0] sm:$0xff]
    %v29 = vld [vmem:[%s0 + $0x8] sm:$0xff]
    %v30 = vld [vmem:[%s0 + $0x10] sm:$0xff]
    %v31 = vld [vmem:[%s0 + $0x18] sm:$0xff]
    %v32 = vld [vmem:[%s0 + $0x20] sm:$0xff]
    %v33 = vld [vmem:[%s0 + $0x28] sm:$0xff]
    %v34 = vld [vmem:[%s0 + $0x30] sm:$0xff]
    %v35 = vld [vmem:[%s0 + $0x38] sm:$0xff]
    %v36 = vld [vmem:[#allocation2] sm:$0xff]
    %v37 = vld [vmem:[#allocation2 + $0x8] sm:$0xff]
    %v38 = vld [vmem:[#allocation2 + $0x10] sm:$0xff]
    %v39 = vld [vmem:[#allocation2 + $0x18] sm:$0xff]
    %v40 = vld [vmem:[#allocation2 + $0x20] sm:$0xff]
    %v41 = vld [vmem:[#allocation2 + $0x28] sm:$0xff]
    %v42 = vld [vmem:[#allocation2 + $0x30] sm:$0xff]
    %v43 = vld [vmem:[#allocation2 + $0x38] sm:$0xff]
    %v44 = vld [vmem:[#allocation2 + $0x40] sm:$0xff]
    %v45 = vld [vmem:[#allocation2 + $0x48] sm:$0xff]
    %v46 = vld [vmem:[#allocation2 + $0x50] sm:$0xff]
    %v47 = vld [vmem:[#allocation2 + $0x58] sm:$0xff]
    %v48 = vld [vmem:[#allocation2 + $0x60] sm:$0xff]
    %v49 = vld [vmem:[#allocation2 + $0x68] sm:$0xff]
    %v50 = vld [vmem:[#allocation2 + $0x70] sm:$0xff]
    %v51 = vld [vmem:[#allocation2 + $0x78] sm:$0xff]
    %v52 = vld [vmem:[#allocation2 + $0x80] sm:$0xff]
    %v53 = vld [vmem:[#allocation2 + $0x88] sm:$0xff]
    %v54 = vld [vmem:[#allocation2 + $0x90] sm:$0xff]
    %v55 = vld [vmem:[#allocation2 + $0x98] sm:$0xff]
    %v56 = vld [vmem:[#allocation2 + $0xa0] sm:$0xff]
    %v57 = vld [vmem:[#allocation2 + $0xa8] sm:$0xff]
    %v58 = vld [vmem:[#allocation2 + $0xb0] sm:$0xff]
    %v59 = vld [vmem:[#allocation2 + $0xb8] sm:$0xff]
    %v60 = vld [vmem:[#allocation2 + $0xc0] sm:$0xff]
    %v61 = vld [vmem:[#allocation2 + $0xc8] sm:$0xff]
    %v62 = vld [vmem:[#allocation2 + $0xd0] sm:$0xff]
    %v63 = vld [vmem:[#allocation2 + $0xd8] sm:$0xff]
    %v64 = vld [vmem:[#allocation2 + $0xe0] sm:$0xff]
    %v65 = vld [vmem:[#allocation2 + $0xe8] sm:$0xff]
    %v66 = vld [vmem:[#allocation2 + $0xf0] sm:$0xff]
    %v67 = vld [vmem:[#allocation2 + $0xf8] sm:$0xff]
    %v68 = vld [vmem:[#allocation2 + $0x100] sm:$0xff]
    %v69 = vld [vmem:[#allocation2 + $0x108] sm:$0xff]
    %v70 = vld [vmem:[#allocation2 + $0x110] sm:$0xff]
    %v71 = vld [vmem:[#allocation2 + $0x118] sm:$0xff]
    %v72 = vld [vmem:[#allocation2 + $0x120] sm:$0xff]
    %v73 = vld [vmem:[#allocation2 + $0x128] sm:$0xff]
    %v74 = vld [vmem:[#allocation2 + $0x130] sm:$0xff]
    %v75 = vld [vmem:[#allocation2 + $0x138] sm:$0xff]
    %v76 = vld [vmem:[#allocation2 + $0x140] sm:$0xff]
    %v77 = vld [vmem:[#allocation2 + $0x148] sm:$0xff]
    %v78 = vld [vmem:[#allocation2 + $0x150] sm:$0xff]
    %v79 = vld [vmem:[#allocation2 + $0x158] sm:$0xff]
    %v80 = vld [vmem:[#allocation2 + $0x160] sm:$0xff]
    %v81 = vld [vmem:[#allocation2 + $0x168] sm:$0xff]
    %v82 = vld [vmem:[#allocation2 + $0x170] sm:$0xff]
    %v83 = vld [vmem:[#allocation2 + $0x178] sm:$0xff]
    %v84 = vld [vmem:[#allocation2 + $0x180] sm:$0xff]
    %v85 = vld [vmem:[#allocation2 + $0x188] sm:$0xff]
    %v86 = vld [vmem:[#allocation2 + $0x190] sm:$0xff]
    %v87 = vld [vmem:[#allocation2 + $0x198] sm:$0xff]
    %v88 = vld [vmem:[#allocation2 + $0x1a0] sm:$0xff]
    %v89 = vld [vmem:[#allocation2 + $0x1a8] sm:$0xff]
    %v90 = vld [vmem:[#allocation2 + $0x1b0] sm:$0xff]
    %v91 = vld [vmem:[#allocation2 + $0x1b8] sm:$0xff]
    %v92 = vld [vmem:[#allocation2 + $0x1c0] sm:$0xff]
    %v93 = vld [vmem:[#allocation2 + $0x1c8] sm:$0xff]
    %v94 = vld [vmem:[#allocation2 + $0x1d0] sm:$0xff]
    %v95 = vld [vmem:[#allocation2 + $0x1d8] sm:$0xff]
    %v96 = vld [vmem:[#allocation2 + $0x1e0] sm:$0xff]
    %v97 = vld [vmem:[#allocation2 + $0x1e8] sm:$0xff]
    %v98 = vld [vmem:[#allocation2 + $0x1f0] sm:$0xff]
    %v99 = vld [vmem:[#allocation2 + $0x1f8] sm:$0xff]
    %v100 = vld [vmem:[%s2] sm:$0xf]
    %v102 = vlaneseq
    %v103 = vshrl.u32 %v102, 7
    %v104 = vsub.s32 0, %v103
    %v105 = vrot.slane %v100, %v104
    %v106 = vlaneseq
    %v107 = vshrl.u32 %v106, 7
    %v108 = vsub.s32 1, %v107
    %v109 = vrot.slane %v100, %v108
    %v110 = vlaneseq
    %v111 = vshrl.u32 %v110, 7
    %v112 = vsub.s32 2, %v111
    %v113 = vrot.slane %v100, %v112
    %v114 = vlaneseq
    %v115 = vshrl.u32 %v114, 7
    %v116 = vsub.s32 3, %v115
    %v117 = vrot.slane %v100, %v116
    %122 = vmatprep.subr.mxu0 %v37
    %123 = vmatpush1.msra.mxu0 %v36
    %124 = vmatprep.subr.mxu0 %v41
    %125 = vmatpush1.msra.mxu0 %v40
    %126 = vmatprep.subr.mxu0 %v45
    %127 = vmatpush1.msra.mxu0 %v44
    %128 = vmatprep.subr.mxu0 %v49
    %129 = vmatpush1.msra.mxu0 %v48
    %130 = vmatprep.subr.mxu0 %v53
    %131 = vmatpush1.msra.mxu0 %v52
    %132 = vmatprep.subr.mxu0 %v57
    %133 = vmatpush1.msra.mxu0 %v56
    %134 = vmatprep.subr.mxu0 %v61
    %135 = vmatpush1.msra.mxu0 %v60
    %136 = vmatprep.subr.mxu0 %v65
    %137 = vmatpush1.msra.mxu0 %v64
    %138 = vmatprep.subr.mxu0 %v69
    %139 = vmatpush1.msra.mxu0 %v68
    %140 = vmatprep.subr.mxu0 %v73
    %141 = vmatpush1.msra.mxu0 %v72
    %142 = vmatprep.subr.mxu0 %v77
    %143 = vmatpush1.msra.mxu0 %v76
    %144 = vmatprep.subr.mxu0 %v81
    %145 = vmatpush1.msra.mxu0 %v80
    %146 = vmatprep.subr.mxu0 %v85
    %147 = vmatpush1.msra.mxu0 %v84
    %148 = vmatprep.subr.mxu0 %v89
    %149 = vmatpush1.msra.mxu0 %v88
    %150 = vmatprep.subr.mxu0 %v93
    %151 = vmatpush1.msra.mxu0 %v92
    %152 = vmatprep.subr.mxu0 %v97
    %153 = vmatpush1.msra.mxu0 %v96
    %154 = vmatprep.subr.mxu0 0.0
    %155 = vmatpush1.msra.mxu0 0.0
    %156 = vmatprep.subr.mxu0 0.0
    %157 = vmatpush1.msra.mxu0 0.0
    %158 = vmatprep.subr.mxu0 0.0
    %159 = vmatpush1.msra.mxu0 0.0
    %160 = vmatprep.subr.mxu0 0.0
    %161 = vmatpush1.msra.mxu0 0.0
    %162 = vmatprep.subr.mxu0 0.0
    %163 = vmatpush1.msra.mxu0 0.0
    %164 = vmatprep.subr.mxu0 0.0
    %165 = vmatpush1.msra.mxu0 0.0
    %166 = vmatprep.subr.mxu0 0.0
    %167 = vmatpush1.msra.mxu0 0.0
    %168 = vmatprep.subr.mxu0 0.0
    %169 = vmatpush1.msra.mxu0 0.0
    %170 = vmatprep.subr.mxu0 0.0
    %171 = vmatpush1.msra.mxu0 0.0
    %172 = vmatprep.subr.mxu0 0.0
    %173 = vmatpush1.msra.mxu0 0.0
    %174 = vmatprep.subr.mxu0 0.0
    %175 = vmatpush1.msra.mxu0 0.0
    %176 = vmatprep.subr.mxu0 0.0
    %177 = vmatpush1.msra.mxu0 0.0
    %178 = vmatprep.subr.mxu0 0.0
    %179 = vmatpush1.msra.mxu0 0.0
    %180 = vmatprep.subr.mxu0 0.0
    %181 = vmatpush1.msra.mxu0 0.0
    %182 = vmatprep.subr.mxu0 0.0
    %183 = vmatpush1.msra.mxu0 0.0
    %184 = vmatprep.subr.mxu0 0.0
    %185 = vmatpush1.msra.mxu0 0.0
    %186 = vmatprep.mubr.f32.mxu0 0.0
    %187 = vmatmul.mubr.f32.gmra.mrb[0].mxu0 %v28
    %v188 = vpop.f32.mrb[0].mxu0
    %v189 = vadd.f32 %v105, %v188
    %v190 = vpop.f32.mrb[0].mxu0
    %v191 = vadd.f32 %v109, %v190
    %192 = vmatprep.mubr.f32.mxu0 0.0
    %193 = vmatmul.mubr.f32.gmra.mrb[0].mxu0 %v29
    %v194 = vpop.f32.mrb[0].mxu0
    %v195 = vadd.f32 %v105, %v194
    %v196 = vpop.f32.mrb[0].mxu0
    %v197 = vadd.f32 %v109, %v196
    %198 = vmatprep.mubr.f32.mxu0 0.0
    %199 = vmatmul.mubr.f32.gmra.mrb[0].mxu0 %v30
    %v200 = vpop.f32.mrb[0].mxu0
    %v201 = vadd.f32 %v105, %v200
    %v202 = vpop.f32.mrb[0].mxu0
    %v203 = vadd.f32 %v109, %v202
    %204 = vmatprep.mubr.f32.mxu0 0.0
    %205 = vmatmul.mubr.f32.gmra.mrb[0].mxu0 %v31
    %v206 = vpop.f32.mrb[0].mxu0
    %v207 = vadd.f32 %v105, %v206
    %v208 = vpop.f32.mrb[0].mxu0
    %v209 = vadd.f32 %v109, %v208
    %210 = vmatprep.mubr.f32.mxu0 0.0
    %211 = vmatmul.mubr.f32.gmra.mrb[0].mxu0 %v32
    %v212 = vpop.f32.mrb[0].mxu0
    %v213 = vadd.f32 %v105, %v212
    %v214 = vpop.f32.mrb[0].mxu0
    %v215 = vadd.f32 %v109, %v214
    %216 = vmatprep.mubr.f32.mxu0 0.0
    %217 = vmatmul.mubr.f32.gmra.mrb[0].mxu0 %v33
    %v218 = vpop.f32.mrb[0].mxu0
    %v219 = vadd.f32 %v105, %v218
    %v220 = vpop.f32.mrb[0].mxu0
    %v221 = vadd.f32 %v109, %v220
    %222 = vmatprep.mubr.f32.mxu0 0.0
    %223 = vmatmul.mubr.f32.gmra.mrb[0].mxu0 %v34
    %v224 = vpop.f32.mrb[0].mxu0
    %v225 = vadd.f32 %v105, %v224
    %v226 = vpop.f32.mrb[0].mxu0
    %v227 = vadd.f32 %v109, %v226
    %228 = vmatprep.mubr.f32.mxu0 0.0
    %229 = vmatmul.mubr.f32.gmra.mrb[0].mxu0 %v35
    %v230 = vpop.f32.mrb[0].mxu0
    %v231 = vadd.f32 %v105, %v230
    %v232 = vpop.f32.mrb[0].mxu0
    %v233 = vadd.f32 %v109, %v232
    %234 = vdwg.mxu0
    %235 = vmatprep.subr.mxu0 %v39
    %236 = vmatpush1.msra.mxu0 %v38
    %237 = vmatprep.subr.mxu0 %v43
    %238 = vmatpush1.msra.mxu0 %v42
    %239 = vmatprep.subr.mxu0 %v47
    %240 = vmatpush1.msra.mxu0 %v46
    %241 = vmatprep.subr.mxu0 %v51
    %242 = vmatpush1.msra.mxu0 %v50
    %243 = vmatprep.subr.mxu0 %v55
    %244 = vmatpush1.msra.mxu0 %v54
    %245 = vmatprep.subr.mxu0 %v59
    %246 = vmatpush1.msra.mxu0 %v58
    %247 = vmatprep.subr.mxu0 %v63
    %248 = vmatpush1.msra.mxu0 %v62
    %249 = vmatprep.subr.mxu0 %v67
    %250 = vmatpush1.msra.mxu0 %v66
    %251 = vmatprep.subr.mxu0 %v71
    %252 = vmatpush1.msra.mxu0 %v70
    %253 = vmatprep.subr.mxu0 %v75
    %254 = vmatpush1.msra.mxu0 %v74
    %255 = vmatprep.subr.mxu0 %v79
    %256 = vmatpush1.msra.mxu0 %v78
    %257 = vmatprep.subr.mxu0 %v83
    %258 = vmatpush1.msra.mxu0 %v82
    %259 = vmatprep.subr.mxu0 %v87
    %260 = vmatpush1.msra.mxu0 %v86
    %261 = vmatprep.subr.mxu0 %v91
    %262 = vmatpush1.msra.mxu0 %v90
    %263 = vmatprep.subr.mxu0 %v95
    %264 = vmatpush1.msra.mxu0 %v94
    %265 = vmatprep.subr.mxu0 %v99
    %266 = vmatpush1.msra.mxu0 %v98
    %267 = vmatprep.subr.mxu0 0.0
    %268 = vmatpush1.msra.mxu0 0.0
    %269 = vmatprep.subr.mxu0 0.0
    %270 = vmatpush1.msra.mxu0 0.0
    %271 = vmatprep.subr.mxu0 0.0
    %272 = vmatpush1.msra.mxu0 0.0
    %273 = vmatprep.subr.mxu0 0.0
    %274 = vmatpush1.msra.mxu0 0.0
    %275 = vmatprep.subr.mxu0 0.0
    %276 = vmatpush1.msra.mxu0 0.0
    %277 = vmatprep.subr.mxu0 0.0
    %278 = vmatpush1.msra.mxu0 0.0
    %279 = vmatprep.subr.mxu0 0.0
    %280 = vmatpush1.msra.mxu0 0.0
    %281 = vmatprep.subr.mxu0 0.0
    %282 = vmatpush1.msra.mxu0 0.0
    %283 = vmatprep.subr.mxu0 0.0
    %284 = vmatpush1.msra.mxu0 0.0
    %285 = vmatprep.subr.mxu0 0.0
    %286 = vmatpush1.msra.mxu0 0.0
    %287 = vmatprep.subr.mxu0 0.0
    %288 = vmatpush1.msra.mxu0 0.0
    %289 = vmatprep.subr.mxu0 0.0
    %290 = vmatpush1.msra.mxu0 0.0
    %291 = vmatprep.subr.mxu0 0.0
    %292 = vmatpush1.msra.mxu0 0.0
    %293 = vmatprep.subr.mxu0 0.0
    %294 = vmatpush1.msra.mxu0 0.0
    %295 = vmatprep.subr.mxu0 0.0
    %296 = vmatpush1.msra.mxu0 0.0
    %297 = vmatprep.subr.mxu0 0.0
    %298 = vmatpush1.msra.mxu0 0.0
    %299 = vmatprep.mubr.f32.mxu0 0.0
    %300 = vmatmul.mubr.f32.gmra.mrb[0].mxu0 %v28
    %v301 = vpop.f32.mrb[0].mxu0
    %v302 = vadd.f32 %v113, %v301
    %v303 = vpop.f32.mrb[0].mxu0
    %v304 = vadd.f32 %v117, %v303
    %305 = vmatprep.mubr.f32.mxu0 0.0
    %306 = vmatmul.mubr.f32.gmra.mrb[0].mxu0 %v29
    %v307 = vpop.f32.mrb[0].mxu0
    %v308 = vadd.f32 %v113, %v307
    %v309 = vpop.f32.mrb[0].mxu0
    %v310 = vadd.f32 %v117, %v309
    %311 = vmatprep.mubr.f32.mxu0 0.0
    %312 = vmatmul.mubr.f32.gmra.mrb[0].mxu0 %v30
    %v313 = vpop.f32.mrb[0].mxu0
    %v314 = vadd.f32 %v113, %v313
    %v315 = vpop.f32.mrb[0].mxu0
    %v316 = vadd.f32 %v117, %v315
    %317 = vmatprep.mubr.f32.mxu0 0.0
    %318 = vmatmul.mubr.f32.gmra.mrb[0].mxu0 %v31
    %v319 = vpop.f32.mrb[0].mxu0
    %v320 = vadd.f32 %v113, %v319
    %v321 = vpop.f32.mrb[0].mxu0
    %v322 = vadd.f32 %v117, %v321
    %323 = vmatprep.mubr.f32.mxu0 0.0
    %324 = vmatmul.mubr.f32.gmra.mrb[0].mxu0 %v32
    %v325 = vpop.f32.mrb[0].mxu0
    %v326 = vadd.f32 %v113, %v325
    %v327 = vpop.f32.mrb[0].mxu0
    %v328 = vadd.f32 %v117, %v327
    %329 = vmatprep.mubr.f32.mxu0 0.0
    %330 = vmatmul.mubr.f32.gmra.mrb[0].mxu0 %v33
    %v331 = vpop.f32.mrb[0].mxu0
    %v332 = vadd.f32 %v113, %v331
    %v333 = vpop.f32.mrb[0].mxu0
    %v334 = vadd.f32 %v117, %v333
    %335 = vmatprep.mubr.f32.mxu0 0.0
    %336 = vmatmul.mubr.f32.gmra.mrb[0].mxu0 %v34
    %v337 = vpop.f32.mrb[0].mxu0
    %v338 = vadd.f32 %v113, %v337
    %v339 = vpop.f32.mrb[0].mxu0
    %v340 = vadd.f32 %v117, %v339
    %341 = vmatprep.mubr.f32.mxu0 0.0
    %342 = vmatmul.mubr.f32.gmra.mrb[0].mxu0 %v35
    %v343 = vpop.f32.mrb[0].mxu0
    %v344 = vadd.f32 %v113, %v343
    %v345 = vpop.f32.mrb[0].mxu0
    %v346 = vadd.f32 %v117, %v345
    %347 = vdwg.mxu0
    %348 = vst [vmem:[%s3] sm:$0xff] %v189
    %349 = vst [vmem:[%s3 + $0x8] sm:$0xff] %v191
    %350 = vst [vmem:[%s3 + $0x10] sm:$0xff] %v302
    %351 = vst [vmem:[%s3 + $0x18] sm:$0xff] %v304
    %352 = vst [vmem:[%s3 + $0x20] sm:$0xff] %v195
    %353 = vst [vmem:[%s3 + $0x28] sm:$0xff] %v197
    %354 = vst [vmem:[%s3 + $0x30] sm:$0xff] %v308
    %355 = vst [vmem:[%s3 + $0x38] sm:$0xff] %v310
    %356 = vst [vmem:[%s3 + $0x40] sm:$0xff] %v201
    %357 = vst [vmem:[%s3 + $0x48] sm:$0xff] %v203
    %358 = vst [vmem:[%s3 + $0x50] sm:$0xff] %v314
    %359 = vst [vmem:[%s3 + $0x58] sm:$0xff] %v316
    %360 = vst [vmem:[%s3 + $0x60] sm:$0xff] %v207
    %361 = vst [vmem:[%s3 + $0x68] sm:$0xff] %v209
    %362 = vst [vmem:[%s3 + $0x70] sm:$0xff] %v320
    %363 = vst [vmem:[%s3 + $0x78] sm:$0xff] %v322
    %364 = vst [vmem:[%s3 + $0x80] sm:$0xff] %v213
    %365 = vst [vmem:[%s3 + $0x88] sm:$0xff] %v215
    %366 = vst [vmem:[%s3 + $0x90] sm:$0xff] %v326
    %367 = vst [vmem:[%s3 + $0x98] sm:$0xff] %v328
    %368 = vst [vmem:[%s3 + $0xa0] sm:$0xff] %v219
    %369 = vst [vmem:[%s3 + $0xa8] sm:$0xff] %v221
    %370 = vst [vmem:[%s3 + $0xb0] sm:$0xff] %v332
    %371 = vst [vmem:[%s3 + $0xb8] sm:$0xff] %v334
    %372 = vst [vmem:[%s3 + $0xc0] sm:$0xff] %v225
    %373 = vst [vmem:[%s3 + $0xc8] sm:$0xff] %v227
    %374 = vst [vmem:[%s3 + $0xd0] sm:$0xff] %v338
    %375 = vst [vmem:[%s3 + $0xd8] sm:$0xff] %v340
    %376 = vst [vmem:[%s3 + $0xe0] sm:$0xff] %v231
    %377 = vst [vmem:[%s3 + $0xe8] sm:$0xff] %v233
    %378 = vst [vmem:[%s3 + $0xf0] sm:$0xff] %v344
    %379 = vst [vmem:[%s3 + $0xf8] sm:$0xff] %v346
    // Predicated region
    $region18: #{decoder_forward.3} parent=1 // pred_check
      _
    $region19: #{decoder_forward.3} parent=1 // pred_check_branch
      %381 = sbr.rel (0) target = $region21
    $region20: #{decoder_forward.3} parent=1 // pred_region
      _
    $region21: #{decoder_forward.3} parent=1 // pred_fallthru
      _
    // Predicated region
    $region22: #{decoder_forward.3} parent=1 // pred_check
      _
    $region23: #{decoder_forward.3} parent=1 // pred_check_branch
      %383 = sbr.rel (0) target = $region25
    $region24: #{decoder_forward.3} parent=1 // pred_region
      _
    $region25: #{decoder_forward.3} parent=1 // pred_fallthru
      _
    %384 = vsyncpa [#allocation3], 1

// kernel: decoder_forward.4
$region0: #{decoder_forward.4}
  #allocation0 [shape = 'u32[]', space=smem, size = 0x4, offset = 0x4, fixed_abs, tag = 'smem constant byte address 0x4 - core index']
  #allocation1 [shape = 'u32[144,128]{1,0:T(1,128)}', space=vmem, size = 0x12000, scoped, tag = 'internal scratch']
  #allocation2 [shape = 'f32[8,128]{1,0:T(8,128)}', space=vmem, size = 0x1000, scoped, tag = 'scratch operand']
  #allocation3 [shape = 'f32[8,128]{1,0:T(8,128)}', space=vmem, size = 0x1000, scoped, tag = 'scratch operand']
  %s0 = inlined_call_operand.vmem [shape: f32[8,8,512], index: 0, kind: input, shape index: {}]
  %s1 = inlined_call_operand.vmem [shape: f32[128,512], index: 1, kind: input, shape index: {}]
  %s2 = inlined_call_operand.vmem [shape: f32[8,8,128], index: 2, kind: output, shape index: {}]
  %s3 = sld [smem:[#allocation0]]
  $region22: #{decoder_forward.4} parent=0
    _
  %s5 = ssub.s32 1, %s3
  %s6 = scalar_select 0, %s5, %s3
  // Predicated region
  $region2: #{decoder_forward.4} parent=0 // pred_check
    _
  $region3: #{decoder_forward.4} parent=0 // pred_check_branch
    %8 = sbr.rel (0) target = $region5
  $region4: #{decoder_forward.4} parent=0 // pred_region
    _
  $region5: #{decoder_forward.4} parent=0 // pred_fallthru
    _
  // Predicated region
  $region6: #{decoder_forward.4} parent=0 // pred_check
    _
  $region7: #{decoder_forward.4} parent=0 // pred_check_branch
    %10 = sbr.rel (0) target = $region9
  $region8: #{decoder_forward.4} parent=0 // pred_region
    _
  $region9: #{decoder_forward.4} parent=0 // pred_fallthru
    _
  %p11 = scmp.eq.s32.totalorder 0, 0
  // Predicated region
  $region10: #{decoder_forward.4} parent=0 // pred_check
    %p12 = pneg %p11
  $region11: #{decoder_forward.4} parent=0 // pred_check_branch
    %14 = sbr.rel (%p12) target = $region13
  $region12: #{decoder_forward.4} parent=0 // pred_region
    %15 = vst [vmem:[#allocation2] sm:$0xff] 0.0
    %16 = vst [vmem:[#allocation3] sm:$0xff] 0.0
  $region13: #{decoder_forward.4} parent=0 // pred_fallthru
    _
  %v17 = vld [vmem:[#allocation2] sm:$0xff]
  %v18 = vld [vmem:[#allocation3] sm:$0xff]
  %v19 = vld [vmem:[%s0] ss:$8 sm:$0xf]
  %s20 = scalar_lea.vmem %s0, 32
  %v21 = vld [vmem:[%s20] ss:$8 sm:$0xf]
  %s22 = scalar_lea.vmem %s0, 64
  %v23 = vld [vmem:[%s22] ss:$8 sm:$0xf]
  %s24 = scalar_lea.vmem %s0, 96
  %v25 = vld [vmem:[%s24] ss:$8 sm:$0xf]
  %s26 = scalar_lea.vmem %s0, 128
  %v27 = vld [vmem:[%s26] ss:$8 sm:$0xf]
  %s28 = scalar_lea.vmem %s0, 160
  %v29 = vld [vmem:[%s28] ss:$8 sm:$0xf]
  %s30 = scalar_lea.vmem %s0, 192
  %v31 = vld [vmem:[%s30] ss:$8 sm:$0xf]
  %s32 = scalar_lea.vmem %s0, 224
  %v33 = vld [vmem:[%s32] ss:$8 sm:$0xf]
  %v34 = vld [vmem:[%s1] sm:$0xff]
  %v35 = vld [vmem:[%s1 + $0x8] sm:$0xff]
  %v36 = vld [vmem:[%s1 + $0x10] sm:$0xff]
  %v37 = vld [vmem:[%s1 + $0x18] sm:$0xff]
  %v38 = vld [vmem:[%s1 + $0x20] sm:$0xff]
  %v39 = vld [vmem:[%s1 + $0x28] sm:$0xff]
  %v40 = vld [vmem:[%s1 + $0x30] sm:$0xff]
  %v41 = vld [vmem:[%s1 + $0x38] sm:$0xff]
  %v42 = vld [vmem:[%s1 + $0x40] sm:$0xff]
  %v43 = vld [vmem:[%s1 + $0x48] sm:$0xff]
  %v44 = vld [vmem:[%s1 + $0x50] sm:$0xff]
  %v45 = vld [vmem:[%s1 + $0x58] sm:$0xff]
  %v46 = vld [vmem:[%s1 + $0x60] sm:$0xff]
  %v47 = vld [vmem:[%s1 + $0x68] sm:$0xff]
  %v48 = vld [vmem:[%s1 + $0x70] sm:$0xff]
  %v49 = vld [vmem:[%s1 + $0x78] sm:$0xff]
  %v50 = vld [vmem:[%s1 + $0x80] sm:$0xff]
  %v51 = vld [vmem:[%s1 + $0x88] sm:$0xff]
  %v52 = vld [vmem:[%s1 + $0x90] sm:$0xff]
  %v53 = vld [vmem:[%s1 + $0x98] sm:$0xff]
  %v54 = vld [vmem:[%s1 + $0xa0] sm:$0xff]
  %v55 = vld [vmem:[%s1 + $0xa8] sm:$0xff]
  %v56 = vld [vmem:[%s1 + $0xb0] sm:$0xff]
  %v57 = vld [vmem:[%s1 + $0xb8] sm:$0xff]
  %v58 = vld [vmem:[%s1 + $0xc0] sm:$0xff]
  %v59 = vld [vmem:[%s1 + $0xc8] sm:$0xff]
  %v60 = vld [vmem:[%s1 + $0xd0] sm:$0xff]
  %v61 = vld [vmem:[%s1 + $0xd8] sm:$0xff]
  %v62 = vld [vmem:[%s1 + $0xe0] sm:$0xff]
  %v63 = vld [vmem:[%s1 + $0xe8] sm:$0xff]
  %v64 = vld [vmem:[%s1 + $0xf0] sm:$0xff]
  %v65 = vld [vmem:[%s1 + $0xf8] sm:$0xff]
  %v66 = vld [vmem:[%s1 + $0x100] sm:$0xff]
  %v67 = vld [vmem:[%s1 + $0x108] sm:$0xff]
  %v68 = vld [vmem:[%s1 + $0x110] sm:$0xff]
  %v69 = vld [vmem:[%s1 + $0x118] sm:$0xff]
  %v70 = vld [vmem:[%s1 + $0x120] sm:$0xff]
  %v71 = vld [vmem:[%s1 + $0x128] sm:$0xff]
  %v72 = vld [vmem:[%s1 + $0x130] sm:$0xff]
  %v73 = vld [vmem:[%s1 + $0x138] sm:$0xff]
  %v74 = vld [vmem:[%s1 + $0x140] sm:$0xff]
  %v75 = vld [vmem:[%s1 + $0x148] sm:$0xff]
  %v76 = vld [vmem:[%s1 + $0x150] sm:$0xff]
  %v77 = vld [vmem:[%s1 + $0x158] sm:$0xff]
  %v78 = vld [vmem:[%s1 + $0x160] sm:$0xff]
  %v79 = vld [vmem:[%s1 + $0x168] sm:$0xff]
  %v80 = vld [vmem:[%s1 + $0x170] sm:$0xff]
  %v81 = vld [vmem:[%s1 + $0x178] sm:$0xff]
  %v82 = vld [vmem:[%s1 + $0x180] sm:$0xff]
  %v83 = vld [vmem:[%s1 + $0x188] sm:$0xff]
  %v84 = vld [vmem:[%s1 + $0x190] sm:$0xff]
  %v85 = vld [vmem:[%s1 + $0x198] sm:$0xff]
  %v86 = vld [vmem:[%s1 + $0x1a0] sm:$0xff]
  %v87 = vld [vmem:[%s1 + $0x1a8] sm:$0xff]
  %v88 = vld [vmem:[%s1 + $0x1b0] sm:$0xff]
  %v89 = vld [vmem:[%s1 + $0x1b8] sm:$0xff]
  %v90 = vld [vmem:[%s1 + $0x1c0] sm:$0xff]
  %v91 = vld [vmem:[%s1 + $0x1c8] sm:$0xff]
  %v92 = vld [vmem:[%s1 + $0x1d0] sm:$0xff]
  %v93 = vld [vmem:[%s1 + $0x1d8] sm:$0xff]
  %v94 = vld [vmem:[%s1 + $0x1e0] sm:$0xff]
  %v95 = vld [vmem:[%s1 + $0x1e8] sm:$0xff]
  %v96 = vld [vmem:[%s1 + $0x1f0] sm:$0xff]
  %v97 = vld [vmem:[%s1 + $0x1f8] sm:$0xff]
  %98 = vmatprep.subr.mxu0 %v35
  %99 = vmatpush1.msra.mxu0 %v34
  %100 = vmatprep.subr.mxu0 %v39
  %101 = vmatpush1.msra.mxu0 %v38
  %102 = vmatprep.subr.mxu0 %v43
  %103 = vmatpush1.msra.mxu0 %v42
  %104 = vmatprep.subr.mxu0 %v47
  %105 = vmatpush1.msra.mxu0 %v46
  %106 = vmatprep.subr.mxu0 %v51
  %107 = vmatpush1.msra.mxu0 %v50
  %108 = vmatprep.subr.mxu0 %v55
  %109 = vmatpush1.msra.mxu0 %v54
  %110 = vmatprep.subr.mxu0 %v59
  %111 = vmatpush1.msra.mxu0 %v58
  %112 = vmatprep.subr.mxu0 %v63
  %113 = vmatpush1.msra.mxu0 %v62
  %114 = vmatprep.subr.mxu0 %v67
  %115 = vmatpush1.msra.mxu0 %v66
  %116 = vmatprep.subr.mxu0 %v71
  %117 = vmatpush1.msra.mxu0 %v70
  %118 = vmatprep.subr.mxu0 %v75
  %119 = vmatpush1.msra.mxu0 %v74
  %120 = vmatprep.subr.mxu0 %v79
  %121 = vmatpush1.msra.mxu0 %v78
  %122 = vmatprep.subr.mxu0 %v83
  %123 = vmatpush1.msra.mxu0 %v82
  %124 = vmatprep.subr.mxu0 %v87
  %125 = vmatpush1.msra.mxu0 %v86
  %126 = vmatprep.subr.mxu0 %v91
  %127 = vmatpush1.msra.mxu0 %v90
  %128 = vmatprep.subr.mxu0 %v95
  %129 = vmatpush1.msra.mxu0 %v94
  %130 = vmatprep.subr.mxu0 0.0
  %131 = vmatpush1.msra.mxu0 0.0
  %132 = vmatprep.subr.mxu0 0.0
  %133 = vmatpush1.msra.mxu0 0.0
  %134 = vmatprep.subr.mxu0 0.0
  %135 = vmatpush1.msra.mxu0 0.0
  %136 = vmatprep.subr.mxu0 0.0
  %137 = vmatpush1.msra.mxu0 0.0
  %138 = vmatprep.subr.mxu0 0.0
  %139 = vmatpush1.msra.mxu0 0.0
  %140 = vmatprep.subr.mxu0 0.0
  %141 = vmatpush1.msra.mxu0 0.0
  %142 = vmatprep.subr.mxu0 0.0
  %143 = vmatpush1.msra.mxu0 0.0
  %144 = vmatprep.subr.mxu0 0.0
  %145 = vmatpush1.msra.mxu0 0.0
  %146 = vmatprep.subr.mxu0 0.0
  %147 = vmatpush1.msra.mxu0 0.0
  %148 = vmatprep.subr.mxu0 0.0
  %149 = vmatpush1.msra.mxu0 0.0
  %150 = vmatprep.subr.mxu0 0.0
  %151 = vmatpush1.msra.mxu0 0.0
  %152 = vmatprep.subr.mxu0 0.0
  %153 = vmatpush1.msra.mxu0 0.0
  %154 = vmatprep.subr.mxu0 0.0
  %155 = vmatpush1.msra.mxu0 0.0
  %156 = vmatprep.subr.mxu0 0.0
  %157 = vmatpush1.msra.mxu0 0.0
  %158 = vmatprep.subr.mxu0 0.0
  %159 = vmatpush1.msra.mxu0 0.0
  %160 = vmatprep.subr.mxu0 0.0
  %161 = vmatpush1.msra.mxu0 0.0
  %162 = vmatprep.mubr.f32.mxu0 0.0
  %163 = vmatmul.mubr.f32.gmra.mrb[0].mxu0 %v17
  %v164 = vpop.f32.mrb[0].mxu0
  %v165 = vadd.f32 0.0, %v164
  %v166 = vpop.f32.mrb[0].mxu0
  %v167 = vadd.f32 0.0, %v166
  %168 = vdwg.mxu0
  %169 = vmatprep.subr.mxu0 %v37
  %170 = vmatpush1.msra.mxu0 %v36
  %171 = vmatprep.subr.mxu0 %v41
  %172 = vmatpush1.msra.mxu0 %v40
  %173 = vmatprep.subr.mxu0 %v45
  %174 = vmatpush1.msra.mxu0 %v44
  %175 = vmatprep.subr.mxu0 %v49
  %176 = vmatpush1.msra.mxu0 %v48
  %177 = vmatprep.subr.mxu0 %v53
  %178 = vmatpush1.msra.mxu0 %v52
  %179 = vmatprep.subr.mxu0 %v57
  %180 = vmatpush1.msra.mxu0 %v56
  %181 = vmatprep.subr.mxu0 %v61
  %182 = vmatpush1.msra.mxu0 %v60
  %183 = vmatprep.subr.mxu0 %v65
  %184 = vmatpush1.msra.mxu0 %v64
  %185 = vmatprep.subr.mxu0 %v69
  %186 = vmatpush1.msra.mxu0 %v68
  %187 = vmatprep.subr.mxu0 %v73
  %188 = vmatpush1.msra.mxu0 %v72
  %189 = vmatprep.subr.mxu0 %v77
  %190 = vmatpush1.msra.mxu0 %v76
  %191 = vmatprep.subr.mxu0 %v81
  %192 = vmatpush1.msra.mxu0 %v80
  %193 = vmatprep.subr.mxu0 %v85
  %194 = vmatpush1.msra.mxu0 %v84
  %195 = vmatprep.subr.mxu0 %v89
  %196 = vmatpush1.msra.mxu0 %v88
  %197 = vmatprep.subr.mxu0 %v93
  %198 = vmatpush1.msra.mxu0 %v92
  %199 = vmatprep.subr.mxu0 %v97
  %200 = vmatpush1.msra.mxu0 %v96
  %201 = vmatprep.subr.mxu0 0.0
  %202 = vmatpush1.msra.mxu0 0.0
  %203 = vmatprep.subr.mxu0 0.0
  %204 = vmatpush1.msra.mxu0 0.0
  %205 = vmatprep.subr.mxu0 0.0
  %206 = vmatpush1.msra.mxu0 0.0
  %207 = vmatprep.subr.mxu0 0.0
  %208 = vmatpush1.msra.mxu0 0.0
  %209 = vmatprep.subr.mxu0 0.0
  %210 = vmatpush1.msra.mxu0 0.0
  %211 = vmatprep.subr.mxu0 0.0
  %212 = vmatpush1.msra.mxu0 0.0
  %213 = vmatprep.subr.mxu0 0.0
  %214 = vmatpush1.msra.mxu0 0.0
  %215 = vmatprep.subr.mxu0 0.0
  %216 = vmatpush1.msra.mxu0 0.0
  %217 = vmatprep.subr.mxu0 0.0
  %218 = vmatpush1.msra.mxu0 0.0
  %219 = vmatprep.subr.mxu0 0.0
  %220 = vmatpush1.msra.mxu0 0.0
  %221 = vmatprep.subr.mxu0 0.0
  %222 = vmatpush1.msra.mxu0 0.0
  %223 = vmatprep.subr.mxu0 0.0
  %224 = vmatpush1.msra.mxu0 0.0
  %225 = vmatprep.subr.mxu0 0.0
  %226 = vmatpush1.msra.mxu0 0.0
  %227 = vmatprep.subr.mxu0 0.0
  %228 = vmatpush1.msra.mxu0 0.0
  %229 = vmatprep.subr.mxu0 0.0
  %230 = vmatpush1.msra.mxu0 0.0
  %231 = vmatprep.subr.mxu0 0.0
  %232 = vmatpush1.msra.mxu0 0.0
  %233 = vmatprep.mubr.f32.mxu0 0.0
  %234 = vmatmul.mubr.f32.gmra.mrb[0].mxu0 %v17
  %v235 = vpop.f32.mrb[0].mxu0
  %v236 = vadd.f32 0.0, %v235
  %v237 = vpop.f32.mrb[0].mxu0
  %v238 = vadd.f32 0.0, %v237
  %239 = vdwg.mxu0
  %v244 = vcombine.low %v165, %v167
  %v245 = vcombine.high %v165, %v167
  %v246 = vcombine.low %v236, %v238
  %v247 = vcombine.high %v236, %v238
  %v249 = vunpack.c.l.s4 1966171168
  %v250 = vunpack.c.0.s8 %v249
  %v251 = vlaneseq
  %v252 = vshrl.u32 %v251, 7
  %v253 = vsub.s32 %v250, %v252
  %v254 = vrot.slane %v244, %v253
  %v256 = vunpack.c.l.s4 1966171168
  %v257 = vunpack.c.0.s8 %v256
  %v258 = vlaneseq
  %v259 = vshrl.u32 %v258, 7
  %v260 = vsub.s32 %v257, %v259
  %v261 = vrot.slane %v245, %v260
  %v263 = vunpack.c.l.s4 1966171168
  %v264 = vunpack.c.0.s8 %v263
  %v265 = vlaneseq
  %v266 = vshrl.u32 %v265, 7
  %v267 = vsub.s32 %v264, %v266
  %v268 = vrot.slane %v246, %v267
  %v270 = vunpack.c.l.s4 1966171168
  %v271 = vunpack.c.0.s8 %v270
  %v272 = vlaneseq
  %v273 = vshrl.u32 %v272, 7
  %v274 = vsub.s32 %v271, %v273
  %v275 = vrot.slane %v247, %v274
  %v276 = vcombine.low %v254, %v268
  %v277 = vcombine.high %v254, %v268
  %v278 = vcombine.low %v261, %v275
  %v279 = vcombine.high %v261, %v275
  %v281 = vunpack.c.l.s4 1966171168
  %v282 = vunpack.c.0.s8 %v281
  %v283 = vlaneseq
  %v284 = vshrl.u32 %v283, 7
  %v285 = vsub.s32 %v282, %v284
  %v286 = vrot.slane %v276, %v285
  %v288 = vunpack.c.l.s4 1966171168
  %v289 = vunpack.c.0.s8 %v288
  %v290 = vlaneseq
  %v291 = vshrl.u32 %v290, 7
  %v292 = vsub.s32 %v289, %v291
  %v293 = vrot.slane %v278, %v292
  %v295 = vunpack.c.l.s4 1966171168
  %v296 = vunpack.c.0.s8 %v295
  %v297 = vlaneseq
  %v298 = vshrl.u32 %v297, 7
  %v299 = vsub.s32 %v296, %v298
  %v300 = vrot.slane %v277, %v299
  %v302 = vunpack.c.l.s4 1966171168
  %v303 = vunpack.c.0.s8 %v302
  %v304 = vlaneseq
  %v305 = vshrl.u32 %v304, 7
  %v306 = vsub.s32 %v303, %v305
  %v307 = vrot.slane %v279, %v306
  %v308 = vcombine.high %v286, %v286
  %v309 = vcombine.high %v293, %v293
  %v310 = vcombine.high %v300, %v300
  %v311 = vcombine.high %v307, %v307
  %v320 = vadd.f32 %v19, %v286
  %v321 = vadd.f32 %v21, %v300
  %v322 = vadd.f32 %v23, %v308
  %v323 = vadd.f32 %v25, %v310
  %v324 = vadd.f32 %v27, %v293
  %v325 = vadd.f32 %v29, %v307
  %v326 = vadd.f32 %v31, %v309
  %v327 = vadd.f32 %v33, %v311
  %v328 = vxor.u32 %v320, 2147483648
  %v329 = vxor.u32 %v321, 2147483648
  %v330 = vxor.u32 %v322, 2147483648
  %v331 = vxor.u32 %v323, 2147483648
  %v332 = vxor.u32 %v324, 2147483648
  %v333 = vxor.u32 %v325, 2147483648
  %v334 = vxor.u32 %v326, 2147483648
  %v335 = vxor.u32 %v327, 2147483648
  %v336 = vmul.f32 %v328, 1.442695
  %v337 = vpow.pop %v336
  %v338 = vmul.f32 %v329, 1.442695
  %v339 = vpow.pop %v338
  %v340 = vmul.f32 %v330, 1.442695
  %v341 = vpow.pop %v340
  %v342 = vmul.f32 %v331, 1.442695
  %v343 = vpow.pop %v342
  %v344 = vmul.f32 %v332, 1.442695
  %v345 = vpow.pop %v344
  %v346 = vmul.f32 %v333, 1.442695
  %v347 = vpow.pop %v346
  %v348 = vmul.f32 %v334, 1.442695
  %v349 = vpow.pop %v348
  %v350 = vmul.f32 %v335, 1.442695
  %v351 = vpow.pop %v350
  %v352 = vadd.f32 %v337, 1.0
  %v353 = vadd.f32 %v339, 1.0
  %v354 = vadd.f32 %v341, 1.0
  %v355 = vadd.f32 %v343, 1.0
  %v356 = vadd.f32 %v345, 1.0
  %v357 = vadd.f32 %v347, 1.0
  %v358 = vadd.f32 %v349, 1.0
  %v359 = vadd.f32 %v351, 1.0
  %v360 = vrcp.pop %v352
  %v361 = vmul.f32 1.0, %v360
  %v362 = vrcp.pop %v353
  %v363 = vmul.f32 1.0, %v362
  %v364 = vrcp.pop %v354
  %v365 = vmul.f32 1.0, %v364
  %v366 = vrcp.pop %v355
  %v367 = vmul.f32 1.0, %v366
  %v368 = vrcp.pop %v356
  %v369 = vmul.f32 1.0, %v368
  %v370 = vrcp.pop %v357
  %v371 = vmul.f32 1.0, %v370
  %v372 = vrcp.pop %v358
  %v373 = vmul.f32 1.0, %v372
  %v374 = vrcp.pop %v359
  %v375 = vmul.f32 1.0, %v374
  %v384 = vrot.slane %v320, 1
  %v385 = vrot.slane %v321, 1
  %v386 = vrot.slane %v322, 1
  %v387 = vrot.slane %v323, 1
  %v388 = vrot.slane %v324, 1
  %v389 = vrot.slane %v325, 1
  %v390 = vrot.slane %v326, 1
  %v391 = vrot.slane %v327, 1
  %v400 = vxor.u32 %v384, 2147483648
  %v401 = vxor.u32 %v385, 2147483648
  %v402 = vxor.u32 %v386, 2147483648
  %v403 = vxor.u32 %v387, 2147483648
  %v404 = vxor.u32 %v388, 2147483648
  %v405 = vxor.u32 %v389, 2147483648
  %v406 = vxor.u32 %v390, 2147483648
  %v407 = vxor.u32 %v391, 2147483648
  %v408 = vmul.f32 %v400, 1.442695
  %v409 = vpow.pop %v408
  %v410 = vmul.f32 %v401, 1.442695
  %v411 = vpow.pop %v410
  %v412 = vmul.f32 %v402, 1.442695
  %v413 = vpow.pop %v412
  %v414 = vmul.f32 %v403, 1.442695
  %v415 = vpow.pop %v414
  %v416 = vmul.f32 %v404, 1.442695
  %v417 = vpow.pop %v416
  %v418 = vmul.f32 %v405, 1.442695
  %v419 = vpow.pop %v418
  %v420 = vmul.f32 %v406, 1.442695
  %v421 = vpow.pop %v420
  %v422 = vmul.f32 %v407, 1.442695
  %v423 = vpow.pop %v422
  %v424 = vadd.f32 %v409, 1.0
  %v425 = vadd.f32 %v411, 1.0
  %v426 = vadd.f32 %v413, 1.0
  %v427 = vadd.f32 %v415, 1.0
  %v428 = vadd.f32 %v417, 1.0
  %v429 = vadd.f32 %v419, 1.0
  %v430 = vadd.f32 %v421, 1.0
  %v431 = vadd.f32 %v423, 1.0
  %v432 = vrcp.pop %v424
  %v433 = vmul.f32 1.0, %v432
  %v434 = vrcp.pop %v425
  %v435 = vmul.f32 1.0, %v434
  %v436 = vrcp.pop %v426
  %v437 = vmul.f32 1.0, %v436
  %v438 = vrcp.pop %v427
  %v439 = vmul.f32 1.0, %v438
  %v440 = vrcp.pop %v428
  %v441 = vmul.f32 1.0, %v440
  %v442 = vrcp.pop %v429
  %v443 = vmul.f32 1.0, %v442
  %v444 = vrcp.pop %v430
  %v445 = vmul.f32 1.0, %v444
  %v446 = vrcp.pop %v431
  %v447 = vmul.f32 1.0, %v446
  %v448 = vrot.slane %v320, 2
  %v449 = vrot.slane %v321, 2
  %v450 = vrot.slane %v322, 2
  %v451 = vrot.slane %v323, 2
  %v452 = vrot.slane %v324, 2
  %v453 = vrot.slane %v325, 2
  %v454 = vrot.slane %v326, 2
  %v455 = vrot.slane %v327, 2
  %v464 = vtanh.pop %v448
  %v465 = vtanh.pop %v449
  %v466 = vtanh.pop %v450
  %v467 = vtanh.pop %v451
  %v468 = vtanh.pop %v452
  %v469 = vtanh.pop %v453
  %v470 = vtanh.pop %v454
  %v471 = vtanh.pop %v455
  %v472 = vrot.slane %v320, 3
  %v473 = vrot.slane %v321, 3
  %v474 = vrot.slane %v322, 3
  %v475 = vrot.slane %v323, 3
  %v476 = vrot.slane %v324, 3
  %v477 = vrot.slane %v325, 3
  %v478 = vrot.slane %v326, 3
  %v479 = vrot.slane %v327, 3
  %v488 = vxor.u32 %v472, 2147483648
  %v489 = vxor.u32 %v473, 2147483648
  %v490 = vxor.u32 %v474, 2147483648
  %v491 = vxor.u32 %v475, 2147483648
  %v492 = vxor.u32 %v476, 2147483648
  %v493 = vxor.u32 %v477, 2147483648
  %v494 = vxor.u32 %v478, 2147483648
  %v495 = vxor.u32 %v479, 2147483648
  %v496 = vmul.f32 %v488, 1.442695
  %v497 = vpow.pop %v496
  %v498 = vmul.f32 %v489, 1.442695
  %v499 = vpow.pop %v498
  %v500 = vmul.f32 %v490, 1.442695
  %v501 = vpow.pop %v500
  %v502 = vmul.f32 %v491, 1.442695
  %v503 = vpow.pop %v502
  %v504 = vmul.f32 %v492, 1.442695
  %v505 = vpow.pop %v504
  %v506 = vmul.f32 %v493, 1.442695
  %v507 = vpow.pop %v506
  %v508 = vmul.f32 %v494, 1.442695
  %v509 = vpow.pop %v508
  %v510 = vmul.f32 %v495, 1.442695
  %v511 = vpow.pop %v510
  %v512 = vadd.f32 %v497, 1.0
  %v513 = vadd.f32 %v499, 1.0
  %v514 = vadd.f32 %v501, 1.0
  %v515 = vadd.f32 %v503, 1.0
  %v516 = vadd.f32 %v505, 1.0
  %v517 = vadd.f32 %v507, 1.0
  %v518 = vadd.f32 %v509, 1.0
  %v519 = vadd.f32 %v511, 1.0
  %v520 = vrcp.pop %v512
  %v521 = vmul.f32 1.0, %v520
  %v522 = vrcp.pop %v513
  %v523 = vmul.f32 1.0, %v522
  %v524 = vrcp.pop %v514
  %v525 = vmul.f32 1.0, %v524
  %v526 = vrcp.pop %v515
  %v527 = vmul.f32 1.0, %v526
  %v528 = vrcp.pop %v516
  %v529 = vmul.f32 1.0, %v528
  %v530 = vrcp.pop %v517
  %v531 = vmul.f32 1.0, %v530
  %v532 = vrcp.pop %v518
  %v533 = vmul.f32 1.0, %v532
  %v534 = vrcp.pop %v519
  %v535 = vmul.f32 1.0, %v534
  %v537 = vcombine.high %v18, %v18
  %v539 = vunpack.c.l.s4 1966171168
  %v540 = vunpack.c.0.s8 %v539
  %v541 = vlaneseq
  %v542 = vshrl.u32 %v541, 7
  %v543 = vsub.s32 %v540, %v542
  %v544 = vrot.slane %v18, %v543
  %v546 = vunpack.c.l.s4 1966171168
  %v547 = vunpack.c.0.s8 %v546
  %v548 = vlaneseq
  %v549 = vshrl.u32 %v548, 7
  %v550 = vsub.s32 %v547, %v549
  %v551 = vrot.slane %v537, %v550
  %v552 = vcombine.high %v544, %v544
  %v553 = vcombine.high %v551, %v551
  %v555 = vunpack.c.l.s4 1966171168
  %v556 = vunpack.c.0.s8 %v555
  %v557 = vlaneseq
  %v558 = vshrl.u32 %v557, 7
  %v559 = vsub.s32 %v556, %v558
  %v560 = vrot.slane %v544, %v559
  %v562 = vunpack.c.l.s4 1966171168
  %v563 = vunpack.c.0.s8 %v562
  %v564 = vlaneseq
  %v565 = vshrl.u32 %v564, 7
  %v566 = vsub.s32 %v563, %v565
  %v567 = vrot.slane %v551, %v566
  %v569 = vunpack.c.l.s4 1966171168
  %v570 = vunpack.c.0.s8 %v569
  %v571 = vlaneseq
  %v572 = vshrl.u32 %v571, 7
  %v573 = vsub.s32 %v570, %v572
  %v574 = vrot.slane %v552, %v573
  %v576 = vunpack.c.l.s4 1966171168
  %v577 = vunpack.c.0.s8 %v576
  %v578 = vlaneseq
  %v579 = vshrl.u32 %v578, 7
  %v580 = vsub.s32 %v577, %v579
  %v581 = vrot.slane %v553, %v580
  %v582 = vcombine.high %v560, %v560
  %v583 = vcombine.high %v567, %v567
  %v584 = vcombine.high %v574, %v574
  %v585 = vcombine.high %v581, %v581
  %v594 = vmul.f32 %v433, %v560
  %v595 = vmul.f32 %v435, %v574
  %v596 = vmul.f32 %v437, %v582
  %v597 = vmul.f32 %v439, %v584
  %v598 = vmul.f32 %v441, %v567
  %v599 = vmul.f32 %v443, %v581
  %v600 = vmul.f32 %v445, %v583
  %v601 = vmul.f32 %v447, %v585
  %v602 = vmul.f32 %v361, %v464
  %v603 = vmul.f32 %v363, %v465
  %v604 = vmul.f32 %v365, %v466
  %v605 = vmul.f32 %v367, %v467
  %v606 = vmul.f32 %v369, %v468
  %v607 = vmul.f32 %v371, %v469
  %v608 = vmul.f32 %v373, %v470
  %v609 = vmul.f32 %v375, %v471
  %v610 = vadd.f32 %v594, %v602
  %v611 = vadd.f32 %v595, %v603
  %v612 = vadd.f32 %v596, %v604
  %v613 = vadd.f32 %v597, %v605
  %v614 = vadd.f32 %v598, %v606
  %v615 = vadd.f32 %v599, %v607
  %v616 = vadd.f32 %v600, %v608
  %v617 = vadd.f32 %v601, %v609
  %v618 = vtanh.pop %v610
  %v619 = vtanh.pop %v611
  %v620 = vtanh.pop %v612
  %v621 = vtanh.pop %v613
  %v622 = vtanh.pop %v614
  %v623 = vtanh.pop %v615
  %v624 = vtanh.pop %v616
  %v625 = vtanh.pop %v617
  %v626 = vmul.f32 %v521, %v618
  %v627 = vmul.f32 %v523, %v619
  %v628 = vmul.f32 %v525, %v620
  %v629 = vmul.f32 %v527, %v621
  %v630 = vmul.f32 %v529, %v622
  %v631 = vmul.f32 %v531, %v623
  %v632 = vmul.f32 %v533, %v624
  %v633 = vmul.f32 %v535, %v625
  %v642 = vcombine.low %v610, %v611
  %v643 = vcombine.low %v612, %v613
  %v644 = vcombine.low %v614, %v615
  %v645 = vcombine.low %v616, %v617
  %v647 = vunpack.c.l.s4 1966171168
  %v648 = vunpack.c.0.s8 %v647
  %v649 = vlaneseq
  %v650 = vshrl.u32 %v649, 7
  %v651 = vsub.s32 %v648, %v650
  %v652 = vrot.slane %v642, %v651
  %v654 = vunpack.c.l.s4 1966171168
  %v655 = vunpack.c.0.s8 %v654
  %v656 = vlaneseq
  %v657 = vshrl.u32 %v656, 7
  %v658 = vsub.s32 %v655, %v657
  %v659 = vrot.slane %v643, %v658
  %v661 = vunpack.c.l.s4 1966171168
  %v662 = vunpack.c.0.s8 %v661
  %v663 = vlaneseq
  %v664 = vshrl.u32 %v663, 7
  %v665 = vsub.s32 %v662, %v664
  %v666 = vrot.slane %v644, %v665
  %v668 = vunpack.c.l.s4 1966171168
  %v669 = vunpack.c.0.s8 %v668
  %v670 = vlaneseq
  %v671 = vshrl.u32 %v670, 7
  %v672 = vsub.s32 %v669, %v671
  %v673 = vrot.slane %v645, %v672
  %v674 = vcombine.low %v652, %v659
  %v675 = vcombine.low %v666, %v673
  %v677 = vunpack.c.l.s4 1966171168
  %v678 = vunpack.c.0.s8 %v677
  %v679 = vlaneseq
  %v680 = vshrl.u32 %v679, 7
  %v681 = vsub.s32 %v678, %v680
  %v682 = vrot.slane %v674, %v681
  %v684 = vunpack.c.l.s4 1966171168
  %v685 = vunpack.c.0.s8 %v684
  %v686 = vlaneseq
  %v687 = vshrl.u32 %v686, 7
  %v688 = vsub.s32 %v685, %v687
  %v689 = vrot.slane %v675, %v688
  %v690 = vcombine.low %v682, %v689
  %692 = vst [vmem:[#allocation3] sm:$0xff] %v690
  %v701 = vcombine.low %v626, %v627
  %v702 = vcombine.low %v628, %v629
  %v703 = vcombine.low %v630, %v631
  %v704 = vcombine.low %v632, %v633
  %v706 = vunpack.c.l.s4 1966171168
  %v707 = vunpack.c.0.s8 %v706
  %v708 = vlaneseq
  %v709 = vshrl.u32 %v708, 7
  %v710 = vsub.s32 %v707, %v709
  %v711 = vrot.slane %v701, %v710
  %v713 = vunpack.c.l.s4 1966171168
  %v714 = vunpack.c.0.s8 %v713
  %v715 = vlaneseq
  %v716 = vshrl.u32 %v715, 7
  %v717 = vsub.s32 %v714, %v716
  %v718 = vrot.slane %v702, %v717
  %v720 = vunpack.c.l.s4 1966171168
  %v721 = vunpack.c.0.s8 %v720
  %v722 = vlaneseq
  %v723 = vshrl.u32 %v722, 7
  %v724 = vsub.s32 %v721, %v723
  %v725 = vrot.slane %v703, %v724
  %v727 = vunpack.c.l.s4 1966171168
  %v728 = vunpack.c.0.s8 %v727
  %v729 = vlaneseq
  %v730 = vshrl.u32 %v729, 7
  %v731 = vsub.s32 %v728, %v730
  %v732 = vrot.slane %v704, %v731
  %v733 = vcombine.low %v711, %v718
  %v734 = vcombine.low %v725, %v732
  %v736 = vunpack.c.l.s4 1966171168
  %v737 = vunpack.c.0.s8 %v736
  %v738 = vlaneseq
  %v739 = vshrl.u32 %v738, 7
  %v740 = vsub.s32 %v737, %v739
  %v741 = vrot.slane %v733, %v740
  %v743 = vunpack.c.l.s4 1966171168
  %v744 = vunpack.c.0.s8 %v743
  %v745 = vlaneseq
  %v746 = vshrl.u32 %v745, 7
  %v747 = vsub.s32 %v744, %v746
  %v748 = vrot.slane %v734, %v747
  %v749 = vcombine.low %v741, %v748
  %751 = vst [vmem:[#allocation2] sm:$0xff] %v749
  %752 = vst [vmem:[%s2] sm:$0x1] %v626
  %753 = vst [vmem:[%s2 + $0x8] sm:$0x1] %v627
  %754 = vst [vmem:[%s2 + $0x10] sm:$0x1] %v628
  %755 = vst [vmem:[%s2 + $0x18] sm:$0x1] %v629
  %756 = vst [vmem:[%s2 + $0x20] sm:$0x1] %v630
  %757 = vst [vmem:[%s2 + $0x28] sm:$0x1] %v631
  %758 = vst [vmem:[%s2 + $0x30] sm:$0x1] %v632
  %759 = vst [vmem:[%s2 + $0x38] sm:$0x1] %v633
  %v760 = vld [vmem:[#allocation2] sm:$0xff]
  %v761 = vld [vmem:[#allocation3] sm:$0xff]
  %s762 = scalar_lea.vmem %s0, 1
  %v763 = vld [vmem:[%s762] ss:$8 sm:$0xf]
  %s764 = scalar_lea.vmem %s0, 33
  %v765 = vld [vmem:[%s764] ss:$8 sm:$0xf]
  %s766 = scalar_lea.vmem %s0, 65
  %v767 = vld [vmem:[%s766] ss:$8 sm:$0xf]
  %s768 = scalar_lea.vmem %s0, 97
  %v769 = vld [vmem:[%s768] ss:$8 sm:$0xf]
  %s770 = scalar_lea.vmem %s0, 129
  %v771 = vld [vmem:[%s770] ss:$8 sm:$0xf]
  %s772 = scalar_lea.vmem %s0, 161
  %v773 = vld [vmem:[%s772] ss:$8 sm:$0xf]
  %s774 = scalar_lea.vmem %s0, 193
  %v775 = vld [vmem:[%s774] ss:$8 sm:$0xf]
  %s776 = scalar_lea.vmem %s0, 225
  %v777 = vld [vmem:[%s776] ss:$8 sm:$0xf]
  %v778 = vld [vmem:[%s1] sm:$0xff]
  %v779 = vld [vmem:[%s1 + $0x8] sm:$0xff]
  %v780 = vld [vmem:[%s1 + $0x10] sm:$0xff]
  %v781 = vld [vmem:[%s1 + $0x18] sm:$0xff]
  %v782 = vld [vmem:[%s1 + $0x20] sm:$0xff]
  %v783 = vld [vmem:[%s1 + $0x28] sm:$0xff]
  %v784 = vld [vmem:[%s1 + $0x30] sm:$0xff]
  %v785 = vld [vmem:[%s1 + $0x38] sm:$0xff]
  %v786 = vld [vmem:[%s1 + $0x40] sm:$0xff]
  %v787 = vld [vmem:[%s1 + $0x48] sm:$0xff]
  %v788 = vld [vmem:[%s1 + $0x50] sm:$0xff]
  %v789 = vld [vmem:[%s1 + $0x58] sm:$0xff]
  %v790 = vld [vmem:[%s1 + $0x60] sm:$0xff]
  %v791 = vld [vmem:[%s1 + $0x68] sm:$0xff]
  %v792 = vld [vmem:[%s1 + $0x70] sm:$0xff]
  %v793 = vld [vmem:[%s1 + $0x78] sm:$0xff]
  %v794 = vld [vmem:[%s1 + $0x80] sm:$0xff]
  %v795 = vld [vmem:[%s1 + $0x88] sm:$0xff]
  %v796 = vld [vmem:[%s1 + $0x90] sm:$0xff]
  %v797 = vld [vmem:[%s1 + $0x98] sm:$0xff]
  %v798 = vld [vmem:[%s1 + $0xa0] sm:$0xff]
  %v799 = vld [vmem:[%s1 + $0xa8] sm:$0xff]
  %v800 = vld [vmem:[%s1 + $0xb0] sm:$0xff]
  %v801 = vld [vmem:[%s1 + $0xb8] sm:$0xff]
  %v802 = vld [vmem:[%s1 + $0xc0] sm:$0xff]
  %v803 = vld [vmem:[%s1 + $0xc8] sm:$0xff]
  %v804 = vld [vmem:[%s1 + $0xd0] sm:$0xff]
  %v805 = vld [vmem:[%s1 + $0xd8] sm:$0xff]
  %v806 = vld [vmem:[%s1 + $0xe0] sm:$0xff]
  %v807 = vld [vmem:[%s1 + $0xe8] sm:$0xff]
  %v808 = vld [vmem:[%s1 + $0xf0] sm:$0xff]
  %v809 = vld [vmem:[%s1 + $0xf8] sm:$0xff]
  %v810 = vld [vmem:[%s1 + $0x100] sm:$0xff]
  %v811 = vld [vmem:[%s1 + $0x108] sm:$0xff]
  %v812 = vld [vmem:[%s1 + $0x110] sm:$0xff]
  %v813 = vld [vmem:[%s1 + $0x118] sm:$0xff]
  %v814 = vld [vmem:[%s1 + $0x120] sm:$0xff]
  %v815 = vld [vmem:[%s1 + $0x128] sm:$0xff]
  %v816 = vld [vmem:[%s1 + $0x130] sm:$0xff]
  %v817 = vld [vmem:[%s1 + $0x138] sm:$0xff]
  %v818 = vld [vmem:[%s1 + $0x140] sm:$0xff]
  %v819 = vld [vmem:[%s1 + $0x148] sm:$0xff]
  %v820 = vld [vmem:[%s1 + $0x150] sm:$0xff]
  %v821 = vld [vmem:[%s1 + $0x158] sm:$0xff]
  %v822 = vld [vmem:[%s1 + $0x160] sm:$0xff]
  %v823 = vld [vmem:[%s1 + $0x168] sm:$0xff]
  %v824 = vld [vmem:[%s1 + $0x170] sm:$0xff]
  %v825 = vld [vmem:[%s1 + $0x178] sm:$0xff]
  %v826 = vld [vmem:[%s1 + $0x180] sm:$0xff]
  %v827 = vld [vmem:[%s1 + $0x188] sm:$0xff]
  %v828 = vld [vmem:[%s1 + $0x190] sm:$0xff]
  %v829 = vld [vmem:[%s1 + $0x198] sm:$0xff]
  %v830 = vld [vmem:[%s1 + $0x1a0] sm:$0xff]
  %v831 = vld [vmem:[%s1 + $0x1a8] sm:$0xff]
  %v832 = vld [vmem:[%s1 + $0x1b0] sm:$0xff]
  %v833 = vld [vmem:[%s1 + $0x1b8] sm:$0xff]
  %v834 = vld [vmem:[%s1 + $0x1c0] sm:$0xff]
  %v835 = vld [vmem:[%s1 + $0x1c8] sm:$0xff]
  %v836 = vld [vmem:[%s1 + $0x1d0] sm:$0xff]
  %v837 = vld [vmem:[%s1 + $0x1d8] sm:$0xff]
  %v838 = vld [vmem:[%s1 + $0x1e0] sm:$0xff]
  %v839 = vld [vmem:[%s1 + $0x1e8] sm:$0xff]
  %v840 = vld [vmem:[%s1 + $0x1f0] sm:$0xff]
  %v841 = vld [vmem:[%s1 + $0x1f8] sm:$0xff]
  %842 = vmatprep.subr.mxu0 %v779
  %843 = vmatpush1.msra.mxu0 %v778
  %844 = vmatprep.subr.mxu0 %v783
  %845 = vmatpush1.msra.mxu0 %v782
  %846 = vmatprep.subr.mxu0 %v787
  %847 = vmatpush1.msra.mxu0 %v786
  %848 = vmatprep.subr.mxu0 %v791
  %849 = vmatpush1.msra.mxu0 %v790
  %850 = vmatprep.subr.mxu0 %v795
  %851 = vmatpush1.msra.mxu0 %v794
  %852 = vmatprep.subr.mxu0 %v799
  %853 = vmatpush1.msra.mxu0 %v798
  %854 = vmatprep.subr.mxu0 %v803
  %855 = vmatpush1.msra.mxu0 %v802
  %856 = vmatprep.subr.mxu0 %v807
  %857 = vmatpush1.msra.mxu0 %v806
  %858 = vmatprep.subr.mxu0 %v811
  %859 = vmatpush1.msra.mxu0 %v810
  %860 = vmatprep.subr.mxu0 %v815
  %861 = vmatpush1.msra.mxu0 %v814
  %862 = vmatprep.subr.mxu0 %v819
  %863 = vmatpush1.msra.mxu0 %v818
  %864 = vmatprep.subr.mxu0 %v823
  %865 = vmatpush1.msra.mxu0 %v822
  %866 = vmatprep.subr.mxu0 %v827
  %867 = vmatpush1.msra.mxu0 %v826
  %868 = vmatprep.subr.mxu0 %v831
  %869 = vmatpush1.msra.mxu0 %v830
  %870 = vmatprep.subr.mxu0 %v835
  %871 = vmatpush1.msra.mxu0 %v834
  %872 = vmatprep.subr.mxu0 %v839
  %873 = vmatpush1.msra.mxu0 %v838
  %874 = vmatprep.subr.mxu0 0.0
  %875 = vmatpush1.msra.mxu0 0.0
  %876 = vmatprep.subr.mxu0 0.0
  %877 = vmatpush1.msra.mxu0 0.0
  %878 = vmatprep.subr.mxu0 0.0
  %879 = vmatpush1.msra.mxu0 0.0
  %880 = vmatprep.subr.mxu0 0.0
  %881 = vmatpush1.msra.mxu0 0.0
  %882 = vmatprep.subr.mxu0 0.0
  %883 = vmatpush1.msra.mxu0 0.0
  %884 = vmatprep.subr.mxu0 0.0
  %885 = vmatpush1.msra.mxu0 0.0
  %886 = vmatprep.subr.mxu0 0.0
  %887 = vmatpush1.msra.mxu0 0.0
  %888 = vmatprep.subr.mxu0 0.0
  %889 = vmatpush1.msra.mxu0 0.0
  %890 = vmatprep.subr.mxu0 0.0
  %891 = vmatpush1.msra.mxu0 0.0
  %892 = vmatprep.subr.mxu0 0.0
  %893 = vmatpush1.msra.mxu0 0.0
  %894 = vmatprep.subr.mxu0 0.0
  %895 = vmatpush1.msra.mxu0 0.0
  %896 = vmatprep.subr.mxu0 0.0
  %897 = vmatpush1.msra.mxu0 0.0
  %898 = vmatprep.subr.mxu0 0.0
  %899 = vmatpush1.msra.mxu0 0.0
  %900 = vmatprep.subr.mxu0 0.0
  %901 = vmatpush1.msra.mxu0 0.0
  %902 = vmatprep.subr.mxu0 0.0
  %903 = vmatpush1.msra.mxu0 0.0
  %904 = vmatprep.subr.mxu0 0.0
  %905 = vmatpush1.msra.mxu0 0.0
  %906 = vmatprep.mubr.f32.mxu0 0.0
  %907 = vmatmul.mubr.f32.gmra.mrb[0].mxu0 %v760
  %v908 = vpop.f32.mrb[0].mxu0
  %v909 = vadd.f32 0.0, %v908
  %v910 = vpop.f32.mrb[0].mxu0
  %v911 = vadd.f32 0.0, %v910
  %912 = vdwg.mxu0
  %913 = vmatprep.subr.mxu0 %v781
  %914 = vmatpush1.msra.mxu0 %v780
  %915 = vmatprep.subr.mxu0 %v785
  %916 = vmatpush1.msra.mxu0 %v784
  %917 = vmatprep.subr.mxu0 %v789
  %918 = vmatpush1.msra.mxu0 %v788
  %919 = vmatprep.subr.mxu0 %v793
  %920 = vmatpush1.msra.mxu0 %v792
  %921 = vmatprep.subr.mxu0 %v797
  %922 = vmatpush1.msra.mxu0 %v796
  %923 = vmatprep.subr.mxu0 %v801
  %924 = vmatpush1.msra.mxu0 %v800
  %925 = vmatprep.subr.mxu0 %v805
  %926 = vmatpush1.msra.mxu0 %v804
  %927 = vmatprep.subr.mxu0 %v809
  %928 = vmatpush1.msra.mxu0 %v808
  %929 = vmatprep.subr.mxu0 %v813
  %930 = vmatpush1.msra.mxu0 %v812
  %931 = vmatprep.subr.mxu0 %v817
  %932 = vmatpush1.msra.mxu0 %v816
  %933 = vmatprep.subr.mxu0 %v821
  %934 = vmatpush1.msra.mxu0 %v820
  %935 = vmatprep.subr.mxu0 %v825
  %936 = vmatpush1.msra.mxu0 %v824
  %937 = vmatprep.subr.mxu0 %v829
  %938 = vmatpush1.msra.mxu0 %v828
  %939 = vmatprep.subr.mxu0 %v833
  %940 = vmatpush1.msra.mxu0 %v832
  %941 = vmatprep.subr.mxu0 %v837
  %942 = vmatpush1.msra.mxu0 %v836
  %943 = vmatprep.subr.mxu0 %v841
  %944 = vmatpush1.msra.mxu0 %v840
  %945 = vmatprep.subr.mxu0 0.0
  %946 = vmatpush1.msra.mxu0 0.0
  %947 = vmatprep.subr.mxu0 0.0
  %948 = vmatpush1.msra.mxu0 0.0
  %949 = vmatprep.subr.mxu0 0.0
  %950 = vmatpush1.msra.mxu0 0.0
  %951 = vmatprep.subr.mxu0 0.0
  %952 = vmatpush1.msra.mxu0 0.0
  %953 = vmatprep.subr.mxu0 0.0
  %954 = vmatpush1.msra.mxu0 0.0
  %955 = vmatprep.subr.mxu0 0.0
  %956 = vmatpush1.msra.mxu0 0.0
  %957 = vmatprep.subr.mxu0 0.0
  %958 = vmatpush1.msra.mxu0 0.0
  %959 = vmatprep.subr.mxu0 0.0
  %960 = vmatpush1.msra.mxu0 0.0
  %961 = vmatprep.subr.mxu0 0.0
  %962 = vmatpush1.msra.mxu0 0.0
  %963 = vmatprep.subr.mxu0 0.0
  %964 = vmatpush1.msra.mxu0 0.0
  %965 = vmatprep.subr.mxu0 0.0
  %966 = vmatpush1.msra.mxu0 0.0
  %967 = vmatprep.subr.mxu0 0.0
  %968 = vmatpush1.msra.mxu0 0.0
  %969 = vmatprep.subr.mxu0 0.0
  %970 = vmatpush1.msra.mxu0 0.0
  %971 = vmatprep.subr.mxu0 0.0
  %972 = vmatpush1.msra.mxu0 0.0
  %973 = vmatprep.subr.mxu0 0.0
  %974 = vmatpush1.msra.mxu0 0.0
  %975 = vmatprep.subr.mxu0 0.0
  %976 = vmatpush1.msra.mxu0 0.0
  %977 = vmatprep.mubr.f32.mxu0 0.0
  %978 = vmatmul.mubr.f32.gmra.mrb[0].mxu0 %v760
  %v979 = vpop.f32.mrb[0].mxu0
  %v980 = vadd.f32 0.0, %v979
  %v981 = vpop.f32.mrb[0].mxu0
  %v982 = vadd.f32 0.0, %v981
  %983 = vdwg.mxu0
  %v988 = vcombine.low %v909, %v911
  %v989 = vcombine.high %v909, %v911
  %v990 = vcombine.low %v980, %v982
  %v991 = vcombine.high %v980, %v982
  %v993 = vunpack.c.l.s4 1966171168
  %v994 = vunpack.c.0.s8 %v993
  %v995 = vlaneseq
  %v996 = vshrl.u32 %v995, 7
  %v997 = vsub.s32 %v994, %v996
  %v998 = vrot.slane %v988, %v997
  %v1000 = vunpack.c.l.s4 1966171168
  %v1001 = vunpack.c.0.s8 %v1000
  %v1002 = vlaneseq
  %v1003 = vshrl.u32 %v1002, 7
  %v1004 = vsub.s32 %v1001, %v1003
  %v1005 = vrot.slane %v989, %v1004
  %v1007 = vunpack.c.l.s4 1966171168
  %v1008 = vunpack.c.0.s8 %v1007
  %v1009 = vlaneseq
  %v1010 = vshrl.u32 %v1009, 7
  %v1011 = vsub.s32 %v1008, %v1010
  %v1012 = vrot.slane %v990, %v1011
  %v1014 = vunpack.c.l.s4 1966171168
  %v1015 = vunpack.c.0.s8 %v1014
  %v1016 = vlaneseq
  %v1017 = vshrl.u32 %v1016, 7
  %v1018 = vsub.s32 %v1015, %v1017
  %v1019 = vrot.slane %v991, %v1018
  %v1020 = vcombine.low %v998, %v1012
  %v1021 = vcombine.high %v998, %v1012
  %v1022 = vcombine.low %v1005, %v1019
  %v1023 = vcombine.high %v1005, %v1019
  %v1025 = vunpack.c.l.s4 1966171168
  %v1026 = vunpack.c.0.s8 %v1025
  %v1027 = vlaneseq
  %v1028 = vshrl.u32 %v1027, 7
  %v1029 = vsub.s32 %v1026, %v1028
  %v1030 = vrot.slane %v1020, %v1029
  %v1032 = vunpack.c.l.s4 1966171168
  %v1033 = vunpack.c.0.s8 %v1032
  %v1034 = vlaneseq
  %v1035 = vshrl.u32 %v1034, 7
  %v1036 = vsub.s32 %v1033, %v1035
  %v1037 = vrot.slane %v1022, %v1036
  %v1039 = vunpack.c.l.s4 1966171168
  %v1040 = vunpack.c.0.s8 %v1039
  %v1041 = vlaneseq
  %v1042 = vshrl.u32 %v1041, 7
  %v1043 = vsub.s32 %v1040, %v1042
  %v1044 = vrot.slane %v1021, %v1043
  %v1046 = vunpack.c.l.s4 1966171168
  %v1047 = vunpack.c.0.s8 %v1046
  %v1048 = vlaneseq
  %v1049 = vshrl.u32 %v1048, 7
  %v1050 = vsub.s32 %v1047, %v1049
  %v1051 = vrot.slane %v1023, %v1050
  %v1052 = vcombine.high %v1030, %v1030
  %v1053 = vcombine.high %v1037, %v1037
  %v1054 = vcombine.high %v1044, %v1044
  %v1055 = vcombine.high %v1051, %v1051
  %v1064 = vadd.f32 %v763, %v1030
  %v1065 = vadd.f32 %v765, %v1044
  %v1066 = vadd.f32 %v767, %v1052
  %v1067 = vadd.f32 %v769, %v1054
  %v1068 = vadd.f32 %v771, %v1037
  %v1069 = vadd.f32 %v773, %v1051
  %v1070 = vadd.f32 %v775, %v1053
  %v1071 = vadd.f32 %v777, %v1055
  %v1072 = vxor.u32 %v1064, 2147483648
  %v1073 = vxor.u32 %v1065, 2147483648
  %v1074 = vxor.u32 %v1066, 2147483648
  %v1075 = vxor.u32 %v1067, 2147483648
  %v1076 = vxor.u32 %v1068, 2147483648
  %v1077 = vxor.u32 %v1069, 2147483648
  %v1078 = vxor.u32 %v1070, 2147483648
  %v1079 = vxor.u32 %v1071, 2147483648
  %v1080 = vmul.f32 %v1072, 1.442695
  %v1081 = vpow.pop %v1080
  %v1082 = vmul.f32 %v1073, 1.442695
  %v1083 = vpow.pop %v1082
  %v1084 = vmul.f32 %v1074, 1.442695
  %v1085 = vpow.pop %v1084
  %v1086 = vmul.f32 %v1075, 1.442695
  %v1087 = vpow.pop %v1086
  %v1088 = vmul.f32 %v1076, 1.442695
  %v1089 = vpow.pop %v1088
  %v1090 = vmul.f32 %v1077, 1.442695
  %v1091 = vpow.pop %v1090
  %v1092 = vmul.f32 %v1078, 1.442695
  %v1093 = vpow.pop %v1092
  %v1094 = vmul.f32 %v1079, 1.442695
  %v1095 = vpow.pop %v1094
  %v1096 = vadd.f32 %v1081, 1.0
  %v1097 = vadd.f32 %v1083, 1.0
  %v1098 = vadd.f32 %v1085, 1.0
  %v1099 = vadd.f32 %v1087, 1.0
  %v1100 = vadd.f32 %v1089, 1.0
  %v1101 = vadd.f32 %v1091, 1.0
  %v1102 = vadd.f32 %v1093, 1.0
  %v1103 = vadd.f32 %v1095, 1.0
  %v1104 = vrcp.pop %v1096
  %v1105 = vmul.f32 1.0, %v1104
  %v1106 = vrcp.pop %v1097
  %v1107 = vmul.f32 1.0, %v1106
  %v1108 = vrcp.pop %v1098
  %v1109 = vmul.f32 1.0, %v1108
  %v1110 = vrcp.pop %v1099
  %v1111 = vmul.f32 1.0, %v1110
  %v1112 = vrcp.pop %v1100
  %v1113 = vmul.f32 1.0, %v1112
  %v1114 = vrcp.pop %v1101
  %v1115 = vmul.f32 1.0, %v1114
  %v1116 = vrcp.pop %v1102
  %v1117 = vmul.f32 1.0, %v1116
  %v1118 = vrcp.pop %v1103
  %v1119 = vmul.f32 1.0, %v1118
  %v1128 = vrot.slane %v1064, 1
  %v1129 = vrot.slane %v1065, 1
  %v1130 = vrot.slane %v1066, 1
  %v1131 = vrot.slane %v1067, 1
  %v1132 = vrot.slane %v1068, 1
  %v1133 = vrot.slane %v1069, 1
  %v1134 = vrot.slane %v1070, 1
  %v1135 = vrot.slane %v1071, 1
  %v1144 = vxor.u32 %v1128, 2147483648
  %v1145 = vxor.u32 %v1129, 2147483648
  %v1146 = vxor.u32 %v1130, 2147483648
  %v1147 = vxor.u32 %v1131, 2147483648
  %v1148 = vxor.u32 %v1132, 2147483648
  %v1149 = vxor.u32 %v1133, 2147483648
  %v1150 = vxor.u32 %v1134, 2147483648
  %v1151 = vxor.u32 %v1135, 2147483648
  %v1152 = vmul.f32 %v1144, 1.442695
  %v1153 = vpow.pop %v1152
  %v1154 = vmul.f32 %v1145, 1.442695
  %v1155 = vpow.pop %v1154
  %v1156 = vmul.f32 %v1146, 1.442695
  %v1157 = vpow.pop %v1156
  %v1158 = vmul.f32 %v1147, 1.442695
  %v1159 = vpow.pop %v1158
  %v1160 = vmul.f32 %v1148, 1.442695
  %v1161 = vpow.pop %v1160
  %v1162 = vmul.f32 %v1149, 1.442695
  %v1163 = vpow.pop %v1162
  %v1164 = vmul.f32 %v1150, 1.442695
  %v1165 = vpow.pop %v1164
  %v1166 = vmul.f32 %v1151, 1.442695
  %v1167 = vpow.pop %v1166
  %v1168 = vadd.f32 %v1153, 1.0
  %v1169 = vadd.f32 %v1155, 1.0
  %v1170 = vadd.f32 %v1157, 1.0
  %v1171 = vadd.f32 %v1159, 1.0
  %v1172 = vadd.f32 %v1161, 1.0
  %v1173 = vadd.f32 %v1163, 1.0
  %v1174 = vadd.f32 %v1165, 1.0
  %v1175 = vadd.f32 %v1167, 1.0
  %v1176 = vrcp.pop %v1168
  %v1177 = vmul.f32 1.0, %v1176
  %v1178 = vrcp.pop %v1169
  %v1179 = vmul.f32 1.0, %v1178
  %v1180 = vrcp.pop %v1170
  %v1181 = vmul.f32 1.0, %v1180
  %v1182 = vrcp.pop %v1171
  %v1183 = vmul.f32 1.0, %v1182
  %v1184 = vrcp.pop %v1172
  %v1185 = vmul.f32 1.0, %v1184
  %v1186 = vrcp.pop %v1173
  %v1187 = vmul.f32 1.0, %v1186
  %v1188 = vrcp.pop %v1174
  %v1189 = vmul.f32 1.0, %v1188
  %v1190 = vrcp.pop %v1175
  %v1191 = vmul.f32 1.0, %v1190
  %v1192 = vrot.slane %v1064, 2
  %v1193 = vrot.slane %v1065, 2
  %v1194 = vrot.slane %v1066, 2
  %v1195 = vrot.slane %v1067, 2
  %v1196 = vrot.slane %v1068, 2
  %v1197 = vrot.slane %v1069, 2
  %v1198 = vrot.slane %v1070, 2
  %v1199 = vrot.slane %v1071, 2
  %v1208 = vtanh.pop %v1192
  %v1209 = vtanh.pop %v1193
  %v1210 = vtanh.pop %v1194
  %v1211 = vtanh.pop %v1195
  %v1212 = vtanh.pop %v1196
  %v1213 = vtanh.pop %v1197
  %v1214 = vtanh.pop %v1198
  %v1215 = vtanh.pop %v1199
  %v1216 = vrot.slane %v1064, 3
  %v1217 = vrot.slane %v1065, 3
  %v1218 = vrot.slane %v1066, 3
  %v1219 = vrot.slane %v1067, 3
  %v1220 = vrot.slane %v1068, 3
  %v1221 = vrot.slane %v1069, 3
  %v1222 = vrot.slane %v1070, 3
  %v1223 = vrot.slane %v1071, 3
  %v1232 = vxor.u32 %v1216, 2147483648
  %v1233 = vxor.u32 %v1217, 2147483648
  %v1234 = vxor.u32 %v1218, 2147483648
  %v1235 = vxor.u32 %v1219, 2147483648
  %v1236 = vxor.u32 %v1220, 2147483648
  %v1237 = vxor.u32 %v1221, 2147483648
  %v1238 = vxor.u32 %v1222, 2147483648
  %v1239 = vxor.u32 %v1223, 2147483648
  %v1240 = vmul.f32 %v1232, 1.442695
  %v1241 = vpow.pop %v1240
  %v1242 = vmul.f32 %v1233, 1.442695
  %v1243 = vpow.pop %v1242
  %v1244 = vmul.f32 %v1234, 1.442695
  %v1245 = vpow.pop %v1244
  %v1246 = vmul.f32 %v1235, 1.442695
  %v1247 = vpow.pop %v1246
  %v1248 = vmul.f32 %v1236, 1.442695
  %v1249 = vpow.pop %v1248
  %v1250 = vmul.f32 %v1237, 1.442695
  %v1251 = vpow.pop %v1250
  %v1252 = vmul.f32 %v1238, 1.442695
  %v1253 = vpow.pop %v1252
  %v1254 = vmul.f32 %v1239, 1.442695
  %v1255 = vpow.pop %v1254
  %v1256 = vadd.f32 %v1241, 1.0
  %v1257 = vadd.f32 %v1243, 1.0
  %v1258 = vadd.f32 %v1245, 1.0
  %v1259 = vadd.f32 %v1247, 1.0
  %v1260 = vadd.f32 %v1249, 1.0
  %v1261 = vadd.f32 %v1251, 1.0
  %v1262 = vadd.f32 %v1253, 1.0
  %v1263 = vadd.f32 %v1255, 1.0
  %v1264 = vrcp.pop %v1256
  %v1265 = vmul.f32 1.0, %v1264
  %v1266 = vrcp.pop %v1257
  %v1267 = vmul.f32 1.0, %v1266
  %v1268 = vrcp.pop %v1258
  %v1269 = vmul.f32 1.0, %v1268
  %v1270 = vrcp.pop %v1259
  %v1271 = vmul.f32 1.0, %v1270
  %v1272 = vrcp.pop %v1260
  %v1273 = vmul.f32 1.0, %v1272
  %v1274 = vrcp.pop %v1261
  %v1275 = vmul.f32 1.0, %v1274
  %v1276 = vrcp.pop %v1262
  %v1277 = vmul.f32 1.0, %v1276
  %v1278 = vrcp.pop %v1263
  %v1279 = vmul.f32 1.0, %v1278
  %v1281 = vcombine.high %v761, %v761
  %v1283 = vunpack.c.l.s4 1966171168
  %v1284 = vunpack.c.0.s8 %v1283
  %v1285 = vlaneseq
  %v1286 = vshrl.u32 %v1285, 7
  %v1287 = vsub.s32 %v1284, %v1286
  %v1288 = vrot.slane %v761, %v1287
  %v1290 = vunpack.c.l.s4 1966171168
  %v1291 = vunpack.c.0.s8 %v1290
  %v1292 = vlaneseq
  %v1293 = vshrl.u32 %v1292, 7
  %v1294 = vsub.s32 %v1291, %v1293
  %v1295 = vrot.slane %v1281, %v1294
  %v1296 = vcombine.high %v1288, %v1288
  %v1297 = vcombine.high %v1295, %v1295
  %v1299 = vunpack.c.l.s4 1966171168
  %v1300 = vunpack.c.0.s8 %v1299
  %v1301 = vlaneseq
  %v1302 = vshrl.u32 %v1301, 7
  %v1303 = vsub.s32 %v1300, %v1302
  %v1304 = vrot.slane %v1288, %v1303
  %v1306 = vunpack.c.l.s4 1966171168
  %v1307 = vunpack.c.0.s8 %v1306
  %v1308 = vlaneseq
  %v1309 = vshrl.u32 %v1308, 7
  %v1310 = vsub.s32 %v1307, %v1309
  %v1311 = vrot.slane %v1295, %v1310
  %v1313 = vunpack.c.l.s4 1966171168
  %v1314 = vunpack.c.0.s8 %v1313
  %v1315 = vlaneseq
  %v1316 = vshrl.u32 %v1315, 7
  %v1317 = vsub.s32 %v1314, %v1316
  %v1318 = vrot.slane %v1296, %v1317
  %v1320 = vunpack.c.l.s4 1966171168
  %v1321 = vunpack.c.0.s8 %v1320
  %v1322 = vlaneseq
  %v1323 = vshrl.u32 %v1322, 7
  %v1324 = vsub.s32 %v1321, %v1323
  %v1325 = vrot.slane %v1297, %v1324
  %v1326 = vcombine.high %v1304, %v1304
  %v1327 = vcombine.high %v1311, %v1311
  %v1328 = vcombine.high %v1318, %v1318
  %v1329 = vcombine.high %v1325, %v1325
  %v1338 = vmul.f32 %v1177, %v1304
  %v1339 = vmul.f32 %v1179, %v1318
  %v1340 = vmul.f32 %v1181, %v1326
  %v1341 = vmul.f32 %v1183, %v1328
  %v1342 = vmul.f32 %v1185, %v1311
  %v1343 = vmul.f32 %v1187, %v1325
  %v1344 = vmul.f32 %v1189, %v1327
  %v1345 = vmul.f32 %v1191, %v1329
  %v1346 = vmul.f32 %v1105, %v1208
  %v1347 = vmul.f32 %v1107, %v1209
  %v1348 = vmul.f32 %v1109, %v1210
  %v1349 = vmul.f32 %v1111, %v1211
  %v1350 = vmul.f32 %v1113, %v1212
  %v1351 = vmul.f32 %v1115, %v1213
  %v1352 = vmul.f32 %v1117, %v1214
  %v1353 = vmul.f32 %v1119, %v1215
  %v1354 = vadd.f32 %v1338, %v1346
  %v1355 = vadd.f32 %v1339, %v1347
  %v1356 = vadd.f32 %v1340, %v1348
  %v1357 = vadd.f32 %v1341, %v1349
  %v1358 = vadd.f32 %v1342, %v1350
  %v1359 = vadd.f32 %v1343, %v1351
  %v1360 = vadd.f32 %v1344, %v1352
  %v1361 = vadd.f32 %v1345, %v1353
  %v1362 = vtanh.pop %v1354
  %v1363 = vtanh.pop %v1355
  %v1364 = vtanh.pop %v1356
  %v1365 = vtanh.pop %v1357
  %v1366 = vtanh.pop %v1358
  %v1367 = vtanh.pop %v1359
  %v1368 = vtanh.pop %v1360
  %v1369 = vtanh.pop %v1361
  %v1370 = vmul.f32 %v1265, %v1362
  %v1371 = vmul.f32 %v1267, %v1363
  %v1372 = vmul.f32 %v1269, %v1364
  %v1373 = vmul.f32 %v1271, %v1365
  %v1374 = vmul.f32 %v1273, %v1366
  %v1375 = vmul.f32 %v1275, %v1367
  %v1376 = vmul.f32 %v1277, %v1368
  %v1377 = vmul.f32 %v1279, %v1369
  %v1386 = vcombine.low %v1354, %v1355
  %v1387 = vcombine.low %v1356, %v1357
  %v1388 = vcombine.low %v1358, %v1359
  %v1389 = vcombine.low %v1360, %v1361
  %v1391 = vunpack.c.l.s4 1966171168
  %v1392 = vunpack.c.0.s8 %v1391
  %v1393 = vlaneseq
  %v1394 = vshrl.u32 %v1393, 7
  %v1395 = vsub.s32 %v1392, %v1394
  %v1396 = vrot.slane %v1386, %v1395
  %v1398 = vunpack.c.l.s4 1966171168
  %v1399 = vunpack.c.0.s8 %v1398
  %v1400 = vlaneseq
  %v1401 = vshrl.u32 %v1400, 7
  %v1402 = vsub.s32 %v1399, %v1401
  %v1403 = vrot.slane %v1387, %v1402
  %v1405 = vunpack.c.l.s4 1966171168
  %v1406 = vunpack.c.0.s8 %v1405
  %v1407 = vlaneseq
  %v1408 = vshrl.u32 %v1407, 7
  %v1409 = vsub.s32 %v1406, %v1408
  %v1410 = vrot.slane %v1388, %v1409
  %v1412 = vunpack.c.l.s4 1966171168
  %v1413 = vunpack.c.0.s8 %v1412
  %v1414 = vlaneseq
  %v1415 = vshrl.u32 %v1414, 7
  %v1416 = vsub.s32 %v1413, %v1415
  %v1417 = vrot.slane %v1389, %v1416
  %v1418 = vcombine.low %v1396, %v1403
  %v1419 = vcombine.low %v1410, %v1417
  %v1421 = vunpack.c.l.s4 1966171168
  %v1422 = vunpack.c.0.s8 %v1421
  %v1423 = vlaneseq
  %v1424 = vshrl.u32 %v1423, 7
  %v1425 = vsub.s32 %v1422, %v1424
  %v1426 = vrot.slane %v1418, %v1425
  %v1428 = vunpack.c.l.s4 1966171168
  %v1429 = vunpack.c.0.s8 %v1428
  %v1430 = vlaneseq
  %v1431 = vshrl.u32 %v1430, 7
  %v1432 = vsub.s32 %v1429, %v1431
  %v1433 = vrot.slane %v1419, %v1432
  %v1434 = vcombine.low %v1426, %v1433
  %1436 = vst [vmem:[#allocation3] sm:$0xff] %v1434
  %v1445 = vcombine.low %v1370, %v1371
  %v1446 = vcombine.low %v1372, %v1373
  %v1447 = vcombine.low %v1374, %v1375
  %v1448 = vcombine.low %v1376, %v1377
  %v1450 = vunpack.c.l.s4 1966171168
  %v1451 = vunpack.c.0.s8 %v1450
  %v1452 = vlaneseq
  %v1453 = vshrl.u32 %v1452, 7
  %v1454 = vsub.s32 %v1451, %v1453
  %v1455 = vrot.slane %v1445, %v1454
  %v1457 = vunpack.c.l.s4 1966171168
  %v1458 = vunpack.c.0.s8 %v1457
  %v1459 = vlaneseq
  %v1460 = vshrl.u32 %v1459, 7
  %v1461 = vsub.s32 %v1458, %v1460
  %v1462 = vrot.slane %v1446, %v1461
  %v1464 = vunpack.c.l.s4 1966171168
  %v1465 = vunpack.c.0.s8 %v1464
  %v1466 = vlaneseq
  %v1467 = vshrl.u32 %v1466, 7
  %v1468 = vsub.s32 %v1465, %v1467
  %v1469 = vrot.slane %v1447, %v1468
  %v1471 = vunpack.c.l.s4 1966171168
  %v1472 = vunpack.c.0.s8 %v1471
  %v1473 = vlaneseq
  %v1474 = vshrl.u32 %v1473, 7
  %v1475 = vsub.s32 %v1472, %v1474
  %v1476 = vrot.slane %v1448, %v1475
  %v1477 = vcombine.low %v1455, %v1462
  %v1478 = vcombine.low %v1469, %v1476
  %v1480 = vunpack.c.l.s4 1966171168
  %v1481 = vunpack.c.0.s8 %v1480
  %v1482 = vlaneseq
  %v1483 = vshrl.u32 %v1482, 7
  %v1484 = vsub.s32 %v1481, %v1483
  %v1485 = vrot.slane %v1477, %v1484
  %v1487 = vunpack.c.l.s4 1966171168
  %v1488 = vunpack.c.0.s8 %v1487
  %v1489 = vlaneseq
  %v1490 = vshrl.u32 %v1489, 7
  %v1491 = vsub.s32 %v1488, %v1490
  %v1492 = vrot.slane %v1478, %v1491
  %v1493 = vcombine.low %v1485, %v1492
  %1495 = vst [vmem:[#allocation2] sm:$0xff] %v1493
  %1496 = vst [vmem:[%s2 + $0x1] sm:$0x1] %v1370
  %1497 = vst [vmem:[%s2 + $0x9] sm:$0x1] %v1371
  %1498 = vst [vmem:[%s2 + $0x11] sm:$0x1] %v1372
  %1499 = vst [vmem:[%s2 + $0x19] sm:$0x1] %v1373
  %1500 = vst [vmem:[%s2 + $0x21] sm:$0x1] %v1374
  %1501 = vst [vmem:[%s2 + $0x29] sm:$0x1] %v1375
  %1502 = vst [vmem:[%s2 + $0x31] sm:$0x1] %v1376
  %1503 = vst [vmem:[%s2 + $0x39] sm:$0x1] %v1377
  %v1504 = vld [vmem:[#allocation2] sm:$0xff]
  %v1505 = vld [vmem:[#allocation3] sm:$0xff]
  %s1506 = scalar_lea.vmem %s0, 2
  %v1507 = vld [vmem:[%s1506] ss:$8 sm:$0xf]
  %s1508 = scalar_lea.vmem %s0, 34
  %v1509 = vld [vmem:[%s1508] ss:$8 sm:$0xf]
  %s1510 = scalar_lea.vmem %s0, 66
  %v1511 = vld [vmem:[%s1510] ss:$8 sm:$0xf]
  %s1512 = scalar_lea.vmem %s0, 98
  %v1513 = vld [vmem:[%s1512] ss:$8 sm:$0xf]
  %s1514 = scalar_lea.vmem %s0, 130
  %v1515 = vld [vmem:[%s1514] ss:$8 sm:$0xf]
  %s1516 = scalar_lea.vmem %s0, 162
  %v1517 = vld [vmem:[%s1516] ss:$8 sm:$0xf]
  %s1518 = scalar_lea.vmem %s0, 194
  %v1519 = vld [vmem:[%s1518] ss:$8 sm:$0xf]
  %s1520 = scalar_lea.vmem %s0, 226
  %v1521 = vld [vmem:[%s1520] ss:$8 sm:$0xf]
  %v1522 = vld [vmem:[%s1] sm:$0xff]
  %v1523 = vld [vmem:[%s1 + $0x8] sm:$0xff]
  %v1524 = vld [vmem:[%s1 + $0x10] sm:$0xff]
  %v1525 = vld [vmem:[%s1 + $0x18] sm:$0xff]
  %v1526 = vld [vmem:[%s1 + $0x20] sm:$0xff]
  %v1527 = vld [vmem:[%s1 + $0x28] sm:$0xff]
  %v1528 = vld [vmem:[%s1 + $0x30] sm:$0xff]
  %v1529 = vld [vmem:[%s1 + $0x38] sm:$0xff]
  %v1530 = vld [vmem:[%s1 + $0x40] sm:$0xff]
  %v1531 = vld [vmem:[%s1 + $0x48] sm:$0xff]
  %v1532 = vld [vmem:[%s1 + $0x50] sm:$0xff]
  %v1533 = vld [vmem:[%s1 + $0x58] sm:$0xff]
  %v1534 = vld [vmem:[%s1 + $0x60] sm:$0xff]
  %v1535 = vld [vmem:[%s1 + $0x68] sm:$0xff]
  %v1536 = vld [vmem:[%s1 + $0x70] sm:$0xff]
  %v1537 = vld [vmem:[%s1 + $0x78] sm:$0xff]
  %v1538 = vld [vmem:[%s1 + $0x80] sm:$0xff]
  %v1539 = vld [vmem:[%s1 + $0x88] sm:$0xff]
  %v1540 = vld [vmem:[%s1 + $0x90] sm:$0xff]
  %v1541 = vld [vmem:[%s1 + $0x98] sm:$0xff]
  %v1542 = vld [vmem:[%s1 + $0xa0] sm:$0xff]
  %v1543 = vld [vmem:[%s1 + $0xa8] sm:$0xff]
  %v1544 = vld [vmem:[%s1 + $0xb0] sm:$0xff]
  %v1545 = vld [vmem:[%s1 + $0xb8] sm:$0xff]
  %v1546 = vld [vmem:[%s1 + $0xc0] sm:$0xff]
  %v1547 = vld [vmem:[%s1 + $0xc8] sm:$0xff]
  %v1548 = vld [vmem:[%s1 + $0xd0] sm:$0xff]
  %v1549 = vld [vmem:[%s1 + $0xd8] sm:$0xff]
  %v1550 = vld [vmem:[%s1 + $0xe0] sm:$0xff]
  %v1551 = vld [vmem:[%s1 + $0xe8] sm:$0xff]
  %v1552 = vld [vmem:[%s1 + $0xf0] sm:$0xff]
  %v1553 = vld [vmem:[%s1 + $0xf8] sm:$0xff]
  %v1554 = vld [vmem:[%s1 + $0x100] sm:$0xff]
  %v1555 = vld [vmem:[%s1 + $0x108] sm:$0xff]
  %v1556 = vld [vmem:[%s1 + $0x110] sm:$0xff]
  %v1557 = vld [vmem:[%s1 + $0x118] sm:$0xff]
  %v1558 = vld [vmem:[%s1 + $0x120] sm:$0xff]
  %v1559 = vld [vmem:[%s1 + $0x128] sm:$0xff]
  %v1560 = vld [vmem:[%s1 + $0x130] sm:$0xff]
  %v1561 = vld [vmem:[%s1 + $0x138] sm:$0xff]
  %v1562 = vld [vmem:[%s1 + $0x140] sm:$0xff]
  %v1563 = vld [vmem:[%s1 + $0x148] sm:$0xff]
  %v1564 = vld [vmem:[%s1 + $0x150] sm:$0xff]
  %v1565 = vld [vmem:[%s1 + $0x158] sm:$0xff]
  %v1566 = vld [vmem:[%s1 + $0x160] sm:$0xff]
  %v1567 = vld [vmem:[%s1 + $0x168] sm:$0xff]
  %v1568 = vld [vmem:[%s1 + $0x170] sm:$0xff]
  %v1569 = vld [vmem:[%s1 + $0x178] sm:$0xff]
  %v1570 = vld [vmem:[%s1 + $0x180] sm:$0xff]
  %v1571 = vld [vmem:[%s1 + $0x188] sm:$0xff]
  %v1572 = vld [vmem:[%s1 + $0x190] sm:$0xff]
  %v1573 = vld [vmem:[%s1 + $0x198] sm:$0xff]
  %v1574 = vld [vmem:[%s1 + $0x1a0] sm:$0xff]
  %v1575 = vld [vmem:[%s1 + $0x1a8] sm:$0xff]
  %v1576 = vld [vmem:[%s1 + $0x1b0] sm:$0xff]
  %v1577 = vld [vmem:[%s1 + $0x1b8] sm:$0xff]
  %v1578 = vld [vmem:[%s1 + $0x1c0] sm:$0xff]
  %v1579 = vld [vmem:[%s1 + $0x1c8] sm:$0xff]
  %v1580 = vld [vmem:[%s1 + $0x1d0] sm:$0xff]
  %v1581 = vld [vmem:[%s1 + $0x1d8] sm:$0xff]
  %v1582 = vld [vmem:[%s1 + $0x1e0] sm:$0xff]
  %v1583 = vld [vmem:[%s1 + $0x1e8] sm:$0xff]
  %v1584 = vld [vmem:[%s1 + $0x1f0] sm:$0xff]
  %v1585 = vld [vmem:[%s1 + $0x1f8] sm:$0xff]
  %1586 = vmatprep.subr.mxu0 %v1523
  %1587 = vmatpush1.msra.mxu0 %v1522
  %1588 = vmatprep.subr.mxu0 %v1527
  %1589 = vmatpush1.msra.mxu0 %v1526
  %1590 = vmatprep.subr.mxu0 %v1531
  %1591 = vmatpush1.msra.mxu0 %v1530
  %1592 = vmatprep.subr.mxu0 %v1535
  %1593 = vmatpush1.msra.mxu0 %v1534
  %1594 = vmatprep.subr.mxu0 %v1539
  %1595 = vmatpush1.msra.mxu0 %v1538
  %1596 = vmatprep.subr.mxu0 %v1543
  %1597 = vmatpush1.msra.mxu0 %v1542
  %1598 = vmatprep.subr.mxu0 %v1547
  %1599 = vmatpush1.msra.mxu0 %v1546
  %1600 = vmatprep.subr.mxu0 %v1551
  %1601 = vmatpush1.msra.mxu0 %v1550
  %1602 = vmatprep.subr.mxu0 %v1555
  %1603 = vmatpush1.msra.mxu0 %v1554
  %1604 = vmatprep.subr.mxu0 %v1559
  %1605 = vmatpush1.msra.mxu0 %v1558
  %1606 = vmatprep.subr.mxu0 %v1563
  %1607 = vmatpush1.msra.mxu0 %v1562
  %1608 = vmatprep.subr.mxu0 %v1567
  %1609 = vmatpush1.msra.mxu0 %v1566
  %1610 = vmatprep.subr.mxu0 %v1571
  %1611 = vmatpush1.msra.mxu0 %v1570
  %1612 = vmatprep.subr.mxu0 %v1575
  %1613 = vmatpush1.msra.mxu0 %v1574
  %1614 = vmatprep.subr.mxu0 %v1579
  %1615 = vmatpush1.msra.mxu0 %v1578
  %1616 = vmatprep.subr.mxu0 %v1583
  %1617 = vmatpush1.msra.mxu0 %v1582
  %1618 = vmatprep.subr.mxu0 0.0
  %1619 = vmatpush1.msra.mxu0 0.0
  %1620 = vmatprep.subr.mxu0 0.0
  %1621 = vmatpush1.msra.mxu0 0.0
  %1622 = vmatprep.subr.mxu0 0.0
  %1623 = vmatpush1.msra.mxu0 0.0
  %1624 = vmatprep.subr.mxu0 0.0
  %1625 = vmatpush1.msra.mxu0 0.0
  %1626 = vmatprep.subr.mxu0 0.0
  %1627 = vmatpush1.msra.mxu0 0.0
  %1628 = vmatprep.subr.mxu0 0.0
  %1629 = vmatpush1.msra.mxu0 0.0
  %1630 = vmatprep.subr.mxu0 0.0
  %1631 = vmatpush1.msra.mxu0 0.0
  %1632 = vmatprep.subr.mxu0 0.0
  %1633 = vmatpush1.msra.mxu0 0.0
  %1634 = vmatprep.subr.mxu0 0.0
  %1635 = vmatpush1.msra.mxu0 0.0
  %1636 = vmatprep.subr.mxu0 0.0
  %1637 = vmatpush1.msra.mxu0 0.0
  %1638 = vmatprep.subr.mxu0 0.0
  %1639 = vmatpush1.msra.mxu0 0.0
  %1640 = vmatprep.subr.mxu0 0.0
  %1641 = vmatpush1.msra.mxu0 0.0
  %1642 = vmatprep.subr.mxu0 0.0
  %1643 = vmatpush1.msra.mxu0 0.0
  %1644 = vmatprep.subr.mxu0 0.0
  %1645 = vmatpush1.msra.mxu0 0.0
  %1646 = vmatprep.subr.mxu0 0.0
  %1647 = vmatpush1.msra.mxu0 0.0
  %1648 = vmatprep.subr.mxu0 0.0
  %1649 = vmatpush1.msra.mxu0 0.0
  %1650 = vmatprep.mubr.f32.mxu0 0.0
  %1651 = vmatmul.mubr.f32.gmra.mrb[0].mxu0 %v1504
  %v1652 = vpop.f32.mrb[0].mxu0
  %v1653 = vadd.f32 0.0, %v1652
  %v1654 = vpop.f32.mrb[0].mxu0
  %v1655 = vadd.f32 0.0, %v1654
  %1656 = vdwg.mxu0
  %1657 = vmatprep.subr.mxu0 %v1525
  %1658 = vmatpush1.msra.mxu0 %v1524
  %1659 = vmatprep.subr.mxu0 %v1529
  %1660 = vmatpush1.msra.mxu0 %v1528
  %1661 = vmatprep.subr.mxu0 %v1533
  %1662 = vmatpush1.msra.mxu0 %v1532
  %1663 = vmatprep.subr.mxu0 %v1537
  %1664 = vmatpush1.msra.mxu0 %v1536
  %1665 = vmatprep.subr.mxu0 %v1541
  %1666 = vmatpush1.msra.mxu0 %v1540
  %1667 = vmatprep.subr.mxu0 %v1545
  %1668 = vmatpush1.msra.mxu0 %v1544
  %1669 = vmatprep.subr.mxu0 %v1549
  %1670 = vmatpush1.msra.mxu0 %v1548
  %1671 = vmatprep.subr.mxu0 %v1553
  %1672 = vmatpush1.msra.mxu0 %v1552
  %1673 = vmatprep.subr.mxu0 %v1557
  %1674 = vmatpush1.msra.mxu0 %v1556
  %1675 = vmatprep.subr.mxu0 %v1561
  %1676 = vmatpush1.msra.mxu0 %v1560
  %1677 = vmatprep.subr.mxu0 %v1565
  %1678 = vmatpush1.msra.mxu0 %v1564
  %1679 = vmatprep.subr.mxu0 %v1569
  %1680 = vmatpush1.msra.mxu0 %v1568
  %1681 = vmatprep.subr.mxu0 %v1573
  %1682 = vmatpush1.msra.mxu0 %v1572
  %1683 = vmatprep.subr.mxu0 %v1577
  %1684 = vmatpush1.msra.mxu0 %v1576
  %1685 = vmatprep.subr.mxu0 %v1581
  %1686 = vmatpush1.msra.mxu0 %v1580
  %1687 = vmatprep.subr.mxu0 %v1585
  %1688 = vmatpush1.msra.mxu0 %v1584
  %1689 = vmatprep.subr.mxu0 0.0
  %1690 = vmatpush1.msra.mxu0 0.0
  %1691 = vmatprep.subr.mxu0 0.0
  %1692 = vmatpush1.msra.mxu0 0.0
  %1693 = vmatprep.subr.mxu0 0.0
  %1694 = vmatpush1.msra.mxu0 0.0
  %1695 = vmatprep.subr.mxu0 0.0
  %1696 = vmatpush1.msra.mxu0 0.0
  %1697 = vmatprep.subr.mxu0 0.0
  %1698 = vmatpush1.msra.mxu0 0.0
  %1699 = vmatprep.subr.mxu0 0.0
  %1700 = vmatpush1.msra.mxu0 0.0
  %1701 = vmatprep.subr.mxu0 0.0
  %1702 = vmatpush1.msra.mxu0 0.0
  %1703 = vmatprep.subr.mxu0 0.0
  %1704 = vmatpush1.msra.mxu0 0.0
  %1705 = vmatprep.subr.mxu0 0.0
  %1706 = vmatpush1.msra.mxu0 0.0
  %1707 = vmatprep.subr.mxu0 0.0
  %1708 = vmatpush1.msra.mxu0 0.0
  %1709 = vmatprep.subr.mxu0 0.0
  %1710 = vmatpush1.msra.mxu0 0.0
  %1711 = vmatprep.subr.mxu0 0.0
  %1712 = vmatpush1.msra.mxu0 0.0
  %1713 = vmatprep.subr.mxu0 0.0
  %1714 = vmatpush1.msra.mxu0 0.0
  %1715 = vmatprep.subr.mxu0 0.0
  %1716 = vmatpush1.msra.mxu0 0.0
  %1717 = vmatprep.subr.mxu0 0.0
  %1718 = vmatpush1.msra.mxu0 0.0
  %1719 = vmatprep.subr.mxu0 0.0
  %1720 = vmatpush1.msra.mxu0 0.0
  %1721 = vmatprep.mubr.f32.mxu0 0.0
  %1722 = vmatmul.mubr.f32.gmra.mrb[0].mxu0 %v1504
  %v1723 = vpop.f32.mrb[0].mxu0
  %v1724 = vadd.f32 0.0, %v1723
  %v1725 = vpop.f32.mrb[0].mxu0
  %v1726 = vadd.f32 0.0, %v1725
  %1727 = vdwg.mxu0
  %v1732 = vcombine.low %v1653, %v1655
  %v1733 = vcombine.high %v1653, %v1655
  %v1734 = vcombine.low %v1724, %v1726
  %v1735 = vcombine.high %v1724, %v1726
  %v1737 = vunpack.c.l.s4 1966171168
  %v1738 = vunpack.c.0.s8 %v1737
  %v1739 = vlaneseq
  %v1740 = vshrl.u32 %v1739, 7
  %v1741 = vsub.s32 %v1738, %v1740
  %v1742 = vrot.slane %v1732, %v1741
  %v1744 = vunpack.c.l.s4 1966171168
  %v1745 = vunpack.c.0.s8 %v1744
  %v1746 = vlaneseq
  %v1747 = vshrl.u32 %v1746, 7
  %v1748 = vsub.s32 %v1745, %v1747
  %v1749 = vrot.slane %v1733, %v1748
  %v1751 = vunpack.c.l.s4 1966171168
  %v1752 = vunpack.c.0.s8 %v1751
  %v1753 = vlaneseq
  %v1754 = vshrl.u32 %v1753, 7
  %v1755 = vsub.s32 %v1752, %v1754
  %v1756 = vrot.slane %v1734, %v1755
  %v1758 = vunpack.c.l.s4 1966171168
  %v1759 = vunpack.c.0.s8 %v1758
  %v1760 = vlaneseq
  %v1761 = vshrl.u32 %v1760, 7
  %v1762 = vsub.s32 %v1759, %v1761
  %v1763 = vrot.slane %v1735, %v1762
  %v1764 = vcombine.low %v1742, %v1756
  %v1765 = vcombine.high %v1742, %v1756
  %v1766 = vcombine.low %v1749, %v1763
  %v1767 = vcombine.high %v1749, %v1763
  %v1769 = vunpack.c.l.s4 1966171168
  %v1770 = vunpack.c.0.s8 %v1769
  %v1771 = vlaneseq
  %v1772 = vshrl.u32 %v1771, 7
  %v1773 = vsub.s32 %v1770, %v1772
  %v1774 = vrot.slane %v1764, %v1773
  %v1776 = vunpack.c.l.s4 1966171168
  %v1777 = vunpack.c.0.s8 %v1776
  %v1778 = vlaneseq
  %v1779 = vshrl.u32 %v1778, 7
  %v1780 = vsub.s32 %v1777, %v1779
  %v1781 = vrot.slane %v1766, %v1780
  %v1783 = vunpack.c.l.s4 1966171168
  %v1784 = vunpack.c.0.s8 %v1783
  %v1785 = vlaneseq
  %v1786 = vshrl.u32 %v1785, 7
  %v1787 = vsub.s32 %v1784, %v1786
  %v1788 = vrot.slane %v1765, %v1787
  %v1790 = vunpack.c.l.s4 1966171168
  %v1791 = vunpack.c.0.s8 %v1790
  %v1792 = vlaneseq
  %v1793 = vshrl.u32 %v1792, 7
  %v1794 = vsub.s32 %v1791, %v1793
  %v1795 = vrot.slane %v1767, %v1794
  %v1796 = vcombine.high %v1774, %v1774
  %v1797 = vcombine.high %v1781, %v1781
  %v1798 = vcombine.high %v1788, %v1788
  %v1799 = vcombine.high %v1795, %v1795
  %v1808 = vadd.f32 %v1507, %v1774
  %v1809 = vadd.f32 %v1509, %v1788
  %v1810 = vadd.f32 %v1511, %v1796
  %v1811 = vadd.f32 %v1513, %v1798
  %v1812 = vadd.f32 %v1515, %v1781
  %v1813 = vadd.f32 %v1517, %v1795
  %v1814 = vadd.f32 %v1519, %v1797
  %v1815 = vadd.f32 %v1521, %v1799
  %v1816 = vxor.u32 %v1808, 2147483648
  %v1817 = vxor.u32 %v1809, 2147483648
  %v1818 = vxor.u32 %v1810, 2147483648
  %v1819 = vxor.u32 %v1811, 2147483648
  %v1820 = vxor.u32 %v1812, 2147483648
  %v1821 = vxor.u32 %v1813, 2147483648
  %v1822 = vxor.u32 %v1814, 2147483648
  %v1823 = vxor.u32 %v1815, 2147483648
  %v1824 = vmul.f32 %v1816, 1.442695
  %v1825 = vpow.pop %v1824
  %v1826 = vmul.f32 %v1817, 1.442695
  %v1827 = vpow.pop %v1826
  %v1828 = vmul.f32 %v1818, 1.442695
  %v1829 = vpow.pop %v1828
  %v1830 = vmul.f32 %v1819, 1.442695
  %v1831 = vpow.pop %v1830
  %v1832 = vmul.f32 %v1820, 1.442695
  %v1833 = vpow.pop %v1832
  %v1834 = vmul.f32 %v1821, 1.442695
  %v1835 = vpow.pop %v1834
  %v1836 = vmul.f32 %v1822, 1.442695
  %v1837 = vpow.pop %v1836
  %v1838 = vmul.f32 %v1823, 1.442695
  %v1839 = vpow.pop %v1838
  %v1840 = vadd.f32 %v1825, 1.0
  %v1841 = vadd.f32 %v1827, 1.0
  %v1842 = vadd.f32 %v1829, 1.0
  %v1843 = vadd.f32 %v1831, 1.0
  %v1844 = vadd.f32 %v1833, 1.0
  %v1845 = vadd.f32 %v1835, 1.0
  %v1846 = vadd.f32 %v1837, 1.0
  %v1847 = vadd.f32 %v1839, 1.0
  %v1848 = vrcp.pop %v1840
  %v1849 = vmul.f32 1.0, %v1848
  %v1850 = vrcp.pop %v1841
  %v1851 = vmul.f32 1.0, %v1850
  %v1852 = vrcp.pop %v1842
  %v1853 = vmul.f32 1.0, %v1852
  %v1854 = vrcp.pop %v1843
  %v1855 = vmul.f32 1.0, %v1854
  %v1856 = vrcp.pop %v1844
  %v1857 = vmul.f32 1.0, %v1856
  %v1858 = vrcp.pop %v1845
  %v1859 = vmul.f32 1.0, %v1858
  %v1860 = vrcp.pop %v1846
  %v1861 = vmul.f32 1.0, %v1860
  %v1862 = vrcp.pop %v1847
  %v1863 = vmul.f32 1.0, %v1862
  %v1872 = vrot.slane %v1808, 1
  %v1873 = vrot.slane %v1809, 1
  %v1874 = vrot.slane %v1810, 1
  %v1875 = vrot.slane %v1811, 1
  %v1876 = vrot.slane %v1812, 1
  %v1877 = vrot.slane %v1813, 1
  %v1878 = vrot.slane %v1814, 1
  %v1879 = vrot.slane %v1815, 1
  %v1888 = vxor.u32 %v1872, 2147483648
  %v1889 = vxor.u32 %v1873, 2147483648
  %v1890 = vxor.u32 %v1874, 2147483648
  %v1891 = vxor.u32 %v1875, 2147483648
  %v1892 = vxor.u32 %v1876, 2147483648
  %v1893 = vxor.u32 %v1877, 2147483648
  %v1894 = vxor.u32 %v1878, 2147483648
  %v1895 = vxor.u32 %v1879, 2147483648
  %v1896 = vmul.f32 %v1888, 1.442695
  %v1897 = vpow.pop %v1896
  %v1898 = vmul.f32 %v1889, 1.442695
  %v1899 = vpow.pop %v1898
  %v1900 = vmul.f32 %v1890, 1.442695
  %v1901 = vpow.pop %v1900
  %v1902 = vmul.f32 %v1891, 1.442695
  %v1903 = vpow.pop %v1902
  %v1904 = vmul.f32 %v1892, 1.442695
  %v1905 = vpow.pop %v1904
  %v1906 = vmul.f32 %v1893, 1.442695
  %v1907 = vpow.pop %v1906
  %v1908 = vmul.f32 %v1894, 1.442695
  %v1909 = vpow.pop %v1908
  %v1910 = vmul.f32 %v1895, 1.442695
  %v1911 = vpow.pop %v1910
  %v1912 = vadd.f32 %v1897, 1.0
  %v1913 = vadd.f32 %v1899, 1.0
  %v1914 = vadd.f32 %v1901, 1.0
  %v1915 = vadd.f32 %v1903, 1.0
  %v1916 = vadd.f32 %v1905, 1.0
  %v1917 = vadd.f32 %v1907, 1.0
  %v1918 = vadd.f32 %v1909, 1.0
  %v1919 = vadd.f32 %v1911, 1.0
  %v1920 = vrcp.pop %v1912
  %v1921 = vmul.f32 1.0, %v1920
  %v1922 = vrcp.pop %v1913
  %v1923 = vmul.f32 1.0, %v1922
  %v1924 = vrcp.pop %v1914
  %v1925 = vmul.f32 1.0, %v1924
  %v1926 = vrcp.pop %v1915
  %v1927 = vmul.f32 1.0, %v1926
  %v1928 = vrcp.pop %v1916
  %v1929 = vmul.f32 1.0, %v1928
  %v1930 = vrcp.pop %v1917
  %v1931 = vmul.f32 1.0, %v1930
  %v1932 = vrcp.pop %v1918
  %v1933 = vmul.f32 1.0, %v1932
  %v1934 = vrcp.pop %v1919
  %v1935 = vmul.f32 1.0, %v1934
  %v1936 = vrot.slane %v1808, 2
  %v1937 = vrot.slane %v1809, 2
  %v1938 = vrot.slane %v1810, 2
  %v1939 = vrot.slane %v1811, 2
  %v1940 = vrot.slane %v1812, 2
  %v1941 = vrot.slane %v1813, 2
  %v1942 = vrot.slane %v1814, 2
  %v1943 = vrot.slane %v1815, 2
  %v1952 = vtanh.pop %v1936
  %v1953 = vtanh.pop %v1937
  %v1954 = vtanh.pop %v1938
  %v1955 = vtanh.pop %v1939
  %v1956 = vtanh.pop %v1940
  %v1957 = vtanh.pop %v1941
  %v1958 = vtanh.pop %v1942
  %v1959 = vtanh.pop %v1943
  %v1960 = vrot.slane %v1808, 3
  %v1961 = vrot.slane %v1809, 3
  %v1962 = vrot.slane %v1810, 3
  %v1963 = vrot.slane %v1811, 3
  %v1964 = vrot.slane %v1812, 3
  %v1965 = vrot.slane %v1813, 3
  %v1966 = vrot.slane %v1814, 3
  %v1967 = vrot.slane %v1815, 3
  %v1976 = vxor.u32 %v1960, 2147483648
  %v1977 = vxor.u32 %v1961, 2147483648
  %v1978 = vxor.u32 %v1962, 2147483648
  %v1979 = vxor.u32 %v1963, 2147483648
  %v1980 = vxor.u32 %v1964, 2147483648
  %v1981 = vxor.u32 %v1965, 2147483648
  %v1982 = vxor.u32 %v1966, 2147483648
  %v1983 = vxor.u32 %v1967, 2147483648
  %v1984 = vmul.f32 %v1976, 1.442695
  %v1985 = vpow.pop %v1984
  %v1986 = vmul.f32 %v1977, 1.442695
  %v1987 = vpow.pop %v1986
  %v1988 = vmul.f32 %v1978, 1.442695
  %v1989 = vpow.pop %v1988
  %v1990 = vmul.f32 %v1979, 1.442695
  %v1991 = vpow.pop %v1990
  %v1992 = vmul.f32 %v1980, 1.442695
  %v1993 = vpow.pop %v1992
  %v1994 = vmul.f32 %v1981, 1.442695
  %v1995 = vpow.pop %v1994
  %v1996 = vmul.f32 %v1982, 1.442695
  %v1997 = vpow.pop %v1996
  %v1998 = vmul.f32 %v1983, 1.442695
  %v1999 = vpow.pop %v1998
  %v2000 = vadd.f32 %v1985, 1.0
  %v2001 = vadd.f32 %v1987, 1.0
  %v2002 = vadd.f32 %v1989, 1.0
  %v2003 = vadd.f32 %v1991, 1.0
  %v2004 = vadd.f32 %v1993, 1.0
  %v2005 = vadd.f32 %v1995, 1.0
  %v2006 = vadd.f32 %v1997, 1.0
  %v2007 = vadd.f32 %v1999, 1.0
  %v2008 = vrcp.pop %v2000
  %v2009 = vmul.f32 1.0, %v2008
  %v2010 = vrcp.pop %v2001
  %v2011 = vmul.f32 1.0, %v2010
  %v2012 = vrcp.pop %v2002
  %v2013 = vmul.f32 1.0, %v2012
  %v2014 = vrcp.pop %v2003
  %v2015 = vmul.f32 1.0, %v2014
  %v2016 = vrcp.pop %v2004
  %v2017 = vmul.f32 1.0, %v2016
  %v2018 = vrcp.pop %v2005
  %v2019 = vmul.f32 1.0, %v2018
  %v2020 = vrcp.pop %v2006
  %v2021 = vmul.f32 1.0, %v2020
  %v2022 = vrcp.pop %v2007
  %v2023 = vmul.f32 1.0, %v2022
  %v2025 = vcombine.high %v1505, %v1505
  %v2027 = vunpack.c.l.s4 1966171168
  %v2028 = vunpack.c.0.s8 %v2027
  %v2029 = vlaneseq
  %v2030 = vshrl.u32 %v2029, 7
  %v2031 = vsub.s32 %v2028, %v2030
  %v2032 = vrot.slane %v1505, %v2031
  %v2034 = vunpack.c.l.s4 1966171168
  %v2035 = vunpack.c.0.s8 %v2034
  %v2036 = vlaneseq
  %v2037 = vshrl.u32 %v2036, 7
  %v2038 = vsub.s32 %v2035, %v2037
  %v2039 = vrot.slane %v2025, %v2038
  %v2040 = vcombine.high %v2032, %v2032
  %v2041 = vcombine.high %v2039, %v2039
  %v2043 = vunpack.c.l.s4 1966171168
  %v2044 = vunpack.c.0.s8 %v2043
  %v2045 = vlaneseq
  %v2046 = vshrl.u32 %v2045, 7
  %v2047 = vsub.s32 %v2044, %v2046
  %v2048 = vrot.slane %v2032, %v2047
  %v2050 = vunpack.c.l.s4 1966171168
  %v2051 = vunpack.c.0.s8 %v2050
  %v2052 = vlaneseq
  %v2053 = vshrl.u32 %v2052, 7
  %v2054 = vsub.s32 %v2051, %v2053
  %v2055 = vrot.slane %v2039, %v2054
  %v2057 = vunpack.c.l.s4 1966171168
  %v2058 = vunpack.c.0.s8 %v2057
  %v2059 = vlaneseq
  %v2060 = vshrl.u32 %v2059, 7
  %v2061 = vsub.s32 %v2058, %v2060
  %v2062 = vrot.slane %v2040, %v2061
  %v2064 = vunpack.c.l.s4 1966171168
  %v2065 = vunpack.c.0.s8 %v2064
  %v2066 = vlaneseq
  %v2067 = vshrl.u32 %v2066, 7
  %v2068 = vsub.s32 %v2065, %v2067
  %v2069 = vrot.slane %v2041, %v2068
  %v2070 = vcombine.high %v2048, %v2048
  %v2071 = vcombine.high %v2055, %v2055
  %v2072 = vcombine.high %v2062, %v2062
  %v2073 = vcombine.high %v2069, %v2069
  %v2082 = vmul.f32 %v1921, %v2048
  %v2083 = vmul.f32 %v1923, %v2062
  %v2084 = vmul.f32 %v1925, %v2070
  %v2085 = vmul.f32 %v1927, %v2072
  %v2086 = vmul.f32 %v1929, %v2055
  %v2087 = vmul.f32 %v1931, %v2069
  %v2088 = vmul.f32 %v1933, %v2071
  %v2089 = vmul.f32 %v1935, %v2073
  %v2090 = vmul.f32 %v1849, %v1952
  %v2091 = vmul.f32 %v1851, %v1953
  %v2092 = vmul.f32 %v1853, %v1954
  %v2093 = vmul.f32 %v1855, %v1955
  %v2094 = vmul.f32 %v1857, %v1956
  %v2095 = vmul.f32 %v1859, %v1957
  %v2096 = vmul.f32 %v1861, %v1958
  %v2097 = vmul.f32 %v1863, %v1959
  %v2098 = vadd.f32 %v2082, %v2090
  %v2099 = vadd.f32 %v2083, %v2091
  %v2100 = vadd.f32 %v2084, %v2092
  %v2101 = vadd.f32 %v2085, %v2093
  %v2102 = vadd.f32 %v2086, %v2094
  %v2103 = vadd.f32 %v2087, %v2095
  %v2104 = vadd.f32 %v2088, %v2096
  %v2105 = vadd.f32 %v2089, %v2097
  %v2106 = vtanh.pop %v2098
  %v2107 = vtanh.pop %v2099
  %v2108 = vtanh.pop %v2100
  %v2109 = vtanh.pop %v2101
  %v2110 = vtanh.pop %v2102
  %v2111 = vtanh.pop %v2103
  %v2112 = vtanh.pop %v2104
  %v2113 = vtanh.pop %v2105
  %v2114 = vmul.f32 %v2009, %v2106
  %v2115 = vmul.f32 %v2011, %v2107
  %v2116 = vmul.f32 %v2013, %v2108
  %v2117 = vmul.f32 %v2015, %v2109
  %v2118 = vmul.f32 %v2017, %v2110
  %v2119 = vmul.f32 %v2019, %v2111
  %v2120 = vmul.f32 %v2021, %v2112
  %v2121 = vmul.f32 %v2023, %v2113
  %v2130 = vcombine.low %v2098, %v2099
  %v2131 = vcombine.low %v2100, %v2101
  %v2132 = vcombine.low %v2102, %v2103
  %v2133 = vcombine.low %v2104, %v2105
  %v2135 = vunpack.c.l.s4 1966171168
  %v2136 = vunpack.c.0.s8 %v2135
  %v2137 = vlaneseq
  %v2138 = vshrl.u32 %v2137, 7
  %v2139 = vsub.s32 %v2136, %v2138
  %v2140 = vrot.slane %v2130, %v2139
  %v2142 = vunpack.c.l.s4 1966171168
  %v2143 = vunpack.c.0.s8 %v2142
  %v2144 = vlaneseq
  %v2145 = vshrl.u32 %v2144, 7
  %v2146 = vsub.s32 %v2143, %v2145
  %v2147 = vrot.slane %v2131, %v2146
  %v2149 = vunpack.c.l.s4 1966171168
  %v2150 = vunpack.c.0.s8 %v2149
  %v2151 = vlaneseq
  %v2152 = vshrl.u32 %v2151, 7
  %v2153 = vsub.s32 %v2150, %v2152
  %v2154 = vrot.slane %v2132, %v2153
  %v2156 = vunpack.c.l.s4 1966171168
  %v2157 = vunpack.c.0.s8 %v2156
  %v2158 = vlaneseq
  %v2159 = vshrl.u32 %v2158, 7
  %v2160 = vsub.s32 %v2157, %v2159
  %v2161 = vrot.slane %v2133, %v2160
  %v2162 = vcombine.low %v2140, %v2147
  %v2163 = vcombine.low %v2154, %v2161
  %v2165 = vunpack.c.l.s4 1966171168
  %v2166 = vunpack.c.0.s8 %v2165
  %v2167 = vlaneseq
  %v2168 = vshrl.u32 %v2167, 7
  %v2169 = vsub.s32 %v2166, %v2168
  %v2170 = vrot.slane %v2162, %v2169
  %v2172 = vunpack.c.l.s4 1966171168
  %v2173 = vunpack.c.0.s8 %v2172
  %v2174 = vlaneseq
  %v2175 = vshrl.u32 %v2174, 7
  %v2176 = vsub.s32 %v2173, %v2175
  %v2177 = vrot.slane %v2163, %v2176
  %v2178 = vcombine.low %v2170, %v2177
  %2180 = vst [vmem:[#allocation3] sm:$0xff] %v2178
  %v2189 = vcombine.low %v2114, %v2115
  %v2190 = vcombine.low %v2116, %v2117
  %v2191 = vcombine.low %v2118, %v2119
  %v2192 = vcombine.low %v2120, %v2121
  %v2194 = vunpack.c.l.s4 1966171168
  %v2195 = vunpack.c.0.s8 %v2194
  %v2196 = vlaneseq
  %v2197 = vshrl.u32 %v2196, 7
  %v2198 = vsub.s32 %v2195, %v2197
  %v2199 = vrot.slane %v2189, %v2198
  %v2201 = vunpack.c.l.s4 1966171168
  %v2202 = vunpack.c.0.s8 %v2201
  %v2203 = vlaneseq
  %v2204 = vshrl.u32 %v2203, 7
  %v2205 = vsub.s32 %v2202, %v2204
  %v2206 = vrot.slane %v2190, %v2205
  %v2208 = vunpack.c.l.s4 1966171168
  %v2209 = vunpack.c.0.s8 %v2208
  %v2210 = vlaneseq
  %v2211 = vshrl.u32 %v2210, 7
  %v2212 = vsub.s32 %v2209, %v2211
  %v2213 = vrot.slane %v2191, %v2212
  %v2215 = vunpack.c.l.s4 1966171168
  %v2216 = vunpack.c.0.s8 %v2215
  %v2217 = vlaneseq
  %v2218 = vshrl.u32 %v2217, 7
  %v2219 = vsub.s32 %v2216, %v2218
  %v2220 = vrot.slane %v2192, %v2219
  %v2221 = vcombine.low %v2199, %v2206
  %v2222 = vcombine.low %v2213, %v2220
  %v2224 = vunpack.c.l.s4 1966171168
  %v2225 = vunpack.c.0.s8 %v2224
  %v2226 = vlaneseq
  %v2227 = vshrl.u32 %v2226, 7
  %v2228 = vsub.s32 %v2225, %v2227
  %v2229 = vrot.slane %v2221, %v2228
  %v2231 = vunpack.c.l.s4 1966171168
  %v2232 = vunpack.c.0.s8 %v2231
  %v2233 = vlaneseq
  %v2234 = vshrl.u32 %v2233, 7
  %v2235 = vsub.s32 %v2232, %v2234
  %v2236 = vrot.slane %v2222, %v2235
  %v2237 = vcombine.low %v2229, %v2236
  %2239 = vst [vmem:[#allocation2] sm:$0xff] %v2237
  %2240 = vst [vmem:[%s2 + $0x2] sm:$0x1] %v2114
  %2241 = vst [vmem:[%s2 + $0xa] sm:$0x1] %v2115
  %2242 = vst [vmem:[%s2 + $0x12] sm:$0x1] %v2116
  %2243 = vst [vmem:[%s2 + $0x1a] sm:$0x1] %v2117
  %2244 = vst [vmem:[%s2 + $0x22] sm:$0x1] %v2118
  %2245 = vst [vmem:[%s2 + $0x2a] sm:$0x1] %v2119
  %2246 = vst [vmem:[%s2 + $0x32] sm:$0x1] %v2120
  %2247 = vst [vmem:[%s2 + $0x3a] sm:$0x1] %v2121
  %v2248 = vld [vmem:[#allocation2] sm:$0xff]
  %v2249 = vld [vmem:[#allocation3] sm:$0xff]
  %s2250 = scalar_lea.vmem %s0, 3
  %v2251 = vld [vmem:[%s2250] ss:$8 sm:$0xf]
  %s2252 = scalar_lea.vmem %s0, 35
  %v2253 = vld [vmem:[%s2252] ss:$8 sm:$0xf]
  %s2254 = scalar_lea.vmem %s0, 67
  %v2255 = vld [vmem:[%s2254] ss:$8 sm:$0xf]
  %s2256 = scalar_lea.vmem %s0, 99
  %v2257 = vld [vmem:[%s2256] ss:$8 sm:$0xf]
  %s2258 = scalar_lea.vmem %s0, 131
  %v2259 = vld [vmem:[%s2258] ss:$8 sm:$0xf]
  %s2260 = scalar_lea.vmem %s0, 163
  %v2261 = vld [vmem:[%s2260] ss:$8 sm:$0xf]
  %s2262 = scalar_lea.vmem %s0, 195
  %v2263 = vld [vmem:[%s2262] ss:$8 sm:$0xf]
  %s2264 = scalar_lea.vmem %s0, 227
  %v2265 = vld [vmem:[%s2264] ss:$8 sm:$0xf]
  %v2266 = vld [vmem:[%s1] sm:$0xff]
  %v2267 = vld [vmem:[%s1 + $0x8] sm:$0xff]
  %v2268 = vld [vmem:[%s1 + $0x10] sm:$0xff]
  %v2269 = vld [vmem:[%s1 + $0x18] sm:$0xff]
  %v2270 = vld [vmem:[%s1 + $0x20] sm:$0xff]
  %v2271 = vld [vmem:[%s1 + $0x28] sm:$0xff]
  %v2272 = vld [vmem:[%s1 + $0x30] sm:$0xff]
  %v2273 = vld [vmem:[%s1 + $0x38] sm:$0xff]
  %v2274 = vld [vmem:[%s1 + $0x40] sm:$0xff]
  %v2275 = vld [vmem:[%s1 + $0x48] sm:$0xff]
  %v2276 = vld [vmem:[%s1 + $0x50] sm:$0xff]
  %v2277 = vld [vmem:[%s1 + $0x58] sm:$0xff]
  %v2278 = vld [vmem:[%s1 + $0x60] sm:$0xff]
  %v2279 = vld [vmem:[%s1 + $0x68] sm:$0xff]
  %v2280 = vld [vmem:[%s1 + $0x70] sm:$0xff]
  %v2281 = vld [vmem:[%s1 + $0x78] sm:$0xff]
  %v2282 = vld [vmem:[%s1 + $0x80] sm:$0xff]
  %v2283 = vld [vmem:[%s1 + $0x88] sm:$0xff]
  %v2284 = vld [vmem:[%s1 + $0x90] sm:$0xff]
  %v2285 = vld [vmem:[%s1 + $0x98] sm:$0xff]
  %v2286 = vld [vmem:[%s1 + $0xa0] sm:$0xff]
  %v2287 = vld [vmem:[%s1 + $0xa8] sm:$0xff]
  %v2288 = vld [vmem:[%s1 + $0xb0] sm:$0xff]
  %v2289 = vld [vmem:[%s1 + $0xb8] sm:$0xff]
  %v2290 = vld [vmem:[%s1 + $0xc0] sm:$0xff]
  %v2291 = vld [vmem:[%s1 + $0xc8] sm:$0xff]
  %v2292 = vld [vmem:[%s1 + $0xd0] sm:$0xff]
  %v2293 = vld [vmem:[%s1 + $0xd8] sm:$0xff]
  %v2294 = vld [vmem:[%s1 + $0xe0] sm:$0xff]
  %v2295 = vld [vmem:[%s1 + $0xe8] sm:$0xff]
  %v2296 = vld [vmem:[%s1 + $0xf0] sm:$0xff]
  %v2297 = vld [vmem:[%s1 + $0xf8] sm:$0xff]
  %v2298 = vld [vmem:[%s1 + $0x100] sm:$0xff]
  %v2299 = vld [vmem:[%s1 + $0x108] sm:$0xff]
  %v2300 = vld [vmem:[%s1 + $0x110] sm:$0xff]
  %v2301 = vld [vmem:[%s1 + $0x118] sm:$0xff]
  %v2302 = vld [vmem:[%s1 + $0x120] sm:$0xff]
  %v2303 = vld [vmem:[%s1 + $0x128] sm:$0xff]
  %v2304 = vld [vmem:[%s1 + $0x130] sm:$0xff]
  %v2305 = vld [vmem:[%s1 + $0x138] sm:$0xff]
  %v2306 = vld [vmem:[%s1 + $0x140] sm:$0xff]
  %v2307 = vld [vmem:[%s1 + $0x148] sm:$0xff]
  %v2308 = vld [vmem:[%s1 + $0x150] sm:$0xff]
  %v2309 = vld [vmem:[%s1 + $0x158] sm:$0xff]
  %v2310 = vld [vmem:[%s1 + $0x160] sm:$0xff]
  %v2311 = vld [vmem:[%s1 + $0x168] sm:$0xff]
  %v2312 = vld [vmem:[%s1 + $0x170] sm:$0xff]
  %v2313 = vld [vmem:[%s1 + $0x178] sm:$0xff]
  %v2314 = vld [vmem:[%s1 + $0x180] sm:$0xff]
  %v2315 = vld [vmem:[%s1 + $0x188] sm:$0xff]
  %v2316 = vld [vmem:[%s1 + $0x190] sm:$0xff]
  %v2317 = vld [vmem:[%s1 + $0x198] sm:$0xff]
  %v2318 = vld [vmem:[%s1 + $0x1a0] sm:$0xff]
  %v2319 = vld [vmem:[%s1 + $0x1a8] sm:$0xff]
  %v2320 = vld [vmem:[%s1 + $0x1b0] sm:$0xff]
  %v2321 = vld [vmem:[%s1 + $0x1b8] sm:$0xff]
  %v2322 = vld [vmem:[%s1 + $0x1c0] sm:$0xff]
  %v2323 = vld [vmem:[%s1 + $0x1c8] sm:$0xff]
  %v2324 = vld [vmem:[%s1 + $0x1d0] sm:$0xff]
  %v2325 = vld [vmem:[%s1 + $0x1d8] sm:$0xff]
  %v2326 = vld [vmem:[%s1 + $0x1e0] sm:$0xff]
  %v2327 = vld [vmem:[%s1 + $0x1e8] sm:$0xff]
  %v2328 = vld [vmem:[%s1 + $0x1f0] sm:$0xff]
  %v2329 = vld [vmem:[%s1 + $0x1f8] sm:$0xff]
  %2330 = vmatprep.subr.mxu0 %v2267
  %2331 = vmatpush1.msra.mxu0 %v2266
  %2332 = vmatprep.subr.mxu0 %v2271
  %2333 = vmatpush1.msra.mxu0 %v2270
  %2334 = vmatprep.subr.mxu0 %v2275
  %2335 = vmatpush1.msra.mxu0 %v2274
  %2336 = vmatprep.subr.mxu0 %v2279
  %2337 = vmatpush1.msra.mxu0 %v2278
  %2338 = vmatprep.subr.mxu0 %v2283
  %2339 = vmatpush1.msra.mxu0 %v2282
  %2340 = vmatprep.subr.mxu0 %v2287
  %2341 = vmatpush1.msra.mxu0 %v2286
  %2342 = vmatprep.subr.mxu0 %v2291
  %2343 = vmatpush1.msra.mxu0 %v2290
  %2344 = vmatprep.subr.mxu0 %v2295
  %2345 = vmatpush1.msra.mxu0 %v2294
  %2346 = vmatprep.subr.mxu0 %v2299
  %2347 = vmatpush1.msra.mxu0 %v2298
  %2348 = vmatprep.subr.mxu0 %v2303
  %2349 = vmatpush1.msra.mxu0 %v2302
  %2350 = vmatprep.subr.mxu0 %v2307
  %2351 = vmatpush1.msra.mxu0 %v2306
  %2352 = vmatprep.subr.mxu0 %v2311
  %2353 = vmatpush1.msra.mxu0 %v2310
  %2354 = vmatprep.subr.mxu0 %v2315
  %2355 = vmatpush1.msra.mxu0 %v2314
  %2356 = vmatprep.subr.mxu0 %v2319
  %2357 = vmatpush1.msra.mxu0 %v2318
  %2358 = vmatprep.subr.mxu0 %v2323
  %2359 = vmatpush1.msra.mxu0 %v2322
  %2360 = vmatprep.subr.mxu0 %v2327
  %2361 = vmatpush1.msra.mxu0 %v2326
  %2362 = vmatprep.subr.mxu0 0.0
  %2363 = vmatpush1.msra.mxu0 0.0
  %2364 = vmatprep.subr.mxu0 0.0
  %2365 = vmatpush1.msra.mxu0 0.0
  %2366 = vmatprep.subr.mxu0 0.0
  %2367 = vmatpush1.msra.mxu0 0.0
  %2368 = vmatprep.subr.mxu0 0.0
  %2369 = vmatpush1.msra.mxu0 0.0
  %2370 = vmatprep.subr.mxu0 0.0
  %2371 = vmatpush1.msra.mxu0 0.0
  %2372 = vmatprep.subr.mxu0 0.0
  %2373 = vmatpush1.msra.mxu0 0.0
  %2374 = vmatprep.subr.mxu0 0.0
  %2375 = vmatpush1.msra.mxu0 0.0
  %2376 = vmatprep.subr.mxu0 0.0
  %2377 = vmatpush1.msra.mxu0 0.0
  %2378 = vmatprep.subr.mxu0 0.0
  %2379 = vmatpush1.msra.mxu0 0.0
  %2380 = vmatprep.subr.mxu0 0.0
  %2381 = vmatpush1.msra.mxu0 0.0
  %2382 = vmatprep.subr.mxu0 0.0
  %2383 = vmatpush1.msra.mxu0 0.0
  %2384 = vmatprep.subr.mxu0 0.0
  %2385 = vmatpush1.msra.mxu0 0.0
  %2386 = vmatprep.subr.mxu0 0.0
  %2387 = vmatpush1.msra.mxu0 0.0
  %2388 = vmatprep.subr.mxu0 0.0
  %2389 = vmatpush1.msra.mxu0 0.0
  %2390 = vmatprep.subr.mxu0 0.0
  %2391 = vmatpush1.msra.mxu0 0.0
  %2392 = vmatprep.subr.mxu0 0.0
  %2393 = vmatpush1.msra.mxu0 0.0
  %2394 = vmatprep.mubr.f32.mxu0 0.0
  %2395 = vmatmul.mubr.f32.gmra.mrb[0].mxu0 %v2248
  %v2396 = vpop.f32.mrb[0].mxu0
  %v2397 = vadd.f32 0.0, %v2396
  %v2398 = vpop.f32.mrb[0].mxu0
  %v2399 = vadd.f32 0.0, %v2398
  %2400 = vdwg.mxu0
  %2401 = vmatprep.subr.mxu0 %v2269
  %2402 = vmatpush1.msra.mxu0 %v2268
  %2403 = vmatprep.subr.mxu0 %v2273
  %2404 = vmatpush1.msra.mxu0 %v2272
  %2405 = vmatprep.subr.mxu0 %v2277
  %2406 = vmatpush1.msra.mxu0 %v2276
  %2407 = vmatprep.subr.mxu0 %v2281
  %2408 = vmatpush1.msra.mxu0 %v2280
  %2409 = vmatprep.subr.mxu0 %v2285
  %2410 = vmatpush1.msra.mxu0 %v2284
  %2411 = vmatprep.subr.mxu0 %v2289
  %2412 = vmatpush1.msra.mxu0 %v2288
  %2413 = vmatprep.subr.mxu0 %v2293
  %2414 = vmatpush1.msra.mxu0 %v2292
  %2415 = vmatprep.subr.mxu0 %v2297
  %2416 = vmatpush1.msra.mxu0 %v2296
  %2417 = vmatprep.subr.mxu0 %v2301
  %2418 = vmatpush1.msra.mxu0 %v2300
  %2419 = vmatprep.subr.mxu0 %v2305
  %2420 = vmatpush1.msra.mxu0 %v2304
  %2421 = vmatprep.subr.mxu0 %v2309
  %2422 = vmatpush1.msra.mxu0 %v2308
  %2423 = vmatprep.subr.mxu0 %v2313
  %2424 = vmatpush1.msra.mxu0 %v2312
  %2425 = vmatprep.subr.mxu0 %v2317
  %2426 = vmatpush1.msra.mxu0 %v2316
  %2427 = vmatprep.subr.mxu0 %v2321
  %2428 = vmatpush1.msra.mxu0 %v2320
  %2429 = vmatprep.subr.mxu0 %v2325
  %2430 = vmatpush1.msra.mxu0 %v2324
  %2431 = vmatprep.subr.mxu0 %v2329
  %2432 = vmatpush1.msra.mxu0 %v2328
  %2433 = vmatprep.subr.mxu0 0.0
  %2434 = vmatpush1.msra.mxu0 0.0
  %2435 = vmatprep.subr.mxu0 0.0
  %2436 = vmatpush1.msra.mxu0 0.0
  %2437 = vmatprep.subr.mxu0 0.0
  %2438 = vmatpush1.msra.mxu0 0.0
  %2439 = vmatprep.subr.mxu0 0.0
  %2440 = vmatpush1.msra.mxu0 0.0
  %2441 = vmatprep.subr.mxu0 0.0
  %2442 = vmatpush1.msra.mxu0 0.0
  %2443 = vmatprep.subr.mxu0 0.0
  %2444 = vmatpush1.msra.mxu0 0.0
  %2445 = vmatprep.subr.mxu0 0.0
  %2446 = vmatpush1.msra.mxu0 0.0
  %2447 = vmatprep.subr.mxu0 0.0
  %2448 = vmatpush1.msra.mxu0 0.0
  %2449 = vmatprep.subr.mxu0 0.0
  %2450 = vmatpush1.msra.mxu0 0.0
  %2451 = vmatprep.subr.mxu0 0.0
  %2452 = vmatpush1.msra.mxu0 0.0
  %2453 = vmatprep.subr.mxu0 0.0
  %2454 = vmatpush1.msra.mxu0 0.0
  %2455 = vmatprep.subr.mxu0 0.0
  %2456 = vmatpush1.msra.mxu0 0.0
  %2457 = vmatprep.subr.mxu0 0.0
  %2458 = vmatpush1.msra.mxu0 0.0
  %2459 = vmatprep.subr.mxu0 0.0
  %2460 = vmatpush1.msra.mxu0 0.0
  %2461 = vmatprep.subr.mxu0 0.0
  %2462 = vmatpush1.msra.mxu0 0.0
  %2463 = vmatprep.subr.mxu0 0.0
  %2464 = vmatpush1.msra.mxu0 0.0
  %2465 = vmatprep.mubr.f32.mxu0 0.0
  %2466 = vmatmul.mubr.f32.gmra.mrb[0].mxu0 %v2248
  %v2467 = vpop.f32.mrb[0].mxu0
  %v2468 = vadd.f32 0.0, %v2467
  %v2469 = vpop.f32.mrb[0].mxu0
  %v2470 = vadd.f32 0.0, %v2469
  %2471 = vdwg.mxu0
  %v2476 = vcombine.low %v2397, %v2399
  %v2477 = vcombine.high %v2397, %v2399
  %v2478 = vcombine.low %v2468, %v2470
  %v2479 = vcombine.high %v2468, %v2470
  %v2481 = vunpack.c.l.s4 1966171168
  %v2482 = vunpack.c.0.s8 %v2481
  %v2483 = vlaneseq
  %v2484 = vshrl.u32 %v2483, 7
  %v2485 = vsub.s32 %v2482, %v2484
  %v2486 = vrot.slane %v2476, %v2485
  %v2488 = vunpack.c.l.s4 1966171168
  %v2489 = vunpack.c.0.s8 %v2488
  %v2490 = vlaneseq
  %v2491 = vshrl.u32 %v2490, 7
  %v2492 = vsub.s32 %v2489, %v2491
  %v2493 = vrot.slane %v2477, %v2492
  %v2495 = vunpack.c.l.s4 1966171168
  %v2496 = vunpack.c.0.s8 %v2495
  %v2497 = vlaneseq
  %v2498 = vshrl.u32 %v2497, 7
  %v2499 = vsub.s32 %v2496, %v2498
  %v2500 = vrot.slane %v2478, %v2499
  %v2502 = vunpack.c.l.s4 1966171168
  %v2503 = vunpack.c.0.s8 %v2502
  %v2504 = vlaneseq
  %v2505 = vshrl.u32 %v2504, 7
  %v2506 = vsub.s32 %v2503, %v2505
  %v2507 = vrot.slane %v2479, %v2506
  %v2508 = vcombine.low %v2486, %v2500
  %v2509 = vcombine.high %v2486, %v2500
  %v2510 = vcombine.low %v2493, %v2507
  %v2511 = vcombine.high %v2493, %v2507
  %v2513 = vunpack.c.l.s4 1966171168
  %v2514 = vunpack.c.0.s8 %v2513
  %v2515 = vlaneseq
  %v2516 = vshrl.u32 %v2515, 7
  %v2517 = vsub.s32 %v2514, %v2516
  %v2518 = vrot.slane %v2508, %v2517
  %v2520 = vunpack.c.l.s4 1966171168
  %v2521 = vunpack.c.0.s8 %v2520
  %v2522 = vlaneseq
  %v2523 = vshrl.u32 %v2522, 7
  %v2524 = vsub.s32 %v2521, %v2523
  %v2525 = vrot.slane %v2510, %v2524
  %v2527 = vunpack.c.l.s4 1966171168
  %v2528 = vunpack.c.0.s8 %v2527
  %v2529 = vlaneseq
  %v2530 = vshrl.u32 %v2529, 7
  %v2531 = vsub.s32 %v2528, %v2530
  %v2532 = vrot.slane %v2509, %v2531
  %v2534 = vunpack.c.l.s4 1966171168
  %v2535 = vunpack.c.0.s8 %v2534
  %v2536 = vlaneseq
  %v2537 = vshrl.u32 %v2536, 7
  %v2538 = vsub.s32 %v2535, %v2537
  %v2539 = vrot.slane %v2511, %v2538
  %v2540 = vcombine.high %v2518, %v2518
  %v2541 = vcombine.high %v2525, %v2525
  %v2542 = vcombine.high %v2532, %v2532
  %v2543 = vcombine.high %v2539, %v2539
  %v2552 = vadd.f32 %v2251, %v2518
  %v2553 = vadd.f32 %v2253, %v2532
  %v2554 = vadd.f32 %v2255, %v2540
  %v2555 = vadd.f32 %v2257, %v2542
  %v2556 = vadd.f32 %v2259, %v2525
  %v2557 = vadd.f32 %v2261, %v2539
  %v2558 = vadd.f32 %v2263, %v2541
  %v2559 = vadd.f32 %v2265, %v2543
  %v2560 = vxor.u32 %v2552, 2147483648
  %v2561 = vxor.u32 %v2553, 2147483648
  %v2562 = vxor.u32 %v2554, 2147483648
  %v2563 = vxor.u32 %v2555, 2147483648
  %v2564 = vxor.u32 %v2556, 2147483648
  %v2565 = vxor.u32 %v2557, 2147483648
  %v2566 = vxor.u32 %v2558, 2147483648
  %v2567 = vxor.u32 %v2559, 2147483648
  %v2568 = vmul.f32 %v2560, 1.442695
  %v2569 = vpow.pop %v2568
  %v2570 = vmul.f32 %v2561, 1.442695
  %v2571 = vpow.pop %v2570
  %v2572 = vmul.f32 %v2562, 1.442695
  %v2573 = vpow.pop %v2572
  %v2574 = vmul.f32 %v2563, 1.442695
  %v2575 = vpow.pop %v2574
  %v2576 = vmul.f32 %v2564, 1.442695
  %v2577 = vpow.pop %v2576
  %v2578 = vmul.f32 %v2565, 1.442695
  %v2579 = vpow.pop %v2578
  %v2580 = vmul.f32 %v2566, 1.442695
  %v2581 = vpow.pop %v2580
  %v2582 = vmul.f32 %v2567, 1.442695
  %v2583 = vpow.pop %v2582
  %v2584 = vadd.f32 %v2569, 1.0
  %v2585 = vadd.f32 %v2571, 1.0
  %v2586 = vadd.f32 %v2573, 1.0
  %v2587 = vadd.f32 %v2575, 1.0
  %v2588 = vadd.f32 %v2577, 1.0
  %v2589 = vadd.f32 %v2579, 1.0
  %v2590 = vadd.f32 %v2581, 1.0
  %v2591 = vadd.f32 %v2583, 1.0
  %v2592 = vrcp.pop %v2584
  %v2593 = vmul.f32 1.0, %v2592
  %v2594 = vrcp.pop %v2585
  %v2595 = vmul.f32 1.0, %v2594
  %v2596 = vrcp.pop %v2586
  %v2597 = vmul.f32 1.0, %v2596
  %v2598 = vrcp.pop %v2587
  %v2599 = vmul.f32 1.0, %v2598
  %v2600 = vrcp.pop %v2588
  %v2601 = vmul.f32 1.0, %v2600
  %v2602 = vrcp.pop %v2589
  %v2603 = vmul.f32 1.0, %v2602
  %v2604 = vrcp.pop %v2590
  %v2605 = vmul.f32 1.0, %v2604
  %v2606 = vrcp.pop %v2591
  %v2607 = vmul.f32 1.0, %v2606
  %v2616 = vrot.slane %v2552, 1
  %v2617 = vrot.slane %v2553, 1
  %v2618 = vrot.slane %v2554, 1
  %v2619 = vrot.slane %v2555, 1
  %v2620 = vrot.slane %v2556, 1
  %v2621 = vrot.slane %v2557, 1
  %v2622 = vrot.slane %v2558, 1
  %v2623 = vrot.slane %v2559, 1
  %v2632 = vxor.u32 %v2616, 2147483648
  %v2633 = vxor.u32 %v2617, 2147483648
  %v2634 = vxor.u32 %v2618, 2147483648
  %v2635 = vxor.u32 %v2619, 2147483648
  %v2636 = vxor.u32 %v2620, 2147483648
  %v2637 = vxor.u32 %v2621, 2147483648
  %v2638 = vxor.u32 %v2622, 2147483648
  %v2639 = vxor.u32 %v2623, 2147483648
  %v2640 = vmul.f32 %v2632, 1.442695
  %v2641 = vpow.pop %v2640
  %v2642 = vmul.f32 %v2633, 1.442695
  %v2643 = vpow.pop %v2642
  %v2644 = vmul.f32 %v2634, 1.442695
  %v2645 = vpow.pop %v2644
  %v2646 = vmul.f32 %v2635, 1.442695
  %v2647 = vpow.pop %v2646
  %v2648 = vmul.f32 %v2636, 1.442695
  %v2649 = vpow.pop %v2648
  %v2650 = vmul.f32 %v2637, 1.442695
  %v2651 = vpow.pop %v2650
  %v2652 = vmul.f32 %v2638, 1.442695
  %v2653 = vpow.pop %v2652
  %v2654 = vmul.f32 %v2639, 1.442695
  %v2655 = vpow.pop %v2654
  %v2656 = vadd.f32 %v2641, 1.0
  %v2657 = vadd.f32 %v2643, 1.0
  %v2658 = vadd.f32 %v2645, 1.0
  %v2659 = vadd.f32 %v2647, 1.0
  %v2660 = vadd.f32 %v2649, 1.0
  %v2661 = vadd.f32 %v2651, 1.0
  %v2662 = vadd.f32 %v2653, 1.0
  %v2663 = vadd.f32 %v2655, 1.0
  %v2664 = vrcp.pop %v2656
  %v2665 = vmul.f32 1.0, %v2664
  %v2666 = vrcp.pop %v2657
  %v2667 = vmul.f32 1.0, %v2666
  %v2668 = vrcp.pop %v2658
  %v2669 = vmul.f32 1.0, %v2668
  %v2670 = vrcp.pop %v2659
  %v2671 = vmul.f32 1.0, %v2670
  %v2672 = vrcp.pop %v2660
  %v2673 = vmul.f32 1.0, %v2672
  %v2674 = vrcp.pop %v2661
  %v2675 = vmul.f32 1.0, %v2674
  %v2676 = vrcp.pop %v2662
  %v2677 = vmul.f32 1.0, %v2676
  %v2678 = vrcp.pop %v2663
  %v2679 = vmul.f32 1.0, %v2678
  %v2680 = vrot.slane %v2552, 2
  %v2681 = vrot.slane %v2553, 2
  %v2682 = vrot.slane %v2554, 2
  %v2683 = vrot.slane %v2555, 2
  %v2684 = vrot.slane %v2556, 2
  %v2685 = vrot.slane %v2557, 2
  %v2686 = vrot.slane %v2558, 2
  %v2687 = vrot.slane %v2559, 2
  %v2696 = vtanh.pop %v2680
  %v2697 = vtanh.pop %v2681
  %v2698 = vtanh.pop %v2682
  %v2699 = vtanh.pop %v2683
  %v2700 = vtanh.pop %v2684
  %v2701 = vtanh.pop %v2685
  %v2702 = vtanh.pop %v2686
  %v2703 = vtanh.pop %v2687
  %v2704 = vrot.slane %v2552, 3
  %v2705 = vrot.slane %v2553, 3
  %v2706 = vrot.slane %v2554, 3
  %v2707 = vrot.slane %v2555, 3
  %v2708 = vrot.slane %v2556, 3
  %v2709 = vrot.slane %v2557, 3
  %v2710 = vrot.slane %v2558, 3
  %v2711 = vrot.slane %v2559, 3
  %v2720 = vxor.u32 %v2704, 2147483648
  %v2721 = vxor.u32 %v2705, 2147483648
  %v2722 = vxor.u32 %v2706, 2147483648
  %v2723 = vxor.u32 %v2707, 2147483648
  %v2724 = vxor.u32 %v2708, 2147483648
  %v2725 = vxor.u32 %v2709, 2147483648
  %v2726 = vxor.u32 %v2710, 2147483648
  %v2727 = vxor.u32 %v2711, 2147483648
  %v2728 = vmul.f32 %v2720, 1.442695
  %v2729 = vpow.pop %v2728
  %v2730 = vmul.f32 %v2721, 1.442695
  %v2731 = vpow.pop %v2730
  %v2732 = vmul.f32 %v2722, 1.442695
  %v2733 = vpow.pop %v2732
  %v2734 = vmul.f32 %v2723, 1.442695
  %v2735 = vpow.pop %v2734
  %v2736 = vmul.f32 %v2724, 1.442695
  %v2737 = vpow.pop %v2736
  %v2738 = vmul.f32 %v2725, 1.442695
  %v2739 = vpow.pop %v2738
  %v2740 = vmul.f32 %v2726, 1.442695
  %v2741 = vpow.pop %v2740
  %v2742 = vmul.f32 %v2727, 1.442695
  %v2743 = vpow.pop %v2742
  %v2744 = vadd.f32 %v2729, 1.0
  %v2745 = vadd.f32 %v2731, 1.0
  %v2746 = vadd.f32 %v2733, 1.0
  %v2747 = vadd.f32 %v2735, 1.0
  %v2748 = vadd.f32 %v2737, 1.0
  %v2749 = vadd.f32 %v2739, 1.0
  %v2750 = vadd.f32 %v2741, 1.0
  %v2751 = vadd.f32 %v2743, 1.0
  %v2752 = vrcp.pop %v2744
  %v2753 = vmul.f32 1.0, %v2752
  %v2754 = vrcp.pop %v2745
  %v2755 = vmul.f32 1.0, %v2754
  %v2756 = vrcp.pop %v2746
  %v2757 = vmul.f32 1.0, %v2756
  %v2758 = vrcp.pop %v2747
  %v2759 = vmul.f32 1.0, %v2758
  %v2760 = vrcp.pop %v2748
  %v2761 = vmul.f32 1.0, %v2760
  %v2762 = vrcp.pop %v2749
  %v2763 = vmul.f32 1.0, %v2762
  %v2764 = vrcp.pop %v2750
  %v2765 = vmul.f32 1.0, %v2764
  %v2766 = vrcp.pop %v2751
  %v2767 = vmul.f32 1.0, %v2766
  %v2769 = vcombine.high %v2249, %v2249
  %v2771 = vunpack.c.l.s4 1966171168
  %v2772 = vunpack.c.0.s8 %v2771
  %v2773 = vlaneseq
  %v2774 = vshrl.u32 %v2773, 7
  %v2775 = vsub.s32 %v2772, %v2774
  %v2776 = vrot.slane %v2249, %v2775
  %v2778 = vunpack.c.l.s4 1966171168
  %v2779 = vunpack.c.0.s8 %v2778
  %v2780 = vlaneseq
  %v2781 = vshrl.u32 %v2780, 7
  %v2782 = vsub.s32 %v2779, %v2781
  %v2783 = vrot.slane %v2769, %v2782
  %v2784 = vcombine.high %v2776, %v2776
  %v2785 = vcombine.high %v2783, %v2783
  %v2787 = vunpack.c.l.s4 1966171168
  %v2788 = vunpack.c.0.s8 %v2787
  %v2789 = vlaneseq
  %v2790 = vshrl.u32 %v2789, 7
  %v2791 = vsub.s32 %v2788, %v2790
  %v2792 = vrot.slane %v2776, %v2791
  %v2794 = vunpack.c.l.s4 1966171168
  %v2795 = vunpack.c.0.s8 %v2794
  %v2796 = vlaneseq
  %v2797 = vshrl.u32 %v2796, 7
  %v2798 = vsub.s32 %v2795, %v2797
  %v2799 = vrot.slane %v2783, %v2798
  %v2801 = vunpack.c.l.s4 1966171168
  %v2802 = vunpack.c.0.s8 %v2801
  %v2803 = vlaneseq
  %v2804 = vshrl.u32 %v2803, 7
  %v2805 = vsub.s32 %v2802, %v2804
  %v2806 = vrot.slane %v2784, %v2805
  %v2808 = vunpack.c.l.s4 1966171168
  %v2809 = vunpack.c.0.s8 %v2808
  %v2810 = vlaneseq
  %v2811 = vshrl.u32 %v2810, 7
  %v2812 = vsub.s32 %v2809, %v2811
  %v2813 = vrot.slane %v2785, %v2812
  %v2814 = vcombine.high %v2792, %v2792
  %v2815 = vcombine.high %v2799, %v2799
  %v2816 = vcombine.high %v2806, %v2806
  %v2817 = vcombine.high %v2813, %v2813
  %v2826 = vmul.f32 %v2665, %v2792
  %v2827 = vmul.f32 %v2667, %v2806
  %v2828 = vmul.f32 %v2669, %v2814
  %v2829 = vmul.f32 %v2671, %v2816
  %v2830 = vmul.f32 %v2673, %v2799
  %v2831 = vmul.f32 %v2675, %v2813
  %v2832 = vmul.f32 %v2677, %v2815
  %v2833 = vmul.f32 %v2679, %v2817
  %v2834 = vmul.f32 %v2593, %v2696
  %v2835 = vmul.f32 %v2595, %v2697
  %v2836 = vmul.f32 %v2597, %v2698
  %v2837 = vmul.f32 %v2599, %v2699
  %v2838 = vmul.f32 %v2601, %v2700
  %v2839 = vmul.f32 %v2603, %v2701
  %v2840 = vmul.f32 %v2605, %v2702
  %v2841 = vmul.f32 %v2607, %v2703
  %v2842 = vadd.f32 %v2826, %v2834
  %v2843 = vadd.f32 %v2827, %v2835
  %v2844 = vadd.f32 %v2828, %v2836
  %v2845 = vadd.f32 %v2829, %v2837
  %v2846 = vadd.f32 %v2830, %v2838
  %v2847 = vadd.f32 %v2831, %v2839
  %v2848 = vadd.f32 %v2832, %v2840
  %v2849 = vadd.f32 %v2833, %v2841
  %v2850 = vtanh.pop %v2842
  %v2851 = vtanh.pop %v2843
  %v2852 = vtanh.pop %v2844
  %v2853 = vtanh.pop %v2845
  %v2854 = vtanh.pop %v2846
  %v2855 = vtanh.pop %v2847
  %v2856 = vtanh.pop %v2848
  %v2857 = vtanh.pop %v2849
  %v2858 = vmul.f32 %v2753, %v2850
  %v2859 = vmul.f32 %v2755, %v2851
  %v2860 = vmul.f32 %v2757, %v2852
  %v2861 = vmul.f32 %v2759, %v2853
  %v2862 = vmul.f32 %v2761, %v2854
  %v2863 = vmul.f32 %v2763, %v2855
  %v2864 = vmul.f32 %v2765, %v2856
  %v2865 = vmul.f32 %v2767, %v2857
  %v2874 = vcombine.low %v2842, %v2843
  %v2875 = vcombine.low %v2844, %v2845
  %v2876 = vcombine.low %v2846, %v2847
  %v2877 = vcombine.low %v2848, %v2849
  %v2879 = vunpack.c.l.s4 1966171168
  %v2880 = vunpack.c.0.s8 %v2879
  %v2881 = vlaneseq
  %v2882 = vshrl.u32 %v2881, 7
  %v2883 = vsub.s32 %v2880, %v2882
  %v2884 = vrot.slane %v2874, %v2883
  %v2886 = vunpack.c.l.s4 1966171168
  %v2887 = vunpack.c.0.s8 %v2886
  %v2888 = vlaneseq
  %v2889 = vshrl.u32 %v2888, 7
  %v2890 = vsub.s32 %v2887, %v2889
  %v2891 = vrot.slane %v2875, %v2890
  %v2893 = vunpack.c.l.s4 1966171168
  %v2894 = vunpack.c.0.s8 %v2893
  %v2895 = vlaneseq
  %v2896 = vshrl.u32 %v2895, 7
  %v2897 = vsub.s32 %v2894, %v2896
  %v2898 = vrot.slane %v2876, %v2897
  %v2900 = vunpack.c.l.s4 1966171168
  %v2901 = vunpack.c.0.s8 %v2900
  %v2902 = vlaneseq
  %v2903 = vshrl.u32 %v2902, 7
  %v2904 = vsub.s32 %v2901, %v2903
  %v2905 = vrot.slane %v2877, %v2904
  %v2906 = vcombine.low %v2884, %v2891
  %v2907 = vcombine.low %v2898, %v2905
  %v2909 = vunpack.c.l.s4 1966171168
  %v2910 = vunpack.c.0.s8 %v2909
  %v2911 = vlaneseq
  %v2912 = vshrl.u32 %v2911, 7
  %v2913 = vsub.s32 %v2910, %v2912
  %v2914 = vrot.slane %v2906, %v2913
  %v2916 = vunpack.c.l.s4 1966171168
  %v2917 = vunpack.c.0.s8 %v2916
  %v2918 = vlaneseq
  %v2919 = vshrl.u32 %v2918, 7
  %v2920 = vsub.s32 %v2917, %v2919
  %v2921 = vrot.slane %v2907, %v2920
  %v2922 = vcombine.low %v2914, %v2921
  %2924 = vst [vmem:[#allocation3] sm:$0xff] %v2922
  %v2933 = vcombine.low %v2858, %v2859
  %v2934 = vcombine.low %v2860, %v2861
  %v2935 = vcombine.low %v2862, %v2863
  %v2936 = vcombine.low %v2864, %v2865
  %v2938 = vunpack.c.l.s4 1966171168
  %v2939 = vunpack.c.0.s8 %v2938
  %v2940 = vlaneseq
  %v2941 = vshrl.u32 %v2940, 7
  %v2942 = vsub.s32 %v2939, %v2941
  %v2943 = vrot.slane %v2933, %v2942
  %v2945 = vunpack.c.l.s4 1966171168
  %v2946 = vunpack.c.0.s8 %v2945
  %v2947 = vlaneseq
  %v2948 = vshrl.u32 %v2947, 7
  %v2949 = vsub.s32 %v2946, %v2948
  %v2950 = vrot.slane %v2934, %v2949
  %v2952 = vunpack.c.l.s4 1966171168
  %v2953 = vunpack.c.0.s8 %v2952
  %v2954 = vlaneseq
  %v2955 = vshrl.u32 %v2954, 7
  %v2956 = vsub.s32 %v2953, %v2955
  %v2957 = vrot.slane %v2935, %v2956
  %v2959 = vunpack.c.l.s4 1966171168
  %v2960 = vunpack.c.0.s8 %v2959
  %v2961 = vlaneseq
  %v2962 = vshrl.u32 %v2961, 7
  %v2963 = vsub.s32 %v2960, %v2962
  %v2964 = vrot.slane %v2936, %v2963
  %v2965 = vcombine.low %v2943, %v2950
  %v2966 = vcombine.low %v2957, %v2964
  %v2968 = vunpack.c.l.s4 1966171168
  %v2969 = vunpack.c.0.s8 %v2968
  %v2970 = vlaneseq
  %v2971 = vshrl.u32 %v2970, 7
  %v2972 = vsub.s32 %v2969, %v2971
  %v2973 = vrot.slane %v2965, %v2972
  %v2975 = vunpack.c.l.s4 1966171168
  %v2976 = vunpack.c.0.s8 %v2975
  %v2977 = vlaneseq
  %v2978 = vshrl.u32 %v2977, 7
  %v2979 = vsub.s32 %v2976, %v2978
  %v2980 = vrot.slane %v2966, %v2979
  %v2981 = vcombine.low %v2973, %v2980
  %2983 = vst [vmem:[#allocation2] sm:$0xff] %v2981
  %2984 = vst [vmem:[%s2 + $0x3] sm:$0x1] %v2858
  %2985 = vst [vmem:[%s2 + $0xb] sm:$0x1] %v2859
  %2986 = vst [vmem:[%s2 + $0x13] sm:$0x1] %v2860
  %2987 = vst [vmem:[%s2 + $0x1b] sm:$0x1] %v2861
  %2988 = vst [vmem:[%s2 + $0x23] sm:$0x1] %v2862
  %2989 = vst [vmem:[%s2 + $0x2b] sm:$0x1] %v2863
  %2990 = vst [vmem:[%s2 + $0x33] sm:$0x1] %v2864
  %2991 = vst [vmem:[%s2 + $0x3b] sm:$0x1] %v2865
  %v2992 = vld [vmem:[#allocation2] sm:$0xff]
  %v2993 = vld [vmem:[#allocation3] sm:$0xff]
  %s2994 = scalar_lea.vmem %s0, 4
  %v2995 = vld [vmem:[%s2994] ss:$8 sm:$0xf]
  %s2996 = scalar_lea.vmem %s0, 36
  %v2997 = vld [vmem:[%s2996] ss:$8 sm:$0xf]
  %s2998 = scalar_lea.vmem %s0, 68
  %v2999 = vld [vmem:[%s2998] ss:$8 sm:$0xf]
  %s3000 = scalar_lea.vmem %s0, 100
  %v3001 = vld [vmem:[%s3000] ss:$8 sm:$0xf]
  %s3002 = scalar_lea.vmem %s0, 132
  %v3003 = vld [vmem:[%s3002] ss:$8 sm:$0xf]
  %s3004 = scalar_lea.vmem %s0, 164
  %v3005 = vld [vmem:[%s3004] ss:$8 sm:$0xf]
  %s3006 = scalar_lea.vmem %s0, 196
  %v3007 = vld [vmem:[%s3006] ss:$8 sm:$0xf]
  %s3008 = scalar_lea.vmem %s0, 228
  %v3009 = vld [vmem:[%s3008] ss:$8 sm:$0xf]
  %v3010 = vld [vmem:[%s1] sm:$0xff]
  %v3011 = vld [vmem:[%s1 + $0x8] sm:$0xff]
  %v3012 = vld [vmem:[%s1 + $0x10] sm:$0xff]
  %v3013 = vld [vmem:[%s1 + $0x18] sm:$0xff]
  %v3014 = vld [vmem:[%s1 + $0x20] sm:$0xff]
  %v3015 = vld [vmem:[%s1 + $0x28] sm:$0xff]
  %v3016 = vld [vmem:[%s1 + $0x30] sm:$0xff]
  %v3017 = vld [vmem:[%s1 + $0x38] sm:$0xff]
  %v3018 = vld [vmem:[%s1 + $0x40] sm:$0xff]
  %v3019 = vld [vmem:[%s1 + $0x48] sm:$0xff]
  %v3020 = vld [vmem:[%s1 + $0x50] sm:$0xff]
  %v3021 = vld [vmem:[%s1 + $0x58] sm:$0xff]
  %v3022 = vld [vmem:[%s1 + $0x60] sm:$0xff]
  %v3023 = vld [vmem:[%s1 + $0x68] sm:$0xff]
  %v3024 = vld [vmem:[%s1 + $0x70] sm:$0xff]
  %v3025 = vld [vmem:[%s1 + $0x78] sm:$0xff]
  %v3026 = vld [vmem:[%s1 + $0x80] sm:$0xff]
  %v3027 = vld [vmem:[%s1 + $0x88] sm:$0xff]
  %v3028 = vld [vmem:[%s1 + $0x90] sm:$0xff]
  %v3029 = vld [vmem:[%s1 + $0x98] sm:$0xff]
  %v3030 = vld [vmem:[%s1 + $0xa0] sm:$0xff]
  %v3031 = vld [vmem:[%s1 + $0xa8] sm:$0xff]
  %v3032 = vld [vmem:[%s1 + $0xb0] sm:$0xff]
  %v3033 = vld [vmem:[%s1 + $0xb8] sm:$0xff]
  %v3034 = vld [vmem:[%s1 + $0xc0] sm:$0xff]
  %v3035 = vld [vmem:[%s1 + $0xc8] sm:$0xff]
  %v3036 = vld [vmem:[%s1 + $0xd0] sm:$0xff]
  %v3037 = vld [vmem:[%s1 + $0xd8] sm:$0xff]
  %v3038 = vld [vmem:[%s1 + $0xe0] sm:$0xff]
  %v3039 = vld [vmem:[%s1 + $0xe8] sm:$0xff]
  %v3040 = vld [vmem:[%s1 + $0xf0] sm:$0xff]
  %v3041 = vld [vmem:[%s1 + $0xf8] sm:$0xff]
  %v3042 = vld [vmem:[%s1 + $0x100] sm:$0xff]
  %v3043 = vld [vmem:[%s1 + $0x108] sm:$0xff]
  %v3044 = vld [vmem:[%s1 + $0x110] sm:$0xff]
  %v3045 = vld [vmem:[%s1 + $0x118] sm:$0xff]
  %v3046 = vld [vmem:[%s1 + $0x120] sm:$0xff]
  %v3047 = vld [vmem:[%s1 + $0x128] sm:$0xff]
  %v3048 = vld [vmem:[%s1 + $0x130] sm:$0xff]
  %v3049 = vld [vmem:[%s1 + $0x138] sm:$0xff]
  %v3050 = vld [vmem:[%s1 + $0x140] sm:$0xff]
  %v3051 = vld [vmem:[%s1 + $0x148] sm:$0xff]
  %v3052 = vld [vmem:[%s1 + $0x150] sm:$0xff]
  %v3053 = vld [vmem:[%s1 + $0x158] sm:$0xff]
  %v3054 = vld [vmem:[%s1 + $0x160] sm:$0xff]
  %v3055 = vld [vmem:[%s1 + $0x168] sm:$0xff]
  %v3056 = vld [vmem:[%s1 + $0x170] sm:$0xff]
  %v3057 = vld [vmem:[%s1 + $0x178] sm:$0xff]
  %v3058 = vld [vmem:[%s1 + $0x180] sm:$0xff]
  %v3059 = vld [vmem:[%s1 + $0x188] sm:$0xff]
  %v3060 = vld [vmem:[%s1 + $0x190] sm:$0xff]
  %v3061 = vld [vmem:[%s1 + $0x198] sm:$0xff]
  %v3062 = vld [vmem:[%s1 + $0x1a0] sm:$0xff]
  %v3063 = vld [vmem:[%s1 + $0x1a8] sm:$0xff]
  %v3064 = vld [vmem:[%s1 + $0x1b0] sm:$0xff]
  %v3065 = vld [vmem:[%s1 + $0x1b8] sm:$0xff]
  %v3066 = vld [vmem:[%s1 + $0x1c0] sm:$0xff]
  %v3067 = vld [vmem:[%s1 + $0x1c8] sm:$0xff]
  %v3068 = vld [vmem:[%s1 + $0x1d0] sm:$0xff]
  %v3069 = vld [vmem:[%s1 + $0x1d8] sm:$0xff]
  %v3070 = vld [vmem:[%s1 + $0x1e0] sm:$0xff]
  %v3071 = vld [vmem:[%s1 + $0x1e8] sm:$0xff]
  %v3072 = vld [vmem:[%s1 + $0x1f0] sm:$0xff]
  %v3073 = vld [vmem:[%s1 + $0x1f8] sm:$0xff]
  %3074 = vmatprep.subr.mxu0 %v3011
  %3075 = vmatpush1.msra.mxu0 %v3010
  %3076 = vmatprep.subr.mxu0 %v3015
  %3077 = vmatpush1.msra.mxu0 %v3014
  %3078 = vmatprep.subr.mxu0 %v3019
  %3079 = vmatpush1.msra.mxu0 %v3018
  %3080 = vmatprep.subr.mxu0 %v3023
  %3081 = vmatpush1.msra.mxu0 %v3022
  %3082 = vmatprep.subr.mxu0 %v3027
  %3083 = vmatpush1.msra.mxu0 %v3026
  %3084 = vmatprep.subr.mxu0 %v3031
  %3085 = vmatpush1.msra.mxu0 %v3030
  %3086 = vmatprep.subr.mxu0 %v3035
  %3087 = vmatpush1.msra.mxu0 %v3034
  %3088 = vmatprep.subr.mxu0 %v3039
  %3089 = vmatpush1.msra.mxu0 %v3038
  %3090 = vmatprep.subr.mxu0 %v3043
  %3091 = vmatpush1.msra.mxu0 %v3042
  %3092 = vmatprep.subr.mxu0 %v3047
  %3093 = vmatpush1.msra.mxu0 %v3046
  %3094 = vmatprep.subr.mxu0 %v3051
  %3095 = vmatpush1.msra.mxu0 %v3050
  %3096 = vmatprep.subr.mxu0 %v3055
  %3097 = vmatpush1.msra.mxu0 %v3054
  %3098 = vmatprep.subr.mxu0 %v3059
  %3099 = vmatpush1.msra.mxu0 %v3058
  %3100 = vmatprep.subr.mxu0 %v3063
  %3101 = vmatpush1.msra.mxu0 %v3062
  %3102 = vmatprep.subr.mxu0 %v3067
  %3103 = vmatpush1.msra.mxu0 %v3066
  %3104 = vmatprep.subr.mxu0 %v3071
  %3105 = vmatpush1.msra.mxu0 %v3070
  %3106 = vmatprep.subr.mxu0 0.0
  %3107 = vmatpush1.msra.mxu0 0.0
  %3108 = vmatprep.subr.mxu0 0.0
  %3109 = vmatpush1.msra.mxu0 0.0
  %3110 = vmatprep.subr.mxu0 0.0
  %3111 = vmatpush1.msra.mxu0 0.0
  %3112 = vmatprep.subr.mxu0 0.0
  %3113 = vmatpush1.msra.mxu0 0.0
  %3114 = vmatprep.subr.mxu0 0.0
  %3115 = vmatpush1.msra.mxu0 0.0
  %3116 = vmatprep.subr.mxu0 0.0
  %3117 = vmatpush1.msra.mxu0 0.0
  %3118 = vmatprep.subr.mxu0 0.0
  %3119 = vmatpush1.msra.mxu0 0.0
  %3120 = vmatprep.subr.mxu0 0.0
  %3121 = vmatpush1.msra.mxu0 0.0
  %3122 = vmatprep.subr.mxu0 0.0
  %3123 = vmatpush1.msra.mxu0 0.0
  %3124 = vmatprep.subr.mxu0 0.0
  %3125 = vmatpush1.msra.mxu0 0.0
  %3126 = vmatprep.subr.mxu0 0.0
  %3127 = vmatpush1.msra.mxu0 0.0
  %3128 = vmatprep.subr.mxu0 0.0
  %3129 = vmatpush1.msra.mxu0 0.0
  %3130 = vmatprep.subr.mxu0 0.0
  %3131 = vmatpush1.msra.mxu0 0.0
  %3132 = vmatprep.subr.mxu0 0.0
  %3133 = vmatpush1.msra.mxu0 0.0
  %3134 = vmatprep.subr.mxu0 0.0
  %3135 = vmatpush1.msra.mxu0 0.0
  %3136 = vmatprep.subr.mxu0 0.0
  %3137 = vmatpush1.msra.mxu0 0.0
  %3138 = vmatprep.mubr.f32.mxu0 0.0
  %3139 = vmatmul.mubr.f32.gmra.mrb[0].mxu0 %v2992
  %v3140 = vpop.f32.mrb[0].mxu0
  %v3141 = vadd.f32 0.0, %v3140
  %v3142 = vpop.f32.mrb[0].mxu0
  %v3143 = vadd.f32 0.0, %v3142
  %3144 = vdwg.mxu0
  %3145 = vmatprep.subr.mxu0 %v3013
  %3146 = vmatpush1.msra.mxu0 %v3012
  %3147 = vmatprep.subr.mxu0 %v3017
  %3148 = vmatpush1.msra.mxu0 %v3016
  %3149 = vmatprep.subr.mxu0 %v3021
  %3150 = vmatpush1.msra.mxu0 %v3020
  %3151 = vmatprep.subr.mxu0 %v3025
  %3152 = vmatpush1.msra.mxu0 %v3024
  %3153 = vmatprep.subr.mxu0 %v3029
  %3154 = vmatpush1.msra.mxu0 %v3028
  %3155 = vmatprep.subr.mxu0 %v3033
  %3156 = vmatpush1.msra.mxu0 %v3032
  %3157 = vmatprep.subr.mxu0 %v3037
  %3158 = vmatpush1.msra.mxu0 %v3036
  %3159 = vmatprep.subr.mxu0 %v3041
  %3160 = vmatpush1.msra.mxu0 %v3040
  %3161 = vmatprep.subr.mxu0 %v3045
  %3162 = vmatpush1.msra.mxu0 %v3044
  %3163 = vmatprep.subr.mxu0 %v3049
  %3164 = vmatpush1.msra.mxu0 %v3048
  %3165 = vmatprep.subr.mxu0 %v3053
  %3166 = vmatpush1.msra.mxu0 %v3052
  %3167 = vmatprep.subr.mxu0 %v3057
  %3168 = vmatpush1.msra.mxu0 %v3056
  %3169 = vmatprep.subr.mxu0 %v3061
  %3170 = vmatpush1.msra.mxu0 %v3060
  %3171 = vmatprep.subr.mxu0 %v3065
  %3172 = vmatpush1.msra.mxu0 %v3064
  %3173 = vmatprep.subr.mxu0 %v3069
  %3174 = vmatpush1.msra.mxu0 %v3068
  %3175 = vmatprep.subr.mxu0 %v3073
  %3176 = vmatpush1.msra.mxu0 %v3072
  %3177 = vmatprep.subr.mxu0 0.0
  %3178 = vmatpush1.msra.mxu0 0.0
  %3179 = vmatprep.subr.mxu0 0.0
  %3180 = vmatpush1.msra.mxu0 0.0
  %3181 = vmatprep.subr.mxu0 0.0
  %3182 = vmatpush1.msra.mxu0 0.0
  %3183 = vmatprep.subr.mxu0 0.0
  %3184 = vmatpush1.msra.mxu0 0.0
  %3185 = vmatprep.subr.mxu0 0.0
  %3186 = vmatpush1.msra.mxu0 0.0
  %3187 = vmatprep.subr.mxu0 0.0
  %3188 = vmatpush1.msra.mxu0 0.0
  %3189 = vmatprep.subr.mxu0 0.0
  %3190 = vmatpush1.msra.mxu0 0.0
  %3191 = vmatprep.subr.mxu0 0.0
  %3192 = vmatpush1.msra.mxu0 0.0
  %3193 = vmatprep.subr.mxu0 0.0
  %3194 = vmatpush1.msra.mxu0 0.0
  %3195 = vmatprep.subr.mxu0 0.0
  %3196 = vmatpush1.msra.mxu0 0.0
  %3197 = vmatprep.subr.mxu0 0.0
  %3198 = vmatpush1.msra.mxu0 0.0
  %3199 = vmatprep.subr.mxu0 0.0
  %3200 = vmatpush1.msra.mxu0 0.0
  %3201 = vmatprep.subr.mxu0 0.0
  %3202 = vmatpush1.msra.mxu0 0.0
  %3203 = vmatprep.subr.mxu0 0.0
  %3204 = vmatpush1.msra.mxu0 0.0
  %3205 = vmatprep.subr.mxu0 0.0
  %3206 = vmatpush1.msra.mxu0 0.0
  %3207 = vmatprep.subr.mxu0 0.0
  %3208 = vmatpush1.msra.mxu0 0.0
  %3209 = vmatprep.mubr.f32.mxu0 0.0
  %3210 = vmatmul.mubr.f32.gmra.mrb[0].mxu0 %v2992
  %v3211 = vpop.f32.mrb[0].mxu0
  %v3212 = vadd.f32 0.0, %v3211
  %v3213 = vpop.f32.mrb[0].mxu0
  %v3214 = vadd.f32 0.0, %v3213
  %3215 = vdwg.mxu0
  %v3220 = vcombine.low %v3141, %v3143
  %v3221 = vcombine.high %v3141, %v3143
  %v3222 = vcombine.low %v3212, %v3214
  %v3223 = vcombine.high %v3212, %v3214
  %v3225 = vunpack.c.l.s4 1966171168
  %v3226 = vunpack.c.0.s8 %v3225
  %v3227 = vlaneseq
  %v3228 = vshrl.u32 %v3227, 7
  %v3229 = vsub.s32 %v3226, %v3228
  %v3230 = vrot.slane %v3220, %v3229
  %v3232 = vunpack.c.l.s4 1966171168
  %v3233 = vunpack.c.0.s8 %v3232
  %v3234 = vlaneseq
  %v3235 = vshrl.u32 %v3234, 7
  %v3236 = vsub.s32 %v3233, %v3235
  %v3237 = vrot.slane %v3221, %v3236
  %v3239 = vunpack.c.l.s4 1966171168
  %v3240 = vunpack.c.0.s8 %v3239
  %v3241 = vlaneseq
  %v3242 = vshrl.u32 %v3241, 7
  %v3243 = vsub.s32 %v3240, %v3242
  %v3244 = vrot.slane %v3222, %v3243
  %v3246 = vunpack.c.l.s4 1966171168
  %v3247 = vunpack.c.0.s8 %v3246
  %v3248 = vlaneseq
  %v3249 = vshrl.u32 %v3248, 7
  %v3250 = vsub.s32 %v3247, %v3249
  %v3251 = vrot.slane %v3223, %v3250
  %v3252 = vcombine.low %v3230, %v3244
  %v3253 = vcombine.high %v3230, %v3244
  %v3254 = vcombine.low %v3237, %v3251
  %v3255 = vcombine.high %v3237, %v3251
  %v3257 = vunpack.c.l.s4 1966171168
  %v3258 = vunpack.c.0.s8 %v3257
  %v3259 = vlaneseq
  %v3260 = vshrl.u32 %v3259, 7
  %v3261 = vsub.s32 %v3258, %v3260
  %v3262 = vrot.slane %v3252, %v3261
  %v3264 = vunpack.c.l.s4 1966171168
  %v3265 = vunpack.c.0.s8 %v3264
  %v3266 = vlaneseq
  %v3267 = vshrl.u32 %v3266, 7
  %v3268 = vsub.s32 %v3265, %v3267
  %v3269 = vrot.slane %v3254, %v3268
  %v3271 = vunpack.c.l.s4 1966171168
  %v3272 = vunpack.c.0.s8 %v3271
  %v3273 = vlaneseq
  %v3274 = vshrl.u32 %v3273, 7
  %v3275 = vsub.s32 %v3272, %v3274
  %v3276 = vrot.slane %v3253, %v3275
  %v3278 = vunpack.c.l.s4 1966171168
  %v3279 = vunpack.c.0.s8 %v3278
  %v3280 = vlaneseq
  %v3281 = vshrl.u32 %v3280, 7
  %v3282 = vsub.s32 %v3279, %v3281
  %v3283 = vrot.slane %v3255, %v3282
  %v3284 = vcombine.high %v3262, %v3262
  %v3285 = vcombine.high %v3269, %v3269
  %v3286 = vcombine.high %v3276, %v3276
  %v3287 = vcombine.high %v3283, %v3283
  %v3296 = vadd.f32 %v2995, %v3262
  %v3297 = vadd.f32 %v2997, %v3276
  %v3298 = vadd.f32 %v2999, %v3284
  %v3299 = vadd.f32 %v3001, %v3286
  %v3300 = vadd.f32 %v3003, %v3269
  %v3301 = vadd.f32 %v3005, %v3283
  %v3302 = vadd.f32 %v3007, %v3285
  %v3303 = vadd.f32 %v3009, %v3287
  %v3304 = vxor.u32 %v3296, 2147483648
  %v3305 = vxor.u32 %v3297, 2147483648
  %v3306 = vxor.u32 %v3298, 2147483648
  %v3307 = vxor.u32 %v3299, 2147483648
  %v3308 = vxor.u32 %v3300, 2147483648
  %v3309 = vxor.u32 %v3301, 2147483648
  %v3310 = vxor.u32 %v3302, 2147483648
  %v3311 = vxor.u32 %v3303, 2147483648
  %v3312 = vmul.f32 %v3304, 1.442695
  %v3313 = vpow.pop %v3312
  %v3314 = vmul.f32 %v3305, 1.442695
  %v3315 = vpow.pop %v3314
  %v3316 = vmul.f32 %v3306, 1.442695
  %v3317 = vpow.pop %v3316
  %v3318 = vmul.f32 %v3307, 1.442695
  %v3319 = vpow.pop %v3318
  %v3320 = vmul.f32 %v3308, 1.442695
  %v3321 = vpow.pop %v3320
  %v3322 = vmul.f32 %v3309, 1.442695
  %v3323 = vpow.pop %v3322
  %v3324 = vmul.f32 %v3310, 1.442695
  %v3325 = vpow.pop %v3324
  %v3326 = vmul.f32 %v3311, 1.442695
  %v3327 = vpow.pop %v3326
  %v3328 = vadd.f32 %v3313, 1.0
  %v3329 = vadd.f32 %v3315, 1.0
  %v3330 = vadd.f32 %v3317, 1.0
  %v3331 = vadd.f32 %v3319, 1.0
  %v3332 = vadd.f32 %v3321, 1.0
  %v3333 = vadd.f32 %v3323, 1.0
  %v3334 = vadd.f32 %v3325, 1.0
  %v3335 = vadd.f32 %v3327, 1.0
  %v3336 = vrcp.pop %v3328
  %v3337 = vmul.f32 1.0, %v3336
  %v3338 = vrcp.pop %v3329
  %v3339 = vmul.f32 1.0, %v3338
  %v3340 = vrcp.pop %v3330
  %v3341 = vmul.f32 1.0, %v3340
  %v3342 = vrcp.pop %v3331
  %v3343 = vmul.f32 1.0, %v3342
  %v3344 = vrcp.pop %v3332
  %v3345 = vmul.f32 1.0, %v3344
  %v3346 = vrcp.pop %v3333
  %v3347 = vmul.f32 1.0, %v3346
  %v3348 = vrcp.pop %v3334
  %v3349 = vmul.f32 1.0, %v3348
  %v3350 = vrcp.pop %v3335
  %v3351 = vmul.f32 1.0, %v3350
  %v3360 = vrot.slane %v3296, 1
  %v3361 = vrot.slane %v3297, 1
  %v3362 = vrot.slane %v3298, 1
  %v3363 = vrot.slane %v3299, 1
  %v3364 = vrot.slane %v3300, 1
  %v3365 = vrot.slane %v3301, 1
  %v3366 = vrot.slane %v3302, 1
  %v3367 = vrot.slane %v3303, 1
  %v3376 = vxor.u32 %v3360, 2147483648
  %v3377 = vxor.u32 %v3361, 2147483648
  %v3378 = vxor.u32 %v3362, 2147483648
  %v3379 = vxor.u32 %v3363, 2147483648
  %v3380 = vxor.u32 %v3364, 2147483648
  %v3381 = vxor.u32 %v3365, 2147483648
  %v3382 = vxor.u32 %v3366, 2147483648
  %v3383 = vxor.u32 %v3367, 2147483648
  %v3384 = vmul.f32 %v3376, 1.442695
  %v3385 = vpow.pop %v3384
  %v3386 = vmul.f32 %v3377, 1.442695
  %v3387 = vpow.pop %v3386
  %v3388 = vmul.f32 %v3378, 1.442695
  %v3389 = vpow.pop %v3388
  %v3390 = vmul.f32 %v3379, 1.442695
  %v3391 = vpow.pop %v3390
  %v3392 = vmul.f32 %v3380, 1.442695
  %v3393 = vpow.pop %v3392
  %v3394 = vmul.f32 %v3381, 1.442695
  %v3395 = vpow.pop %v3394
  %v3396 = vmul.f32 %v3382, 1.442695
  %v3397 = vpow.pop %v3396
  %v3398 = vmul.f32 %v3383, 1.442695
  %v3399 = vpow.pop %v3398
  %v3400 = vadd.f32 %v3385, 1.0
  %v3401 = vadd.f32 %v3387, 1.0
  %v3402 = vadd.f32 %v3389, 1.0
  %v3403 = vadd.f32 %v3391, 1.0
  %v3404 = vadd.f32 %v3393, 1.0
  %v3405 = vadd.f32 %v3395, 1.0
  %v3406 = vadd.f32 %v3397, 1.0
  %v3407 = vadd.f32 %v3399, 1.0
  %v3408 = vrcp.pop %v3400
  %v3409 = vmul.f32 1.0, %v3408
  %v3410 = vrcp.pop %v3401
  %v3411 = vmul.f32 1.0, %v3410
  %v3412 = vrcp.pop %v3402
  %v3413 = vmul.f32 1.0, %v3412
  %v3414 = vrcp.pop %v3403
  %v3415 = vmul.f32 1.0, %v3414
  %v3416 = vrcp.pop %v3404
  %v3417 = vmul.f32 1.0, %v3416
  %v3418 = vrcp.pop %v3405
  %v3419 = vmul.f32 1.0, %v3418
  %v3420 = vrcp.pop %v3406
  %v3421 = vmul.f32 1.0, %v3420
  %v3422 = vrcp.pop %v3407
  %v3423 = vmul.f32 1.0, %v3422
  %v3424 = vrot.slane %v3296, 2
  %v3425 = vrot.slane %v3297, 2
  %v3426 = vrot.slane %v3298, 2
  %v3427 = vrot.slane %v3299, 2
  %v3428 = vrot.slane %v3300, 2
  %v3429 = vrot.slane %v3301, 2
  %v3430 = vrot.slane %v3302, 2
  %v3431 = vrot.slane %v3303, 2
  %v3440 = vtanh.pop %v3424
  %v3441 = vtanh.pop %v3425
  %v3442 = vtanh.pop %v3426
  %v3443 = vtanh.pop %v3427
  %v3444 = vtanh.pop %v3428
  %v3445 = vtanh.pop %v3429
  %v3446 = vtanh.pop %v3430
  %v3447 = vtanh.pop %v3431
  %v3448 = vrot.slane %v3296, 3
  %v3449 = vrot.slane %v3297, 3
  %v3450 = vrot.slane %v3298, 3
  %v3451 = vrot.slane %v3299, 3
  %v3452 = vrot.slane %v3300, 3
  %v3453 = vrot.slane %v3301, 3
  %v3454 = vrot.slane %v3302, 3
  %v3455 = vrot.slane %v3303, 3
  %v3464 = vxor.u32 %v3448, 2147483648
  %v3465 = vxor.u32 %v3449, 2147483648
  %v3466 = vxor.u32 %v3450, 2147483648
  %v3467 = vxor.u32 %v3451, 2147483648
  %v3468 = vxor.u32 %v3452, 2147483648
  %v3469 = vxor.u32 %v3453, 2147483648
  %v3470 = vxor.u32 %v3454, 2147483648
  %v3471 = vxor.u32 %v3455, 2147483648
  %v3472 = vmul.f32 %v3464, 1.442695
  %v3473 = vpow.pop %v3472
  %v3474 = vmul.f32 %v3465, 1.442695
  %v3475 = vpow.pop %v3474
  %v3476 = vmul.f32 %v3466, 1.442695
  %v3477 = vpow.pop %v3476
  %v3478 = vmul.f32 %v3467, 1.442695
  %v3479 = vpow.pop %v3478
  %v3480 = vmul.f32 %v3468, 1.442695
  %v3481 = vpow.pop %v3480
  %v3482 = vmul.f32 %v3469, 1.442695
  %v3483 = vpow.pop %v3482
  %v3484 = vmul.f32 %v3470, 1.442695
  %v3485 = vpow.pop %v3484
  %v3486 = vmul.f32 %v3471, 1.442695
  %v3487 = vpow.pop %v3486
  %v3488 = vadd.f32 %v3473, 1.0
  %v3489 = vadd.f32 %v3475, 1.0
  %v3490 = vadd.f32 %v3477, 1.0
  %v3491 = vadd.f32 %v3479, 1.0
  %v3492 = vadd.f32 %v3481, 1.0
  %v3493 = vadd.f32 %v3483, 1.0
  %v3494 = vadd.f32 %v3485, 1.0
  %v3495 = vadd.f32 %v3487, 1.0
  %v3496 = vrcp.pop %v3488
  %v3497 = vmul.f32 1.0, %v3496
  %v3498 = vrcp.pop %v3489
  %v3499 = vmul.f32 1.0, %v3498
  %v3500 = vrcp.pop %v3490
  %v3501 = vmul.f32 1.0, %v3500
  %v3502 = vrcp.pop %v3491
  %v3503 = vmul.f32 1.0, %v3502
  %v3504 = vrcp.pop %v3492
  %v3505 = vmul.f32 1.0, %v3504
  %v3506 = vrcp.pop %v3493
  %v3507 = vmul.f32 1.0, %v3506
  %v3508 = vrcp.pop %v3494
  %v3509 = vmul.f32 1.0, %v3508
  %v3510 = vrcp.pop %v3495
  %v3511 = vmul.f32 1.0, %v3510
  %v3513 = vcombine.high %v2993, %v2993
  %v3515 = vunpack.c.l.s4 1966171168
  %v3516 = vunpack.c.0.s8 %v3515
  %v3517 = vlaneseq
  %v3518 = vshrl.u32 %v3517, 7
  %v3519 = vsub.s32 %v3516, %v3518
  %v3520 = vrot.slane %v2993, %v3519
  %v3522 = vunpack.c.l.s4 1966171168
  %v3523 = vunpack.c.0.s8 %v3522
  %v3524 = vlaneseq
  %v3525 = vshrl.u32 %v3524, 7
  %v3526 = vsub.s32 %v3523, %v3525
  %v3527 = vrot.slane %v3513, %v3526
  %v3528 = vcombine.high %v3520, %v3520
  %v3529 = vcombine.high %v3527, %v3527
  %v3531 = vunpack.c.l.s4 1966171168
  %v3532 = vunpack.c.0.s8 %v3531
  %v3533 = vlaneseq
  %v3534 = vshrl.u32 %v3533, 7
  %v3535 = vsub.s32 %v3532, %v3534
  %v3536 = vrot.slane %v3520, %v3535
  %v3538 = vunpack.c.l.s4 1966171168
  %v3539 = vunpack.c.0.s8 %v3538
  %v3540 = vlaneseq
  %v3541 = vshrl.u32 %v3540, 7
  %v3542 = vsub.s32 %v3539, %v3541
  %v3543 = vrot.slane %v3527, %v3542
  %v3545 = vunpack.c.l.s4 1966171168
  %v3546 = vunpack.c.0.s8 %v3545
  %v3547 = vlaneseq
  %v3548 = vshrl.u32 %v3547, 7
  %v3549 = vsub.s32 %v3546, %v3548
  %v3550 = vrot.slane %v3528, %v3549
  %v3552 = vunpack.c.l.s4 1966171168
  %v3553 = vunpack.c.0.s8 %v3552
  %v3554 = vlaneseq
  %v3555 = vshrl.u32 %v3554, 7
  %v3556 = vsub.s32 %v3553, %v3555
  %v3557 = vrot.slane %v3529, %v3556
  %v3558 = vcombine.high %v3536, %v3536
  %v3559 = vcombine.high %v3543, %v3543
  %v3560 = vcombine.high %v3550, %v3550
  %v3561 = vcombine.high %v3557, %v3557
  %v3570 = vmul.f32 %v3409, %v3536
  %v3571 = vmul.f32 %v3411, %v3550
  %v3572 = vmul.f32 %v3413, %v3558
  %v3573 = vmul.f32 %v3415, %v3560
  %v3574 = vmul.f32 %v3417, %v3543
  %v3575 = vmul.f32 %v3419, %v3557
  %v3576 = vmul.f32 %v3421, %v3559
  %v3577 = vmul.f32 %v3423, %v3561
  %v3578 = vmul.f32 %v3337, %v3440
  %v3579 = vmul.f32 %v3339, %v3441
  %v3580 = vmul.f32 %v3341, %v3442
  %v3581 = vmul.f32 %v3343, %v3443
  %v3582 = vmul.f32 %v3345, %v3444
  %v3583 = vmul.f32 %v3347, %v3445
  %v3584 = vmul.f32 %v3349, %v3446
  %v3585 = vmul.f32 %v3351, %v3447
  %v3586 = vadd.f32 %v3570, %v3578
  %v3587 = vadd.f32 %v3571, %v3579
  %v3588 = vadd.f32 %v3572, %v3580
  %v3589 = vadd.f32 %v3573, %v3581
  %v3590 = vadd.f32 %v3574, %v3582
  %v3591 = vadd.f32 %v3575, %v3583
  %v3592 = vadd.f32 %v3576, %v3584
  %v3593 = vadd.f32 %v3577, %v3585
  %v3594 = vtanh.pop %v3586
  %v3595 = vtanh.pop %v3587
  %v3596 = vtanh.pop %v3588
  %v3597 = vtanh.pop %v3589
  %v3598 = vtanh.pop %v3590
  %v3599 = vtanh.pop %v3591
  %v3600 = vtanh.pop %v3592
  %v3601 = vtanh.pop %v3593
  %v3602 = vmul.f32 %v3497, %v3594
  %v3603 = vmul.f32 %v3499, %v3595
  %v3604 = vmul.f32 %v3501, %v3596
  %v3605 = vmul.f32 %v3503, %v3597
  %v3606 = vmul.f32 %v3505, %v3598
  %v3607 = vmul.f32 %v3507, %v3599
  %v3608 = vmul.f32 %v3509, %v3600
  %v3609 = vmul.f32 %v3511, %v3601
  %v3618 = vcombine.low %v3586, %v3587
  %v3619 = vcombine.low %v3588, %v3589
  %v3620 = vcombine.low %v3590, %v3591
  %v3621 = vcombine.low %v3592, %v3593
  %v3623 = vunpack.c.l.s4 1966171168
  %v3624 = vunpack.c.0.s8 %v3623
  %v3625 = vlaneseq
  %v3626 = vshrl.u32 %v3625, 7
  %v3627 = vsub.s32 %v3624, %v3626
  %v3628 = vrot.slane %v3618, %v3627
  %v3630 = vunpack.c.l.s4 1966171168
  %v3631 = vunpack.c.0.s8 %v3630
  %v3632 = vlaneseq
  %v3633 = vshrl.u32 %v3632, 7
  %v3634 = vsub.s32 %v3631, %v3633
  %v3635 = vrot.slane %v3619, %v3634
  %v3637 = vunpack.c.l.s4 1966171168
  %v3638 = vunpack.c.0.s8 %v3637
  %v3639 = vlaneseq
  %v3640 = vshrl.u32 %v3639, 7
  %v3641 = vsub.s32 %v3638, %v3640
  %v3642 = vrot.slane %v3620, %v3641
  %v3644 = vunpack.c.l.s4 1966171168
  %v3645 = vunpack.c.0.s8 %v3644
  %v3646 = vlaneseq
  %v3647 = vshrl.u32 %v3646, 7
  %v3648 = vsub.s32 %v3645, %v3647
  %v3649 = vrot.slane %v3621, %v3648
  %v3650 = vcombine.low %v3628, %v3635
  %v3651 = vcombine.low %v3642, %v3649
  %v3653 = vunpack.c.l.s4 1966171168
  %v3654 = vunpack.c.0.s8 %v3653
  %v3655 = vlaneseq
  %v3656 = vshrl.u32 %v3655, 7
  %v3657 = vsub.s32 %v3654, %v3656
  %v3658 = vrot.slane %v3650, %v3657
  %v3660 = vunpack.c.l.s4 1966171168
  %v3661 = vunpack.c.0.s8 %v3660
  %v3662 = vlaneseq
  %v3663 = vshrl.u32 %v3662, 7
  %v3664 = vsub.s32 %v3661, %v3663
  %v3665 = vrot.slane %v3651, %v3664
  %v3666 = vcombine.low %v3658, %v3665
  %3668 = vst [vmem:[#allocation3] sm:$0xff] %v3666
  %v3677 = vcombine.low %v3602, %v3603
  %v3678 = vcombine.low %v3604, %v3605
  %v3679 = vcombine.low %v3606, %v3607
  %v3680 = vcombine.low %v3608, %v3609
  %v3682 = vunpack.c.l.s4 1966171168
  %v3683 = vunpack.c.0.s8 %v3682
  %v3684 = vlaneseq
  %v3685 = vshrl.u32 %v3684, 7
  %v3686 = vsub.s32 %v3683, %v3685
  %v3687 = vrot.slane %v3677, %v3686
  %v3689 = vunpack.c.l.s4 1966171168
  %v3690 = vunpack.c.0.s8 %v3689
  %v3691 = vlaneseq
  %v3692 = vshrl.u32 %v3691, 7
  %v3693 = vsub.s32 %v3690, %v3692
  %v3694 = vrot.slane %v3678, %v3693
  %v3696 = vunpack.c.l.s4 1966171168
  %v3697 = vunpack.c.0.s8 %v3696
  %v3698 = vlaneseq
  %v3699 = vshrl.u32 %v3698, 7
  %v3700 = vsub.s32 %v3697, %v3699
  %v3701 = vrot.slane %v3679, %v3700
  %v3703 = vunpack.c.l.s4 1966171168
  %v3704 = vunpack.c.0.s8 %v3703
  %v3705 = vlaneseq
  %v3706 = vshrl.u32 %v3705, 7
  %v3707 = vsub.s32 %v3704, %v3706
  %v3708 = vrot.slane %v3680, %v3707
  %v3709 = vcombine.low %v3687, %v3694
  %v3710 = vcombine.low %v3701, %v3708
  %v3712 = vunpack.c.l.s4 1966171168
  %v3713 = vunpack.c.0.s8 %v3712
  %v3714 = vlaneseq
  %v3715 = vshrl.u32 %v3714, 7
  %v3716 = vsub.s32 %v3713, %v3715
  %v3717 = vrot.slane %v3709, %v3716
  %v3719 = vunpack.c.l.s4 1966171168
  %v3720 = vunpack.c.0.s8 %v3719
  %v3721 = vlaneseq
  %v3722 = vshrl.u32 %v3721, 7
  %v3723 = vsub.s32 %v3720, %v3722
  %v3724 = vrot.slane %v3710, %v3723
  %v3725 = vcombine.low %v3717, %v3724
  %3727 = vst [vmem:[#allocation2] sm:$0xff] %v3725
  %3728 = vst [vmem:[%s2 + $0x4] sm:$0x1] %v3602
  %3729 = vst [vmem:[%s2 + $0xc] sm:$0x1] %v3603
  %3730 = vst [vmem:[%s2 + $0x14] sm:$0x1] %v3604
  %3731 = vst [vmem:[%s2 + $0x1c] sm:$0x1] %v3605
  %3732 = vst [vmem:[%s2 + $0x24] sm:$0x1] %v3606
  %3733 = vst [vmem:[%s2 + $0x2c] sm:$0x1] %v3607
  %3734 = vst [vmem:[%s2 + $0x34] sm:$0x1] %v3608
  %3735 = vst [vmem:[%s2 + $0x3c] sm:$0x1] %v3609
  %v3736 = vld [vmem:[#allocation2] sm:$0xff]
  %v3737 = vld [vmem:[#allocation3] sm:$0xff]
  %s3738 = scalar_lea.vmem %s0, 5
  %v3739 = vld [vmem:[%s3738] ss:$8 sm:$0xf]
  %s3740 = scalar_lea.vmem %s0, 37
  %v3741 = vld [vmem:[%s3740] ss:$8 sm:$0xf]
  %s3742 = scalar_lea.vmem %s0, 69
  %v3743 = vld [vmem:[%s3742] ss:$8 sm:$0xf]
  %s3744 = scalar_lea.vmem %s0, 101
  %v3745 = vld [vmem:[%s3744] ss:$8 sm:$0xf]
  %s3746 = scalar_lea.vmem %s0, 133
  %v3747 = vld [vmem:[%s3746] ss:$8 sm:$0xf]
  %s3748 = scalar_lea.vmem %s0, 165
  %v3749 = vld [vmem:[%s3748] ss:$8 sm:$0xf]
  %s3750 = scalar_lea.vmem %s0, 197
  %v3751 = vld [vmem:[%s3750] ss:$8 sm:$0xf]
  %s3752 = scalar_lea.vmem %s0, 229
  %v3753 = vld [vmem:[%s3752] ss:$8 sm:$0xf]
  %v3754 = vld [vmem:[%s1] sm:$0xff]
  %v3755 = vld [vmem:[%s1 + $0x8] sm:$0xff]
  %v3756 = vld [vmem:[%s1 + $0x10] sm:$0xff]
  %v3757 = vld [vmem:[%s1 + $0x18] sm:$0xff]
  %v3758 = vld [vmem:[%s1 + $0x20] sm:$0xff]
  %v3759 = vld [vmem:[%s1 + $0x28] sm:$0xff]
  %v3760 = vld [vmem:[%s1 + $0x30] sm:$0xff]
  %v3761 = vld [vmem:[%s1 + $0x38] sm:$0xff]
  %v3762 = vld [vmem:[%s1 + $0x40] sm:$0xff]
  %v3763 = vld [vmem:[%s1 + $0x48] sm:$0xff]
  %v3764 = vld [vmem:[%s1 + $0x50] sm:$0xff]
  %v3765 = vld [vmem:[%s1 + $0x58] sm:$0xff]
  %v3766 = vld [vmem:[%s1 + $0x60] sm:$0xff]
  %v3767 = vld [vmem:[%s1 + $0x68] sm:$0xff]
  %v3768 = vld [vmem:[%s1 + $0x70] sm:$0xff]
  %v3769 = vld [vmem:[%s1 + $0x78] sm:$0xff]
  %v3770 = vld [vmem:[%s1 + $0x80] sm:$0xff]
  %v3771 = vld [vmem:[%s1 + $0x88] sm:$0xff]
  %v3772 = vld [vmem:[%s1 + $0x90] sm:$0xff]
  %v3773 = vld [vmem:[%s1 + $0x98] sm:$0xff]
  %v3774 = vld [vmem:[%s1 + $0xa0] sm:$0xff]
  %v3775 = vld [vmem:[%s1 + $0xa8] sm:$0xff]
  %v3776 = vld [vmem:[%s1 + $0xb0] sm:$0xff]
  %v3777 = vld [vmem:[%s1 + $0xb8] sm:$0xff]
  %v3778 = vld [vmem:[%s1 + $0xc0] sm:$0xff]
  %v3779 = vld [vmem:[%s1 + $0xc8] sm:$0xff]
  %v3780 = vld [vmem:[%s1 + $0xd0] sm:$0xff]
  %v3781 = vld [vmem:[%s1 + $0xd8] sm:$0xff]
  %v3782 = vld [vmem:[%s1 + $0xe0] sm:$0xff]
  %v3783 = vld [vmem:[%s1 + $0xe8] sm:$0xff]
  %v3784 = vld [vmem:[%s1 + $0xf0] sm:$0xff]
  %v3785 = vld [vmem:[%s1 + $0xf8] sm:$0xff]
  %v3786 = vld [vmem:[%s1 + $0x100] sm:$0xff]
  %v3787 = vld [vmem:[%s1 + $0x108] sm:$0xff]
  %v3788 = vld [vmem:[%s1 + $0x110] sm:$0xff]
  %v3789 = vld [vmem:[%s1 + $0x118] sm:$0xff]
  %v3790 = vld [vmem:[%s1 + $0x120] sm:$0xff]
  %v3791 = vld [vmem:[%s1 + $0x128] sm:$0xff]
  %v3792 = vld [vmem:[%s1 + $0x130] sm:$0xff]
  %v3793 = vld [vmem:[%s1 + $0x138] sm:$0xff]
  %v3794 = vld [vmem:[%s1 + $0x140] sm:$0xff]
  %v3795 = vld [vmem:[%s1 + $0x148] sm:$0xff]
  %v3796 = vld [vmem:[%s1 + $0x150] sm:$0xff]
  %v3797 = vld [vmem:[%s1 + $0x158] sm:$0xff]
  %v3798 = vld [vmem:[%s1 + $0x160] sm:$0xff]
  %v3799 = vld [vmem:[%s1 + $0x168] sm:$0xff]
  %v3800 = vld [vmem:[%s1 + $0x170] sm:$0xff]
  %v3801 = vld [vmem:[%s1 + $0x178] sm:$0xff]
  %v3802 = vld [vmem:[%s1 + $0x180] sm:$0xff]
  %v3803 = vld [vmem:[%s1 + $0x188] sm:$0xff]
  %v3804 = vld [vmem:[%s1 + $0x190] sm:$0xff]
  %v3805 = vld [vmem:[%s1 + $0x198] sm:$0xff]
  %v3806 = vld [vmem:[%s1 + $0x1a0] sm:$0xff]
  %v3807 = vld [vmem:[%s1 + $0x1a8] sm:$0xff]
  %v3808 = vld [vmem:[%s1 + $0x1b0] sm:$0xff]
  %v3809 = vld [vmem:[%s1 + $0x1b8] sm:$0xff]
  %v3810 = vld [vmem:[%s1 + $0x1c0] sm:$0xff]
  %v3811 = vld [vmem:[%s1 + $0x1c8] sm:$0xff]
  %v3812 = vld [vmem:[%s1 + $0x1d0] sm:$0xff]
  %v3813 = vld [vmem:[%s1 + $0x1d8] sm:$0xff]
  %v3814 = vld [vmem:[%s1 + $0x1e0] sm:$0xff]
  %v3815 = vld [vmem:[%s1 + $0x1e8] sm:$0xff]
  %v3816 = vld [vmem:[%s1 + $0x1f0] sm:$0xff]
  %v3817 = vld [vmem:[%s1 + $0x1f8] sm:$0xff]
  %3818 = vmatprep.subr.mxu0 %v3755
  %3819 = vmatpush1.msra.mxu0 %v3754
  %3820 = vmatprep.subr.mxu0 %v3759
  %3821 = vmatpush1.msra.mxu0 %v3758
  %3822 = vmatprep.subr.mxu0 %v3763
  %3823 = vmatpush1.msra.mxu0 %v3762
  %3824 = vmatprep.subr.mxu0 %v3767
  %3825 = vmatpush1.msra.mxu0 %v3766
  %3826 = vmatprep.subr.mxu0 %v3771
  %3827 = vmatpush1.msra.mxu0 %v3770
  %3828 = vmatprep.subr.mxu0 %v3775
  %3829 = vmatpush1.msra.mxu0 %v3774
  %3830 = vmatprep.subr.mxu0 %v3779
  %3831 = vmatpush1.msra.mxu0 %v3778
  %3832 = vmatprep.subr.mxu0 %v3783
  %3833 = vmatpush1.msra.mxu0 %v3782
  %3834 = vmatprep.subr.mxu0 %v3787
  %3835 = vmatpush1.msra.mxu0 %v3786
  %3836 = vmatprep.subr.mxu0 %v3791
  %3837 = vmatpush1.msra.mxu0 %v3790
  %3838 = vmatprep.subr.mxu0 %v3795
  %3839 = vmatpush1.msra.mxu0 %v3794
  %3840 = vmatprep.subr.mxu0 %v3799
  %3841 = vmatpush1.msra.mxu0 %v3798
  %3842 = vmatprep.subr.mxu0 %v3803
  %3843 = vmatpush1.msra.mxu0 %v3802
  %3844 = vmatprep.subr.mxu0 %v3807
  %3845 = vmatpush1.msra.mxu0 %v3806
  %3846 = vmatprep.subr.mxu0 %v3811
  %3847 = vmatpush1.msra.mxu0 %v3810
  %3848 = vmatprep.subr.mxu0 %v3815
  %3849 = vmatpush1.msra.mxu0 %v3814
  %3850 = vmatprep.subr.mxu0 0.0
  %3851 = vmatpush1.msra.mxu0 0.0
  %3852 = vmatprep.subr.mxu0 0.0
  %3853 = vmatpush1.msra.mxu0 0.0
  %3854 = vmatprep.subr.mxu0 0.0
  %3855 = vmatpush1.msra.mxu0 0.0
  %3856 = vmatprep.subr.mxu0 0.0
  %3857 = vmatpush1.msra.mxu0 0.0
  %3858 = vmatprep.subr.mxu0 0.0
  %3859 = vmatpush1.msra.mxu0 0.0
  %3860 = vmatprep.subr.mxu0 0.0
  %3861 = vmatpush1.msra.mxu0 0.0
  %3862 = vmatprep.subr.mxu0 0.0
  %3863 = vmatpush1.msra.mxu0 0.0
  %3864 = vmatprep.subr.mxu0 0.0
  %3865 = vmatpush1.msra.mxu0 0.0
  %3866 = vmatprep.subr.mxu0 0.0
  %3867 = vmatpush1.msra.mxu0 0.0
  %3868 = vmatprep.subr.mxu0 0.0
  %3869 = vmatpush1.msra.mxu0 0.0
  %3870 = vmatprep.subr.mxu0 0.0
  %3871 = vmatpush1.msra.mxu0 0.0
  %3872 = vmatprep.subr.mxu0 0.0
  %3873 = vmatpush1.msra.mxu0 0.0
  %3874 = vmatprep.subr.mxu0 0.0
  %3875 = vmatpush1.msra.mxu0 0.0
  %3876 = vmatprep.subr.mxu0 0.0
  %3877 = vmatpush1.msra.mxu0 0.0
  %3878 = vmatprep.subr.mxu0 0.0
  %3879 = vmatpush1.msra.mxu0 0.0
  %3880 = vmatprep.subr.mxu0 0.0
  %3881 = vmatpush1.msra.mxu0 0.0
  %3882 = vmatprep.mubr.f32.mxu0 0.0
  %3883 = vmatmul.mubr.f32.gmra.mrb[0].mxu0 %v3736
  %v3884 = vpop.f32.mrb[0].mxu0
  %v3885 = vadd.f32 0.0, %v3884
  %v3886 = vpop.f32.mrb[0].mxu0
  %v3887 = vadd.f32 0.0, %v3886
  %3888 = vdwg.mxu0
  %3889 = vmatprep.subr.mxu0 %v3757
  %3890 = vmatpush1.msra.mxu0 %v3756
  %3891 = vmatprep.subr.mxu0 %v3761
  %3892 = vmatpush1.msra.mxu0 %v3760
  %3893 = vmatprep.subr.mxu0 %v3765
  %3894 = vmatpush1.msra.mxu0 %v3764
  %3895 = vmatprep.subr.mxu0 %v3769
  %3896 = vmatpush1.msra.mxu0 %v3768
  %3897 = vmatprep.subr.mxu0 %v3773
  %3898 = vmatpush1.msra.mxu0 %v3772
  %3899 = vmatprep.subr.mxu0 %v3777
  %3900 = vmatpush1.msra.mxu0 %v3776
  %3901 = vmatprep.subr.mxu0 %v3781
  %3902 = vmatpush1.msra.mxu0 %v3780
  %3903 = vmatprep.subr.mxu0 %v3785
  %3904 = vmatpush1.msra.mxu0 %v3784
  %3905 = vmatprep.subr.mxu0 %v3789
  %3906 = vmatpush1.msra.mxu0 %v3788
  %3907 = vmatprep.subr.mxu0 %v3793
  %3908 = vmatpush1.msra.mxu0 %v3792
  %3909 = vmatprep.subr.mxu0 %v3797
  %3910 = vmatpush1.msra.mxu0 %v3796
  %3911 = vmatprep.subr.mxu0 %v3801
  %3912 = vmatpush1.msra.mxu0 %v3800
  %3913 = vmatprep.subr.mxu0 %v3805
  %3914 = vmatpush1.msra.mxu0 %v3804
  %3915 = vmatprep.subr.mxu0 %v3809
  %3916 = vmatpush1.msra.mxu0 %v3808
  %3917 = vmatprep.subr.mxu0 %v3813
  %3918 = vmatpush1.msra.mxu0 %v3812
  %3919 = vmatprep.subr.mxu0 %v3817
  %3920 = vmatpush1.msra.mxu0 %v3816
  %3921 = vmatprep.subr.mxu0 0.0
  %3922 = vmatpush1.msra.mxu0 0.0
  %3923 = vmatprep.subr.mxu0 0.0
  %3924 = vmatpush1.msra.mxu0 0.0
  %3925 = vmatprep.subr.mxu0 0.0
  %3926 = vmatpush1.msra.mxu0 0.0
  %3927 = vmatprep.subr.mxu0 0.0
  %3928 = vmatpush1.msra.mxu0 0.0
  %3929 = vmatprep.subr.mxu0 0.0
  %3930 = vmatpush1.msra.mxu0 0.0
  %3931 = vmatprep.subr.mxu0 0.0
  %3932 = vmatpush1.msra.mxu0 0.0
  %3933 = vmatprep.subr.mxu0 0.0
  %3934 = vmatpush1.msra.mxu0 0.0
  %3935 = vmatprep.subr.mxu0 0.0
  %3936 = vmatpush1.msra.mxu0 0.0
  %3937 = vmatprep.subr.mxu0 0.0
  %3938 = vmatpush1.msra.mxu0 0.0
  %3939 = vmatprep.subr.mxu0 0.0
  %3940 = vmatpush1.msra.mxu0 0.0
  %3941 = vmatprep.subr.mxu0 0.0
  %3942 = vmatpush1.msra.mxu0 0.0
  %3943 = vmatprep.subr.mxu0 0.0
  %3944 = vmatpush1.msra.mxu0 0.0
  %3945 = vmatprep.subr.mxu0 0.0
  %3946 = vmatpush1.msra.mxu0 0.0
  %3947 = vmatprep.subr.mxu0 0.0
  %3948 = vmatpush1.msra.mxu0 0.0
  %3949 = vmatprep.subr.mxu0 0.0
  %3950 = vmatpush1.msra.mxu0 0.0
  %3951 = vmatprep.subr.mxu0 0.0
  %3952 = vmatpush1.msra.mxu0 0.0
  %3953 = vmatprep.mubr.f32.mxu0 0.0
  %3954 = vmatmul.mubr.f32.gmra.mrb[0].mxu0 %v3736
  %v3955 = vpop.f32.mrb[0].mxu0
  %v3956 = vadd.f32 0.0, %v3955
  %v3957 = vpop.f32.mrb[0].mxu0
  %v3958 = vadd.f32 0.0, %v3957
  %3959 = vdwg.mxu0
  %v3964 = vcombine.low %v3885, %v3887
  %v3965 = vcombine.high %v3885, %v3887
  %v3966 = vcombine.low %v3956, %v3958
  %v3967 = vcombine.high %v3956, %v3958
  %v3969 = vunpack.c.l.s4 1966171168
  %v3970 = vunpack.c.0.s8 %v3969
  %v3971 = vlaneseq
  %v3972 = vshrl.u32 %v3971, 7
  %v3973 = vsub.s32 %v3970, %v3972
  %v3974 = vrot.slane %v3964, %v3973
  %v3976 = vunpack.c.l.s4 1966171168
  %v3977 = vunpack.c.0.s8 %v3976
  %v3978 = vlaneseq
  %v3979 = vshrl.u32 %v3978, 7
  %v3980 = vsub.s32 %v3977, %v3979
  %v3981 = vrot.slane %v3965, %v3980
  %v3983 = vunpack.c.l.s4 1966171168
  %v3984 = vunpack.c.0.s8 %v3983
  %v3985 = vlaneseq
  %v3986 = vshrl.u32 %v3985, 7
  %v3987 = vsub.s32 %v3984, %v3986
  %v3988 = vrot.slane %v3966, %v3987
  %v3990 = vunpack.c.l.s4 1966171168
  %v3991 = vunpack.c.0.s8 %v3990
  %v3992 = vlaneseq
  %v3993 = vshrl.u32 %v3992, 7
  %v3994 = vsub.s32 %v3991, %v3993
  %v3995 = vrot.slane %v3967, %v3994
  %v3996 = vcombine.low %v3974, %v3988
  %v3997 = vcombine.high %v3974, %v3988
  %v3998 = vcombine.low %v3981, %v3995
  %v3999 = vcombine.high %v3981, %v3995
  %v4001 = vunpack.c.l.s4 1966171168
  %v4002 = vunpack.c.0.s8 %v4001
  %v4003 = vlaneseq
  %v4004 = vshrl.u32 %v4003, 7
  %v4005 = vsub.s32 %v4002, %v4004
  %v4006 = vrot.slane %v3996, %v4005
  %v4008 = vunpack.c.l.s4 1966171168
  %v4009 = vunpack.c.0.s8 %v4008
  %v4010 = vlaneseq
  %v4011 = vshrl.u32 %v4010, 7
  %v4012 = vsub.s32 %v4009, %v4011
  %v4013 = vrot.slane %v3998, %v4012
  %v4015 = vunpack.c.l.s4 1966171168
  %v4016 = vunpack.c.0.s8 %v4015
  %v4017 = vlaneseq
  %v4018 = vshrl.u32 %v4017, 7
  %v4019 = vsub.s32 %v4016, %v4018
  %v4020 = vrot.slane %v3997, %v4019
  %v4022 = vunpack.c.l.s4 1966171168
  %v4023 = vunpack.c.0.s8 %v4022
  %v4024 = vlaneseq
  %v4025 = vshrl.u32 %v4024, 7
  %v4026 = vsub.s32 %v4023, %v4025
  %v4027 = vrot.slane %v3999, %v4026
  %v4028 = vcombine.high %v4006, %v4006
  %v4029 = vcombine.high %v4013, %v4013
  %v4030 = vcombine.high %v4020, %v4020
  %v4031 = vcombine.high %v4027, %v4027
  %v4040 = vadd.f32 %v3739, %v4006
  %v4041 = vadd.f32 %v3741, %v4020
  %v4042 = vadd.f32 %v3743, %v4028
  %v4043 = vadd.f32 %v3745, %v4030
  %v4044 = vadd.f32 %v3747, %v4013
  %v4045 = vadd.f32 %v3749, %v4027
  %v4046 = vadd.f32 %v3751, %v4029
  %v4047 = vadd.f32 %v3753, %v4031
  %v4048 = vxor.u32 %v4040, 2147483648
  %v4049 = vxor.u32 %v4041, 2147483648
  %v4050 = vxor.u32 %v4042, 2147483648
  %v4051 = vxor.u32 %v4043, 2147483648
  %v4052 = vxor.u32 %v4044, 2147483648
  %v4053 = vxor.u32 %v4045, 2147483648
  %v4054 = vxor.u32 %v4046, 2147483648
  %v4055 = vxor.u32 %v4047, 2147483648
  %v4056 = vmul.f32 %v4048, 1.442695
  %v4057 = vpow.pop %v4056
  %v4058 = vmul.f32 %v4049, 1.442695
  %v4059 = vpow.pop %v4058
  %v4060 = vmul.f32 %v4050, 1.442695
  %v4061 = vpow.pop %v4060
  %v4062 = vmul.f32 %v4051, 1.442695
  %v4063 = vpow.pop %v4062
  %v4064 = vmul.f32 %v4052, 1.442695
  %v4065 = vpow.pop %v4064
  %v4066 = vmul.f32 %v4053, 1.442695
  %v4067 = vpow.pop %v4066
  %v4068 = vmul.f32 %v4054, 1.442695
  %v4069 = vpow.pop %v4068
  %v4070 = vmul.f32 %v4055, 1.442695
  %v4071 = vpow.pop %v4070
  %v4072 = vadd.f32 %v4057, 1.0
  %v4073 = vadd.f32 %v4059, 1.0
  %v4074 = vadd.f32 %v4061, 1.0
  %v4075 = vadd.f32 %v4063, 1.0
  %v4076 = vadd.f32 %v4065, 1.0
  %v4077 = vadd.f32 %v4067, 1.0
  %v4078 = vadd.f32 %v4069, 1.0
  %v4079 = vadd.f32 %v4071, 1.0
  %v4080 = vrcp.pop %v4072
  %v4081 = vmul.f32 1.0, %v4080
  %v4082 = vrcp.pop %v4073
  %v4083 = vmul.f32 1.0, %v4082
  %v4084 = vrcp.pop %v4074
  %v4085 = vmul.f32 1.0, %v4084
  %v4086 = vrcp.pop %v4075
  %v4087 = vmul.f32 1.0, %v4086
  %v4088 = vrcp.pop %v4076
  %v4089 = vmul.f32 1.0, %v4088
  %v4090 = vrcp.pop %v4077
  %v4091 = vmul.f32 1.0, %v4090
  %v4092 = vrcp.pop %v4078
  %v4093 = vmul.f32 1.0, %v4092
  %v4094 = vrcp.pop %v4079
  %v4095 = vmul.f32 1.0, %v4094
  %v4104 = vrot.slane %v4040, 1
  %v4105 = vrot.slane %v4041, 1
  %v4106 = vrot.slane %v4042, 1
  %v4107 = vrot.slane %v4043, 1
  %v4108 = vrot.slane %v4044, 1
  %v4109 = vrot.slane %v4045, 1
  %v4110 = vrot.slane %v4046, 1
  %v4111 = vrot.slane %v4047, 1
  %v4120 = vxor.u32 %v4104, 2147483648
  %v4121 = vxor.u32 %v4105, 2147483648
  %v4122 = vxor.u32 %v4106, 2147483648
  %v4123 = vxor.u32 %v4107, 2147483648
  %v4124 = vxor.u32 %v4108, 2147483648
  %v4125 = vxor.u32 %v4109, 2147483648
  %v4126 = vxor.u32 %v4110, 2147483648
  %v4127 = vxor.u32 %v4111, 2147483648
  %v4128 = vmul.f32 %v4120, 1.442695
  %v4129 = vpow.pop %v4128
  %v4130 = vmul.f32 %v4121, 1.442695
  %v4131 = vpow.pop %v4130
  %v4132 = vmul.f32 %v4122, 1.442695
  %v4133 = vpow.pop %v4132
  %v4134 = vmul.f32 %v4123, 1.442695
  %v4135 = vpow.pop %v4134
  %v4136 = vmul.f32 %v4124, 1.442695
  %v4137 = vpow.pop %v4136
  %v4138 = vmul.f32 %v4125, 1.442695
  %v4139 = vpow.pop %v4138
  %v4140 = vmul.f32 %v4126, 1.442695
  %v4141 = vpow.pop %v4140
  %v4142 = vmul.f32 %v4127, 1.442695
  %v4143 = vpow.pop %v4142
  %v4144 = vadd.f32 %v4129, 1.0
  %v4145 = vadd.f32 %v4131, 1.0
  %v4146 = vadd.f32 %v4133, 1.0
  %v4147 = vadd.f32 %v4135, 1.0
  %v4148 = vadd.f32 %v4137, 1.0
  %v4149 = vadd.f32 %v4139, 1.0
  %v4150 = vadd.f32 %v4141, 1.0
  %v4151 = vadd.f32 %v4143, 1.0
  %v4152 = vrcp.pop %v4144
  %v4153 = vmul.f32 1.0, %v4152
  %v4154 = vrcp.pop %v4145
  %v4155 = vmul.f32 1.0, %v4154
  %v4156 = vrcp.pop %v4146
  %v4157 = vmul.f32 1.0, %v4156
  %v4158 = vrcp.pop %v4147
  %v4159 = vmul.f32 1.0, %v4158
  %v4160 = vrcp.pop %v4148
  %v4161 = vmul.f32 1.0, %v4160
  %v4162 = vrcp.pop %v4149
  %v4163 = vmul.f32 1.0, %v4162
  %v4164 = vrcp.pop %v4150
  %v4165 = vmul.f32 1.0, %v4164
  %v4166 = vrcp.pop %v4151
  %v4167 = vmul.f32 1.0, %v4166
  %v4168 = vrot.slane %v4040, 2
  %v4169 = vrot.slane %v4041, 2
  %v4170 = vrot.slane %v4042, 2
  %v4171 = vrot.slane %v4043, 2
  %v4172 = vrot.slane %v4044, 2
  %v4173 = vrot.slane %v4045, 2
  %v4174 = vrot.slane %v4046, 2
  %v4175 = vrot.slane %v4047, 2
  %v4184 = vtanh.pop %v4168
  %v4185 = vtanh.pop %v4169
  %v4186 = vtanh.pop %v4170
  %v4187 = vtanh.pop %v4171
  %v4188 = vtanh.pop %v4172
  %v4189 = vtanh.pop %v4173
  %v4190 = vtanh.pop %v4174
  %v4191 = vtanh.pop %v4175
  %v4192 = vrot.slane %v4040, 3
  %v4193 = vrot.slane %v4041, 3
  %v4194 = vrot.slane %v4042, 3
  %v4195 = vrot.slane %v4043, 3
  %v4196 = vrot.slane %v4044, 3
  %v4197 = vrot.slane %v4045, 3
  %v4198 = vrot.slane %v4046, 3
  %v4199 = vrot.slane %v4047, 3
  %v4208 = vxor.u32 %v4192, 2147483648
  %v4209 = vxor.u32 %v4193, 2147483648
  %v4210 = vxor.u32 %v4194, 2147483648
  %v4211 = vxor.u32 %v4195, 2147483648
  %v4212 = vxor.u32 %v4196, 2147483648
  %v4213 = vxor.u32 %v4197, 2147483648
  %v4214 = vxor.u32 %v4198, 2147483648
  %v4215 = vxor.u32 %v4199, 2147483648
  %v4216 = vmul.f32 %v4208, 1.442695
  %v4217 = vpow.pop %v4216
  %v4218 = vmul.f32 %v4209, 1.442695
  %v4219 = vpow.pop %v4218
  %v4220 = vmul.f32 %v4210, 1.442695
  %v4221 = vpow.pop %v4220
  %v4222 = vmul.f32 %v4211, 1.442695
  %v4223 = vpow.pop %v4222
  %v4224 = vmul.f32 %v4212, 1.442695
  %v4225 = vpow.pop %v4224
  %v4226 = vmul.f32 %v4213, 1.442695
  %v4227 = vpow.pop %v4226
  %v4228 = vmul.f32 %v4214, 1.442695
  %v4229 = vpow.pop %v4228
  %v4230 = vmul.f32 %v4215, 1.442695
  %v4231 = vpow.pop %v4230
  %v4232 = vadd.f32 %v4217, 1.0
  %v4233 = vadd.f32 %v4219, 1.0
  %v4234 = vadd.f32 %v4221, 1.0
  %v4235 = vadd.f32 %v4223, 1.0
  %v4236 = vadd.f32 %v4225, 1.0
  %v4237 = vadd.f32 %v4227, 1.0
  %v4238 = vadd.f32 %v4229, 1.0
  %v4239 = vadd.f32 %v4231, 1.0
  %v4240 = vrcp.pop %v4232
  %v4241 = vmul.f32 1.0, %v4240
  %v4242 = vrcp.pop %v4233
  %v4243 = vmul.f32 1.0, %v4242
  %v4244 = vrcp.pop %v4234
  %v4245 = vmul.f32 1.0, %v4244
  %v4246 = vrcp.pop %v4235
  %v4247 = vmul.f32 1.0, %v4246
  %v4248 = vrcp.pop %v4236
  %v4249 = vmul.f32 1.0, %v4248
  %v4250 = vrcp.pop %v4237
  %v4251 = vmul.f32 1.0, %v4250
  %v4252 = vrcp.pop %v4238
  %v4253 = vmul.f32 1.0, %v4252
  %v4254 = vrcp.pop %v4239
  %v4255 = vmul.f32 1.0, %v4254
  %v4257 = vcombine.high %v3737, %v3737
  %v4259 = vunpack.c.l.s4 1966171168
  %v4260 = vunpack.c.0.s8 %v4259
  %v4261 = vlaneseq
  %v4262 = vshrl.u32 %v4261, 7
  %v4263 = vsub.s32 %v4260, %v4262
  %v4264 = vrot.slane %v3737, %v4263
  %v4266 = vunpack.c.l.s4 1966171168
  %v4267 = vunpack.c.0.s8 %v4266
  %v4268 = vlaneseq
  %v4269 = vshrl.u32 %v4268, 7
  %v4270 = vsub.s32 %v4267, %v4269
  %v4271 = vrot.slane %v4257, %v4270
  %v4272 = vcombine.high %v4264, %v4264
  %v4273 = vcombine.high %v4271, %v4271
  %v4275 = vunpack.c.l.s4 1966171168
  %v4276 = vunpack.c.0.s8 %v4275
  %v4277 = vlaneseq
  %v4278 = vshrl.u32 %v4277, 7
  %v4279 = vsub.s32 %v4276, %v4278
  %v4280 = vrot.slane %v4264, %v4279
  %v4282 = vunpack.c.l.s4 1966171168
  %v4283 = vunpack.c.0.s8 %v4282
  %v4284 = vlaneseq
  %v4285 = vshrl.u32 %v4284, 7
  %v4286 = vsub.s32 %v4283, %v4285
  %v4287 = vrot.slane %v4271, %v4286
  %v4289 = vunpack.c.l.s4 1966171168
  %v4290 = vunpack.c.0.s8 %v4289
  %v4291 = vlaneseq
  %v4292 = vshrl.u32 %v4291, 7
  %v4293 = vsub.s32 %v4290, %v4292
  %v4294 = vrot.slane %v4272, %v4293
  %v4296 = vunpack.c.l.s4 1966171168
  %v4297 = vunpack.c.0.s8 %v4296
  %v4298 = vlaneseq
  %v4299 = vshrl.u32 %v4298, 7
  %v4300 = vsub.s32 %v4297, %v4299
  %v4301 = vrot.slane %v4273, %v4300
  %v4302 = vcombine.high %v4280, %v4280
  %v4303 = vcombine.high %v4287, %v4287
  %v4304 = vcombine.high %v4294, %v4294
  %v4305 = vcombine.high %v4301, %v4301
  %v4314 = vmul.f32 %v4153, %v4280
  %v4315 = vmul.f32 %v4155, %v4294
  %v4316 = vmul.f32 %v4157, %v4302
  %v4317 = vmul.f32 %v4159, %v4304
  %v4318 = vmul.f32 %v4161, %v4287
  %v4319 = vmul.f32 %v4163, %v4301
  %v4320 = vmul.f32 %v4165, %v4303
  %v4321 = vmul.f32 %v4167, %v4305
  %v4322 = vmul.f32 %v4081, %v4184
  %v4323 = vmul.f32 %v4083, %v4185
  %v4324 = vmul.f32 %v4085, %v4186
  %v4325 = vmul.f32 %v4087, %v4187
  %v4326 = vmul.f32 %v4089, %v4188
  %v4327 = vmul.f32 %v4091, %v4189
  %v4328 = vmul.f32 %v4093, %v4190
  %v4329 = vmul.f32 %v4095, %v4191
  %v4330 = vadd.f32 %v4314, %v4322
  %v4331 = vadd.f32 %v4315, %v4323
  %v4332 = vadd.f32 %v4316, %v4324
  %v4333 = vadd.f32 %v4317, %v4325
  %v4334 = vadd.f32 %v4318, %v4326
  %v4335 = vadd.f32 %v4319, %v4327
  %v4336 = vadd.f32 %v4320, %v4328
  %v4337 = vadd.f32 %v4321, %v4329
  %v4338 = vtanh.pop %v4330
  %v4339 = vtanh.pop %v4331
  %v4340 = vtanh.pop %v4332
  %v4341 = vtanh.pop %v4333
  %v4342 = vtanh.pop %v4334
  %v4343 = vtanh.pop %v4335
  %v4344 = vtanh.pop %v4336
  %v4345 = vtanh.pop %v4337
  %v4346 = vmul.f32 %v4241, %v4338
  %v4347 = vmul.f32 %v4243, %v4339
  %v4348 = vmul.f32 %v4245, %v4340
  %v4349 = vmul.f32 %v4247, %v4341
  %v4350 = vmul.f32 %v4249, %v4342
  %v4351 = vmul.f32 %v4251, %v4343
  %v4352 = vmul.f32 %v4253, %v4344
  %v4353 = vmul.f32 %v4255, %v4345
  %v4362 = vcombine.low %v4330, %v4331
  %v4363 = vcombine.low %v4332, %v4333
  %v4364 = vcombine.low %v4334, %v4335
  %v4365 = vcombine.low %v4336, %v4337
  %v4367 = vunpack.c.l.s4 1966171168
  %v4368 = vunpack.c.0.s8 %v4367
  %v4369 = vlaneseq
  %v4370 = vshrl.u32 %v4369, 7
  %v4371 = vsub.s32 %v4368, %v4370
  %v4372 = vrot.slane %v4362, %v4371
  %v4374 = vunpack.c.l.s4 1966171168
  %v4375 = vunpack.c.0.s8 %v4374
  %v4376 = vlaneseq
  %v4377 = vshrl.u32 %v4376, 7
  %v4378 = vsub.s32 %v4375, %v4377
  %v4379 = vrot.slane %v4363, %v4378
  %v4381 = vunpack.c.l.s4 1966171168
  %v4382 = vunpack.c.0.s8 %v4381
  %v4383 = vlaneseq
  %v4384 = vshrl.u32 %v4383, 7
  %v4385 = vsub.s32 %v4382, %v4384
  %v4386 = vrot.slane %v4364, %v4385
  %v4388 = vunpack.c.l.s4 1966171168
  %v4389 = vunpack.c.0.s8 %v4388
  %v4390 = vlaneseq
  %v4391 = vshrl.u32 %v4390, 7
  %v4392 = vsub.s32 %v4389, %v4391
  %v4393 = vrot.slane %v4365, %v4392
  %v4394 = vcombine.low %v4372, %v4379
  %v4395 = vcombine.low %v4386, %v4393
  %v4397 = vunpack.c.l.s4 1966171168
  %v4398 = vunpack.c.0.s8 %v4397
  %v4399 = vlaneseq
  %v4400 = vshrl.u32 %v4399, 7
  %v4401 = vsub.s32 %v4398, %v4400
  %v4402 = vrot.slane %v4394, %v4401
  %v4404 = vunpack.c.l.s4 1966171168
  %v4405 = vunpack.c.0.s8 %v4404
  %v4406 = vlaneseq
  %v4407 = vshrl.u32 %v4406, 7
  %v4408 = vsub.s32 %v4405, %v4407
  %v4409 = vrot.slane %v4395, %v4408
  %v4410 = vcombine.low %v4402, %v4409
  %4412 = vst [vmem:[#allocation3] sm:$0xff] %v4410
  %v4421 = vcombine.low %v4346, %v4347
  %v4422 = vcombine.low %v4348, %v4349
  %v4423 = vcombine.low %v4350, %v4351
  %v4424 = vcombine.low %v4352, %v4353
  %v4426 = vunpack.c.l.s4 1966171168
  %v4427 = vunpack.c.0.s8 %v4426
  %v4428 = vlaneseq
  %v4429 = vshrl.u32 %v4428, 7
  %v4430 = vsub.s32 %v4427, %v4429
  %v4431 = vrot.slane %v4421, %v4430
  %v4433 = vunpack.c.l.s4 1966171168
  %v4434 = vunpack.c.0.s8 %v4433
  %v4435 = vlaneseq
  %v4436 = vshrl.u32 %v4435, 7
  %v4437 = vsub.s32 %v4434, %v4436
  %v4438 = vrot.slane %v4422, %v4437
  %v4440 = vunpack.c.l.s4 1966171168
  %v4441 = vunpack.c.0.s8 %v4440
  %v4442 = vlaneseq
  %v4443 = vshrl.u32 %v4442, 7
  %v4444 = vsub.s32 %v4441, %v4443
  %v4445 = vrot.slane %v4423, %v4444
  %v4447 = vunpack.c.l.s4 1966171168
  %v4448 = vunpack.c.0.s8 %v4447
  %v4449 = vlaneseq
  %v4450 = vshrl.u32 %v4449, 7
  %v4451 = vsub.s32 %v4448, %v4450
  %v4452 = vrot.slane %v4424, %v4451
  %v4453 = vcombine.low %v4431, %v4438
  %v4454 = vcombine.low %v4445, %v4452
  %v4456 = vunpack.c.l.s4 1966171168
  %v4457 = vunpack.c.0.s8 %v4456
  %v4458 = vlaneseq
  %v4459 = vshrl.u32 %v4458, 7
  %v4460 = vsub.s32 %v4457, %v4459
  %v4461 = vrot.slane %v4453, %v4460
  %v4463 = vunpack.c.l.s4 1966171168
  %v4464 = vunpack.c.0.s8 %v4463
  %v4465 = vlaneseq
  %v4466 = vshrl.u32 %v4465, 7
  %v4467 = vsub.s32 %v4464, %v4466
  %v4468 = vrot.slane %v4454, %v4467
  %v4469 = vcombine.low %v4461, %v4468
  %4471 = vst [vmem:[#allocation2] sm:$0xff] %v4469
  %4472 = vst [vmem:[%s2 + $0x5] sm:$0x1] %v4346
  %4473 = vst [vmem:[%s2 + $0xd] sm:$0x1] %v4347
  %4474 = vst [vmem:[%s2 + $0x15] sm:$0x1] %v4348
  %4475 = vst [vmem:[%s2 + $0x1d] sm:$0x1] %v4349
  %4476 = vst [vmem:[%s2 + $0x25] sm:$0x1] %v4350
  %4477 = vst [vmem:[%s2 + $0x2d] sm:$0x1] %v4351
  %4478 = vst [vmem:[%s2 + $0x35] sm:$0x1] %v4352
  %4479 = vst [vmem:[%s2 + $0x3d] sm:$0x1] %v4353
  %v4480 = vld [vmem:[#allocation2] sm:$0xff]
  %v4481 = vld [vmem:[#allocation3] sm:$0xff]
  %s4482 = scalar_lea.vmem %s0, 6
  %v4483 = vld [vmem:[%s4482] ss:$8 sm:$0xf]
  %s4484 = scalar_lea.vmem %s0, 38
  %v4485 = vld [vmem:[%s4484] ss:$8 sm:$0xf]
  %s4486 = scalar_lea.vmem %s0, 70
  %v4487 = vld [vmem:[%s4486] ss:$8 sm:$0xf]
  %s4488 = scalar_lea.vmem %s0, 102
  %v4489 = vld [vmem:[%s4488] ss:$8 sm:$0xf]
  %s4490 = scalar_lea.vmem %s0, 134
  %v4491 = vld [vmem:[%s4490] ss:$8 sm:$0xf]
  %s4492 = scalar_lea.vmem %s0, 166
  %v4493 = vld [vmem:[%s4492] ss:$8 sm:$0xf]
  %s4494 = scalar_lea.vmem %s0, 198
  %v4495 = vld [vmem:[%s4494] ss:$8 sm:$0xf]
  %s4496 = scalar_lea.vmem %s0, 230
  %v4497 = vld [vmem:[%s4496] ss:$8 sm:$0xf]
  %v4498 = vld [vmem:[%s1] sm:$0xff]
  %v4499 = vld [vmem:[%s1 + $0x8] sm:$0xff]
  %v4500 = vld [vmem:[%s1 + $0x10] sm:$0xff]
  %v4501 = vld [vmem:[%s1 + $0x18] sm:$0xff]
  %v4502 = vld [vmem:[%s1 + $0x20] sm:$0xff]
  %v4503 = vld [vmem:[%s1 + $0x28] sm:$0xff]
  %v4504 = vld [vmem:[%s1 + $0x30] sm:$0xff]
  %v4505 = vld [vmem:[%s1 + $0x38] sm:$0xff]
  %v4506 = vld [vmem:[%s1 + $0x40] sm:$0xff]
  %v4507 = vld [vmem:[%s1 + $0x48] sm:$0xff]
  %v4508 = vld [vmem:[%s1 + $0x50] sm:$0xff]
  %v4509 = vld [vmem:[%s1 + $0x58] sm:$0xff]
  %v4510 = vld [vmem:[%s1 + $0x60] sm:$0xff]
  %v4511 = vld [vmem:[%s1 + $0x68] sm:$0xff]
  %v4512 = vld [vmem:[%s1 + $0x70] sm:$0xff]
  %v4513 = vld [vmem:[%s1 + $0x78] sm:$0xff]
  %v4514 = vld [vmem:[%s1 + $0x80] sm:$0xff]
  %v4515 = vld [vmem:[%s1 + $0x88] sm:$0xff]
  %v4516 = vld [vmem:[%s1 + $0x90] sm:$0xff]
  %v4517 = vld [vmem:[%s1 + $0x98] sm:$0xff]
  %v4518 = vld [vmem:[%s1 + $0xa0] sm:$0xff]
  %v4519 = vld [vmem:[%s1 + $0xa8] sm:$0xff]
  %v4520 = vld [vmem:[%s1 + $0xb0] sm:$0xff]
  %v4521 = vld [vmem:[%s1 + $0xb8] sm:$0xff]
  %v4522 = vld [vmem:[%s1 + $0xc0] sm:$0xff]
  %v4523 = vld [vmem:[%s1 + $0xc8] sm:$0xff]
  %v4524 = vld [vmem:[%s1 + $0xd0] sm:$0xff]
  %v4525 = vld [vmem:[%s1 + $0xd8] sm:$0xff]
  %v4526 = vld [vmem:[%s1 + $0xe0] sm:$0xff]
  %v4527 = vld [vmem:[%s1 + $0xe8] sm:$0xff]
  %v4528 = vld [vmem:[%s1 + $0xf0] sm:$0xff]
  %v4529 = vld [vmem:[%s1 + $0xf8] sm:$0xff]
  %v4530 = vld [vmem:[%s1 + $0x100] sm:$0xff]
  %v4531 = vld [vmem:[%s1 + $0x108] sm:$0xff]
  %v4532 = vld [vmem:[%s1 + $0x110] sm:$0xff]
  %v4533 = vld [vmem:[%s1 + $0x118] sm:$0xff]
  %v4534 = vld [vmem:[%s1 + $0x120] sm:$0xff]
  %v4535 = vld [vmem:[%s1 + $0x128] sm:$0xff]
  %v4536 = vld [vmem:[%s1 + $0x130] sm:$0xff]
  %v4537 = vld [vmem:[%s1 + $0x138] sm:$0xff]
  %v4538 = vld [vmem:[%s1 + $0x140] sm:$0xff]
  %v4539 = vld [vmem:[%s1 + $0x148] sm:$0xff]
  %v4540 = vld [vmem:[%s1 + $0x150] sm:$0xff]
  %v4541 = vld [vmem:[%s1 + $0x158] sm:$0xff]
  %v4542 = vld [vmem:[%s1 + $0x160] sm:$0xff]
  %v4543 = vld [vmem:[%s1 + $0x168] sm:$0xff]
  %v4544 = vld [vmem:[%s1 + $0x170] sm:$0xff]
  %v4545 = vld [vmem:[%s1 + $0x178] sm:$0xff]
  %v4546 = vld [vmem:[%s1 + $0x180] sm:$0xff]
  %v4547 = vld [vmem:[%s1 + $0x188] sm:$0xff]
  %v4548 = vld [vmem:[%s1 + $0x190] sm:$0xff]
  %v4549 = vld [vmem:[%s1 + $0x198] sm:$0xff]
  %v4550 = vld [vmem:[%s1 + $0x1a0] sm:$0xff]
  %v4551 = vld [vmem:[%s1 + $0x1a8] sm:$0xff]
  %v4552 = vld [vmem:[%s1 + $0x1b0] sm:$0xff]
  %v4553 = vld [vmem:[%s1 + $0x1b8] sm:$0xff]
  %v4554 = vld [vmem:[%s1 + $0x1c0] sm:$0xff]
  %v4555 = vld [vmem:[%s1 + $0x1c8] sm:$0xff]
  %v4556 = vld [vmem:[%s1 + $0x1d0] sm:$0xff]
  %v4557 = vld [vmem:[%s1 + $0x1d8] sm:$0xff]
  %v4558 = vld [vmem:[%s1 + $0x1e0] sm:$0xff]
  %v4559 = vld [vmem:[%s1 + $0x1e8] sm:$0xff]
  %v4560 = vld [vmem:[%s1 + $0x1f0] sm:$0xff]
  %v4561 = vld [vmem:[%s1 + $0x1f8] sm:$0xff]
  %4562 = vmatprep.subr.mxu0 %v4499
  %4563 = vmatpush1.msra.mxu0 %v4498
  %4564 = vmatprep.subr.mxu0 %v4503
  %4565 = vmatpush1.msra.mxu0 %v4502
  %4566 = vmatprep.subr.mxu0 %v4507
  %4567 = vmatpush1.msra.mxu0 %v4506
  %4568 = vmatprep.subr.mxu0 %v4511
  %4569 = vmatpush1.msra.mxu0 %v4510
  %4570 = vmatprep.subr.mxu0 %v4515
  %4571 = vmatpush1.msra.mxu0 %v4514
  %4572 = vmatprep.subr.mxu0 %v4519
  %4573 = vmatpush1.msra.mxu0 %v4518
  %4574 = vmatprep.subr.mxu0 %v4523
  %4575 = vmatpush1.msra.mxu0 %v4522
  %4576 = vmatprep.subr.mxu0 %v4527
  %4577 = vmatpush1.msra.mxu0 %v4526
  %4578 = vmatprep.subr.mxu0 %v4531
  %4579 = vmatpush1.msra.mxu0 %v4530
  %4580 = vmatprep.subr.mxu0 %v4535
  %4581 = vmatpush1.msra.mxu0 %v4534
  %4582 = vmatprep.subr.mxu0 %v4539
  %4583 = vmatpush1.msra.mxu0 %v4538
  %4584 = vmatprep.subr.mxu0 %v4543
  %4585 = vmatpush1.msra.mxu0 %v4542
  %4586 = vmatprep.subr.mxu0 %v4547
  %4587 = vmatpush1.msra.mxu0 %v4546
  %4588 = vmatprep.subr.mxu0 %v4551
  %4589 = vmatpush1.msra.mxu0 %v4550
  %4590 = vmatprep.subr.mxu0 %v4555
  %4591 = vmatpush1.msra.mxu0 %v4554
  %4592 = vmatprep.subr.mxu0 %v4559
  %4593 = vmatpush1.msra.mxu0 %v4558
  %4594 = vmatprep.subr.mxu0 0.0
  %4595 = vmatpush1.msra.mxu0 0.0
  %4596 = vmatprep.subr.mxu0 0.0
  %4597 = vmatpush1.msra.mxu0 0.0
  %4598 = vmatprep.subr.mxu0 0.0
  %4599 = vmatpush1.msra.mxu0 0.0
  %4600 = vmatprep.subr.mxu0 0.0
  %4601 = vmatpush1.msra.mxu0 0.0
  %4602 = vmatprep.subr.mxu0 0.0
  %4603 = vmatpush1.msra.mxu0 0.0
  %4604 = vmatprep.subr.mxu0 0.0
  %4605 = vmatpush1.msra.mxu0 0.0
  %4606 = vmatprep.subr.mxu0 0.0
  %4607 = vmatpush1.msra.mxu0 0.0
  %4608 = vmatprep.subr.mxu0 0.0
  %4609 = vmatpush1.msra.mxu0 0.0
  %4610 = vmatprep.subr.mxu0 0.0
  %4611 = vmatpush1.msra.mxu0 0.0
  %4612 = vmatprep.subr.mxu0 0.0
  %4613 = vmatpush1.msra.mxu0 0.0
  %4614 = vmatprep.subr.mxu0 0.0
  %4615 = vmatpush1.msra.mxu0 0.0
  %4616 = vmatprep.subr.mxu0 0.0
  %4617 = vmatpush1.msra.mxu0 0.0
  %4618 = vmatprep.subr.mxu0 0.0
  %4619 = vmatpush1.msra.mxu0 0.0
  %4620 = vmatprep.subr.mxu0 0.0
  %4621 = vmatpush1.msra.mxu0 0.0
  %4622 = vmatprep.subr.mxu0 0.0
  %4623 = vmatpush1.msra.mxu0 0.0
  %4624 = vmatprep.subr.mxu0 0.0
  %4625 = vmatpush1.msra.mxu0 0.0
  %4626 = vmatprep.mubr.f32.mxu0 0.0
  %4627 = vmatmul.mubr.f32.gmra.mrb[0].mxu0 %v4480
  %v4628 = vpop.f32.mrb[0].mxu0
  %v4629 = vadd.f32 0.0, %v4628
  %v4630 = vpop.f32.mrb[0].mxu0
  %v4631 = vadd.f32 0.0, %v4630
  %4632 = vdwg.mxu0
  %4633 = vmatprep.subr.mxu0 %v4501
  %4634 = vmatpush1.msra.mxu0 %v4500
  %4635 = vmatprep.subr.mxu0 %v4505
  %4636 = vmatpush1.msra.mxu0 %v4504
  %4637 = vmatprep.subr.mxu0 %v4509
  %4638 = vmatpush1.msra.mxu0 %v4508
  %4639 = vmatprep.subr.mxu0 %v4513
  %4640 = vmatpush1.msra.mxu0 %v4512
  %4641 = vmatprep.subr.mxu0 %v4517
  %4642 = vmatpush1.msra.mxu0 %v4516
  %4643 = vmatprep.subr.mxu0 %v4521
  %4644 = vmatpush1.msra.mxu0 %v4520
  %4645 = vmatprep.subr.mxu0 %v4525
  %4646 = vmatpush1.msra.mxu0 %v4524
  %4647 = vmatprep.subr.mxu0 %v4529
  %4648 = vmatpush1.msra.mxu0 %v4528
  %4649 = vmatprep.subr.mxu0 %v4533
  %4650 = vmatpush1.msra.mxu0 %v4532
  %4651 = vmatprep.subr.mxu0 %v4537
  %4652 = vmatpush1.msra.mxu0 %v4536
  %4653 = vmatprep.subr.mxu0 %v4541
  %4654 = vmatpush1.msra.mxu0 %v4540
  %4655 = vmatprep.subr.mxu0 %v4545
  %4656 = vmatpush1.msra.mxu0 %v4544
  %4657 = vmatprep.subr.mxu0 %v4549
  %4658 = vmatpush1.msra.mxu0 %v4548
  %4659 = vmatprep.subr.mxu0 %v4553
  %4660 = vmatpush1.msra.mxu0 %v4552
  %4661 = vmatprep.subr.mxu0 %v4557
  %4662 = vmatpush1.msra.mxu0 %v4556
  %4663 = vmatprep.subr.mxu0 %v4561
  %4664 = vmatpush1.msra.mxu0 %v4560
  %4665 = vmatprep.subr.mxu0 0.0
  %4666 = vmatpush1.msra.mxu0 0.0
  %4667 = vmatprep.subr.mxu0 0.0
  %4668 = vmatpush1.msra.mxu0 0.0
  %4669 = vmatprep.subr.mxu0 0.0
  %4670 = vmatpush1.msra.mxu0 0.0
  %4671 = vmatprep.subr.mxu0 0.0
  %4672 = vmatpush1.msra.mxu0 0.0
  %4673 = vmatprep.subr.mxu0 0.0
  %4674 = vmatpush1.msra.mxu0 0.0
  %4675 = vmatprep.subr.mxu0 0.0
  %4676 = vmatpush1.msra.mxu0 0.0
  %4677 = vmatprep.subr.mxu0 0.0
  %4678 = vmatpush1.msra.mxu0 0.0
  %4679 = vmatprep.subr.mxu0 0.0
  %4680 = vmatpush1.msra.mxu0 0.0
  %4681 = vmatprep.subr.mxu0 0.0
  %4682 = vmatpush1.msra.mxu0 0.0
  %4683 = vmatprep.subr.mxu0 0.0
  %4684 = vmatpush1.msra.mxu0 0.0
  %4685 = vmatprep.subr.mxu0 0.0
  %4686 = vmatpush1.msra.mxu0 0.0
  %4687 = vmatprep.subr.mxu0 0.0
  %4688 = vmatpush1.msra.mxu0 0.0
  %4689 = vmatprep.subr.mxu0 0.0
  %4690 = vmatpush1.msra.mxu0 0.0
  %4691 = vmatprep.subr.mxu0 0.0
  %4692 = vmatpush1.msra.mxu0 0.0
  %4693 = vmatprep.subr.mxu0 0.0
  %4694 = vmatpush1.msra.mxu0 0.0
  %4695 = vmatprep.subr.mxu0 0.0
  %4696 = vmatpush1.msra.mxu0 0.0
  %4697 = vmatprep.mubr.f32.mxu0 0.0
  %4698 = vmatmul.mubr.f32.gmra.mrb[0].mxu0 %v4480
  %v4699 = vpop.f32.mrb[0].mxu0
  %v4700 = vadd.f32 0.0, %v4699
  %v4701 = vpop.f32.mrb[0].mxu0
  %v4702 = vadd.f32 0.0, %v4701
  %4703 = vdwg.mxu0
  %v4708 = vcombine.low %v4629, %v4631
  %v4709 = vcombine.high %v4629, %v4631
  %v4710 = vcombine.low %v4700, %v4702
  %v4711 = vcombine.high %v4700, %v4702
  %v4713 = vunpack.c.l.s4 1966171168
  %v4714 = vunpack.c.0.s8 %v4713
  %v4715 = vlaneseq
  %v4716 = vshrl.u32 %v4715, 7
  %v4717 = vsub.s32 %v4714, %v4716
  %v4718 = vrot.slane %v4708, %v4717
  %v4720 = vunpack.c.l.s4 1966171168
  %v4721 = vunpack.c.0.s8 %v4720
  %v4722 = vlaneseq
  %v4723 = vshrl.u32 %v4722, 7
  %v4724 = vsub.s32 %v4721, %v4723
  %v4725 = vrot.slane %v4709, %v4724
  %v4727 = vunpack.c.l.s4 1966171168
  %v4728 = vunpack.c.0.s8 %v4727
  %v4729 = vlaneseq
  %v4730 = vshrl.u32 %v4729, 7
  %v4731 = vsub.s32 %v4728, %v4730
  %v4732 = vrot.slane %v4710, %v4731
  %v4734 = vunpack.c.l.s4 1966171168
  %v4735 = vunpack.c.0.s8 %v4734
  %v4736 = vlaneseq
  %v4737 = vshrl.u32 %v4736, 7
  %v4738 = vsub.s32 %v4735, %v4737
  %v4739 = vrot.slane %v4711, %v4738
  %v4740 = vcombine.low %v4718, %v4732
  %v4741 = vcombine.high %v4718, %v4732
  %v4742 = vcombine.low %v4725, %v4739
  %v4743 = vcombine.high %v4725, %v4739
  %v4745 = vunpack.c.l.s4 1966171168
  %v4746 = vunpack.c.0.s8 %v4745
  %v4747 = vlaneseq
  %v4748 = vshrl.u32 %v4747, 7
  %v4749 = vsub.s32 %v4746, %v4748
  %v4750 = vrot.slane %v4740, %v4749
  %v4752 = vunpack.c.l.s4 1966171168
  %v4753 = vunpack.c.0.s8 %v4752
  %v4754 = vlaneseq
  %v4755 = vshrl.u32 %v4754, 7
  %v4756 = vsub.s32 %v4753, %v4755
  %v4757 = vrot.slane %v4742, %v4756
  %v4759 = vunpack.c.l.s4 1966171168
  %v4760 = vunpack.c.0.s8 %v4759
  %v4761 = vlaneseq
  %v4762 = vshrl.u32 %v4761, 7
  %v4763 = vsub.s32 %v4760, %v4762
  %v4764 = vrot.slane %v4741, %v4763
  %v4766 = vunpack.c.l.s4 1966171168
  %v4767 = vunpack.c.0.s8 %v4766
  %v4768 = vlaneseq
  %v4769 = vshrl.u32 %v4768, 7
  %v4770 = vsub.s32 %v4767, %v4769
  %v4771 = vrot.slane %v4743, %v4770
  %v4772 = vcombine.high %v4750, %v4750
  %v4773 = vcombine.high %v4757, %v4757
  %v4774 = vcombine.high %v4764, %v4764
  %v4775 = vcombine.high %v4771, %v4771
  %v4784 = vadd.f32 %v4483, %v4750
  %v4785 = vadd.f32 %v4485, %v4764
  %v4786 = vadd.f32 %v4487, %v4772
  %v4787 = vadd.f32 %v4489, %v4774
  %v4788 = vadd.f32 %v4491, %v4757
  %v4789 = vadd.f32 %v4493, %v4771
  %v4790 = vadd.f32 %v4495, %v4773
  %v4791 = vadd.f32 %v4497, %v4775
  %v4792 = vxor.u32 %v4784, 2147483648
  %v4793 = vxor.u32 %v4785, 2147483648
  %v4794 = vxor.u32 %v4786, 2147483648
  %v4795 = vxor.u32 %v4787, 2147483648
  %v4796 = vxor.u32 %v4788, 2147483648
  %v4797 = vxor.u32 %v4789, 2147483648
  %v4798 = vxor.u32 %v4790, 2147483648
  %v4799 = vxor.u32 %v4791, 2147483648
  %v4800 = vmul.f32 %v4792, 1.442695
  %v4801 = vpow.pop %v4800
  %v4802 = vmul.f32 %v4793, 1.442695
  %v4803 = vpow.pop %v4802
  %v4804 = vmul.f32 %v4794, 1.442695
  %v4805 = vpow.pop %v4804
  %v4806 = vmul.f32 %v4795, 1.442695
  %v4807 = vpow.pop %v4806
  %v4808 = vmul.f32 %v4796, 1.442695
  %v4809 = vpow.pop %v4808
  %v4810 = vmul.f32 %v4797, 1.442695
  %v4811 = vpow.pop %v4810
  %v4812 = vmul.f32 %v4798, 1.442695
  %v4813 = vpow.pop %v4812
  %v4814 = vmul.f32 %v4799, 1.442695
  %v4815 = vpow.pop %v4814
  %v4816 = vadd.f32 %v4801, 1.0
  %v4817 = vadd.f32 %v4803, 1.0
  %v4818 = vadd.f32 %v4805, 1.0
  %v4819 = vadd.f32 %v4807, 1.0
  %v4820 = vadd.f32 %v4809, 1.0
  %v4821 = vadd.f32 %v4811, 1.0
  %v4822 = vadd.f32 %v4813, 1.0
  %v4823 = vadd.f32 %v4815, 1.0
  %v4824 = vrcp.pop %v4816
  %v4825 = vmul.f32 1.0, %v4824
  %v4826 = vrcp.pop %v4817
  %v4827 = vmul.f32 1.0, %v4826
  %v4828 = vrcp.pop %v4818
  %v4829 = vmul.f32 1.0, %v4828
  %v4830 = vrcp.pop %v4819
  %v4831 = vmul.f32 1.0, %v4830
  %v4832 = vrcp.pop %v4820
  %v4833 = vmul.f32 1.0, %v4832
  %v4834 = vrcp.pop %v4821
  %v4835 = vmul.f32 1.0, %v4834
  %v4836 = vrcp.pop %v4822
  %v4837 = vmul.f32 1.0, %v4836
  %v4838 = vrcp.pop %v4823
  %v4839 = vmul.f32 1.0, %v4838
  %v4848 = vrot.slane %v4784, 1
  %v4849 = vrot.slane %v4785, 1
  %v4850 = vrot.slane %v4786, 1
  %v4851 = vrot.slane %v4787, 1
  %v4852 = vrot.slane %v4788, 1
  %v4853 = vrot.slane %v4789, 1
  %v4854 = vrot.slane %v4790, 1
  %v4855 = vrot.slane %v4791, 1
  %v4864 = vxor.u32 %v4848, 2147483648
  %v4865 = vxor.u32 %v4849, 2147483648
  %v4866 = vxor.u32 %v4850, 2147483648
  %v4867 = vxor.u32 %v4851, 2147483648
  %v4868 = vxor.u32 %v4852, 2147483648
  %v4869 = vxor.u32 %v4853, 2147483648
  %v4870 = vxor.u32 %v4854, 2147483648
  %v4871 = vxor.u32 %v4855, 2147483648
  %v4872 = vmul.f32 %v4864, 1.442695
  %v4873 = vpow.pop %v4872
  %v4874 = vmul.f32 %v4865, 1.442695
  %v4875 = vpow.pop %v4874
  %v4876 = vmul.f32 %v4866, 1.442695
  %v4877 = vpow.pop %v4876
  %v4878 = vmul.f32 %v4867, 1.442695
  %v4879 = vpow.pop %v4878
  %v4880 = vmul.f32 %v4868, 1.442695
  %v4881 = vpow.pop %v4880
  %v4882 = vmul.f32 %v4869, 1.442695
  %v4883 = vpow.pop %v4882
  %v4884 = vmul.f32 %v4870, 1.442695
  %v4885 = vpow.pop %v4884
  %v4886 = vmul.f32 %v4871, 1.442695
  %v4887 = vpow.pop %v4886
  %v4888 = vadd.f32 %v4873, 1.0
  %v4889 = vadd.f32 %v4875, 1.0
  %v4890 = vadd.f32 %v4877, 1.0
  %v4891 = vadd.f32 %v4879, 1.0
  %v4892 = vadd.f32 %v4881, 1.0
  %v4893 = vadd.f32 %v4883, 1.0
  %v4894 = vadd.f32 %v4885, 1.0
  %v4895 = vadd.f32 %v4887, 1.0
  %v4896 = vrcp.pop %v4888
  %v4897 = vmul.f32 1.0, %v4896
  %v4898 = vrcp.pop %v4889
  %v4899 = vmul.f32 1.0, %v4898
  %v4900 = vrcp.pop %v4890
  %v4901 = vmul.f32 1.0, %v4900
  %v4902 = vrcp.pop %v4891
  %v4903 = vmul.f32 1.0, %v4902
  %v4904 = vrcp.pop %v4892
  %v4905 = vmul.f32 1.0, %v4904
  %v4906 = vrcp.pop %v4893
  %v4907 = vmul.f32 1.0, %v4906
  %v4908 = vrcp.pop %v4894
  %v4909 = vmul.f32 1.0, %v4908
  %v4910 = vrcp.pop %v4895
  %v4911 = vmul.f32 1.0, %v4910
  %v4912 = vrot.slane %v4784, 2
  %v4913 = vrot.slane %v4785, 2
  %v4914 = vrot.slane %v4786, 2
  %v4915 = vrot.slane %v4787, 2
  %v4916 = vrot.slane %v4788, 2
  %v4917 = vrot.slane %v4789, 2
  %v4918 = vrot.slane %v4790, 2
  %v4919 = vrot.slane %v4791, 2
  %v4928 = vtanh.pop %v4912
  %v4929 = vtanh.pop %v4913
  %v4930 = vtanh.pop %v4914
  %v4931 = vtanh.pop %v4915
  %v4932 = vtanh.pop %v4916
  %v4933 = vtanh.pop %v4917
  %v4934 = vtanh.pop %v4918
  %v4935 = vtanh.pop %v4919
  %v4936 = vrot.slane %v4784, 3
  %v4937 = vrot.slane %v4785, 3
  %v4938 = vrot.slane %v4786, 3
  %v4939 = vrot.slane %v4787, 3
  %v4940 = vrot.slane %v4788, 3
  %v4941 = vrot.slane %v4789, 3
  %v4942 = vrot.slane %v4790, 3
  %v4943 = vrot.slane %v4791, 3
  %v4952 = vxor.u32 %v4936, 2147483648
  %v4953 = vxor.u32 %v4937, 2147483648
  %v4954 = vxor.u32 %v4938, 2147483648
  %v4955 = vxor.u32 %v4939, 2147483648
  %v4956 = vxor.u32 %v4940, 2147483648
  %v4957 = vxor.u32 %v4941, 2147483648
  %v4958 = vxor.u32 %v4942, 2147483648
  %v4959 = vxor.u32 %v4943, 2147483648
  %v4960 = vmul.f32 %v4952, 1.442695
  %v4961 = vpow.pop %v4960
  %v4962 = vmul.f32 %v4953, 1.442695
  %v4963 = vpow.pop %v4962
  %v4964 = vmul.f32 %v4954, 1.442695
  %v4965 = vpow.pop %v4964
  %v4966 = vmul.f32 %v4955, 1.442695
  %v4967 = vpow.pop %v4966
  %v4968 = vmul.f32 %v4956, 1.442695
  %v4969 = vpow.pop %v4968
  %v4970 = vmul.f32 %v4957, 1.442695
  %v4971 = vpow.pop %v4970
  %v4972 = vmul.f32 %v4958, 1.442695
  %v4973 = vpow.pop %v4972
  %v4974 = vmul.f32 %v4959, 1.442695
  %v4975 = vpow.pop %v4974
  %v4976 = vadd.f32 %v4961, 1.0
  %v4977 = vadd.f32 %v4963, 1.0
  %v4978 = vadd.f32 %v4965, 1.0
  %v4979 = vadd.f32 %v4967, 1.0
  %v4980 = vadd.f32 %v4969, 1.0
  %v4981 = vadd.f32 %v4971, 1.0
  %v4982 = vadd.f32 %v4973, 1.0
  %v4983 = vadd.f32 %v4975, 1.0
  %v4984 = vrcp.pop %v4976
  %v4985 = vmul.f32 1.0, %v4984
  %v4986 = vrcp.pop %v4977
  %v4987 = vmul.f32 1.0, %v4986
  %v4988 = vrcp.pop %v4978
  %v4989 = vmul.f32 1.0, %v4988
  %v4990 = vrcp.pop %v4979
  %v4991 = vmul.f32 1.0, %v4990
  %v4992 = vrcp.pop %v4980
  %v4993 = vmul.f32 1.0, %v4992
  %v4994 = vrcp.pop %v4981
  %v4995 = vmul.f32 1.0, %v4994
  %v4996 = vrcp.pop %v4982
  %v4997 = vmul.f32 1.0, %v4996
  %v4998 = vrcp.pop %v4983
  %v4999 = vmul.f32 1.0, %v4998
  %v5001 = vcombine.high %v4481, %v4481
  %v5003 = vunpack.c.l.s4 1966171168
  %v5004 = vunpack.c.0.s8 %v5003
  %v5005 = vlaneseq
  %v5006 = vshrl.u32 %v5005, 7
  %v5007 = vsub.s32 %v5004, %v5006
  %v5008 = vrot.slane %v4481, %v5007
  %v5010 = vunpack.c.l.s4 1966171168
  %v5011 = vunpack.c.0.s8 %v5010
  %v5012 = vlaneseq
  %v5013 = vshrl.u32 %v5012, 7
  %v5014 = vsub.s32 %v5011, %v5013
  %v5015 = vrot.slane %v5001, %v5014
  %v5016 = vcombine.high %v5008, %v5008
  %v5017 = vcombine.high %v5015, %v5015
  %v5019 = vunpack.c.l.s4 1966171168
  %v5020 = vunpack.c.0.s8 %v5019
  %v5021 = vlaneseq
  %v5022 = vshrl.u32 %v5021, 7
  %v5023 = vsub.s32 %v5020, %v5022
  %v5024 = vrot.slane %v5008, %v5023
  %v5026 = vunpack.c.l.s4 1966171168
  %v5027 = vunpack.c.0.s8 %v5026
  %v5028 = vlaneseq
  %v5029 = vshrl.u32 %v5028, 7
  %v5030 = vsub.s32 %v5027, %v5029
  %v5031 = vrot.slane %v5015, %v5030
  %v5033 = vunpack.c.l.s4 1966171168
  %v5034 = vunpack.c.0.s8 %v5033
  %v5035 = vlaneseq
  %v5036 = vshrl.u32 %v5035, 7
  %v5037 = vsub.s32 %v5034, %v5036
  %v5038 = vrot.slane %v5016, %v5037
  %v5040 = vunpack.c.l.s4 1966171168
  %v5041 = vunpack.c.0.s8 %v5040
  %v5042 = vlaneseq
  %v5043 = vshrl.u32 %v5042, 7
  %v5044 = vsub.s32 %v5041, %v5043
  %v5045 = vrot.slane %v5017, %v5044
  %v5046 = vcombine.high %v5024, %v5024
  %v5047 = vcombine.high %v5031, %v5031
  %v5048 = vcombine.high %v5038, %v5038
  %v5049 = vcombine.high %v5045, %v5045
  %v5058 = vmul.f32 %v4897, %v5024
  %v5059 = vmul.f32 %v4899, %v5038
  %v5060 = vmul.f32 %v4901, %v5046
  %v5061 = vmul.f32 %v4903, %v5048
  %v5062 = vmul.f32 %v4905, %v5031
  %v5063 = vmul.f32 %v4907, %v5045
  %v5064 = vmul.f32 %v4909, %v5047
  %v5065 = vmul.f32 %v4911, %v5049
  %v5066 = vmul.f32 %v4825, %v4928
  %v5067 = vmul.f32 %v4827, %v4929
  %v5068 = vmul.f32 %v4829, %v4930
  %v5069 = vmul.f32 %v4831, %v4931
  %v5070 = vmul.f32 %v4833, %v4932
  %v5071 = vmul.f32 %v4835, %v4933
  %v5072 = vmul.f32 %v4837, %v4934
  %v5073 = vmul.f32 %v4839, %v4935
  %v5074 = vadd.f32 %v5058, %v5066
  %v5075 = vadd.f32 %v5059, %v5067
  %v5076 = vadd.f32 %v5060, %v5068
  %v5077 = vadd.f32 %v5061, %v5069
  %v5078 = vadd.f32 %v5062, %v5070
  %v5079 = vadd.f32 %v5063, %v5071
  %v5080 = vadd.f32 %v5064, %v5072
  %v5081 = vadd.f32 %v5065, %v5073
  %v5082 = vtanh.pop %v5074
  %v5083 = vtanh.pop %v5075
  %v5084 = vtanh.pop %v5076
  %v5085 = vtanh.pop %v5077
  %v5086 = vtanh.pop %v5078
  %v5087 = vtanh.pop %v5079
  %v5088 = vtanh.pop %v5080
  %v5089 = vtanh.pop %v5081
  %v5090 = vmul.f32 %v4985, %v5082
  %v5091 = vmul.f32 %v4987, %v5083
  %v5092 = vmul.f32 %v4989, %v5084
  %v5093 = vmul.f32 %v4991, %v5085
  %v5094 = vmul.f32 %v4993, %v5086
  %v5095 = vmul.f32 %v4995, %v5087
  %v5096 = vmul.f32 %v4997, %v5088
  %v5097 = vmul.f32 %v4999, %v5089
  %v5106 = vcombine.low %v5074, %v5075
  %v5107 = vcombine.low %v5076, %v5077
  %v5108 = vcombine.low %v5078, %v5079
  %v5109 = vcombine.low %v5080, %v5081
  %v5111 = vunpack.c.l.s4 1966171168
  %v5112 = vunpack.c.0.s8 %v5111
  %v5113 = vlaneseq
  %v5114 = vshrl.u32 %v5113, 7
  %v5115 = vsub.s32 %v5112, %v5114
  %v5116 = vrot.slane %v5106, %v5115
  %v5118 = vunpack.c.l.s4 1966171168
  %v5119 = vunpack.c.0.s8 %v5118
  %v5120 = vlaneseq
  %v5121 = vshrl.u32 %v5120, 7
  %v5122 = vsub.s32 %v5119, %v5121
  %v5123 = vrot.slane %v5107, %v5122
  %v5125 = vunpack.c.l.s4 1966171168
  %v5126 = vunpack.c.0.s8 %v5125
  %v5127 = vlaneseq
  %v5128 = vshrl.u32 %v5127, 7
  %v5129 = vsub.s32 %v5126, %v5128
  %v5130 = vrot.slane %v5108, %v5129
  %v5132 = vunpack.c.l.s4 1966171168
  %v5133 = vunpack.c.0.s8 %v5132
  %v5134 = vlaneseq
  %v5135 = vshrl.u32 %v5134, 7
  %v5136 = vsub.s32 %v5133, %v5135
  %v5137 = vrot.slane %v5109, %v5136
  %v5138 = vcombine.low %v5116, %v5123
  %v5139 = vcombine.low %v5130, %v5137
  %v5141 = vunpack.c.l.s4 1966171168
  %v5142 = vunpack.c.0.s8 %v5141
  %v5143 = vlaneseq
  %v5144 = vshrl.u32 %v5143, 7
  %v5145 = vsub.s32 %v5142, %v5144
  %v5146 = vrot.slane %v5138, %v5145
  %v5148 = vunpack.c.l.s4 1966171168
  %v5149 = vunpack.c.0.s8 %v5148
  %v5150 = vlaneseq
  %v5151 = vshrl.u32 %v5150, 7
  %v5152 = vsub.s32 %v5149, %v5151
  %v5153 = vrot.slane %v5139, %v5152
  %v5154 = vcombine.low %v5146, %v5153
  %5156 = vst [vmem:[#allocation3] sm:$0xff] %v5154
  %v5165 = vcombine.low %v5090, %v5091
  %v5166 = vcombine.low %v5092, %v5093
  %v5167 = vcombine.low %v5094, %v5095
  %v5168 = vcombine.low %v5096, %v5097
  %v5170 = vunpack.c.l.s4 1966171168
  %v5171 = vunpack.c.0.s8 %v5170
  %v5172 = vlaneseq
  %v5173 = vshrl.u32 %v5172, 7
  %v5174 = vsub.s32 %v5171, %v5173
  %v5175 = vrot.slane %v5165, %v5174
  %v5177 = vunpack.c.l.s4 1966171168
  %v5178 = vunpack.c.0.s8 %v5177
  %v5179 = vlaneseq
  %v5180 = vshrl.u32 %v5179, 7
  %v5181 = vsub.s32 %v5178, %v5180
  %v5182 = vrot.slane %v5166, %v5181
  %v5184 = vunpack.c.l.s4 1966171168
  %v5185 = vunpack.c.0.s8 %v5184
  %v5186 = vlaneseq
  %v5187 = vshrl.u32 %v5186, 7
  %v5188 = vsub.s32 %v5185, %v5187
  %v5189 = vrot.slane %v5167, %v5188
  %v5191 = vunpack.c.l.s4 1966171168
  %v5192 = vunpack.c.0.s8 %v5191
  %v5193 = vlaneseq
  %v5194 = vshrl.u32 %v5193, 7
  %v5195 = vsub.s32 %v5192, %v5194
  %v5196 = vrot.slane %v5168, %v5195
  %v5197 = vcombine.low %v5175, %v5182
  %v5198 = vcombine.low %v5189, %v5196
  %v5200 = vunpack.c.l.s4 1966171168
  %v5201 = vunpack.c.0.s8 %v5200
  %v5202 = vlaneseq
  %v5203 = vshrl.u32 %v5202, 7
  %v5204 = vsub.s32 %v5201, %v5203
  %v5205 = vrot.slane %v5197, %v5204
  %v5207 = vunpack.c.l.s4 1966171168
  %v5208 = vunpack.c.0.s8 %v5207
  %v5209 = vlaneseq
  %v5210 = vshrl.u32 %v5209, 7
  %v5211 = vsub.s32 %v5208, %v5210
  %v5212 = vrot.slane %v5198, %v5211
  %v5213 = vcombine.low %v5205, %v5212
  %5215 = vst [vmem:[#allocation2] sm:$0xff] %v5213
  %5216 = vst [vmem:[%s2 + $0x6] sm:$0x1] %v5090
  %5217 = vst [vmem:[%s2 + $0xe] sm:$0x1] %v5091
  %5218 = vst [vmem:[%s2 + $0x16] sm:$0x1] %v5092
  %5219 = vst [vmem:[%s2 + $0x1e] sm:$0x1] %v5093
  %5220 = vst [vmem:[%s2 + $0x26] sm:$0x1] %v5094
  %5221 = vst [vmem:[%s2 + $0x2e] sm:$0x1] %v5095
  %5222 = vst [vmem:[%s2 + $0x36] sm:$0x1] %v5096
  %5223 = vst [vmem:[%s2 + $0x3e] sm:$0x1] %v5097
  %v5224 = vld [vmem:[#allocation2] sm:$0xff]
  %v5225 = vld [vmem:[#allocation3] sm:$0xff]
  %s5226 = scalar_lea.vmem %s0, 7
  %v5227 = vld [vmem:[%s5226] ss:$8 sm:$0xf]
  %s5228 = scalar_lea.vmem %s0, 39
  %v5229 = vld [vmem:[%s5228] ss:$8 sm:$0xf]
  %s5230 = scalar_lea.vmem %s0, 71
  %v5231 = vld [vmem:[%s5230] ss:$8 sm:$0xf]
  %s5232 = scalar_lea.vmem %s0, 103
  %v5233 = vld [vmem:[%s5232] ss:$8 sm:$0xf]
  %s5234 = scalar_lea.vmem %s0, 135
  %v5235 = vld [vmem:[%s5234] ss:$8 sm:$0xf]
  %s5236 = scalar_lea.vmem %s0, 167
  %v5237 = vld [vmem:[%s5236] ss:$8 sm:$0xf]
  %s5238 = scalar_lea.vmem %s0, 199
  %v5239 = vld [vmem:[%s5238] ss:$8 sm:$0xf]
  %s5240 = scalar_lea.vmem %s0, 231
  %v5241 = vld [vmem:[%s5240] ss:$8 sm:$0xf]
  %v5242 = vld [vmem:[%s1] sm:$0xff]
  %v5243 = vld [vmem:[%s1 + $0x8] sm:$0xff]
  %v5244 = vld [vmem:[%s1 + $0x10] sm:$0xff]
  %v5245 = vld [vmem:[%s1 + $0x18] sm:$0xff]
  %v5246 = vld [vmem:[%s1 + $0x20] sm:$0xff]
  %v5247 = vld [vmem:[%s1 + $0x28] sm:$0xff]
  %v5248 = vld [vmem:[%s1 + $0x30] sm:$0xff]
  %v5249 = vld [vmem:[%s1 + $0x38] sm:$0xff]
  %v5250 = vld [vmem:[%s1 + $0x40] sm:$0xff]
  %v5251 = vld [vmem:[%s1 + $0x48] sm:$0xff]
  %v5252 = vld [vmem:[%s1 + $0x50] sm:$0xff]
  %v5253 = vld [vmem:[%s1 + $0x58] sm:$0xff]
  %v5254 = vld [vmem:[%s1 + $0x60] sm:$0xff]
  %v5255 = vld [vmem:[%s1 + $0x68] sm:$0xff]
  %v5256 = vld [vmem:[%s1 + $0x70] sm:$0xff]
  %v5257 = vld [vmem:[%s1 + $0x78] sm:$0xff]
  %v5258 = vld [vmem:[%s1 + $0x80] sm:$0xff]
  %v5259 = vld [vmem:[%s1 + $0x88] sm:$0xff]
  %v5260 = vld [vmem:[%s1 + $0x90] sm:$0xff]
  %v5261 = vld [vmem:[%s1 + $0x98] sm:$0xff]
  %v5262 = vld [vmem:[%s1 + $0xa0] sm:$0xff]
  %v5263 = vld [vmem:[%s1 + $0xa8] sm:$0xff]
  %v5264 = vld [vmem:[%s1 + $0xb0] sm:$0xff]
  %v5265 = vld [vmem:[%s1 + $0xb8] sm:$0xff]
  %v5266 = vld [vmem:[%s1 + $0xc0] sm:$0xff]
  %v5267 = vld [vmem:[%s1 + $0xc8] sm:$0xff]
  %v5268 = vld [vmem:[%s1 + $0xd0] sm:$0xff]
  %v5269 = vld [vmem:[%s1 + $0xd8] sm:$0xff]
  %v5270 = vld [vmem:[%s1 + $0xe0] sm:$0xff]
  %v5271 = vld [vmem:[%s1 + $0xe8] sm:$0xff]
  %v5272 = vld [vmem:[%s1 + $0xf0] sm:$0xff]
  %v5273 = vld [vmem:[%s1 + $0xf8] sm:$0xff]
  %v5274 = vld [vmem:[%s1 + $0x100] sm:$0xff]
  %v5275 = vld [vmem:[%s1 + $0x108] sm:$0xff]
  %v5276 = vld [vmem:[%s1 + $0x110] sm:$0xff]
  %v5277 = vld [vmem:[%s1 + $0x118] sm:$0xff]
  %v5278 = vld [vmem:[%s1 + $0x120] sm:$0xff]
  %v5279 = vld [vmem:[%s1 + $0x128] sm:$0xff]
  %v5280 = vld [vmem:[%s1 + $0x130] sm:$0xff]
  %v5281 = vld [vmem:[%s1 + $0x138] sm:$0xff]
  %v5282 = vld [vmem:[%s1 + $0x140] sm:$0xff]
  %v5283 = vld [vmem:[%s1 + $0x148] sm:$0xff]
  %v5284 = vld [vmem:[%s1 + $0x150] sm:$0xff]
  %v5285 = vld [vmem:[%s1 + $0x158] sm:$0xff]
  %v5286 = vld [vmem:[%s1 + $0x160] sm:$0xff]
  %v5287 = vld [vmem:[%s1 + $0x168] sm:$0xff]
  %v5288 = vld [vmem:[%s1 + $0x170] sm:$0xff]
  %v5289 = vld [vmem:[%s1 + $0x178] sm:$0xff]
  %v5290 = vld [vmem:[%s1 + $0x180] sm:$0xff]
  %v5291 = vld [vmem:[%s1 + $0x188] sm:$0xff]
  %v5292 = vld [vmem:[%s1 + $0x190] sm:$0xff]
  %v5293 = vld [vmem:[%s1 + $0x198] sm:$0xff]
  %v5294 = vld [vmem:[%s1 + $0x1a0] sm:$0xff]
  %v5295 = vld [vmem:[%s1 + $0x1a8] sm:$0xff]
  %v5296 = vld [vmem:[%s1 + $0x1b0] sm:$0xff]
  %v5297 = vld [vmem:[%s1 + $0x1b8] sm:$0xff]
  %v5298 = vld [vmem:[%s1 + $0x1c0] sm:$0xff]
  %v5299 = vld [vmem:[%s1 + $0x1c8] sm:$0xff]
  %v5300 = vld [vmem:[%s1 + $0x1d0] sm:$0xff]
  %v5301 = vld [vmem:[%s1 + $0x1d8] sm:$0xff]
  %v5302 = vld [vmem:[%s1 + $0x1e0] sm:$0xff]
  %v5303 = vld [vmem:[%s1 + $0x1e8] sm:$0xff]
  %v5304 = vld [vmem:[%s1 + $0x1f0] sm:$0xff]
  %v5305 = vld [vmem:[%s1 + $0x1f8] sm:$0xff]
  %5306 = vmatprep.subr.mxu0 %v5243
  %5307 = vmatpush1.msra.mxu0 %v5242
  %5308 = vmatprep.subr.mxu0 %v5247
  %5309 = vmatpush1.msra.mxu0 %v5246
  %5310 = vmatprep.subr.mxu0 %v5251
  %5311 = vmatpush1.msra.mxu0 %v5250
  %5312 = vmatprep.subr.mxu0 %v5255
  %5313 = vmatpush1.msra.mxu0 %v5254
  %5314 = vmatprep.subr.mxu0 %v5259
  %5315 = vmatpush1.msra.mxu0 %v5258
  %5316 = vmatprep.subr.mxu0 %v5263
  %5317 = vmatpush1.msra.mxu0 %v5262
  %5318 = vmatprep.subr.mxu0 %v5267
  %5319 = vmatpush1.msra.mxu0 %v5266
  %5320 = vmatprep.subr.mxu0 %v5271
  %5321 = vmatpush1.msra.mxu0 %v5270
  %5322 = vmatprep.subr.mxu0 %v5275
  %5323 = vmatpush1.msra.mxu0 %v5274
  %5324 = vmatprep.subr.mxu0 %v5279
  %5325 = vmatpush1.msra.mxu0 %v5278
  %5326 = vmatprep.subr.mxu0 %v5283
  %5327 = vmatpush1.msra.mxu0 %v5282
  %5328 = vmatprep.subr.mxu0 %v5287
  %5329 = vmatpush1.msra.mxu0 %v5286
  %5330 = vmatprep.subr.mxu0 %v5291
  %5331 = vmatpush1.msra.mxu0 %v5290
  %5332 = vmatprep.subr.mxu0 %v5295
  %5333 = vmatpush1.msra.mxu0 %v5294
  %5334 = vmatprep.subr.mxu0 %v5299
  %5335 = vmatpush1.msra.mxu0 %v5298
  %5336 = vmatprep.subr.mxu0 %v5303
  %5337 = vmatpush1.msra.mxu0 %v5302
  %5338 = vmatprep.subr.mxu0 0.0
  %5339 = vmatpush1.msra.mxu0 0.0
  %5340 = vmatprep.subr.mxu0 0.0
  %5341 = vmatpush1.msra.mxu0 0.0
  %5342 = vmatprep.subr.mxu0 0.0
  %5343 = vmatpush1.msra.mxu0 0.0
  %5344 = vmatprep.subr.mxu0 0.0
  %5345 = vmatpush1.msra.mxu0 0.0
  %5346 = vmatprep.subr.mxu0 0.0
  %5347 = vmatpush1.msra.mxu0 0.0
  %5348 = vmatprep.subr.mxu0 0.0
  %5349 = vmatpush1.msra.mxu0 0.0
  %5350 = vmatprep.subr.mxu0 0.0
  %5351 = vmatpush1.msra.mxu0 0.0
  %5352 = vmatprep.subr.mxu0 0.0
  %5353 = vmatpush1.msra.mxu0 0.0
  %5354 = vmatprep.subr.mxu0 0.0
  %5355 = vmatpush1.msra.mxu0 0.0
  %5356 = vmatprep.subr.mxu0 0.0
  %5357 = vmatpush1.msra.mxu0 0.0
  %5358 = vmatprep.subr.mxu0 0.0
  %5359 = vmatpush1.msra.mxu0 0.0
  %5360 = vmatprep.subr.mxu0 0.0
  %5361 = vmatpush1.msra.mxu0 0.0
  %5362 = vmatprep.subr.mxu0 0.0
  %5363 = vmatpush1.msra.mxu0 0.0
  %5364 = vmatprep.subr.mxu0 0.0
  %5365 = vmatpush1.msra.mxu0 0.0
  %5366 = vmatprep.subr.mxu0 0.0
  %5367 = vmatpush1.msra.mxu0 0.0
  %5368 = vmatprep.subr.mxu0 0.0
  %5369 = vmatpush1.msra.mxu0 0.0
  %5370 = vmatprep.mubr.f32.mxu0 0.0
  %5371 = vmatmul.mubr.f32.gmra.mrb[0].mxu0 %v5224
  %v5372 = vpop.f32.mrb[0].mxu0
  %v5373 = vadd.f32 0.0, %v5372
  %v5374 = vpop.f32.mrb[0].mxu0
  %v5375 = vadd.f32 0.0, %v5374
  %5376 = vdwg.mxu0
  %5377 = vmatprep.subr.mxu0 %v5245
  %5378 = vmatpush1.msra.mxu0 %v5244
  %5379 = vmatprep.subr.mxu0 %v5249
  %5380 = vmatpush1.msra.mxu0 %v5248
  %5381 = vmatprep.subr.mxu0 %v5253
  %5382 = vmatpush1.msra.mxu0 %v5252
  %5383 = vmatprep.subr.mxu0 %v5257
  %5384 = vmatpush1.msra.mxu0 %v5256
  %5385 = vmatprep.subr.mxu0 %v5261
  %5386 = vmatpush1.msra.mxu0 %v5260
  %5387 = vmatprep.subr.mxu0 %v5265
  %5388 = vmatpush1.msra.mxu0 %v5264
  %5389 = vmatprep.subr.mxu0 %v5269
  %5390 = vmatpush1.msra.mxu0 %v5268
  %5391 = vmatprep.subr.mxu0 %v5273
  %5392 = vmatpush1.msra.mxu0 %v5272
  %5393 = vmatprep.subr.mxu0 %v5277
  %5394 = vmatpush1.msra.mxu0 %v5276
  %5395 = vmatprep.subr.mxu0 %v5281
  %5396 = vmatpush1.msra.mxu0 %v5280
  %5397 = vmatprep.subr.mxu0 %v5285
  %5398 = vmatpush1.msra.mxu0 %v5284
  %5399 = vmatprep.subr.mxu0 %v5289
  %5400 = vmatpush1.msra.mxu0 %v5288
  %5401 = vmatprep.subr.mxu0 %v5293
  %5402 = vmatpush1.msra.mxu0 %v5292
  %5403 = vmatprep.subr.mxu0 %v5297
  %5404 = vmatpush1.msra.mxu0 %v5296
  %5405 = vmatprep.subr.mxu0 %v5301
  %5406 = vmatpush1.msra.mxu0 %v5300
  %5407 = vmatprep.subr.mxu0 %v5305
  %5408 = vmatpush1.msra.mxu0 %v5304
  %5409 = vmatprep.subr.mxu0 0.0
  %5410 = vmatpush1.msra.mxu0 0.0
  %5411 = vmatprep.subr.mxu0 0.0
  %5412 = vmatpush1.msra.mxu0 0.0
  %5413 = vmatprep.subr.mxu0 0.0
  %5414 = vmatpush1.msra.mxu0 0.0
  %5415 = vmatprep.subr.mxu0 0.0
  %5416 = vmatpush1.msra.mxu0 0.0
  %5417 = vmatprep.subr.mxu0 0.0
  %5418 = vmatpush1.msra.mxu0 0.0
  %5419 = vmatprep.subr.mxu0 0.0
  %5420 = vmatpush1.msra.mxu0 0.0
  %5421 = vmatprep.subr.mxu0 0.0
  %5422 = vmatpush1.msra.mxu0 0.0
  %5423 = vmatprep.subr.mxu0 0.0
  %5424 = vmatpush1.msra.mxu0 0.0
  %5425 = vmatprep.subr.mxu0 0.0
  %5426 = vmatpush1.msra.mxu0 0.0
  %5427 = vmatprep.subr.mxu0 0.0
  %5428 = vmatpush1.msra.mxu0 0.0
  %5429 = vmatprep.subr.mxu0 0.0
  %5430 = vmatpush1.msra.mxu0 0.0
  %5431 = vmatprep.subr.mxu0 0.0
  %5432 = vmatpush1.msra.mxu0 0.0
  %5433 = vmatprep.subr.mxu0 0.0
  %5434 = vmatpush1.msra.mxu0 0.0
  %5435 = vmatprep.subr.mxu0 0.0
  %5436 = vmatpush1.msra.mxu0 0.0
  %5437 = vmatprep.subr.mxu0 0.0
  %5438 = vmatpush1.msra.mxu0 0.0
  %5439 = vmatprep.subr.mxu0 0.0
  %5440 = vmatpush1.msra.mxu0 0.0
  %5441 = vmatprep.mubr.f32.mxu0 0.0
  %5442 = vmatmul.mubr.f32.gmra.mrb[0].mxu0 %v5224
  %v5443 = vpop.f32.mrb[0].mxu0
  %v5444 = vadd.f32 0.0, %v5443
  %v5445 = vpop.f32.mrb[0].mxu0
  %v5446 = vadd.f32 0.0, %v5445
  %5447 = vdwg.mxu0
  %v5452 = vcombine.low %v5373, %v5375
  %v5453 = vcombine.high %v5373, %v5375
  %v5454 = vcombine.low %v5444, %v5446
  %v5455 = vcombine.high %v5444, %v5446
  %v5457 = vunpack.c.l.s4 1966171168
  %v5458 = vunpack.c.0.s8 %v5457
  %v5459 = vlaneseq
  %v5460 = vshrl.u32 %v5459, 7
  %v5461 = vsub.s32 %v5458, %v5460
  %v5462 = vrot.slane %v5452, %v5461
  %v5464 = vunpack.c.l.s4 1966171168
  %v5465 = vunpack.c.0.s8 %v5464
  %v5466 = vlaneseq
  %v5467 = vshrl.u32 %v5466, 7
  %v5468 = vsub.s32 %v5465, %v5467
  %v5469 = vrot.slane %v5453, %v5468
  %v5471 = vunpack.c.l.s4 1966171168
  %v5472 = vunpack.c.0.s8 %v5471
  %v5473 = vlaneseq
  %v5474 = vshrl.u32 %v5473, 7
  %v5475 = vsub.s32 %v5472, %v5474
  %v5476 = vrot.slane %v5454, %v5475
  %v5478 = vunpack.c.l.s4 1966171168
  %v5479 = vunpack.c.0.s8 %v5478
  %v5480 = vlaneseq
  %v5481 = vshrl.u32 %v5480, 7
  %v5482 = vsub.s32 %v5479, %v5481
  %v5483 = vrot.slane %v5455, %v5482
  %v5484 = vcombine.low %v5462, %v5476
  %v5485 = vcombine.high %v5462, %v5476
  %v5486 = vcombine.low %v5469, %v5483
  %v5487 = vcombine.high %v5469, %v5483
  %v5489 = vunpack.c.l.s4 1966171168
  %v5490 = vunpack.c.0.s8 %v5489
  %v5491 = vlaneseq
  %v5492 = vshrl.u32 %v5491, 7
  %v5493 = vsub.s32 %v5490, %v5492
  %v5494 = vrot.slane %v5484, %v5493
  %v5496 = vunpack.c.l.s4 1966171168
  %v5497 = vunpack.c.0.s8 %v5496
  %v5498 = vlaneseq
  %v5499 = vshrl.u32 %v5498, 7
  %v5500 = vsub.s32 %v5497, %v5499
  %v5501 = vrot.slane %v5486, %v5500
  %v5503 = vunpack.c.l.s4 1966171168
  %v5504 = vunpack.c.0.s8 %v5503
  %v5505 = vlaneseq
  %v5506 = vshrl.u32 %v5505, 7
  %v5507 = vsub.s32 %v5504, %v5506
  %v5508 = vrot.slane %v5485, %v5507
  %v5510 = vunpack.c.l.s4 1966171168
  %v5511 = vunpack.c.0.s8 %v5510
  %v5512 = vlaneseq
  %v5513 = vshrl.u32 %v5512, 7
  %v5514 = vsub.s32 %v5511, %v5513
  %v5515 = vrot.slane %v5487, %v5514
  %v5516 = vcombine.high %v5494, %v5494
  %v5517 = vcombine.high %v5501, %v5501
  %v5518 = vcombine.high %v5508, %v5508
  %v5519 = vcombine.high %v5515, %v5515
  %v5528 = vadd.f32 %v5227, %v5494
  %v5529 = vadd.f32 %v5229, %v5508
  %v5530 = vadd.f32 %v5231, %v5516
  %v5531 = vadd.f32 %v5233, %v5518
  %v5532 = vadd.f32 %v5235, %v5501
  %v5533 = vadd.f32 %v5237, %v5515
  %v5534 = vadd.f32 %v5239, %v5517
  %v5535 = vadd.f32 %v5241, %v5519
  %v5536 = vxor.u32 %v5528, 2147483648
  %v5537 = vxor.u32 %v5529, 2147483648
  %v5538 = vxor.u32 %v5530, 2147483648
  %v5539 = vxor.u32 %v5531, 2147483648
  %v5540 = vxor.u32 %v5532, 2147483648
  %v5541 = vxor.u32 %v5533, 2147483648
  %v5542 = vxor.u32 %v5534, 2147483648
  %v5543 = vxor.u32 %v5535, 2147483648
  %v5544 = vmul.f32 %v5536, 1.442695
  %v5545 = vpow.pop %v5544
  %v5546 = vmul.f32 %v5537, 1.442695
  %v5547 = vpow.pop %v5546
  %v5548 = vmul.f32 %v5538, 1.442695
  %v5549 = vpow.pop %v5548
  %v5550 = vmul.f32 %v5539, 1.442695
  %v5551 = vpow.pop %v5550
  %v5552 = vmul.f32 %v5540, 1.442695
  %v5553 = vpow.pop %v5552
  %v5554 = vmul.f32 %v5541, 1.442695
  %v5555 = vpow.pop %v5554
  %v5556 = vmul.f32 %v5542, 1.442695
  %v5557 = vpow.pop %v5556
  %v5558 = vmul.f32 %v5543, 1.442695
  %v5559 = vpow.pop %v5558
  %v5560 = vadd.f32 %v5545, 1.0
  %v5561 = vadd.f32 %v5547, 1.0
  %v5562 = vadd.f32 %v5549, 1.0
  %v5563 = vadd.f32 %v5551, 1.0
  %v5564 = vadd.f32 %v5553, 1.0
  %v5565 = vadd.f32 %v5555, 1.0
  %v5566 = vadd.f32 %v5557, 1.0
  %v5567 = vadd.f32 %v5559, 1.0
  %v5568 = vrcp.pop %v5560
  %v5569 = vmul.f32 1.0, %v5568
  %v5570 = vrcp.pop %v5561
  %v5571 = vmul.f32 1.0, %v5570
  %v5572 = vrcp.pop %v5562
  %v5573 = vmul.f32 1.0, %v5572
  %v5574 = vrcp.pop %v5563
  %v5575 = vmul.f32 1.0, %v5574
  %v5576 = vrcp.pop %v5564
  %v5577 = vmul.f32 1.0, %v5576
  %v5578 = vrcp.pop %v5565
  %v5579 = vmul.f32 1.0, %v5578
  %v5580 = vrcp.pop %v5566
  %v5581 = vmul.f32 1.0, %v5580
  %v5582 = vrcp.pop %v5567
  %v5583 = vmul.f32 1.0, %v5582
  %v5592 = vrot.slane %v5528, 1
  %v5593 = vrot.slane %v5529, 1
  %v5594 = vrot.slane %v5530, 1
  %v5595 = vrot.slane %v5531, 1
  %v5596 = vrot.slane %v5532, 1
  %v5597 = vrot.slane %v5533, 1
  %v5598 = vrot.slane %v5534, 1
  %v5599 = vrot.slane %v5535, 1
  %v5608 = vxor.u32 %v5592, 2147483648
  %v5609 = vxor.u32 %v5593, 2147483648
  %v5610 = vxor.u32 %v5594, 2147483648
  %v5611 = vxor.u32 %v5595, 2147483648
  %v5612 = vxor.u32 %v5596, 2147483648
  %v5613 = vxor.u32 %v5597, 2147483648
  %v5614 = vxor.u32 %v5598, 2147483648
  %v5615 = vxor.u32 %v5599, 2147483648
  %v5616 = vmul.f32 %v5608, 1.442695
  %v5617 = vpow.pop %v5616
  %v5618 = vmul.f32 %v5609, 1.442695
  %v5619 = vpow.pop %v5618
  %v5620 = vmul.f32 %v5610, 1.442695
  %v5621 = vpow.pop %v5620
  %v5622 = vmul.f32 %v5611, 1.442695
  %v5623 = vpow.pop %v5622
  %v5624 = vmul.f32 %v5612, 1.442695
  %v5625 = vpow.pop %v5624
  %v5626 = vmul.f32 %v5613, 1.442695
  %v5627 = vpow.pop %v5626
  %v5628 = vmul.f32 %v5614, 1.442695
  %v5629 = vpow.pop %v5628
  %v5630 = vmul.f32 %v5615, 1.442695
  %v5631 = vpow.pop %v5630
  %v5632 = vadd.f32 %v5617, 1.0
  %v5633 = vadd.f32 %v5619, 1.0
  %v5634 = vadd.f32 %v5621, 1.0
  %v5635 = vadd.f32 %v5623, 1.0
  %v5636 = vadd.f32 %v5625, 1.0
  %v5637 = vadd.f32 %v5627, 1.0
  %v5638 = vadd.f32 %v5629, 1.0
  %v5639 = vadd.f32 %v5631, 1.0
  %v5640 = vrcp.pop %v5632
  %v5641 = vmul.f32 1.0, %v5640
  %v5642 = vrcp.pop %v5633
  %v5643 = vmul.f32 1.0, %v5642
  %v5644 = vrcp.pop %v5634
  %v5645 = vmul.f32 1.0, %v5644
  %v5646 = vrcp.pop %v5635
  %v5647 = vmul.f32 1.0, %v5646
  %v5648 = vrcp.pop %v5636
  %v5649 = vmul.f32 1.0, %v5648
  %v5650 = vrcp.pop %v5637
  %v5651 = vmul.f32 1.0, %v5650
  %v5652 = vrcp.pop %v5638
  %v5653 = vmul.f32 1.0, %v5652
  %v5654 = vrcp.pop %v5639
  %v5655 = vmul.f32 1.0, %v5654
  %v5656 = vrot.slane %v5528, 2
  %v5657 = vrot.slane %v5529, 2
  %v5658 = vrot.slane %v5530, 2
  %v5659 = vrot.slane %v5531, 2
  %v5660 = vrot.slane %v5532, 2
  %v5661 = vrot.slane %v5533, 2
  %v5662 = vrot.slane %v5534, 2
  %v5663 = vrot.slane %v5535, 2
  %v5672 = vtanh.pop %v5656
  %v5673 = vtanh.pop %v5657
  %v5674 = vtanh.pop %v5658
  %v5675 = vtanh.pop %v5659
  %v5676 = vtanh.pop %v5660
  %v5677 = vtanh.pop %v5661
  %v5678 = vtanh.pop %v5662
  %v5679 = vtanh.pop %v5663
  %v5680 = vrot.slane %v5528, 3
  %v5681 = vrot.slane %v5529, 3
  %v5682 = vrot.slane %v5530, 3
  %v5683 = vrot.slane %v5531, 3
  %v5684 = vrot.slane %v5532, 3
  %v5685 = vrot.slane %v5533, 3
  %v5686 = vrot.slane %v5534, 3
  %v5687 = vrot.slane %v5535, 3
  %v5696 = vxor.u32 %v5680, 2147483648
  %v5697 = vxor.u32 %v5681, 2147483648
  %v5698 = vxor.u32 %v5682, 2147483648
  %v5699 = vxor.u32 %v5683, 2147483648
  %v5700 = vxor.u32 %v5684, 2147483648
  %v5701 = vxor.u32 %v5685, 2147483648
  %v5702 = vxor.u32 %v5686, 2147483648
  %v5703 = vxor.u32 %v5687, 2147483648
  %v5704 = vmul.f32 %v5696, 1.442695
  %v5705 = vpow.pop %v5704
  %v5706 = vmul.f32 %v5697, 1.442695
  %v5707 = vpow.pop %v5706
  %v5708 = vmul.f32 %v5698, 1.442695
  %v5709 = vpow.pop %v5708
  %v5710 = vmul.f32 %v5699, 1.442695
  %v5711 = vpow.pop %v5710
  %v5712 = vmul.f32 %v5700, 1.442695
  %v5713 = vpow.pop %v5712
  %v5714 = vmul.f32 %v5701, 1.442695
  %v5715 = vpow.pop %v5714
  %v5716 = vmul.f32 %v5702, 1.442695
  %v5717 = vpow.pop %v5716
  %v5718 = vmul.f32 %v5703, 1.442695
  %v5719 = vpow.pop %v5718
  %v5720 = vadd.f32 %v5705, 1.0
  %v5721 = vadd.f32 %v5707, 1.0
  %v5722 = vadd.f32 %v5709, 1.0
  %v5723 = vadd.f32 %v5711, 1.0
  %v5724 = vadd.f32 %v5713, 1.0
  %v5725 = vadd.f32 %v5715, 1.0
  %v5726 = vadd.f32 %v5717, 1.0
  %v5727 = vadd.f32 %v5719, 1.0
  %v5728 = vrcp.pop %v5720
  %v5729 = vmul.f32 1.0, %v5728
  %v5730 = vrcp.pop %v5721
  %v5731 = vmul.f32 1.0, %v5730
  %v5732 = vrcp.pop %v5722
  %v5733 = vmul.f32 1.0, %v5732
  %v5734 = vrcp.pop %v5723
  %v5735 = vmul.f32 1.0, %v5734
  %v5736 = vrcp.pop %v5724
  %v5737 = vmul.f32 1.0, %v5736
  %v5738 = vrcp.pop %v5725
  %v5739 = vmul.f32 1.0, %v5738
  %v5740 = vrcp.pop %v5726
  %v5741 = vmul.f32 1.0, %v5740
  %v5742 = vrcp.pop %v5727
  %v5743 = vmul.f32 1.0, %v5742
  %v5745 = vcombine.high %v5225, %v5225
  %v5747 = vunpack.c.l.s4 1966171168
  %v5748 = vunpack.c.0.s8 %v5747
  %v5749 = vlaneseq
  %v5750 = vshrl.u32 %v5749, 7
  %v5751 = vsub.s32 %v5748, %v5750
  %v5752 = vrot.slane %v5225, %v5751
  %v5754 = vunpack.c.l.s4 1966171168
  %v5755 = vunpack.c.0.s8 %v5754
  %v5756 = vlaneseq
  %v5757 = vshrl.u32 %v5756, 7
  %v5758 = vsub.s32 %v5755, %v5757
  %v5759 = vrot.slane %v5745, %v5758
  %v5760 = vcombine.high %v5752, %v5752
  %v5761 = vcombine.high %v5759, %v5759
  %v5763 = vunpack.c.l.s4 1966171168
  %v5764 = vunpack.c.0.s8 %v5763
  %v5765 = vlaneseq
  %v5766 = vshrl.u32 %v5765, 7
  %v5767 = vsub.s32 %v5764, %v5766
  %v5768 = vrot.slane %v5752, %v5767
  %v5770 = vunpack.c.l.s4 1966171168
  %v5771 = vunpack.c.0.s8 %v5770
  %v5772 = vlaneseq
  %v5773 = vshrl.u32 %v5772, 7
  %v5774 = vsub.s32 %v5771, %v5773
  %v5775 = vrot.slane %v5759, %v5774
  %v5777 = vunpack.c.l.s4 1966171168
  %v5778 = vunpack.c.0.s8 %v5777
  %v5779 = vlaneseq
  %v5780 = vshrl.u32 %v5779, 7
  %v5781 = vsub.s32 %v5778, %v5780
  %v5782 = vrot.slane %v5760, %v5781
  %v5784 = vunpack.c.l.s4 1966171168
  %v5785 = vunpack.c.0.s8 %v5784
  %v5786 = vlaneseq
  %v5787 = vshrl.u32 %v5786, 7
  %v5788 = vsub.s32 %v5785, %v5787
  %v5789 = vrot.slane %v5761, %v5788
  %v5790 = vcombine.high %v5768, %v5768
  %v5791 = vcombine.high %v5775, %v5775
  %v5792 = vcombine.high %v5782, %v5782
  %v5793 = vcombine.high %v5789, %v5789
  %v5802 = vmul.f32 %v5641, %v5768
  %v5803 = vmul.f32 %v5643, %v5782
  %v5804 = vmul.f32 %v5645, %v5790
  %v5805 = vmul.f32 %v5647, %v5792
  %v5806 = vmul.f32 %v5649, %v5775
  %v5807 = vmul.f32 %v5651, %v5789
  %v5808 = vmul.f32 %v5653, %v5791
  %v5809 = vmul.f32 %v5655, %v5793
  %v5810 = vmul.f32 %v5569, %v5672
  %v5811 = vmul.f32 %v5571, %v5673
  %v5812 = vmul.f32 %v5573, %v5674
  %v5813 = vmul.f32 %v5575, %v5675
  %v5814 = vmul.f32 %v5577, %v5676
  %v5815 = vmul.f32 %v5579, %v5677
  %v5816 = vmul.f32 %v5581, %v5678
  %v5817 = vmul.f32 %v5583, %v5679
  %v5818 = vadd.f32 %v5802, %v5810
  %v5819 = vadd.f32 %v5803, %v5811
  %v5820 = vadd.f32 %v5804, %v5812
  %v5821 = vadd.f32 %v5805, %v5813
  %v5822 = vadd.f32 %v5806, %v5814
  %v5823 = vadd.f32 %v5807, %v5815
  %v5824 = vadd.f32 %v5808, %v5816
  %v5825 = vadd.f32 %v5809, %v5817
  %v5826 = vtanh.pop %v5818
  %v5827 = vtanh.pop %v5819
  %v5828 = vtanh.pop %v5820
  %v5829 = vtanh.pop %v5821
  %v5830 = vtanh.pop %v5822
  %v5831 = vtanh.pop %v5823
  %v5832 = vtanh.pop %v5824
  %v5833 = vtanh.pop %v5825
  %v5834 = vmul.f32 %v5729, %v5826
  %v5835 = vmul.f32 %v5731, %v5827
  %v5836 = vmul.f32 %v5733, %v5828
  %v5837 = vmul.f32 %v5735, %v5829
  %v5838 = vmul.f32 %v5737, %v5830
  %v5839 = vmul.f32 %v5739, %v5831
  %v5840 = vmul.f32 %v5741, %v5832
  %v5841 = vmul.f32 %v5743, %v5833
  %v5850 = vcombine.low %v5818, %v5819
  %v5851 = vcombine.low %v5820, %v5821
  %v5852 = vcombine.low %v5822, %v5823
  %v5853 = vcombine.low %v5824, %v5825
  %v5855 = vunpack.c.l.s4 1966171168
  %v5856 = vunpack.c.0.s8 %v5855
  %v5857 = vlaneseq
  %v5858 = vshrl.u32 %v5857, 7
  %v5859 = vsub.s32 %v5856, %v5858
  %v5860 = vrot.slane %v5850, %v5859
  %v5862 = vunpack.c.l.s4 1966171168
  %v5863 = vunpack.c.0.s8 %v5862
  %v5864 = vlaneseq
  %v5865 = vshrl.u32 %v5864, 7
  %v5866 = vsub.s32 %v5863, %v5865
  %v5867 = vrot.slane %v5851, %v5866
  %v5869 = vunpack.c.l.s4 1966171168
  %v5870 = vunpack.c.0.s8 %v5869
  %v5871 = vlaneseq
  %v5872 = vshrl.u32 %v5871, 7
  %v5873 = vsub.s32 %v5870, %v5872
  %v5874 = vrot.slane %v5852, %v5873
  %v5876 = vunpack.c.l.s4 1966171168
  %v5877 = vunpack.c.0.s8 %v5876
  %v5878 = vlaneseq
  %v5879 = vshrl.u32 %v5878, 7
  %v5880 = vsub.s32 %v5877, %v5879
  %v5881 = vrot.slane %v5853, %v5880
  %v5882 = vcombine.low %v5860, %v5867
  %v5883 = vcombine.low %v5874, %v5881
  %v5885 = vunpack.c.l.s4 1966171168
  %v5886 = vunpack.c.0.s8 %v5885
  %v5887 = vlaneseq
  %v5888 = vshrl.u32 %v5887, 7
  %v5889 = vsub.s32 %v5886, %v5888
  %v5890 = vrot.slane %v5882, %v5889
  %v5892 = vunpack.c.l.s4 1966171168
  %v5893 = vunpack.c.0.s8 %v5892
  %v5894 = vlaneseq
  %v5895 = vshrl.u32 %v5894, 7
  %v5896 = vsub.s32 %v5893, %v5895
  %v5897 = vrot.slane %v5883, %v5896
  %v5898 = vcombine.low %v5890, %v5897
  %5900 = vst [vmem:[#allocation3] sm:$0xff] %v5898
  %v5909 = vcombine.low %v5834, %v5835
  %v5910 = vcombine.low %v5836, %v5837
  %v5911 = vcombine.low %v5838, %v5839
  %v5912 = vcombine.low %v5840, %v5841
  %v5914 = vunpack.c.l.s4 1966171168
  %v5915 = vunpack.c.0.s8 %v5914
  %v5916 = vlaneseq
  %v5917 = vshrl.u32 %v5916, 7
  %v5918 = vsub.s32 %v5915, %v5917
  %v5919 = vrot.slane %v5909, %v5918
  %v5921 = vunpack.c.l.s4 1966171168
  %v5922 = vunpack.c.0.s8 %v5921
  %v5923 = vlaneseq
  %v5924 = vshrl.u32 %v5923, 7
  %v5925 = vsub.s32 %v5922, %v5924
  %v5926 = vrot.slane %v5910, %v5925
  %v5928 = vunpack.c.l.s4 1966171168
  %v5929 = vunpack.c.0.s8 %v5928
  %v5930 = vlaneseq
  %v5931 = vshrl.u32 %v5930, 7
  %v5932 = vsub.s32 %v5929, %v5931
  %v5933 = vrot.slane %v5911, %v5932
  %v5935 = vunpack.c.l.s4 1966171168
  %v5936 = vunpack.c.0.s8 %v5935
  %v5937 = vlaneseq
  %v5938 = vshrl.u32 %v5937, 7
  %v5939 = vsub.s32 %v5936, %v5938
  %v5940 = vrot.slane %v5912, %v5939
  %v5941 = vcombine.low %v5919, %v5926
  %v5942 = vcombine.low %v5933, %v5940
  %v5944 = vunpack.c.l.s4 1966171168
  %v5945 = vunpack.c.0.s8 %v5944
  %v5946 = vlaneseq
  %v5947 = vshrl.u32 %v5946, 7
  %v5948 = vsub.s32 %v5945, %v5947
  %v5949 = vrot.slane %v5941, %v5948
  %v5951 = vunpack.c.l.s4 1966171168
  %v5952 = vunpack.c.0.s8 %v5951
  %v5953 = vlaneseq
  %v5954 = vshrl.u32 %v5953, 7
  %v5955 = vsub.s32 %v5952, %v5954
  %v5956 = vrot.slane %v5942, %v5955
  %v5957 = vcombine.low %v5949, %v5956
  %5959 = vst [vmem:[#allocation2] sm:$0xff] %v5957
  %5960 = vst [vmem:[%s2 + $0x7] sm:$0x1] %v5834
  %5961 = vst [vmem:[%s2 + $0xf] sm:$0x1] %v5835
  %5962 = vst [vmem:[%s2 + $0x17] sm:$0x1] %v5836
  %5963 = vst [vmem:[%s2 + $0x1f] sm:$0x1] %v5837
  %5964 = vst [vmem:[%s2 + $0x27] sm:$0x1] %v5838
  %5965 = vst [vmem:[%s2 + $0x2f] sm:$0x1] %v5839
  %5966 = vst [vmem:[%s2 + $0x37] sm:$0x1] %v5840
  %5967 = vst [vmem:[%s2 + $0x3f] sm:$0x1] %v5841
  // Predicated region
  $region14: #{decoder_forward.4} parent=0 // pred_check
    _
  $region15: #{decoder_forward.4} parent=0 // pred_check_branch
    %5969 = sbr.rel (0) target = $region17
  $region16: #{decoder_forward.4} parent=0 // pred_region
    _
  $region17: #{decoder_forward.4} parent=0 // pred_fallthru
    _
  // Predicated region
  $region18: #{decoder_forward.4} parent=0 // pred_check
    _
  $region19: #{decoder_forward.4} parent=0 // pred_check_branch
    %5971 = sbr.rel (0) target = $region21
  $region20: #{decoder_forward.4} parent=0 // pred_region
    _
  $region21: #{decoder_forward.4} parent=0 // pred_fallthru
    _

</llo_original>
